<compile_context>
chip_gen: v6e
topology: v6e:2x2x1
jax: 0.10.0
libtpu: 0.0.40
codegen_flags: <defaults>
</compile_context>

<pallas_src>
import functools

import jax
import jax.numpy as jnp
from jax.experimental import pallas as pl
from jax.experimental.pallas import tpu as pltpu

_LANE = 128      # lane width
_SUB = 16        # bf16 sublane packing granularity
_TM_MAX = 512    # v7x-safe M tile (double-buffered bf16 blocks stay << 32 MiB)
_K_SINGLE = 2048  # largest K handled as a single block; above this, tile K
_TK = 512        # K tile when K is tiled


def _round_up(x, m):
    return ((x + m - 1) // m) * m


def _cdiv(a, b):
    return (a + b - 1) // b


# ----------------------------------------------------------------------------
# Pallas kernels
# ----------------------------------------------------------------------------
def _conv_mm_kernel(p_ref, w_ref, b_ref, o_ref, acc_ref, *, act):
    """acc += p @ w (bf16 MXU, f32 acc); on last K step: +bias, act, store."""
    k = pl.program_id(1)

    @pl.when(k == 0)
    def _():
        acc_ref[...] = jnp.zeros_like(acc_ref)

    acc_ref[...] += jnp.dot(p_ref[...], w_ref[...],
                            preferred_element_type=jnp.float32)

    @pl.when(k == pl.num_programs(1) - 1)
    def _():
        y = acc_ref[...] + b_ref[...]            # (TM, N) + (1, N)
        if act == "relu":
            y = jnp.maximum(y, 0.0)
        o_ref[...] = y.astype(o_ref.dtype)


def _head_mm_kernel(p_ref, w1_ref, b1_ref, w2_ref, b2_ref, o_ref, acc_ref, *,
                    use_sigmoid):
    """Matting head: conv3x3+BN+ReLU then fused 1x1 conv (+bias, +sigmoid)."""
    k = pl.program_id(1)

    @pl.when(k == 0)
    def _():
        acc_ref[...] = jnp.zeros_like(acc_ref)

    acc_ref[...] += jnp.dot(p_ref[...], w1_ref[...],
                            preferred_element_type=jnp.float32)

    @pl.when(k == pl.num_programs(1) - 1)
    def _():
        h = jnp.maximum(acc_ref[...] + b1_ref[...], 0.0)            # (TM, mid)
        # 1x1 conv with a single output channel == lane reduction (no MXU pass)
        y = jnp.sum(h * w2_ref[...], axis=-1, keepdims=True) + b2_ref[...]
        if use_sigmoid:
            # exp + reciprocal both go to the EUP slot; clip keeps exact [0,1].
            y = jnp.clip(pl.reciprocal(1.0 + jnp.exp(-y), approx=True), 0.0, 1.0)
        o_ref[...] = y.astype(o_ref.dtype)


# ----------------------------------------------------------------------------
# pallas_call wrapper: tiling + padding + specs
# ----------------------------------------------------------------------------
def _tiling(M, K):
    M_pad = _round_up(max(M, _SUB), _SUB)
    TM = min(_TM_MAX, M_pad)
    # keep >=2 grid steps along the parallel axis when there is enough work
    # (v7x has 2 TensorCores per chip).
    if M_pad > 8 * _SUB and _cdiv(M_pad, TM) < 2:
        TM = _round_up(_cdiv(M_pad, 2), _SUB)
    n_m = _cdiv(M_pad, TM)
    M_full = n_m * TM

    K_pad = _round_up(K, _LANE)
    if K_pad > _K_SINGLE:
        K_full = _round_up(K_pad, _TK)
        TK = _TK
    else:
        K_full = K_pad
        TK = K_pad
    n_k = K_full // TK
    return TM, n_m, M_full, TK, n_k, K_full


def fused_conv_matmul(patches, w_mat, bias, *, act="relu",
                      out_dtype=jnp.bfloat16,
                      head_w2=None, head_b2=None, head_sigmoid=False):
    """y = act(patches @ w_mat + bias)   [optionally -> 1x1 conv (+sigmoid)]

    patches: (M, K) any float dtype (cast to bf16), w_mat: (K, N) BN-folded
    weights (cast to bf16), bias: (N,) f32.  Head-fusion args compute the
    matting head's trailing 1x1 conv inside the same kernel.
    """
    M, K = patches.shape
    Kw, N = w_mat.shape
    assert K == Kw
    TM, n_m, M_full, TK, n_k, K_full = _tiling(M, K)

    # zero-pad to tile boundaries (zero rows/cols contribute nothing to the dot)
    p = jnp.pad(patches.astype(jnp.bfloat16), ((0, M_full - M), (0, K_full - K)))
    w = jnp.pad(w_mat.astype(jnp.bfloat16), ((0, K_full - K), (0, 0)))
    b = bias.reshape(1, N).astype(jnp.float32)

    compiler_params = pltpu.CompilerParams(
        dimension_semantics=("parallel", "arbitrary"),
        vmem_limit_bytes=32 * 1024 * 1024)
    scratch = [pltpu.VMEM((TM, N), jnp.float32)]

    if head_w2 is None:
        out = pl.pallas_call(
            functools.partial(_conv_mm_kernel, act=act),
            out_shape=jax.ShapeDtypeStruct((M_full, N), out_dtype),
            grid=(n_m, n_k),
            in_specs=[
                pl.BlockSpec((TM, TK), lambda i, k: (i, k)),
                pl.BlockSpec((TK, N), lambda i, k: (k, 0)),
                pl.BlockSpec((1, N), lambda i, k: (0, 0)),
            ],
            out_specs=pl.BlockSpec((TM, N), lambda i, k: (i, 0)),
            scratch_shapes=scratch,
            compiler_params=compiler_params,
        )(p, w, b)
        return out[:M]

    # fused matting head path: second (1x1) conv as an epilogue
    w2_row = head_w2.reshape(1, N).astype(jnp.float32)      # (N, 1) -> (1, N)
    b2 = head_b2.reshape(1, 1).astype(jnp.float32)
    out = pl.pallas_call(
        functools.partial(_head_mm_kernel, use_sigmoid=head_sigmoid),
        out_shape=jax.ShapeDtypeStruct((M_full, 1), jnp.float32),
        grid=(n_m, n_k),
        in_specs=[
            pl.BlockSpec((TM, TK), lambda i, k: (i, k)),
            pl.BlockSpec((TK, N), lambda i, k: (k, 0)),
            pl.BlockSpec((1, N), lambda i, k: (0, 0)),
            pl.BlockSpec((1, N), lambda i, k: (0, 0)),
            pl.BlockSpec((1, 1), lambda i, k: (0, 0)),
        ],
        out_specs=pl.BlockSpec((TM, 1), lambda i, k: (i, 0)),
        scratch_shapes=scratch,
        compiler_params=compiler_params,
    )(p, w, b, w2_row, b2)
    return out[:M]


# ----------------------------------------------------------------------------
# JAX glue: im2col, bilinear upsample (data movement only)
# ----------------------------------------------------------------------------
def _im2col_3x3(x_nhwc, stride):
    # TODO(synk): replace with an in-kernel halo conv to avoid the 9x HBM
    #             activation amplification; done in bf16 to halve that traffic.
    B, H, W, C = x_nhwc.shape
    xp = jnp.pad(x_nhwc, ((0, 0), (1, 1), (1, 1), (0, 0)))
    Ho = (H + 2 - 3) // stride + 1
    Wo = (W + 2 - 3) // stride + 1
    cols = []
    for dy in range(3):
        for dx in range(3):
            cols.append(
                xp[:, dy:dy + (Ho - 1) * stride + 1:stride,
                      dx:dx + (Wo - 1) * stride + 1:stride, :]
            )
    patches = jnp.concatenate(cols, axis=-1)            # (B, Ho, Wo, 9*C)
    return patches.reshape(B * Ho * Wo, 9 * C), (B, Ho, Wo)


def _interp_indices(n_in):
    # PyTorch F.interpolate(scale_factor=2, mode='bilinear', align_corners=False)
    dst = jnp.arange(2 * n_in, dtype=jnp.float32)
    src = jnp.maximum((dst + 0.5) * 0.5 - 0.5, 0.0)
    i0 = jnp.floor(src).astype(jnp.int32)
    frac = src - i0.astype(jnp.float32)
    i1 = jnp.minimum(i0 + 1, n_in - 1)
    return i0, i1, frac


def upsample2x_bilinear(x_nhwc):
    # TODO(synk): could be fused into the following fusion-block kernel to avoid
    #             materializing the full-resolution F_up in HBM.
    B, H, W, C = x_nhwc.shape
    x32 = x_nhwc.astype(jnp.float32)
    i0, i1, fh = _interp_indices(H)
    xh = (x32[:, i0] * (1.0 - fh)[None, :, None, None]
          + x32[:, i1] * fh[None, :, None, None])
    j0, j1, fw = _interp_indices(W)
    xw = (xh[:, :, j0] * (1.0 - fw)[None, None, :, None]
          + xh[:, :, j1] * fw[None, None, :, None])
    return xw.astype(jnp.bfloat16)


# ----------------------------------------------------------------------------
# Conv3x3 + BatchNorm(eval) + ReLU block (Basic_Conv3x3 equivalent)
# ----------------------------------------------------------------------------
def _fold_bn(p):
    """Fold BN (running stats) and conv bias: returns (w_mat, bias)."""
    cout = p["w"].shape[-1]
    scale = p["gamma"] / jnp.sqrt(p["var"] + 1e-5)           # (Cout,)
    conv_b = p["b"] if p["b"] is not None else 0.0
    bias = scale * (conv_b - p["mean"]) + p["beta"]
    w_fold = p["w"] * scale                                  # (3,3,Cin,Cout)*(Cout,)
    return w_fold.reshape(-1, cout), bias


def conv3x3_bn_relu(x_nhwc, p, stride):
    patches, (B, Ho, Wo) = _im2col_3x3(x_nhwc, stride)
    w_mat, bias = _fold_bn(p)
    out = fused_conv_matmul(patches, w_mat, bias, act="relu",
                            out_dtype=jnp.bfloat16)
    return out.reshape(B, Ho, Wo, w_mat.shape[-1])


def matting_head(x_nhwc, params, use_sigmoid):
    patches, (B, Ho, Wo) = _im2col_3x3(x_nhwc, stride=1)
    w_mat, bias = _fold_bn(params["head_conv1"])
    out = fused_conv_matmul(patches, w_mat, bias, act="relu",
                            head_w2=params["head_conv2_w"],
                            head_b2=params["head_conv2_b"],
                            head_sigmoid=use_sigmoid)
    return out.reshape(B, Ho, Wo, 1)


# ----------------------------------------------------------------------------
# Deterministic parameter initialization (synthetic; no checkpoint loading)
# ----------------------------------------------------------------------------
def _init_conv_bn(key, cin, cout, with_conv_bias=False):
    ks = jax.random.split(key, 6)
    return {
        "w": jax.random.normal(ks[0], (3, 3, cin, cout), jnp.float32)
             / jnp.sqrt(9.0 * cin),
        "gamma": 1.0 + 0.1 * jax.random.normal(ks[1], (cout,), jnp.float32),
        "beta": 0.1 * jax.random.normal(ks[2], (cout,), jnp.float32),
        "mean": 0.1 * jax.random.normal(ks[3], (cout,), jnp.float32),
        "var": 1.0 + 0.1 * jnp.abs(jax.random.normal(ks[4], (cout,), jnp.float32)),
        "b": (0.1 * jax.random.normal(ks[5], (cout,), jnp.float32)
              if with_conv_bias else None),
    }


def init_detail_capture_params(key, in_chans, img_chans,
                               convstream_out, fusion_out, mid_chans):
    conv_chans = [img_chans] + list(convstream_out)
    fus_chans = [in_chans] + list(fusion_out)
    keys = iter(jax.random.split(key, 2 * (len(conv_chans) + len(fus_chans)) + 8))

    params = {"convstream": [], "fusion": []}
    for i in range(len(conv_chans) - 1):
        params["convstream"].append(
            _init_conv_bn(next(keys), conv_chans[i], conv_chans[i + 1]))
    for i in range(len(fus_chans) - 1):
        cin = fus_chans[i] + conv_chans[-(i + 1)]
        params["fusion"].append(_init_conv_bn(next(keys), cin, fus_chans[i + 1]))
    # Matting head: conv3x3(+bias)+BN+ReLU, then conv1x1(+bias)
    params["head_conv1"] = _init_conv_bn(next(keys), fusion_out[-1], mid_chans,
                                         with_conv_bias=True)
    params["head_conv2_w"] = (jax.random.normal(next(keys), (mid_chans, 1),
                                                jnp.float32)
                              / jnp.sqrt(float(mid_chans)))
    params["head_conv2_b"] = 0.1 * jax.random.normal(next(keys), (1,), jnp.float32)
    return params


# ----------------------------------------------------------------------------
# DetailCapture forward
# ----------------------------------------------------------------------------
def detail_capture_forward(params, features_nchw, images_nchw, use_sigmoid=True):
    # layout: NCHW in/out (PyTorch convention), NHWC/bf16 internally.
    images = jnp.transpose(images_nchw, (0, 2, 3, 1)).astype(jnp.bfloat16)
    feats = jnp.transpose(features_nchw, (0, 2, 3, 1)).astype(jnp.bfloat16)

    # ConvStream: D0 = images, D1..Dn = stride-2 Conv3x3+BN+ReLU cascade
    D = [images]
    x = images
    for p in params["convstream"]:
        x = conv3x3_bn_relu(x, p, stride=2)
        D.append(x)

    # Fusion blocks: upsample features 2x, concat detail feature, conv3x3+BN+ReLU
    n_fus = len(params["fusion"])
    for i, p in enumerate(params["fusion"]):
        f_up = upsample2x_bilinear(feats)
        d = D[n_fus - 1 - i]                          # D_{n-1-i}
        cat = jnp.concatenate([d, f_up], axis=-1)     # torch.cat([D, F_up], dim=1)
        feats = conv3x3_bn_relu(cat, p, stride=1)

    # Matting head (1x1 conv + sigmoid fused into the conv3x3 kernel)
    out = matting_head(feats, params, use_sigmoid)
    return jnp.transpose(out, (0, 3, 1, 2)).astype(jnp.float32)   # (B, 1, H, W)


# ----------------------------------------------------------------------------
if __name__ == "__main__":
    key = jax.random.PRNGKey(0)
    k_img, k_feat, k_par = jax.random.split(key, 3)

    # Small-shape configuration consistent with the module's structure:
    #   features come from a ViT at stride 16; images carry RGB+trimap (4 ch).
    B, H, W = 2, 32, 32
    in_chans, img_chans = 32, 4
    convstream_out = [8, 16, 32]
    fusion_out = [32, 16, 8, 8]          # len == len(convstream_out) + 1
    mid_chans = 8

    images = jax.random.normal(k_img, (B, img_chans, H, W), jnp.float32)
    features = jax.random.normal(k_feat, (B, in_chans, H // 16, W // 16),
                                 jnp.float32)

    params = init_detail_capture_params(
        k_par, in_chans, img_chans, convstream_out, fusion_out, mid_chans)

    fwd = jax.jit(functools.partial(detail_capture_forward, use_sigmoid=True))
    phas = fwd(params, features, images)
    jax.block_until_ready(phas)

    assert phas.shape == (B, 1, H, W), phas.shape
    assert bool(jnp.all(jnp.isfinite(phas)))
    assert bool(jnp.all((phas >= 0.0) & (phas <= 1.0)))   # sigmoid output range
    print("KERNEL_OK")
</pallas_src>

<mosaic_0001>
module attributes {stable_mosaic.version = 11 : i64} {
  func.func @_conv_mm_kernel(%arg0: i32, %arg1: i32, %arg2: memref<256x128xbf16, #tpu.memory_space<vmem>>, %arg3: memref<128x8xbf16, #tpu.memory_space<vmem>>, %arg4: memref<1x8xf32, #tpu.memory_space<vmem>>, %arg5: memref<256x8xbf16, #tpu.memory_space<vmem>>, %arg6: memref<256x8xf32, #tpu.memory_space<vmem>>) attributes {dimension_semantics = [#tpu.dimension_semantics<parallel>, #tpu.dimension_semantics<arbitrary>], iteration_bounds = array<i64: 2, 1>, scalar_prefetch = 0 : i64, scratch_operands = 1 : i64, tpu.core_type = #tpu.core_type<tc>, window_params = [{transform_indices = @transform_0, window_bounds = array<i64: 256, 128>}, {transform_indices = @transform_1, window_bounds = array<i64: 128, 8>}, {pipeline_mode = #tpu.pipeline_mode<synchronous>, transform_indices = @transform_2, window_bounds = array<i64: 1, 8>}, {transform_indices = @transform_3, window_bounds = array<i64: 256, 8>}]} {
    %c0_i32 = arith.constant 0 : i32
    %0 = arith.cmpi eq, %arg1, %c0_i32 : i32
    %1 = arith.extui %0 : i1 to i32
    %c0_i32_0 = arith.constant 0 : i32
    %2 = arith.cmpi ne, %1, %c0_i32_0 : i32
    scf.if %2 {
      %cst_10 = arith.constant 0.000000e+00 : f32
      %12 = vector.broadcast %cst_10 : f32 to vector<256x8xf32>
      %c0_11 = arith.constant 0 : index
      %c0_12 = arith.constant 0 : index
      %13 = vector.load %arg6[%c0_11, %c0_12] : memref<256x8xf32, #tpu.memory_space<vmem>>, vector<256x8xf32>
      tpu.vector_store %arg6[%c0_11, %c0_12], %12 {strides = array<i32>} : memref<256x8xf32, #tpu.memory_space<vmem>>, vector<256x8xf32>,
    } else {
    }
    %c0 = arith.constant 0 : index
    %c0_1 = arith.constant 0 : index
    %3 = vector.load %arg6[%c0, %c0_1] : memref<256x8xf32, #tpu.memory_space<vmem>>, vector<256x8xf32>
    %c0_2 = arith.constant 0 : index
    %c0_3 = arith.constant 0 : index
    %4 = vector.load %arg2[%c0_2, %c0_3] : memref<256x128xbf16, #tpu.memory_space<vmem>>, vector<256x128xbf16>
    %c0_4 = arith.constant 0 : index
    %c0_5 = arith.constant 0 : index
    %5 = vector.load %arg3[%c0_4, %c0_5] : memref<128x8xbf16, #tpu.memory_space<vmem>>, vector<128x8xbf16>
    %cst = arith.constant dense<0.000000e+00> : vector<256x8xf32>
    %6 = tpu.matmul %4, %5, %cst {dimension_numbers = #tpu.dot_dimension_numbers<[1], [0], [0], [1], [0, 0, 1, 1], [], []>} : vector<256x128xbf16>, vector<128x8xbf16>, vector<256x8xf32> -> vector<256x8xf32>
    %7 = arith.addf %3, %6 : vector<256x8xf32>
    %c0_6 = arith.constant 0 : index
    %c0_7 = arith.constant 0 : index
    %8 = vector.load %arg6[%c0_6, %c0_7] : memref<256x8xf32, #tpu.memory_space<vmem>>, vector<256x8xf32>
    tpu.vector_store %arg6[%c0_6, %c0_7], %7 {strides = array<i32>} : memref<256x8xf32, #tpu.memory_space<vmem>>, vector<256x8xf32>,
    %c0_i32_8 = arith.constant 0 : i32
    %9 = arith.cmpi eq, %arg1, %c0_i32_8 : i32
    %10 = arith.extui %9 : i1 to i32
    %c0_i32_9 = arith.constant 0 : i32
    %11 = arith.cmpi ne, %10, %c0_i32_9 : i32
    scf.if %11 {
      %c0_10 = arith.constant 0 : index
      %c0_11 = arith.constant 0 : index
      %12 = vector.load %arg6[%c0_10, %c0_11] : memref<256x8xf32, #tpu.memory_space<vmem>>, vector<256x8xf32>
      %c0_12 = arith.constant 0 : index
      %c0_13 = arith.constant 0 : index
      %13 = vector.load %arg4[%c0_12, %c0_13] : memref<1x8xf32, #tpu.memory_space<vmem>>, vector<1x8xf32>
      %14 = vector.broadcast %13 : vector<1x8xf32> to vector<256x8xf32>
      %15 = arith.addf %12, %14 : vector<256x8xf32>
      %cst_14 = arith.constant 0.000000e+00 : f32
      %16 = vector.broadcast %cst_14 : f32 to vector<256x8xf32>
      %17 = arith.maximumf %15, %16 : vector<256x8xf32>
      %18 = arith.truncf %17 : vector<256x8xf32> to vector<256x8xbf16>
      %c0_15 = arith.constant 0 : index
      %c0_16 = arith.constant 0 : index
      %19 = vector.load %arg5[%c0_15, %c0_16] : memref<256x8xbf16, #tpu.memory_space<vmem>>, vector<256x8xbf16>
      tpu.vector_store %arg5[%c0_15, %c0_16], %18 {strides = array<i32>} : memref<256x8xbf16, #tpu.memory_space<vmem>>, vector<256x8xbf16>,
    } else {
    }
    return
  }
  func.func @transform_0(%arg0: i32, %arg1: i32) -> (i32, i32) {
    %c0_i32 = arith.constant 0 : i32
    return %arg0, %arg1 : i32, i32
  }
  func.func @transform_1(%arg0: i32, %arg1: i32) -> (i32, i32) {
    %c0_i32 = arith.constant 0 : i32
    %c0_i32_0 = arith.constant 0 : i32
    return %arg1, %c0_i32 : i32, i32
  }
  func.func @transform_2(%arg0: i32, %arg1: i32) -> (i32, i32) {
    %c0_i32 = arith.constant 0 : i32
    %c0_i32_0 = arith.constant 0 : i32
    %c0_i32_1 = arith.constant 0 : i32
    return %c0_i32, %c0_i32_0 : i32, i32
  }
  func.func @transform_3(%arg0: i32, %arg1: i32) -> (i32, i32) {
    %c0_i32 = arith.constant 0 : i32
    %c0_i32_0 = arith.constant 0 : i32
    return %arg0, %c0_i32 : i32, i32
  }
}

module attributes {stable_mosaic.version = 11 : i64} {
  func.func @_conv_mm_kernel(%arg0: i32, %arg1: i32, %arg2: memref<128x128xbf16, #tpu.memory_space<vmem>>, %arg3: memref<128x16xbf16, #tpu.memory_space<vmem>>, %arg4: memref<1x16xf32, #tpu.memory_space<vmem>>, %arg5: memref<128x16xbf16, #tpu.memory_space<vmem>>, %arg6: memref<128x16xf32, #tpu.memory_space<vmem>>) attributes {dimension_semantics = [#tpu.dimension_semantics<parallel>, #tpu.dimension_semantics<arbitrary>], iteration_bounds = array<i64: 1, 1>, scalar_prefetch = 0 : i64, scratch_operands = 1 : i64, tpu.core_type = #tpu.core_type<tc>, window_params = [{transform_indices = @transform_0, window_bounds = array<i64: 128, 128>}, {transform_indices = @transform_1, window_bounds = array<i64: 128, 16>}, {pipeline_mode = #tpu.pipeline_mode<synchronous>, transform_indices = @transform_2, window_bounds = array<i64: 1, 16>}, {transform_indices = @transform_3, window_bounds = array<i64: 128, 16>}]} {
    %c0_i32 = arith.constant 0 : i32
    %0 = arith.cmpi eq, %arg1, %c0_i32 : i32
    %1 = arith.extui %0 : i1 to i32
    %c0_i32_0 = arith.constant 0 : i32
    %2 = arith.cmpi ne, %1, %c0_i32_0 : i32
    scf.if %2 {
      %cst_10 = arith.constant 0.000000e+00 : f32
      %12 = vector.broadcast %cst_10 : f32 to vector<128x16xf32>
      %c0_11 = arith.constant 0 : index
      %c0_12 = arith.constant 0 : index
      %13 = vector.load %arg6[%c0_11, %c0_12] : memref<128x16xf32, #tpu.memory_space<vmem>>, vector<128x16xf32>
      tpu.vector_store %arg6[%c0_11, %c0_12], %12 {strides = array<i32>} : memref<128x16xf32, #tpu.memory_space<vmem>>, vector<128x16xf32>,
    } else {
    }
    %c0 = arith.constant 0 : index
    %c0_1 = arith.constant 0 : index
    %3 = vector.load %arg6[%c0, %c0_1] : memref<128x16xf32, #tpu.memory_space<vmem>>, vector<128x16xf32>
    %c0_2 = arith.constant 0 : index
    %c0_3 = arith.constant 0 : index
    %4 = vector.load %arg2[%c0_2, %c0_3] : memref<128x128xbf16, #tpu.memory_space<vmem>>, vector<128x128xbf16>
    %c0_4 = arith.constant 0 : index
    %c0_5 = arith.constant 0 : index
    %5 = vector.load %arg3[%c0_4, %c0_5] : memref<128x16xbf16, #tpu.memory_space<vmem>>, vector<128x16xbf16>
    %cst = arith.constant dense<0.000000e+00> : vector<128x16xf32>
    %6 = tpu.matmul %4, %5, %cst {dimension_numbers = #tpu.dot_dimension_numbers<[1], [0], [0], [1], [0, 0, 1, 1], [], []>} : vector<128x128xbf16>, vector<128x16xbf16>, vector<128x16xf32> -> vector<128x16xf32>
    %7 = arith.addf %3, %6 : vector<128x16xf32>
    %c0_6 = arith.constant 0 : index
    %c0_7 = arith.constant 0 : index
    %8 = vector.load %arg6[%c0_6, %c0_7] : memref<128x16xf32, #tpu.memory_space<vmem>>, vector<128x16xf32>
    tpu.vector_store %arg6[%c0_6, %c0_7], %7 {strides = array<i32>} : memref<128x16xf32, #tpu.memory_space<vmem>>, vector<128x16xf32>,
    %c0_i32_8 = arith.constant 0 : i32
    %9 = arith.cmpi eq, %arg1, %c0_i32_8 : i32
    %10 = arith.extui %9 : i1 to i32
    %c0_i32_9 = arith.constant 0 : i32
    %11 = arith.cmpi ne, %10, %c0_i32_9 : i32
    scf.if %11 {
      %c0_10 = arith.constant 0 : index
      %c0_11 = arith.constant 0 : index
      %12 = vector.load %arg6[%c0_10, %c0_11] : memref<128x16xf32, #tpu.memory_space<vmem>>, vector<128x16xf32>
      %c0_12 = arith.constant 0 : index
      %c0_13 = arith.constant 0 : index
      %13 = vector.load %arg4[%c0_12, %c0_13] : memref<1x16xf32, #tpu.memory_space<vmem>>, vector<1x16xf32>
      %14 = vector.broadcast %13 : vector<1x16xf32> to vector<128x16xf32>
      %15 = arith.addf %12, %14 : vector<128x16xf32>
      %cst_14 = arith.constant 0.000000e+00 : f32
      %16 = vector.broadcast %cst_14 : f32 to vector<128x16xf32>
      %17 = arith.maximumf %15, %16 : vector<128x16xf32>
      %18 = arith.truncf %17 : vector<128x16xf32> to vector<128x16xbf16>
      %c0_15 = arith.constant 0 : index
      %c0_16 = arith.constant 0 : index
      %19 = vector.load %arg5[%c0_15, %c0_16] : memref<128x16xbf16, #tpu.memory_space<vmem>>, vector<128x16xbf16>
      tpu.vector_store %arg5[%c0_15, %c0_16], %18 {strides = array<i32>} : memref<128x16xbf16, #tpu.memory_space<vmem>>, vector<128x16xbf16>,
    } else {
    }
    return
  }
  func.func @transform_0(%arg0: i32, %arg1: i32) -> (i32, i32) {
    %c0_i32 = arith.constant 0 : i32
    return %arg0, %arg1 : i32, i32
  }
  func.func @transform_1(%arg0: i32, %arg1: i32) -> (i32, i32) {
    %c0_i32 = arith.constant 0 : i32
    %c0_i32_0 = arith.constant 0 : i32
    return %arg1, %c0_i32 : i32, i32
  }
  func.func @transform_2(%arg0: i32, %arg1: i32) -> (i32, i32) {
    %c0_i32 = arith.constant 0 : i32
    %c0_i32_0 = arith.constant 0 : i32
    %c0_i32_1 = arith.constant 0 : i32
    return %c0_i32, %c0_i32_0 : i32, i32
  }
  func.func @transform_3(%arg0: i32, %arg1: i32) -> (i32, i32) {
    %c0_i32 = arith.constant 0 : i32
    %c0_i32_0 = arith.constant 0 : i32
    return %arg0, %c0_i32 : i32, i32
  }
}

module attributes {stable_mosaic.version = 11 : i64} {
  func.func @_conv_mm_kernel(%arg0: i32, %arg1: i32, %arg2: memref<32x256xbf16, #tpu.memory_space<vmem>>, %arg3: memref<256x32xbf16, #tpu.memory_space<vmem>>, %arg4: memref<1x32xf32, #tpu.memory_space<vmem>>, %arg5: memref<32x32xbf16, #tpu.memory_space<vmem>>, %arg6: memref<32x32xf32, #tpu.memory_space<vmem>>) attributes {dimension_semantics = [#tpu.dimension_semantics<parallel>, #tpu.dimension_semantics<arbitrary>], iteration_bounds = array<i64: 1, 1>, scalar_prefetch = 0 : i64, scratch_operands = 1 : i64, tpu.core_type = #tpu.core_type<tc>, window_params = [{transform_indices = @transform_0, window_bounds = array<i64: 32, 256>}, {transform_indices = @transform_1, window_bounds = array<i64: 256, 32>}, {pipeline_mode = #tpu.pipeline_mode<synchronous>, transform_indices = @transform_2, window_bounds = array<i64: 1, 32>}, {transform_indices = @transform_3, window_bounds = array<i64: 32, 32>}]} {
    %c0_i32 = arith.constant 0 : i32
    %0 = arith.cmpi eq, %arg1, %c0_i32 : i32
    %1 = arith.extui %0 : i1 to i32
    %c0_i32_0 = arith.constant 0 : i32
    %2 = arith.cmpi ne, %1, %c0_i32_0 : i32
    scf.if %2 {
      %cst_10 = arith.constant 0.000000e+00 : f32
      %12 = vector.broadcast %cst_10 : f32 to vector<32x32xf32>
      %c0_11 = arith.constant 0 : index
      %c0_12 = arith.constant 0 : index
      %13 = vector.load %arg6[%c0_11, %c0_12] : memref<32x32xf32, #tpu.memory_space<vmem>>, vector<32x32xf32>
      tpu.vector_store %arg6[%c0_11, %c0_12], %12 {strides = array<i32>} : memref<32x32xf32, #tpu.memory_space<vmem>>, vector<32x32xf32>,
    } else {
    }
    %c0 = arith.constant 0 : index
    %c0_1 = arith.constant 0 : index
    %3 = vector.load %arg6[%c0, %c0_1] : memref<32x32xf32, #tpu.memory_space<vmem>>, vector<32x32xf32>
    %c0_2 = arith.constant 0 : index
    %c0_3 = arith.constant 0 : index
    %4 = vector.load %arg2[%c0_2, %c0_3] : memref<32x256xbf16, #tpu.memory_space<vmem>>, vector<32x256xbf16>
    %c0_4 = arith.constant 0 : index
    %c0_5 = arith.constant 0 : index
    %5 = vector.load %arg3[%c0_4, %c0_5] : memref<256x32xbf16, #tpu.memory_space<vmem>>, vector<256x32xbf16>
    %cst = arith.constant dense<0.000000e+00> : vector<32x32xf32>
    %6 = tpu.matmul %4, %5, %cst {dimension_numbers = #tpu.dot_dimension_numbers<[1], [0], [0], [1], [0, 0, 1, 1], [], []>} : vector<32x256xbf16>, vector<256x32xbf16>, vector<32x32xf32> -> vector<32x32xf32>
    %7 = arith.addf %3, %6 : vector<32x32xf32>
    %c0_6 = arith.constant 0 : index
    %c0_7 = arith.constant 0 : index
    %8 = vector.load %arg6[%c0_6, %c0_7] : memref<32x32xf32, #tpu.memory_space<vmem>>, vector<32x32xf32>
    tpu.vector_store %arg6[%c0_6, %c0_7], %7 {strides = array<i32>} : memref<32x32xf32, #tpu.memory_space<vmem>>, vector<32x32xf32>,
    %c0_i32_8 = arith.constant 0 : i32
    %9 = arith.cmpi eq, %arg1, %c0_i32_8 : i32
    %10 = arith.extui %9 : i1 to i32
    %c0_i32_9 = arith.constant 0 : i32
    %11 = arith.cmpi ne, %10, %c0_i32_9 : i32
    scf.if %11 {
      %c0_10 = arith.constant 0 : index
      %c0_11 = arith.constant 0 : index
      %12 = vector.load %arg6[%c0_10, %c0_11] : memref<32x32xf32, #tpu.memory_space<vmem>>, vector<32x32xf32>
      %c0_12 = arith.constant 0 : index
      %c0_13 = arith.constant 0 : index
      %13 = vector.load %arg4[%c0_12, %c0_13] : memref<1x32xf32, #tpu.memory_space<vmem>>, vector<1x32xf32>
      %14 = vector.broadcast %13 : vector<1x32xf32> to vector<32x32xf32>
      %15 = arith.addf %12, %14 : vector<32x32xf32>
      %cst_14 = arith.constant 0.000000e+00 : f32
      %16 = vector.broadcast %cst_14 : f32 to vector<32x32xf32>
      %17 = arith.maximumf %15, %16 : vector<32x32xf32>
      %18 = arith.truncf %17 : vector<32x32xf32> to vector<32x32xbf16>
      %c0_15 = arith.constant 0 : index
      %c0_16 = arith.constant 0 : index
      %19 = vector.load %arg5[%c0_15, %c0_16] : memref<32x32xbf16, #tpu.memory_space<vmem>>, vector<32x32xbf16>
      tpu.vector_store %arg5[%c0_15, %c0_16], %18 {strides = array<i32>} : memref<32x32xbf16, #tpu.memory_space<vmem>>, vector<32x32xbf16>,
    } else {
    }
    return
  }
  func.func @transform_0(%arg0: i32, %arg1: i32) -> (i32, i32) {
    %c0_i32 = arith.constant 0 : i32
    return %arg0, %arg1 : i32, i32
  }
  func.func @transform_1(%arg0: i32, %arg1: i32) -> (i32, i32) {
    %c0_i32 = arith.constant 0 : i32
    %c0_i32_0 = arith.constant 0 : i32
    return %arg1, %c0_i32 : i32, i32
  }
  func.func @transform_2(%arg0: i32, %arg1: i32) -> (i32, i32) {
    %c0_i32 = arith.constant 0 : i32
    %c0_i32_0 = arith.constant 0 : i32
    %c0_i32_1 = arith.constant 0 : i32
    return %c0_i32, %c0_i32_0 : i32, i32
  }
  func.func @transform_3(%arg0: i32, %arg1: i32) -> (i32, i32) {
    %c0_i32 = arith.constant 0 : i32
    %c0_i32_0 = arith.constant 0 : i32
    return %arg0, %c0_i32 : i32, i32
  }
}

module attributes {stable_mosaic.version = 11 : i64} {
  func.func @_conv_mm_kernel(%arg0: i32, %arg1: i32, %arg2: memref<32x640xbf16, #tpu.memory_space<vmem>>, %arg3: memref<640x32xbf16, #tpu.memory_space<vmem>>, %arg4: memref<1x32xf32, #tpu.memory_space<vmem>>, %arg5: memref<32x32xbf16, #tpu.memory_space<vmem>>, %arg6: memref<32x32xf32, #tpu.memory_space<vmem>>) attributes {dimension_semantics = [#tpu.dimension_semantics<parallel>, #tpu.dimension_semantics<arbitrary>], iteration_bounds = array<i64: 1, 1>, scalar_prefetch = 0 : i64, scratch_operands = 1 : i64, tpu.core_type = #tpu.core_type<tc>, window_params = [{transform_indices = @transform_0, window_bounds = array<i64: 32, 640>}, {transform_indices = @transform_1, window_bounds = array<i64: 640, 32>}, {pipeline_mode = #tpu.pipeline_mode<synchronous>, transform_indices = @transform_2, window_bounds = array<i64: 1, 32>}, {transform_indices = @transform_3, window_bounds = array<i64: 32, 32>}]} {
    %c0_i32 = arith.constant 0 : i32
    %0 = arith.cmpi eq, %arg1, %c0_i32 : i32
    %1 = arith.extui %0 : i1 to i32
    %c0_i32_0 = arith.constant 0 : i32
    %2 = arith.cmpi ne, %1, %c0_i32_0 : i32
    scf.if %2 {
      %cst_10 = arith.constant 0.000000e+00 : f32
      %12 = vector.broadcast %cst_10 : f32 to vector<32x32xf32>
      %c0_11 = arith.constant 0 : index
      %c0_12 = arith.constant 0 : index
      %13 = vector.load %arg6[%c0_11, %c0_12] : memref<32x32xf32, #tpu.memory_space<vmem>>, vector<32x32xf32>
      tpu.vector_store %arg6[%c0_11, %c0_12], %12 {strides = array<i32>} : memref<32x32xf32, #tpu.memory_space<vmem>>, vector<32x32xf32>,
    } else {
    }
    %c0 = arith.constant 0 : index
    %c0_1 = arith.constant 0 : index
    %3 = vector.load %arg6[%c0, %c0_1] : memref<32x32xf32, #tpu.memory_space<vmem>>, vector<32x32xf32>
    %c0_2 = arith.constant 0 : index
    %c0_3 = arith.constant 0 : index
    %4 = vector.load %arg2[%c0_2, %c0_3] : memref<32x640xbf16, #tpu.memory_space<vmem>>, vector<32x640xbf16>
    %c0_4 = arith.constant 0 : index
    %c0_5 = arith.constant 0 : index
    %5 = vector.load %arg3[%c0_4, %c0_5] : memref<640x32xbf16, #tpu.memory_space<vmem>>, vector<640x32xbf16>
    %cst = arith.constant dense<0.000000e+00> : vector<32x32xf32>
    %6 = tpu.matmul %4, %5, %cst {dimension_numbers = #tpu.dot_dimension_numbers<[1], [0], [0], [1], [0, 0, 1, 1], [], []>} : vector<32x640xbf16>, vector<640x32xbf16>, vector<32x32xf32> -> vector<32x32xf32>
    %7 = arith.addf %3, %6 : vector<32x32xf32>
    %c0_6 = arith.constant 0 : index
    %c0_7 = arith.constant 0 : index
    %8 = vector.load %arg6[%c0_6, %c0_7] : memref<32x32xf32, #tpu.memory_space<vmem>>, vector<32x32xf32>
    tpu.vector_store %arg6[%c0_6, %c0_7], %7 {strides = array<i32>} : memref<32x32xf32, #tpu.memory_space<vmem>>, vector<32x32xf32>,
    %c0_i32_8 = arith.constant 0 : i32
    %9 = arith.cmpi eq, %arg1, %c0_i32_8 : i32
    %10 = arith.extui %9 : i1 to i32
    %c0_i32_9 = arith.constant 0 : i32
    %11 = arith.cmpi ne, %10, %c0_i32_9 : i32
    scf.if %11 {
      %c0_10 = arith.constant 0 : index
      %c0_11 = arith.constant 0 : index
      %12 = vector.load %arg6[%c0_10, %c0_11] : memref<32x32xf32, #tpu.memory_space<vmem>>, vector<32x32xf32>
      %c0_12 = arith.constant 0 : index
      %c0_13 = arith.constant 0 : index
      %13 = vector.load %arg4[%c0_12, %c0_13] : memref<1x32xf32, #tpu.memory_space<vmem>>, vector<1x32xf32>
      %14 = vector.broadcast %13 : vector<1x32xf32> to vector<32x32xf32>
      %15 = arith.addf %12, %14 : vector<32x32xf32>
      %cst_14 = arith.constant 0.000000e+00 : f32
      %16 = vector.broadcast %cst_14 : f32 to vector<32x32xf32>
      %17 = arith.maximumf %15, %16 : vector<32x32xf32>
      %18 = arith.truncf %17 : vector<32x32xf32> to vector<32x32xbf16>
      %c0_15 = arith.constant 0 : index
      %c0_16 = arith.constant 0 : index
      %19 = vector.load %arg5[%c0_15, %c0_16] : memref<32x32xbf16, #tpu.memory_space<vmem>>, vector<32x32xbf16>
      tpu.vector_store %arg5[%c0_15, %c0_16], %18 {strides = array<i32>} : memref<32x32xbf16, #tpu.memory_space<vmem>>, vector<32x32xbf16>,
    } else {
    }
    return
  }
  func.func @transform_0(%arg0: i32, %arg1: i32) -> (i32, i32) {
    %c0_i32 = arith.constant 0 : i32
    return %arg0, %arg1 : i32, i32
  }
  func.func @transform_1(%arg0: i32, %arg1: i32) -> (i32, i32) {
    %c0_i32 = arith.constant 0 : i32
    %c0_i32_0 = arith.constant 0 : i32
    return %arg1, %c0_i32 : i32, i32
  }
  func.func @transform_2(%arg0: i32, %arg1: i32) -> (i32, i32) {
    %c0_i32 = arith.constant 0 : i32
    %c0_i32_0 = arith.constant 0 : i32
    %c0_i32_1 = arith.constant 0 : i32
    return %c0_i32, %c0_i32_0 : i32, i32
  }
  func.func @transform_3(%arg0: i32, %arg1: i32) -> (i32, i32) {
    %c0_i32 = arith.constant 0 : i32
    %c0_i32_0 = arith.constant 0 : i32
    return %arg0, %c0_i32 : i32, i32
  }
}

module attributes {stable_mosaic.version = 11 : i64} {
  func.func @_conv_mm_kernel(%arg0: i32, %arg1: i32, %arg2: memref<128x512xbf16, #tpu.memory_space<vmem>>, %arg3: memref<512x16xbf16, #tpu.memory_space<vmem>>, %arg4: memref<1x16xf32, #tpu.memory_space<vmem>>, %arg5: memref<128x16xbf16, #tpu.memory_space<vmem>>, %arg6: memref<128x16xf32, #tpu.memory_space<vmem>>) attributes {dimension_semantics = [#tpu.dimension_semantics<parallel>, #tpu.dimension_semantics<arbitrary>], iteration_bounds = array<i64: 1, 1>, scalar_prefetch = 0 : i64, scratch_operands = 1 : i64, tpu.core_type = #tpu.core_type<tc>, window_params = [{transform_indices = @transform_0, window_bounds = array<i64: 128, 512>}, {transform_indices = @transform_1, window_bounds = array<i64: 512, 16>}, {pipeline_mode = #tpu.pipeline_mode<synchronous>, transform_indices = @transform_2, window_bounds = array<i64: 1, 16>}, {transform_indices = @transform_3, window_bounds = array<i64: 128, 16>}]} {
    %c0_i32 = arith.constant 0 : i32
    %0 = arith.cmpi eq, %arg1, %c0_i32 : i32
    %1 = arith.extui %0 : i1 to i32
    %c0_i32_0 = arith.constant 0 : i32
    %2 = arith.cmpi ne, %1, %c0_i32_0 : i32
    scf.if %2 {
      %cst_10 = arith.constant 0.000000e+00 : f32
      %12 = vector.broadcast %cst_10 : f32 to vector<128x16xf32>
      %c0_11 = arith.constant 0 : index
      %c0_12 = arith.constant 0 : index
      %13 = vector.load %arg6[%c0_11, %c0_12] : memref<128x16xf32, #tpu.memory_space<vmem>>, vector<128x16xf32>
      tpu.vector_store %arg6[%c0_11, %c0_12], %12 {strides = array<i32>} : memref<128x16xf32, #tpu.memory_space<vmem>>, vector<128x16xf32>,
    } else {
    }
    %c0 = arith.constant 0 : index
    %c0_1 = arith.constant 0 : index
    %3 = vector.load %arg6[%c0, %c0_1] : memref<128x16xf32, #tpu.memory_space<vmem>>, vector<128x16xf32>
    %c0_2 = arith.constant 0 : index
    %c0_3 = arith.constant 0 : index
    %4 = vector.load %arg2[%c0_2, %c0_3] : memref<128x512xbf16, #tpu.memory_space<vmem>>, vector<128x512xbf16>
    %c0_4 = arith.constant 0 : index
    %c0_5 = arith.constant 0 : index
    %5 = vector.load %arg3[%c0_4, %c0_5] : memref<512x16xbf16, #tpu.memory_space<vmem>>, vector<512x16xbf16>
    %cst = arith.constant dense<0.000000e+00> : vector<128x16xf32>
    %6 = tpu.matmul %4, %5, %cst {dimension_numbers = #tpu.dot_dimension_numbers<[1], [0], [0], [1], [0, 0, 1, 1], [], []>} : vector<128x512xbf16>, vector<512x16xbf16>, vector<128x16xf32> -> vector<128x16xf32>
    %7 = arith.addf %3, %6 : vector<128x16xf32>
    %c0_6 = arith.constant 0 : index
    %c0_7 = arith.constant 0 : index
    %8 = vector.load %arg6[%c0_6, %c0_7] : memref<128x16xf32, #tpu.memory_space<vmem>>, vector<128x16xf32>
    tpu.vector_store %arg6[%c0_6, %c0_7], %7 {strides = array<i32>} : memref<128x16xf32, #tpu.memory_space<vmem>>, vector<128x16xf32>,
    %c0_i32_8 = arith.constant 0 : i32
    %9 = arith.cmpi eq, %arg1, %c0_i32_8 : i32
    %10 = arith.extui %9 : i1 to i32
    %c0_i32_9 = arith.constant 0 : i32
    %11 = arith.cmpi ne, %10, %c0_i32_9 : i32
    scf.if %11 {
      %c0_10 = arith.constant 0 : index
      %c0_11 = arith.constant 0 : index
      %12 = vector.load %arg6[%c0_10, %c0_11] : memref<128x16xf32, #tpu.memory_space<vmem>>, vector<128x16xf32>
      %c0_12 = arith.constant 0 : index
      %c0_13 = arith.constant 0 : index
      %13 = vector.load %arg4[%c0_12, %c0_13] : memref<1x16xf32, #tpu.memory_space<vmem>>, vector<1x16xf32>
      %14 = vector.broadcast %13 : vector<1x16xf32> to vector<128x16xf32>
      %15 = arith.addf %12, %14 : vector<128x16xf32>
      %cst_14 = arith.constant 0.000000e+00 : f32
      %16 = vector.broadcast %cst_14 : f32 to vector<128x16xf32>
      %17 = arith.maximumf %15, %16 : vector<128x16xf32>
      %18 = arith.truncf %17 : vector<128x16xf32> to vector<128x16xbf16>
      %c0_15 = arith.constant 0 : index
      %c0_16 = arith.constant 0 : index
      %19 = vector.load %arg5[%c0_15, %c0_16] : memref<128x16xbf16, #tpu.memory_space<vmem>>, vector<128x16xbf16>
      tpu.vector_store %arg5[%c0_15, %c0_16], %18 {strides = array<i32>} : memref<128x16xbf16, #tpu.memory_space<vmem>>, vector<128x16xbf16>,
    } else {
    }
    return
  }
  func.func @transform_0(%arg0: i32, %arg1: i32) -> (i32, i32) {
    %c0_i32 = arith.constant 0 : i32
    return %arg0, %arg1 : i32, i32
  }
  func.func @transform_1(%arg0: i32, %arg1: i32) -> (i32, i32) {
    %c0_i32 = arith.constant 0 : i32
    %c0_i32_0 = arith.constant 0 : i32
    return %arg1, %c0_i32 : i32, i32
  }
  func.func @transform_2(%arg0: i32, %arg1: i32) -> (i32, i32) {
    %c0_i32 = arith.constant 0 : i32
    %c0_i32_0 = arith.constant 0 : i32
    %c0_i32_1 = arith.constant 0 : i32
    return %c0_i32, %c0_i32_0 : i32, i32
  }
  func.func @transform_3(%arg0: i32, %arg1: i32) -> (i32, i32) {
    %c0_i32 = arith.constant 0 : i32
    %c0_i32_0 = arith.constant 0 : i32
    return %arg0, %c0_i32 : i32, i32
  }
}

module attributes {stable_mosaic.version = 11 : i64} {
  func.func @_conv_mm_kernel(%arg0: i32, %arg1: i32, %arg2: memref<256x256xbf16, #tpu.memory_space<vmem>>, %arg3: memref<256x8xbf16, #tpu.memory_space<vmem>>, %arg4: memref<1x8xf32, #tpu.memory_space<vmem>>, %arg5: memref<256x8xbf16, #tpu.memory_space<vmem>>, %arg6: memref<256x8xf32, #tpu.memory_space<vmem>>) attributes {dimension_semantics = [#tpu.dimension_semantics<parallel>, #tpu.dimension_semantics<arbitrary>], iteration_bounds = array<i64: 2, 1>, scalar_prefetch = 0 : i64, scratch_operands = 1 : i64, tpu.core_type = #tpu.core_type<tc>, window_params = [{transform_indices = @transform_0, window_bounds = array<i64: 256, 256>}, {transform_indices = @transform_1, window_bounds = array<i64: 256, 8>}, {pipeline_mode = #tpu.pipeline_mode<synchronous>, transform_indices = @transform_2, window_bounds = array<i64: 1, 8>}, {transform_indices = @transform_3, window_bounds = array<i64: 256, 8>}]} {
    %c0_i32 = arith.constant 0 : i32
    %0 = arith.cmpi eq, %arg1, %c0_i32 : i32
    %1 = arith.extui %0 : i1 to i32
    %c0_i32_0 = arith.constant 0 : i32
    %2 = arith.cmpi ne, %1, %c0_i32_0 : i32
    scf.if %2 {
      %cst_10 = arith.constant 0.000000e+00 : f32
      %12 = vector.broadcast %cst_10 : f32 to vector<256x8xf32>
      %c0_11 = arith.constant 0 : index
      %c0_12 = arith.constant 0 : index
      %13 = vector.load %arg6[%c0_11, %c0_12] : memref<256x8xf32, #tpu.memory_space<vmem>>, vector<256x8xf32>
      tpu.vector_store %arg6[%c0_11, %c0_12], %12 {strides = array<i32>} : memref<256x8xf32, #tpu.memory_space<vmem>>, vector<256x8xf32>,
    } else {
    }
    %c0 = arith.constant 0 : index
    %c0_1 = arith.constant 0 : index
    %3 = vector.load %arg6[%c0, %c0_1] : memref<256x8xf32, #tpu.memory_space<vmem>>, vector<256x8xf32>
    %c0_2 = arith.constant 0 : index
    %c0_3 = arith.constant 0 : index
    %4 = vector.load %arg2[%c0_2, %c0_3] : memref<256x256xbf16, #tpu.memory_space<vmem>>, vector<256x256xbf16>
    %c0_4 = arith.constant 0 : index
    %c0_5 = arith.constant 0 : index
    %5 = vector.load %arg3[%c0_4, %c0_5] : memref<256x8xbf16, #tpu.memory_space<vmem>>, vector<256x8xbf16>
    %cst = arith.constant dense<0.000000e+00> : vector<256x8xf32>
    %6 = tpu.matmul %4, %5, %cst {dimension_numbers = #tpu.dot_dimension_numbers<[1], [0], [0], [1], [0, 0, 1, 1], [], []>} : vector<256x256xbf16>, vector<256x8xbf16>, vector<256x8xf32> -> vector<256x8xf32>
    %7 = arith.addf %3, %6 : vector<256x8xf32>
    %c0_6 = arith.constant 0 : index
    %c0_7 = arith.constant 0 : index
    %8 = vector.load %arg6[%c0_6, %c0_7] : memref<256x8xf32, #tpu.memory_space<vmem>>, vector<256x8xf32>
    tpu.vector_store %arg6[%c0_6, %c0_7], %7 {strides = array<i32>} : memref<256x8xf32, #tpu.memory_space<vmem>>, vector<256x8xf32>,
    %c0_i32_8 = arith.constant 0 : i32
    %9 = arith.cmpi eq, %arg1, %c0_i32_8 : i32
    %10 = arith.extui %9 : i1 to i32
    %c0_i32_9 = arith.constant 0 : i32
    %11 = arith.cmpi ne, %10, %c0_i32_9 : i32
    scf.if %11 {
      %c0_10 = arith.constant 0 : index
      %c0_11 = arith.constant 0 : index
      %12 = vector.load %arg6[%c0_10, %c0_11] : memref<256x8xf32, #tpu.memory_space<vmem>>, vector<256x8xf32>
      %c0_12 = arith.constant 0 : index
      %c0_13 = arith.constant 0 : index
      %13 = vector.load %arg4[%c0_12, %c0_13] : memref<1x8xf32, #tpu.memory_space<vmem>>, vector<1x8xf32>
      %14 = vector.broadcast %13 : vector<1x8xf32> to vector<256x8xf32>
      %15 = arith.addf %12, %14 : vector<256x8xf32>
      %cst_14 = arith.constant 0.000000e+00 : f32
      %16 = vector.broadcast %cst_14 : f32 to vector<256x8xf32>
      %17 = arith.maximumf %15, %16 : vector<256x8xf32>
      %18 = arith.truncf %17 : vector<256x8xf32> to vector<256x8xbf16>
      %c0_15 = arith.constant 0 : index
      %c0_16 = arith.constant 0 : index
      %19 = vector.load %arg5[%c0_15, %c0_16] : memref<256x8xbf16, #tpu.memory_space<vmem>>, vector<256x8xbf16>
      tpu.vector_store %arg5[%c0_15, %c0_16], %18 {strides = array<i32>} : memref<256x8xbf16, #tpu.memory_space<vmem>>, vector<256x8xbf16>,
    } else {
    }
    return
  }
  func.func @transform_0(%arg0: i32, %arg1: i32) -> (i32, i32) {
    %c0_i32 = arith.constant 0 : i32
    return %arg0, %arg1 : i32, i32
  }
  func.func @transform_1(%arg0: i32, %arg1: i32) -> (i32, i32) {
    %c0_i32 = arith.constant 0 : i32
    %c0_i32_0 = arith.constant 0 : i32
    return %arg1, %c0_i32 : i32, i32
  }
  func.func @transform_2(%arg0: i32, %arg1: i32) -> (i32, i32) {
    %c0_i32 = arith.constant 0 : i32
    %c0_i32_0 = arith.constant 0 : i32
    %c0_i32_1 = arith.constant 0 : i32
    return %c0_i32, %c0_i32_0 : i32, i32
  }
  func.func @transform_3(%arg0: i32, %arg1: i32) -> (i32, i32) {
    %c0_i32 = arith.constant 0 : i32
    %c0_i32_0 = arith.constant 0 : i32
    return %arg0, %c0_i32 : i32, i32
  }
}

module attributes {stable_mosaic.version = 11 : i64} {
  func.func @_conv_mm_kernel(%arg0: i32, %arg1: i32, %arg2: memref<512x128xbf16, #tpu.memory_space<vmem>>, %arg3: memref<128x8xbf16, #tpu.memory_space<vmem>>, %arg4: memref<1x8xf32, #tpu.memory_space<vmem>>, %arg5: memref<512x8xbf16, #tpu.memory_space<vmem>>, %arg6: memref<512x8xf32, #tpu.memory_space<vmem>>) attributes {dimension_semantics = [#tpu.dimension_semantics<parallel>, #tpu.dimension_semantics<arbitrary>], iteration_bounds = array<i64: 4, 1>, scalar_prefetch = 0 : i64, scratch_operands = 1 : i64, tpu.core_type = #tpu.core_type<tc>, window_params = [{transform_indices = @transform_0, window_bounds = array<i64: 512, 128>}, {transform_indices = @transform_1, window_bounds = array<i64: 128, 8>}, {pipeline_mode = #tpu.pipeline_mode<synchronous>, transform_indices = @transform_2, window_bounds = array<i64: 1, 8>}, {transform_indices = @transform_3, window_bounds = array<i64: 512, 8>}]} {
    %c0_i32 = arith.constant 0 : i32
    %0 = arith.cmpi eq, %arg1, %c0_i32 : i32
    %1 = arith.extui %0 : i1 to i32
    %c0_i32_0 = arith.constant 0 : i32
    %2 = arith.cmpi ne, %1, %c0_i32_0 : i32
    scf.if %2 {
      %cst_10 = arith.constant 0.000000e+00 : f32
      %12 = vector.broadcast %cst_10 : f32 to vector<512x8xf32>
      %c0_11 = arith.constant 0 : index
      %c0_12 = arith.constant 0 : index
      %13 = vector.load %arg6[%c0_11, %c0_12] : memref<512x8xf32, #tpu.memory_space<vmem>>, vector<512x8xf32>
      tpu.vector_store %arg6[%c0_11, %c0_12], %12 {strides = array<i32>} : memref<512x8xf32, #tpu.memory_space<vmem>>, vector<512x8xf32>,
    } else {
    }
    %c0 = arith.constant 0 : index
    %c0_1 = arith.constant 0 : index
    %3 = vector.load %arg6[%c0, %c0_1] : memref<512x8xf32, #tpu.memory_space<vmem>>, vector<512x8xf32>
    %c0_2 = arith.constant 0 : index
    %c0_3 = arith.constant 0 : index
    %4 = vector.load %arg2[%c0_2, %c0_3] : memref<512x128xbf16, #tpu.memory_space<vmem>>, vector<512x128xbf16>
    %c0_4 = arith.constant 0 : index
    %c0_5 = arith.constant 0 : index
    %5 = vector.load %arg3[%c0_4, %c0_5] : memref<128x8xbf16, #tpu.memory_space<vmem>>, vector<128x8xbf16>
    %cst = arith.constant dense<0.000000e+00> : vector<512x8xf32>
    %6 = tpu.matmul %4, %5, %cst {dimension_numbers = #tpu.dot_dimension_numbers<[1], [0], [0], [1], [0, 0, 1, 1], [], []>} : vector<512x128xbf16>, vector<128x8xbf16>, vector<512x8xf32> -> vector<512x8xf32>
    %7 = arith.addf %3, %6 : vector<512x8xf32>
    %c0_6 = arith.constant 0 : index
    %c0_7 = arith.constant 0 : index
    %8 = vector.load %arg6[%c0_6, %c0_7] : memref<512x8xf32, #tpu.memory_space<vmem>>, vector<512x8xf32>
    tpu.vector_store %arg6[%c0_6, %c0_7], %7 {strides = array<i32>} : memref<512x8xf32, #tpu.memory_space<vmem>>, vector<512x8xf32>,
    %c0_i32_8 = arith.constant 0 : i32
    %9 = arith.cmpi eq, %arg1, %c0_i32_8 : i32
    %10 = arith.extui %9 : i1 to i32
    %c0_i32_9 = arith.constant 0 : i32
    %11 = arith.cmpi ne, %10, %c0_i32_9 : i32
    scf.if %11 {
      %c0_10 = arith.constant 0 : index
      %c0_11 = arith.constant 0 : index
      %12 = vector.load %arg6[%c0_10, %c0_11] : memref<512x8xf32, #tpu.memory_space<vmem>>, vector<512x8xf32>
      %c0_12 = arith.constant 0 : index
      %c0_13 = arith.constant 0 : index
      %13 = vector.load %arg4[%c0_12, %c0_13] : memref<1x8xf32, #tpu.memory_space<vmem>>, vector<1x8xf32>
      %14 = vector.broadcast %13 : vector<1x8xf32> to vector<512x8xf32>
      %15 = arith.addf %12, %14 : vector<512x8xf32>
      %cst_14 = arith.constant 0.000000e+00 : f32
      %16 = vector.broadcast %cst_14 : f32 to vector<512x8xf32>
      %17 = arith.maximumf %15, %16 : vector<512x8xf32>
      %18 = arith.truncf %17 : vector<512x8xf32> to vector<512x8xbf16>
      %c0_15 = arith.constant 0 : index
      %c0_16 = arith.constant 0 : index
      %19 = vector.load %arg5[%c0_15, %c0_16] : memref<512x8xbf16, #tpu.memory_space<vmem>>, vector<512x8xbf16>
      tpu.vector_store %arg5[%c0_15, %c0_16], %18 {strides = array<i32>} : memref<512x8xbf16, #tpu.memory_space<vmem>>, vector<512x8xbf16>,
    } else {
    }
    return
  }
  func.func @transform_0(%arg0: i32, %arg1: i32) -> (i32, i32) {
    %c0_i32 = arith.constant 0 : i32
    return %arg0, %arg1 : i32, i32
  }
  func.func @transform_1(%arg0: i32, %arg1: i32) -> (i32, i32) {
    %c0_i32 = arith.constant 0 : i32
    %c0_i32_0 = arith.constant 0 : i32
    return %arg1, %c0_i32 : i32, i32
  }
  func.func @transform_2(%arg0: i32, %arg1: i32) -> (i32, i32) {
    %c0_i32 = arith.constant 0 : i32
    %c0_i32_0 = arith.constant 0 : i32
    %c0_i32_1 = arith.constant 0 : i32
    return %c0_i32, %c0_i32_0 : i32, i32
  }
  func.func @transform_3(%arg0: i32, %arg1: i32) -> (i32, i32) {
    %c0_i32 = arith.constant 0 : i32
    %c0_i32_0 = arith.constant 0 : i32
    return %arg0, %c0_i32 : i32, i32
  }
}

module attributes {stable_mosaic.version = 11 : i64} {
  func.func @_head_mm_kernel(%arg0: i32, %arg1: i32, %arg2: memref<512x128xbf16, #tpu.memory_space<vmem>>, %arg3: memref<128x8xbf16, #tpu.memory_space<vmem>>, %arg4: memref<1x8xf32, #tpu.memory_space<vmem>>, %arg5: memref<1x8xf32, #tpu.memory_space<vmem>>, %arg6: memref<1x1xf32, #tpu.memory_space<vmem>>, %arg7: memref<512x1xf32, #tpu.memory_space<vmem>>, %arg8: memref<512x8xf32, #tpu.memory_space<vmem>>) attributes {dimension_semantics = [#tpu.dimension_semantics<parallel>, #tpu.dimension_semantics<arbitrary>], iteration_bounds = array<i64: 4, 1>, scalar_prefetch = 0 : i64, scratch_operands = 1 : i64, tpu.core_type = #tpu.core_type<tc>, window_params = [{transform_indices = @transform_0, window_bounds = array<i64: 512, 128>}, {transform_indices = @transform_1, window_bounds = array<i64: 128, 8>}, {pipeline_mode = #tpu.pipeline_mode<synchronous>, transform_indices = @transform_2, window_bounds = array<i64: 1, 8>}, {pipeline_mode = #tpu.pipeline_mode<synchronous>, transform_indices = @transform_3, window_bounds = array<i64: 1, 8>}, {pipeline_mode = #tpu.pipeline_mode<synchronous>, transform_indices = @transform_4, window_bounds = array<i64: 1, 1>}, {transform_indices = @transform_5, window_bounds = array<i64: 512, 1>}]} {
    %c0_i32 = arith.constant 0 : i32
    %0 = arith.cmpi eq, %arg1, %c0_i32 : i32
    %1 = arith.extui %0 : i1 to i32
    %c0_i32_0 = arith.constant 0 : i32
    %2 = arith.cmpi ne, %1, %c0_i32_0 : i32
    scf.if %2 {
      %cst_10 = arith.constant 0.000000e+00 : f32
      %12 = vector.broadcast %cst_10 : f32 to vector<512x8xf32>
      %c0_11 = arith.constant 0 : index
      %c0_12 = arith.constant 0 : index
      %13 = vector.load %arg8[%c0_11, %c0_12] : memref<512x8xf32, #tpu.memory_space<vmem>>, vector<512x8xf32>
      tpu.vector_store %arg8[%c0_11, %c0_12], %12 {strides = array<i32>} : memref<512x8xf32, #tpu.memory_space<vmem>>, vector<512x8xf32>,
    } else {
    }
    %c0 = arith.constant 0 : index
    %c0_1 = arith.constant 0 : index
    %3 = vector.load %arg8[%c0, %c0_1] : memref<512x8xf32, #tpu.memory_space<vmem>>, vector<512x8xf32>
    %c0_2 = arith.constant 0 : index
    %c0_3 = arith.constant 0 : index
    %4 = vector.load %arg2[%c0_2, %c0_3] : memref<512x128xbf16, #tpu.memory_space<vmem>>, vector<512x128xbf16>
    %c0_4 = arith.constant 0 : index
    %c0_5 = arith.constant 0 : index
    %5 = vector.load %arg3[%c0_4, %c0_5] : memref<128x8xbf16, #tpu.memory_space<vmem>>, vector<128x8xbf16>
    %cst = arith.constant dense<0.000000e+00> : vector<512x8xf32>
    %6 = tpu.matmul %4, %5, %cst {dimension_numbers = #tpu.dot_dimension_numbers<[1], [0], [0], [1], [0, 0, 1, 1], [], []>} : vector<512x128xbf16>, vector<128x8xbf16>, vector<512x8xf32> -> vector<512x8xf32>
    %7 = arith.addf %3, %6 : vector<512x8xf32>
    %c0_6 = arith.constant 0 : index
    %c0_7 = arith.constant 0 : index
    %8 = vector.load %arg8[%c0_6, %c0_7] : memref<512x8xf32, #tpu.memory_space<vmem>>, vector<512x8xf32>
    tpu.vector_store %arg8[%c0_6, %c0_7], %7 {strides = array<i32>} : memref<512x8xf32, #tpu.memory_space<vmem>>, vector<512x8xf32>,
    %c0_i32_8 = arith.constant 0 : i32
    %9 = arith.cmpi eq, %arg1, %c0_i32_8 : i32
    %10 = arith.extui %9 : i1 to i32
    %c0_i32_9 = arith.constant 0 : i32
    %11 = arith.cmpi ne, %10, %c0_i32_9 : i32
    scf.if %11 {
      %c0_10 = arith.constant 0 : index
      %c0_11 = arith.constant 0 : index
      %12 = vector.load %arg8[%c0_10, %c0_11] : memref<512x8xf32, #tpu.memory_space<vmem>>, vector<512x8xf32>
      %c0_12 = arith.constant 0 : index
      %c0_13 = arith.constant 0 : index
      %13 = vector.load %arg4[%c0_12, %c0_13] : memref<1x8xf32, #tpu.memory_space<vmem>>, vector<1x8xf32>
      %14 = vector.broadcast %13 : vector<1x8xf32> to vector<512x8xf32>
      %15 = arith.addf %12, %14 : vector<512x8xf32>
      %cst_14 = arith.constant 0.000000e+00 : f32
      %16 = vector.broadcast %cst_14 : f32 to vector<512x8xf32>
      %17 = arith.maximumf %15, %16 : vector<512x8xf32>
      %c0_15 = arith.constant 0 : index
      %c0_16 = arith.constant 0 : index
      %18 = vector.load %arg5[%c0_15, %c0_16] : memref<1x8xf32, #tpu.memory_space<vmem>>, vector<1x8xf32>
      %19 = vector.broadcast %18 : vector<1x8xf32> to vector<512x8xf32>
      %20 = arith.mulf %17, %19 : vector<512x8xf32>
      %cst_17 = arith.constant dense<0.000000e+00> : vector<512xf32>
      %21 = vector.multi_reduction <add>, %20, %cst_17 [1] : vector<512x8xf32> to vector<512xf32>
      %22 = vector.shape_cast %21 : vector<512xf32> to vector<512x1xf32>
      %c0_18 = arith.constant 0 : index
      %c0_19 = arith.constant 0 : index
      %23 = vector.load %arg6[%c0_18, %c0_19] : memref<1x1xf32, #tpu.memory_space<vmem>>, vector<1x1xf32>
      %24 = vector.broadcast %23 : vector<1x1xf32> to vector<512x1xf32>
      %25 = arith.addf %22, %24 : vector<512x1xf32>
      %cst_20 = arith.constant 0.000000e+00 : f32
      %26 = vector.broadcast %cst_20 : f32 to vector<512x1xf32>
      %27 = arith.subf %26, %25 : vector<512x1xf32>
      %28 = math.exp %27 : vector<512x1xf32>
      %cst_21 = arith.constant 1.000000e+00 : f32
      %29 = vector.broadcast %cst_21 : f32 to vector<512x1xf32>
      %30 = arith.addf %29, %28 : vector<512x1xf32>
      %31 = tpu.reciprocal %30 {approx = true} : vector<512x1xf32> -> vector<512x1xf32>
      %cst_22 = arith.constant 0.000000e+00 : f32
      %cst_23 = arith.constant 1.000000e+00 : f32
      %32 = vector.broadcast %cst_22 : f32 to vector<512x1xf32>
      %33 = arith.maximumf %32, %31 : vector<512x1xf32>
      %34 = vector.broadcast %cst_23 : f32 to vector<512x1xf32>
      %35 = arith.minimumf %34, %33 : vector<512x1xf32>
      %c0_24 = arith.constant 0 : index
      %c0_25 = arith.constant 0 : index
      %36 = vector.load %arg7[%c0_24, %c0_25] : memref<512x1xf32, #tpu.memory_space<vmem>>, vector<512x1xf32>
      tpu.vector_store %arg7[%c0_24, %c0_25], %35 {strides = array<i32>} : memref<512x1xf32, #tpu.memory_space<vmem>>, vector<512x1xf32>,
    } else {
    }
    return
  }
  func.func @transform_0(%arg0: i32, %arg1: i32) -> (i32, i32) {
    %c0_i32 = arith.constant 0 : i32
    return %arg0, %arg1 : i32, i32
  }
  func.func @transform_1(%arg0: i32, %arg1: i32) -> (i32, i32) {
    %c0_i32 = arith.constant 0 : i32
    %c0_i32_0 = arith.constant 0 : i32
    return %arg1, %c0_i32 : i32, i32
  }
  func.func @transform_2(%arg0: i32, %arg1: i32) -> (i32, i32) {
    %c0_i32 = arith.constant 0 : i32
    %c0_i32_0 = arith.constant 0 : i32
    %c0_i32_1 = arith.constant 0 : i32
    return %c0_i32, %c0_i32_0 : i32, i32
  }
  func.func @transform_3(%arg0: i32, %arg1: i32) -> (i32, i32) {
    %c0_i32 = arith.constant 0 : i32
    %c0_i32_0 = arith.constant 0 : i32
    %c0_i32_1 = arith.constant 0 : i32
    return %c0_i32, %c0_i32_0 : i32, i32
  }
  func.func @transform_4(%arg0: i32, %arg1: i32) -> (i32, i32) {
    %c0_i32 = arith.constant 0 : i32
    %c0_i32_0 = arith.constant 0 : i32
    %c0_i32_1 = arith.constant 0 : i32
    return %c0_i32, %c0_i32_0 : i32, i32
  }
  func.func @transform_5(%arg0: i32, %arg1: i32) -> (i32, i32) {
    %c0_i32 = arith.constant 0 : i32
    %c0_i32_0 = arith.constant 0 : i32
    return %arg0, %c0_i32 : i32, i32
  }
}

</mosaic_0001>

<llo_original>
// kernel: detail_capture_forward.8
$region0: #{detail_capture_forward.8}
  #allocation0 [shape = 'u32[]', space=smem, size = 0x4, offset = 0x4, fixed_abs, tag = 'smem constant byte address 0x4 - core index']
  #allocation1 [shape = 'u32[144,128]{1,0:T(1,128)}', space=vmem, size = 0x12000, scoped, tag = 'internal scratch']
  #allocation2 [shape = 'f32[256,8]{1,0:T(8,128)}', space=vmem, size = 0x20000, scoped, tag = 'scratch operand']
  %s0 = inlined_call_operand.vmem [shape: bf16[512,128], index: 0, kind: input, shape index: {}]
  %s1 = inlined_call_operand.vmem [shape: bf16[128,8], index: 1, kind: input, shape index: {}]
  %s2 = inlined_call_operand.vmem [shape: f32[1,8], index: 2, kind: input, shape index: {}]
  %s3 = inlined_call_operand.vmem [shape: bf16[512,8], index: 3, kind: output, shape index: {}]
  %s4 = sld [smem:[#allocation0]]
  $region53: #{detail_capture_forward.8} parent=0
    _
  %s6 = ssub.s32 1, %s4
  %s7 = scalar_select 0, %s6, %s4
  loop: start=0, step=1, limit=4
  $region2: #{detail_capture_forward.8} parent=0 // loop_pre_header
    _
  $region3: #{detail_capture_forward.8} parent=0 // loop_header
    %s9 = sphi 0, %s13
    %p10 = scmp.ge.s32.totalorder %s9, 4
    %s16 = sphi 0, %s28
    %s17 = sphi 0, %s24
    %s18 = sphi 0, %s16
    %s19 = sphi 0, %s17
    %s20 = sphi 0, %s18
    %s21 = sphi 0, %s19
    %s33 = sphi 0, %s35
    %s36 = sphi 0, %s33
    %s37 = sphi 0, %s36
    %s53 = sphi 0, %s37
    %s59 = sphi 0, %s61
    %s62 = sphi 0, %s59
    %s63 = sphi 0, %s62
    %s79 = sphi 0, %s63
    %s83 = sphi 0, %s83
    %s85 = sphi 0, %s83
    %s86 = sphi 0, %s85
    %s100 = sphi 0, %s86
    %s106 = sphi 0, %s108
    %s109 = sphi 0, %s106
    %s110 = sphi 0, %s109
    %s126 = sphi 0, %s110
  $region4: #{detail_capture_forward.8} parent=0 // loop_header_branch
    %12 = sbr.rel (%p10) target = $region8
  $region5: #{detail_capture_forward.8} parent=0 // loop_body
    %s14 = ssub.s32 %s9, 1
    %s15 = ssub.s32 %s9, 2
    %s22 = sadd.s32 1, %s17
    %p23 = scmp.ge.s32.totalorder %s22, 1
    %s24 = scalar_select %p23, 0, %s22
    %s25 = sadd.s32 1, %s16
    %s26 = scalar_select %p23, %s25, %s16
    %p27 = scmp.ge.s32.totalorder %s26, 2
    %s28 = scalar_select %p27, 0, %s26
    %s29 = ssub.s32 %s16, %s28
    %s30 = ssub.s32 %s17, %s24
    %s31 = sor.u32 %s29, %s30
    %p32 = scmp.eq.s32.totalorder %s31, 0
    %s34 = sadd.s32 %s33, 1
    %s35 = scalar_select %p32, %s33, %s34
    %p38 = pneg %p32
    %p39 = scmp.eq.s32.totalorder %s9, 1
    %p40 = por %p38, %p39
    %p41 = scmp.ne.s32.totalorder %s33, %s36
    %p42 = scmp.eq.s32.totalorder %s9, 0
    %p43 = por %p41, %p42
    %p44 = scmp.ne.s32.totalorder %s33, %s36
    %p45 = scmp.eq.s32.totalorder %s14, 1
    %p46 = por %p44, %p45
    %p47 = scmp.ne.s32.totalorder %s36, %s37
    %p48 = scmp.eq.s32.totalorder %s14, 0
    %p49 = por %p47, %p48
    %p50 = scmp.ne.s32.totalorder %s36, %s37
    %p51 = scmp.eq.s32.totalorder %s15, 1
    %p52 = por %p50, %p51
    %p54 = scmp.ne.s32.totalorder %s37, %s53
    %p55 = scmp.eq.s32.totalorder %s15, 0
    %p56 = por %p54, %p55
    %s57 = ssub.s32 %s17, %s24
    %p58 = scmp.eq.s32.totalorder %s57, 0
    %s60 = sadd.s32 %s59, 1
    %s61 = scalar_select %p58, %s59, %s60
    %p64 = pneg %p58
    %p65 = scmp.eq.s32.totalorder %s9, 1
    %p66 = por %p64, %p65
    %p67 = scmp.ne.s32.totalorder %s59, %s62
    %p68 = scmp.eq.s32.totalorder %s9, 0
    %p69 = por %p67, %p68
    %p70 = scmp.ne.s32.totalorder %s59, %s62
    %p71 = scmp.eq.s32.totalorder %s14, 1
    %p72 = por %p70, %p71
    %p73 = scmp.ne.s32.totalorder %s62, %s63
    %p74 = scmp.eq.s32.totalorder %s14, 0
    %p75 = por %p73, %p74
    %p76 = scmp.ne.s32.totalorder %s62, %s63
    %p77 = scmp.eq.s32.totalorder %s15, 1
    %p78 = por %p76, %p77
    %p80 = scmp.ne.s32.totalorder %s63, %s79
    %p81 = scmp.eq.s32.totalorder %s15, 0
    %p82 = por %p80, %p81
    %s84 = sadd.s32 %s83, 1
    %p87 = scmp.eq.s32.totalorder %s9, 1
    %p88 = scmp.ne.s32.totalorder %s83, %s85
    %p89 = scmp.eq.s32.totalorder %s9, 0
    %p90 = por %p88, %p89
    %p91 = scmp.ne.s32.totalorder %s83, %s85
    %p92 = scmp.eq.s32.totalorder %s14, 1
    %p93 = por %p91, %p92
    %p94 = scmp.ne.s32.totalorder %s85, %s86
    %p95 = scmp.eq.s32.totalorder %s14, 0
    %p96 = por %p94, %p95
    %p97 = scmp.ne.s32.totalorder %s85, %s86
    %p98 = scmp.eq.s32.totalorder %s15, 1
    %p99 = por %p97, %p98
    %p101 = scmp.ne.s32.totalorder %s86, %s100
    %p102 = scmp.eq.s32.totalorder %s15, 0
    %p103 = por %p101, %p102
    %s104 = ssub.s32 %s16, %s28
    %p105 = scmp.eq.s32.totalorder %s104, 0
    %s107 = sadd.s32 %s106, 1
    %s108 = scalar_select %p105, %s106, %s107
    %p111 = pneg %p105
    %p112 = scmp.eq.s32.totalorder %s9, 1
    %p113 = por %p111, %p112
    %p114 = scmp.ne.s32.totalorder %s106, %s109
    %p115 = scmp.eq.s32.totalorder %s9, 0
    %p116 = por %p114, %p115
    %p117 = scmp.ne.s32.totalorder %s106, %s109
    %p118 = scmp.eq.s32.totalorder %s14, 1
    %p119 = por %p117, %p118
    %p120 = scmp.ne.s32.totalorder %s109, %s110
    %p121 = scmp.eq.s32.totalorder %s14, 0
    %p122 = por %p120, %p121
    %p123 = scmp.ne.s32.totalorder %s109, %s110
    %p124 = scmp.eq.s32.totalorder %s15, 1
    %p125 = por %p123, %p124
    %p127 = scmp.ne.s32.totalorder %s110, %s126
    %p128 = scmp.eq.s32.totalorder %s15, 0
    %p129 = por %p127, %p128
    %p130 = scmp.le.s32.totalorder 1, %s9
    %p131 = scmp.lt.s32.totalorder %s9, 3
    %p132 = pnand %p130, %p131
    %p133 = pneg %p132
    // Predicated region
    $region9: #{detail_capture_forward.8} parent=5 // pred_check
      _
    $region10: #{detail_capture_forward.8} parent=5 // pred_check_branch
      %135 = sbr.rel (%p132) target = $region12
    $region11: #{detail_capture_forward.8} parent=5 // pred_region
      %s136 = ssub.s32 %s9, 1
      // Predicated region
      $region13: #{detail_capture_forward.8} parent=11 // pred_check
        %p137 = pneg %p75
      $region14: #{detail_capture_forward.8} parent=11 // pred_check_branch
        %139 = sbr.rel (%p137) target = $region16
      $region15: #{detail_capture_forward.8} parent=11 // pred_region
        %s140 = smul.u32 16, %s19
        %p141 = scmp.lt.s32.totalorder %s140, 15
        %s142 = scalar_select %p141, %s140, 15
        %s143 = smul.addr %s142, 4
        %s144 = scalar_lea.vmem %s1, %s143
        %s145 = smul.u32 16, %s19
      $region16: #{detail_capture_forward.8} parent=11 // pred_fallthru
        _
      // Predicated region
      $region17: #{detail_capture_forward.8} parent=11 // pred_check
        %p146 = pneg %p96
      $region18: #{detail_capture_forward.8} parent=11 // pred_check_branch
        %148 = sbr.rel (%p146) target = $region20
      $region19: #{detail_capture_forward.8} parent=11 // pred_region
        _
      $region20: #{detail_capture_forward.8} parent=11 // pred_fallthru
        _
    $region12: #{detail_capture_forward.8} parent=5 // pred_fallthru
      _
    %p149 = scmp.lt.s32.totalorder %s9, 2
    // Predicated region
    $region21: #{detail_capture_forward.8} parent=5 // pred_check
      %p150 = pneg %p149
    $region22: #{detail_capture_forward.8} parent=5 // pred_check_branch
      %152 = sbr.rel (%p150) target = $region24
    $region23: #{detail_capture_forward.8} parent=5 // pred_region
      // Predicated region
      $region25: #{detail_capture_forward.8} parent=23 // pred_check
        %p153 = pneg %p43
      $region26: #{detail_capture_forward.8} parent=23 // pred_check_branch
        %155 = sbr.rel (%p153) target = $region28
      $region27: #{detail_capture_forward.8} parent=23 // pred_region
        %s156 = smul.u32 32, %s16
        %p157 = scmp.lt.s32.totalorder %s156, 63
        %s158 = scalar_select %p157, %s156, 63
        %p159 = scmp.lt.s32.totalorder %s17, 0
        %s160 = scalar_select %p159, %s17, 0
        %s161 = sadd.s32 %s160, %s158
        %s162 = smul.addr %s161, 4
        %s163 = scalar_lea.vmem %s0, %s162
        %s164 = smul.u32 32, %s16
      $region28: #{detail_capture_forward.8} parent=23 // pred_fallthru
        _
    $region24: #{detail_capture_forward.8} parent=5 // pred_fallthru
      _
    %p165 = scmp.le.s32.totalorder 1, %s9
    %p166 = scmp.lt.s32.totalorder %s9, 3
    %p167 = pnand %p165, %p166
    %p168 = pneg %p167
    // Predicated region
    $region29: #{detail_capture_forward.8} parent=5 // pred_check
      _
    $region30: #{detail_capture_forward.8} parent=5 // pred_check_branch
      %170 = sbr.rel (%p167) target = $region32
    $region31: #{detail_capture_forward.8} parent=5 // pred_region
      %s171 = ssub.s32 %s9, 1
      %s172 = smul.u32 32, %s18
      %p173 = scmp.lt.s32.totalorder %s172, 63
      %s174 = scalar_select %p173, %s172, 63
      %p175 = scmp.lt.s32.totalorder %s19, 0
      %s176 = scalar_select %p175, %s19, 0
      %s177 = sadd.s32 %s176, %s174
      %s178 = smul.addr %s177, 4
      %s179 = scalar_lea.vmem %s0, %s178
      %p180 = pneg %p49
      %p181 = pneg %p46
      %s182 = smul.u32 16, %s19
      %p183 = scmp.lt.s32.totalorder %s182, 15
      %s184 = scalar_select %p183, %s182, 15
      %s185 = smul.addr %s184, 4
      %s186 = scalar_lea.vmem %s1, %s185
      %p187 = pneg %p75
      %p188 = pneg %p72
      %p189 = pneg %p96
      %p190 = pneg %p93
      %p191 = pneg %p122
      %p192 = pneg %p119
      %s193 = smul.u32 32, %s18
      %p194 = scmp.lt.s32.totalorder %s193, 63
      %s195 = scalar_select %p194, %s193, 63
      %s196 = smul.addr %s195, 4
      %s197 = scalar_lea.vmem %s3, %s196
      %s198 = smul.u32 32, %s18
      %p199 = scmp.lt.s32.totalorder %s198, 63
      %s200 = scalar_select %p199, %s198, 63
      %p201 = scmp.lt.s32.totalorder %s19, 0
      %s202 = scalar_select %p201, %s19, 0
      %s203 = sadd.s32 %s202, %s200
      %s204 = smul.addr %s203, 4
      %s205 = scalar_lea.vmem %s0, %s204
      %s206 = smul.u32 32, %s18
      %s207 = smul.u32 16, %s19
      %p208 = scmp.lt.s32.totalorder %s207, 15
      %s209 = scalar_select %p208, %s207, 15
      %s210 = smul.addr %s209, 4
      %s211 = scalar_lea.vmem %s1, %s210
      %s212 = smul.u32 16, %s19
      %s213 = smul.u32 32, %s18
      %p214 = scmp.lt.s32.totalorder %s213, 63
      %s215 = scalar_select %p214, %s213, 63
      %s216 = smul.addr %s215, 4
      %s217 = scalar_lea.vmem %s3, %s216
      %s218 = smul.u32 32, %s18
      %p220 = scmp.eq.s32.totalorder %s19, 0
      // Predicated region
      $region33: #{detail_capture_forward.8} parent=31 // pred_check
        %p221 = pneg %p220
      $region34: #{detail_capture_forward.8} parent=31 // pred_check_branch
        %223 = sbr.rel (%p221) target = $region36
      $region35: #{detail_capture_forward.8} parent=31 // pred_region
        %vm224 = vcmask 64512
        %225 = vst.msk [vmem:[#allocation2] sm:$0xff] %vm224, 0.0
        %226 = vst.msk [vmem:[#allocation2 + $0x8] sm:$0xff] %vm224, 0.0
        %227 = vst.msk [vmem:[#allocation2 + $0x10] sm:$0xff] %vm224, 0.0
        %228 = vst.msk [vmem:[#allocation2 + $0x18] sm:$0xff] %vm224, 0.0
        %229 = vst.msk [vmem:[#allocation2 + $0x20] sm:$0xff] %vm224, 0.0
        %230 = vst.msk [vmem:[#allocation2 + $0x28] sm:$0xff] %vm224, 0.0
        %231 = vst.msk [vmem:[#allocation2 + $0x30] sm:$0xff] %vm224, 0.0
        %232 = vst.msk [vmem:[#allocation2 + $0x38] sm:$0xff] %vm224, 0.0
        %233 = vst.msk [vmem:[#allocation2 + $0x40] sm:$0xff] %vm224, 0.0
        %234 = vst.msk [vmem:[#allocation2 + $0x48] sm:$0xff] %vm224, 0.0
        %235 = vst.msk [vmem:[#allocation2 + $0x50] sm:$0xff] %vm224, 0.0
        %236 = vst.msk [vmem:[#allocation2 + $0x58] sm:$0xff] %vm224, 0.0
        %237 = vst.msk [vmem:[#allocation2 + $0x60] sm:$0xff] %vm224, 0.0
        %238 = vst.msk [vmem:[#allocation2 + $0x68] sm:$0xff] %vm224, 0.0
        %239 = vst.msk [vmem:[#allocation2 + $0x70] sm:$0xff] %vm224, 0.0
        %240 = vst.msk [vmem:[#allocation2 + $0x78] sm:$0xff] %vm224, 0.0
        %241 = vst.msk [vmem:[#allocation2 + $0x80] sm:$0xff] %vm224, 0.0
        %242 = vst.msk [vmem:[#allocation2 + $0x88] sm:$0xff] %vm224, 0.0
        %243 = vst.msk [vmem:[#allocation2 + $0x90] sm:$0xff] %vm224, 0.0
        %244 = vst.msk [vmem:[#allocation2 + $0x98] sm:$0xff] %vm224, 0.0
        %245 = vst.msk [vmem:[#allocation2 + $0xa0] sm:$0xff] %vm224, 0.0
        %246 = vst.msk [vmem:[#allocation2 + $0xa8] sm:$0xff] %vm224, 0.0
        %247 = vst.msk [vmem:[#allocation2 + $0xb0] sm:$0xff] %vm224, 0.0
        %248 = vst.msk [vmem:[#allocation2 + $0xb8] sm:$0xff] %vm224, 0.0
        %249 = vst.msk [vmem:[#allocation2 + $0xc0] sm:$0xff] %vm224, 0.0
        %250 = vst.msk [vmem:[#allocation2 + $0xc8] sm:$0xff] %vm224, 0.0
        %251 = vst.msk [vmem:[#allocation2 + $0xd0] sm:$0xff] %vm224, 0.0
        %252 = vst.msk [vmem:[#allocation2 + $0xd8] sm:$0xff] %vm224, 0.0
        %253 = vst.msk [vmem:[#allocation2 + $0xe0] sm:$0xff] %vm224, 0.0
        %254 = vst.msk [vmem:[#allocation2 + $0xe8] sm:$0xff] %vm224, 0.0
        %255 = vst.msk [vmem:[#allocation2 + $0xf0] sm:$0xff] %vm224, 0.0
        %256 = vst.msk [vmem:[#allocation2 + $0xf8] sm:$0xff] %vm224, 0.0
      $region36: #{detail_capture_forward.8} parent=31 // pred_fallthru
        _
      %v257 = vld [vmem:[#allocation2] sm:$0xff]
      %v258 = vld [vmem:[#allocation2 + $0x8] sm:$0xff]
      %v259 = vld [vmem:[#allocation2 + $0x10] sm:$0xff]
      %v260 = vld [vmem:[#allocation2 + $0x18] sm:$0xff]
      %v261 = vld [vmem:[#allocation2 + $0x20] sm:$0xff]
      %v262 = vld [vmem:[#allocation2 + $0x28] sm:$0xff]
      %v263 = vld [vmem:[#allocation2 + $0x30] sm:$0xff]
      %v264 = vld [vmem:[#allocation2 + $0x38] sm:$0xff]
      %v265 = vld [vmem:[#allocation2 + $0x40] sm:$0xff]
      %v266 = vld [vmem:[#allocation2 + $0x48] sm:$0xff]
      %v267 = vld [vmem:[#allocation2 + $0x50] sm:$0xff]
      %v268 = vld [vmem:[#allocation2 + $0x58] sm:$0xff]
      %v269 = vld [vmem:[#allocation2 + $0x60] sm:$0xff]
      %v270 = vld [vmem:[#allocation2 + $0x68] sm:$0xff]
      %v271 = vld [vmem:[#allocation2 + $0x70] sm:$0xff]
      %v272 = vld [vmem:[#allocation2 + $0x78] sm:$0xff]
      %v273 = vld [vmem:[#allocation2 + $0x80] sm:$0xff]
      %v274 = vld [vmem:[#allocation2 + $0x88] sm:$0xff]
      %v275 = vld [vmem:[#allocation2 + $0x90] sm:$0xff]
      %v276 = vld [vmem:[#allocation2 + $0x98] sm:$0xff]
      %v277 = vld [vmem:[#allocation2 + $0xa0] sm:$0xff]
      %v278 = vld [vmem:[#allocation2 + $0xa8] sm:$0xff]
      %v279 = vld [vmem:[#allocation2 + $0xb0] sm:$0xff]
      %v280 = vld [vmem:[#allocation2 + $0xb8] sm:$0xff]
      %v281 = vld [vmem:[#allocation2 + $0xc0] sm:$0xff]
      %v282 = vld [vmem:[#allocation2 + $0xc8] sm:$0xff]
      %v283 = vld [vmem:[#allocation2 + $0xd0] sm:$0xff]
      %v284 = vld [vmem:[#allocation2 + $0xd8] sm:$0xff]
      %v285 = vld [vmem:[#allocation2 + $0xe0] sm:$0xff]
      %v286 = vld [vmem:[#allocation2 + $0xe8] sm:$0xff]
      %v287 = vld [vmem:[#allocation2 + $0xf0] sm:$0xff]
      %v288 = vld [vmem:[#allocation2 + $0xf8] sm:$0xff]
      %v289 = vld [vmem:[%s205] sm:$0xf]
      %v290 = vld [vmem:[%s205 + $0x4] sm:$0xf]
      %v291 = vld [vmem:[%s205 + $0x8] sm:$0xf]
      %v292 = vld [vmem:[%s205 + $0xc] sm:$0xf]
      %v293 = vld [vmem:[%s205 + $0x10] sm:$0xf]
      %v294 = vld [vmem:[%s205 + $0x14] sm:$0xf]
      %v295 = vld [vmem:[%s205 + $0x18] sm:$0xf]
      %v296 = vld [vmem:[%s205 + $0x1c] sm:$0xf]
      %v297 = vld [vmem:[%s205 + $0x20] sm:$0xf]
      %v298 = vld [vmem:[%s205 + $0x24] sm:$0xf]
      %v299 = vld [vmem:[%s205 + $0x28] sm:$0xf]
      %v300 = vld [vmem:[%s205 + $0x2c] sm:$0xf]
      %v301 = vld [vmem:[%s205 + $0x30] sm:$0xf]
      %v302 = vld [vmem:[%s205 + $0x34] sm:$0xf]
      %v303 = vld [vmem:[%s205 + $0x38] sm:$0xf]
      %v304 = vld [vmem:[%s205 + $0x3c] sm:$0xf]
      %v305 = vld [vmem:[%s205 + $0x40] sm:$0xf]
      %v306 = vld [vmem:[%s205 + $0x44] sm:$0xf]
      %v307 = vld [vmem:[%s205 + $0x48] sm:$0xf]
      %v308 = vld [vmem:[%s205 + $0x4c] sm:$0xf]
      %v309 = vld [vmem:[%s205 + $0x50] sm:$0xf]
      %v310 = vld [vmem:[%s205 + $0x54] sm:$0xf]
      %v311 = vld [vmem:[%s205 + $0x58] sm:$0xf]
      %v312 = vld [vmem:[%s205 + $0x5c] sm:$0xf]
      %v313 = vld [vmem:[%s205 + $0x60] sm:$0xf]
      %v314 = vld [vmem:[%s205 + $0x64] sm:$0xf]
      %v315 = vld [vmem:[%s205 + $0x68] sm:$0xf]
      %v316 = vld [vmem:[%s205 + $0x6c] sm:$0xf]
      %v317 = vld [vmem:[%s205 + $0x70] sm:$0xf]
      %v318 = vld [vmem:[%s205 + $0x74] sm:$0xf]
      %v319 = vld [vmem:[%s205 + $0x78] sm:$0xf]
      %v320 = vld [vmem:[%s205 + $0x7c] sm:$0xf]
      %v321 = vld [vmem:[%s211] sm:$0xf]
      %v322 = vld [vmem:[%s211 + $0x4] sm:$0xf]
      %v323 = vld [vmem:[%s211 + $0x8] sm:$0xf]
      %v324 = vld [vmem:[%s211 + $0xc] sm:$0xf]
      %v325 = vld [vmem:[%s211 + $0x10] sm:$0xf]
      %v326 = vld [vmem:[%s211 + $0x14] sm:$0xf]
      %v327 = vld [vmem:[%s211 + $0x18] sm:$0xf]
      %v328 = vld [vmem:[%s211 + $0x1c] sm:$0xf]
      %v329 = vld [vmem:[%s211 + $0x20] sm:$0xf]
      %v330 = vld [vmem:[%s211 + $0x24] sm:$0xf]
      %v331 = vld [vmem:[%s211 + $0x28] sm:$0xf]
      %v332 = vld [vmem:[%s211 + $0x2c] sm:$0xf]
      %v333 = vld [vmem:[%s211 + $0x30] sm:$0xf]
      %v334 = vld [vmem:[%s211 + $0x34] sm:$0xf]
      %v335 = vld [vmem:[%s211 + $0x38] sm:$0xf]
      %v336 = vld [vmem:[%s211 + $0x3c] sm:$0xf]
      %v369 = vunpack.c.l.b16 %v289
      %v370 = vunpack.c.l.b16 %v290
      %v371 = vunpack.c.l.b16 %v291
      %v372 = vunpack.c.l.b16 %v292
      %v373 = vunpack.c.l.b16 %v293
      %v374 = vunpack.c.l.b16 %v294
      %v375 = vunpack.c.l.b16 %v295
      %v376 = vunpack.c.l.b16 %v296
      %v377 = vunpack.c.l.b16 %v297
      %v378 = vunpack.c.l.b16 %v298
      %v379 = vunpack.c.l.b16 %v299
      %v380 = vunpack.c.l.b16 %v300
      %v381 = vunpack.c.l.b16 %v301
      %v382 = vunpack.c.l.b16 %v302
      %v383 = vunpack.c.l.b16 %v303
      %v384 = vunpack.c.l.b16 %v304
      %v385 = vunpack.c.l.b16 %v305
      %v386 = vunpack.c.l.b16 %v306
      %v387 = vunpack.c.l.b16 %v307
      %v388 = vunpack.c.l.b16 %v308
      %v389 = vunpack.c.l.b16 %v309
      %v390 = vunpack.c.l.b16 %v310
      %v391 = vunpack.c.l.b16 %v311
      %v392 = vunpack.c.l.b16 %v312
      %v393 = vunpack.c.l.b16 %v313
      %v394 = vunpack.c.l.b16 %v314
      %v395 = vunpack.c.l.b16 %v315
      %v396 = vunpack.c.l.b16 %v316
      %v397 = vunpack.c.l.b16 %v317
      %v398 = vunpack.c.l.b16 %v318
      %v399 = vunpack.c.l.b16 %v319
      %v400 = vunpack.c.l.b16 %v320
      %v401 = vpack.c.b16 %v370, %v369
      %v402 = vpack.c.b16 %v372, %v371
      %v403 = vpack.c.b16 %v374, %v373
      %v404 = vpack.c.b16 %v376, %v375
      %v405 = vpack.c.b16 %v378, %v377
      %v406 = vpack.c.b16 %v380, %v379
      %v407 = vpack.c.b16 %v382, %v381
      %v408 = vpack.c.b16 %v384, %v383
      %v409 = vpack.c.b16 %v386, %v385
      %v410 = vpack.c.b16 %v388, %v387
      %v411 = vpack.c.b16 %v390, %v389
      %v412 = vpack.c.b16 %v392, %v391
      %v413 = vpack.c.b16 %v394, %v393
      %v414 = vpack.c.b16 %v396, %v395
      %v415 = vpack.c.b16 %v398, %v397
      %v416 = vpack.c.b16 %v400, %v399
      %v449 = vunpack.c.l.b16 %v321
      %v450 = vunpack.c.l.b16 %v322
      %v451 = vunpack.c.l.b16 %v323
      %v452 = vunpack.c.l.b16 %v324
      %v453 = vunpack.c.l.b16 %v325
      %v454 = vunpack.c.l.b16 %v326
      %v455 = vunpack.c.l.b16 %v327
      %v456 = vunpack.c.l.b16 %v328
      %v457 = vunpack.c.l.b16 %v329
      %v458 = vunpack.c.l.b16 %v330
      %v459 = vunpack.c.l.b16 %v331
      %v460 = vunpack.c.l.b16 %v332
      %v461 = vunpack.c.l.b16 %v333
      %v462 = vunpack.c.l.b16 %v334
      %v463 = vunpack.c.l.b16 %v335
      %v464 = vunpack.c.l.b16 %v336
      %v465 = vpack.c.b16 %v450, %v449
      %v466 = vpack.c.b16 %v452, %v451
      %v467 = vpack.c.b16 %v454, %v453
      %v468 = vpack.c.b16 %v456, %v455
      %v469 = vpack.c.b16 %v458, %v457
      %v470 = vpack.c.b16 %v460, %v459
      %v471 = vpack.c.b16 %v462, %v461
      %v472 = vpack.c.b16 %v464, %v463
      %481 = vmatprep.subr.bf16.mxu0 0
      %482 = vmatpush1.bf16.msra.mxu0 %v472
      %483 = vmatprep.subr.bf16.mxu0 0
      %484 = vmatpush1.bf16.msra.mxu0 %v471
      %485 = vmatprep.subr.bf16.mxu0 0
      %486 = vmatpush1.bf16.msra.mxu0 %v470
      %487 = vmatprep.subr.bf16.mxu0 0
      %488 = vmatpush1.bf16.msra.mxu0 %v469
      %489 = vmatprep.subr.bf16.mxu0 0
      %490 = vmatpush1.bf16.msra.mxu0 %v468
      %491 = vmatprep.subr.bf16.mxu0 0
      %492 = vmatpush1.bf16.msra.mxu0 %v467
      %493 = vmatprep.subr.bf16.mxu0 0
      %494 = vmatpush1.bf16.msra.mxu0 %v466
      %495 = vmatprep.subr.bf16.mxu0 0
      %496 = vmatpush1.bf16.msra.mxu0 %v465
      %497 = vmatprep.subr.bf16.mxu0 0
      %498 = vmatpush2.bf16.msra.mxu0 0
      %499 = vmatprep.subr.bf16.mxu0 0
      %500 = vmatpush2.bf16.msra.mxu0 0
      %501 = vmatprep.subr.bf16.mxu0 0
      %502 = vmatpush2.bf16.msra.mxu0 0
      %503 = vmatprep.subr.bf16.mxu0 0
      %504 = vmatpush2.bf16.msra.mxu0 0
      %505 = vmatprep.subr.bf16.mxu0 0
      %506 = vmatpush2.bf16.msra.mxu0 0
      %507 = vmatprep.subr.bf16.mxu0 0
      %508 = vmatpush2.bf16.msra.mxu0 0
      %509 = vmatprep.subr.bf16.mxu0 0
      %510 = vmatpush2.bf16.msra.mxu0 0
      %511 = vmatprep.subr.bf16.mxu0 0
      %512 = vmatpush2.bf16.msra.mxu0 0
      %513 = vmatprep.mubr.bf16.mxu0 0
      %514 = vmatmul.mubr.bf16.gmra.mxu0 %v401
      %v515 = vpop.f32.mrf.mxu0
      %v516 = vadd.f32 0.0, %v515
      %v517 = vpop.f32.mrf.mxu0
      %v518 = vpop.f32.mrf.mxu0
      %v519 = vadd.f32 0.0, %v518
      %v520 = vpop.f32.mrf.mxu0
      %521 = vmatprep.mubr.bf16.mxu0 0
      %522 = vmatmul.mubr.bf16.gmra.mxu0 %v402
      %v523 = vpop.f32.mrf.mxu0
      %v524 = vadd.f32 0.0, %v523
      %v525 = vpop.f32.mrf.mxu0
      %v526 = vpop.f32.mrf.mxu0
      %v527 = vadd.f32 0.0, %v526
      %v528 = vpop.f32.mrf.mxu0
      %529 = vmatprep.mubr.bf16.mxu0 0
      %530 = vmatmul.mubr.bf16.gmra.mxu0 %v403
      %v531 = vpop.f32.mrf.mxu0
      %v532 = vadd.f32 0.0, %v531
      %v533 = vpop.f32.mrf.mxu0
      %v534 = vpop.f32.mrf.mxu0
      %v535 = vadd.f32 0.0, %v534
      %v536 = vpop.f32.mrf.mxu0
      %537 = vmatprep.mubr.bf16.mxu0 0
      %538 = vmatmul.mubr.bf16.gmra.mxu0 %v404
      %v539 = vpop.f32.mrf.mxu0
      %v540 = vadd.f32 0.0, %v539
      %v541 = vpop.f32.mrf.mxu0
      %v542 = vpop.f32.mrf.mxu0
      %v543 = vadd.f32 0.0, %v542
      %v544 = vpop.f32.mrf.mxu0
      %545 = vmatprep.mubr.bf16.mxu0 0
      %546 = vmatmul.mubr.bf16.gmra.mxu0 %v405
      %v547 = vpop.f32.mrf.mxu0
      %v548 = vadd.f32 0.0, %v547
      %v549 = vpop.f32.mrf.mxu0
      %v550 = vpop.f32.mrf.mxu0
      %v551 = vadd.f32 0.0, %v550
      %v552 = vpop.f32.mrf.mxu0
      %553 = vmatprep.mubr.bf16.mxu0 0
      %554 = vmatmul.mubr.bf16.gmra.mxu0 %v406
      %v555 = vpop.f32.mrf.mxu0
      %v556 = vadd.f32 0.0, %v555
      %v557 = vpop.f32.mrf.mxu0
      %v558 = vpop.f32.mrf.mxu0
      %v559 = vadd.f32 0.0, %v558
      %v560 = vpop.f32.mrf.mxu0
      %561 = vmatprep.mubr.bf16.mxu0 0
      %562 = vmatmul.mubr.bf16.gmra.mxu0 %v407
      %v563 = vpop.f32.mrf.mxu0
      %v564 = vadd.f32 0.0, %v563
      %v565 = vpop.f32.mrf.mxu0
      %v566 = vpop.f32.mrf.mxu0
      %v567 = vadd.f32 0.0, %v566
      %v568 = vpop.f32.mrf.mxu0
      %569 = vmatprep.mubr.bf16.mxu0 0
      %570 = vmatmul.mubr.bf16.gmra.mxu0 %v408
      %v571 = vpop.f32.mrf.mxu0
      %v572 = vadd.f32 0.0, %v571
      %v573 = vpop.f32.mrf.mxu0
      %v574 = vpop.f32.mrf.mxu0
      %v575 = vadd.f32 0.0, %v574
      %v576 = vpop.f32.mrf.mxu0
      %577 = vmatprep.mubr.bf16.mxu0 0
      %578 = vmatmul.mubr.bf16.gmra.mxu0 %v409
      %v579 = vpop.f32.mrf.mxu0
      %v580 = vadd.f32 0.0, %v579
      %v581 = vpop.f32.mrf.mxu0
      %v582 = vpop.f32.mrf.mxu0
      %v583 = vadd.f32 0.0, %v582
      %v584 = vpop.f32.mrf.mxu0
      %585 = vmatprep.mubr.bf16.mxu0 0
      %586 = vmatmul.mubr.bf16.gmra.mxu0 %v410
      %v587 = vpop.f32.mrf.mxu0
      %v588 = vadd.f32 0.0, %v587
      %v589 = vpop.f32.mrf.mxu0
      %v590 = vpop.f32.mrf.mxu0
      %v591 = vadd.f32 0.0, %v590
      %v592 = vpop.f32.mrf.mxu0
      %593 = vmatprep.mubr.bf16.mxu0 0
      %594 = vmatmul.mubr.bf16.gmra.mxu0 %v411
      %v595 = vpop.f32.mrf.mxu0
      %v596 = vadd.f32 0.0, %v595
      %v597 = vpop.f32.mrf.mxu0
      %v598 = vpop.f32.mrf.mxu0
      %v599 = vadd.f32 0.0, %v598
      %v600 = vpop.f32.mrf.mxu0
      %601 = vmatprep.mubr.bf16.mxu0 0
      %602 = vmatmul.mubr.bf16.gmra.mxu0 %v412
      %v603 = vpop.f32.mrf.mxu0
      %v604 = vadd.f32 0.0, %v603
      %v605 = vpop.f32.mrf.mxu0
      %v606 = vpop.f32.mrf.mxu0
      %v607 = vadd.f32 0.0, %v606
      %v608 = vpop.f32.mrf.mxu0
      %609 = vmatprep.mubr.bf16.mxu0 0
      %610 = vmatmul.mubr.bf16.gmra.mxu0 %v413
      %v611 = vpop.f32.mrf.mxu0
      %v612 = vadd.f32 0.0, %v611
      %v613 = vpop.f32.mrf.mxu0
      %v614 = vpop.f32.mrf.mxu0
      %v615 = vadd.f32 0.0, %v614
      %v616 = vpop.f32.mrf.mxu0
      %617 = vmatprep.mubr.bf16.mxu0 0
      %618 = vmatmul.mubr.bf16.gmra.mxu0 %v414
      %v619 = vpop.f32.mrf.mxu0
      %v620 = vadd.f32 0.0, %v619
      %v621 = vpop.f32.mrf.mxu0
      %v622 = vpop.f32.mrf.mxu0
      %v623 = vadd.f32 0.0, %v622
      %v624 = vpop.f32.mrf.mxu0
      %625 = vmatprep.mubr.bf16.mxu0 0
      %626 = vmatmul.mubr.bf16.gmra.mxu0 %v415
      %v627 = vpop.f32.mrf.mxu0
      %v628 = vadd.f32 0.0, %v627
      %v629 = vpop.f32.mrf.mxu0
      %v630 = vpop.f32.mrf.mxu0
      %v631 = vadd.f32 0.0, %v630
      %v632 = vpop.f32.mrf.mxu0
      %633 = vmatprep.mubr.bf16.mxu0 0
      %634 = vmatmul.mubr.bf16.gmra.mxu0 %v416
      %v635 = vpop.f32.mrf.mxu0
      %v636 = vadd.f32 0.0, %v635
      %v637 = vpop.f32.mrf.mxu0
      %v638 = vpop.f32.mrf.mxu0
      %v639 = vadd.f32 0.0, %v638
      %v640 = vpop.f32.mrf.mxu0
      %641 = vdwg.mxu0
      %v642 = vadd.f32 %v257, %v516
      %v643 = vadd.f32 %v258, %v519
      %v644 = vadd.f32 %v259, %v524
      %v645 = vadd.f32 %v260, %v527
      %v646 = vadd.f32 %v261, %v532
      %v647 = vadd.f32 %v262, %v535
      %v648 = vadd.f32 %v263, %v540
      %v649 = vadd.f32 %v264, %v543
      %v650 = vadd.f32 %v265, %v548
      %v651 = vadd.f32 %v266, %v551
      %v652 = vadd.f32 %v267, %v556
      %v653 = vadd.f32 %v268, %v559
      %v654 = vadd.f32 %v269, %v564
      %v655 = vadd.f32 %v270, %v567
      %v656 = vadd.f32 %v271, %v572
      %v657 = vadd.f32 %v272, %v575
      %v658 = vadd.f32 %v273, %v580
      %v659 = vadd.f32 %v274, %v583
      %v660 = vadd.f32 %v275, %v588
      %v661 = vadd.f32 %v276, %v591
      %v662 = vadd.f32 %v277, %v596
      %v663 = vadd.f32 %v278, %v599
      %v664 = vadd.f32 %v279, %v604
      %v665 = vadd.f32 %v280, %v607
      %v666 = vadd.f32 %v281, %v612
      %v667 = vadd.f32 %v282, %v615
      %v668 = vadd.f32 %v283, %v620
      %v669 = vadd.f32 %v284, %v623
      %v670 = vadd.f32 %v285, %v628
      %v671 = vadd.f32 %v286, %v631
      %v672 = vadd.f32 %v287, %v636
      %v673 = vadd.f32 %v288, %v639
      %vm674 = vcmask 64512
      %675 = vst.msk [vmem:[#allocation2] sm:$0xff] %vm674, %v642
      %676 = vst.msk [vmem:[#allocation2 + $0x8] sm:$0xff] %vm674, %v643
      %677 = vst.msk [vmem:[#allocation2 + $0x10] sm:$0xff] %vm674, %v644
      %678 = vst.msk [vmem:[#allocation2 + $0x18] sm:$0xff] %vm674, %v645
      %679 = vst.msk [vmem:[#allocation2 + $0x20] sm:$0xff] %vm674, %v646
      %680 = vst.msk [vmem:[#allocation2 + $0x28] sm:$0xff] %vm674, %v647
      %681 = vst.msk [vmem:[#allocation2 + $0x30] sm:$0xff] %vm674, %v648
      %682 = vst.msk [vmem:[#allocation2 + $0x38] sm:$0xff] %vm674, %v649
      %683 = vst.msk [vmem:[#allocation2 + $0x40] sm:$0xff] %vm674, %v650
      %684 = vst.msk [vmem:[#allocation2 + $0x48] sm:$0xff] %vm674, %v651
      %685 = vst.msk [vmem:[#allocation2 + $0x50] sm:$0xff] %vm674, %v652
      %686 = vst.msk [vmem:[#allocation2 + $0x58] sm:$0xff] %vm674, %v653
      %687 = vst.msk [vmem:[#allocation2 + $0x60] sm:$0xff] %vm674, %v654
      %688 = vst.msk [vmem:[#allocation2 + $0x68] sm:$0xff] %vm674, %v655
      %689 = vst.msk [vmem:[#allocation2 + $0x70] sm:$0xff] %vm674, %v656
      %690 = vst.msk [vmem:[#allocation2 + $0x78] sm:$0xff] %vm674, %v657
      %691 = vst.msk [vmem:[#allocation2 + $0x80] sm:$0xff] %vm674, %v658
      %692 = vst.msk [vmem:[#allocation2 + $0x88] sm:$0xff] %vm674, %v659
      %693 = vst.msk [vmem:[#allocation2 + $0x90] sm:$0xff] %vm674, %v660
      %694 = vst.msk [vmem:[#allocation2 + $0x98] sm:$0xff] %vm674, %v661
      %695 = vst.msk [vmem:[#allocation2 + $0xa0] sm:$0xff] %vm674, %v662
      %696 = vst.msk [vmem:[#allocation2 + $0xa8] sm:$0xff] %vm674, %v663
      %697 = vst.msk [vmem:[#allocation2 + $0xb0] sm:$0xff] %vm674, %v664
      %698 = vst.msk [vmem:[#allocation2 + $0xb8] sm:$0xff] %vm674, %v665
      %699 = vst.msk [vmem:[#allocation2 + $0xc0] sm:$0xff] %vm674, %v666
      %700 = vst.msk [vmem:[#allocation2 + $0xc8] sm:$0xff] %vm674, %v667
      %701 = vst.msk [vmem:[#allocation2 + $0xd0] sm:$0xff] %vm674, %v668
      %702 = vst.msk [vmem:[#allocation2 + $0xd8] sm:$0xff] %vm674, %v669
      %703 = vst.msk [vmem:[#allocation2 + $0xe0] sm:$0xff] %vm674, %v670
      %704 = vst.msk [vmem:[#allocation2 + $0xe8] sm:$0xff] %vm674, %v671
      %705 = vst.msk [vmem:[#allocation2 + $0xf0] sm:$0xff] %vm674, %v672
      %706 = vst.msk [vmem:[#allocation2 + $0xf8] sm:$0xff] %vm674, %v673
      // Predicated region
      $region37: #{detail_capture_forward.8} parent=31 // pred_check
        %p707 = pneg %p220
      $region38: #{detail_capture_forward.8} parent=31 // pred_check_branch
        %709 = sbr.rel (%p707) target = $region40
      $region39: #{detail_capture_forward.8} parent=31 // pred_region
        %v710 = vld [vmem:[#allocation2] sm:$0xff]
        %v711 = vld [vmem:[#allocation2 + $0x8] sm:$0xff]
        %v712 = vld [vmem:[#allocation2 + $0x10] sm:$0xff]
        %v713 = vld [vmem:[#allocation2 + $0x18] sm:$0xff]
        %v714 = vld [vmem:[#allocation2 + $0x20] sm:$0xff]
        %v715 = vld [vmem:[#allocation2 + $0x28] sm:$0xff]
        %v716 = vld [vmem:[#allocation2 + $0x30] sm:$0xff]
        %v717 = vld [vmem:[#allocation2 + $0x38] sm:$0xff]
        %v718 = vld [vmem:[#allocation2 + $0x40] sm:$0xff]
        %v719 = vld [vmem:[#allocation2 + $0x48] sm:$0xff]
        %v720 = vld [vmem:[#allocation2 + $0x50] sm:$0xff]
        %v721 = vld [vmem:[#allocation2 + $0x58] sm:$0xff]
        %v722 = vld [vmem:[#allocation2 + $0x60] sm:$0xff]
        %v723 = vld [vmem:[#allocation2 + $0x68] sm:$0xff]
        %v724 = vld [vmem:[#allocation2 + $0x70] sm:$0xff]
        %v725 = vld [vmem:[#allocation2 + $0x78] sm:$0xff]
        %v726 = vld [vmem:[#allocation2 + $0x80] sm:$0xff]
        %v727 = vld [vmem:[#allocation2 + $0x88] sm:$0xff]
        %v728 = vld [vmem:[#allocation2 + $0x90] sm:$0xff]
        %v729 = vld [vmem:[#allocation2 + $0x98] sm:$0xff]
        %v730 = vld [vmem:[#allocation2 + $0xa0] sm:$0xff]
        %v731 = vld [vmem:[#allocation2 + $0xa8] sm:$0xff]
        %v732 = vld [vmem:[#allocation2 + $0xb0] sm:$0xff]
        %v733 = vld [vmem:[#allocation2 + $0xb8] sm:$0xff]
        %v734 = vld [vmem:[#allocation2 + $0xc0] sm:$0xff]
        %v735 = vld [vmem:[#allocation2 + $0xc8] sm:$0xff]
        %v736 = vld [vmem:[#allocation2 + $0xd0] sm:$0xff]
        %v737 = vld [vmem:[#allocation2 + $0xd8] sm:$0xff]
        %v738 = vld [vmem:[#allocation2 + $0xe0] sm:$0xff]
        %v739 = vld [vmem:[#allocation2 + $0xe8] sm:$0xff]
        %v740 = vld [vmem:[#allocation2 + $0xf0] sm:$0xff]
        %v741 = vld [vmem:[#allocation2 + $0xf8] sm:$0xff]
        %v742 = vld [vmem:[%s2] sm:$0x1]
        %v744 = vlaneseq
        %v745 = vshrl.u32 %v744, 7
        %v746 = vsub.s32 0, %v745
        %v747 = vrot.slane %v742, %v746
        %v749 = vadd.f32 %v710, %v747
        %v750 = vadd.f32 %v711, %v747
        %v751 = vadd.f32 %v712, %v747
        %v752 = vadd.f32 %v713, %v747
        %v753 = vadd.f32 %v714, %v747
        %v754 = vadd.f32 %v715, %v747
        %v755 = vadd.f32 %v716, %v747
        %v756 = vadd.f32 %v717, %v747
        %v757 = vadd.f32 %v718, %v747
        %v758 = vadd.f32 %v719, %v747
        %v759 = vadd.f32 %v720, %v747
        %v760 = vadd.f32 %v721, %v747
        %v761 = vadd.f32 %v722, %v747
        %v762 = vadd.f32 %v723, %v747
        %v763 = vadd.f32 %v724, %v747
        %v764 = vadd.f32 %v725, %v747
        %v765 = vadd.f32 %v726, %v747
        %v766 = vadd.f32 %v727, %v747
        %v767 = vadd.f32 %v728, %v747
        %v768 = vadd.f32 %v729, %v747
        %v769 = vadd.f32 %v730, %v747
        %v770 = vadd.f32 %v731, %v747
        %v771 = vadd.f32 %v732, %v747
        %v772 = vadd.f32 %v733, %v747
        %v773 = vadd.f32 %v734, %v747
        %v774 = vadd.f32 %v735, %v747
        %v775 = vadd.f32 %v736, %v747
        %v776 = vadd.f32 %v737, %v747
        %v777 = vadd.f32 %v738, %v747
        %v778 = vadd.f32 %v739, %v747
        %v779 = vadd.f32 %v740, %v747
        %v780 = vadd.f32 %v741, %v747
        %v781 = vmax.f32 %v749, 0.0
        %v782 = vmax.f32 %v750, 0.0
        %v783 = vmax.f32 %v751, 0.0
        %v784 = vmax.f32 %v752, 0.0
        %v785 = vmax.f32 %v753, 0.0
        %v786 = vmax.f32 %v754, 0.0
        %v787 = vmax.f32 %v755, 0.0
        %v788 = vmax.f32 %v756, 0.0
        %v789 = vmax.f32 %v757, 0.0
        %v790 = vmax.f32 %v758, 0.0
        %v791 = vmax.f32 %v759, 0.0
        %v792 = vmax.f32 %v760, 0.0
        %v793 = vmax.f32 %v761, 0.0
        %v794 = vmax.f32 %v762, 0.0
        %v795 = vmax.f32 %v763, 0.0
        %v796 = vmax.f32 %v764, 0.0
        %v797 = vmax.f32 %v765, 0.0
        %v798 = vmax.f32 %v766, 0.0
        %v799 = vmax.f32 %v767, 0.0
        %v800 = vmax.f32 %v768, 0.0
        %v801 = vmax.f32 %v769, 0.0
        %v802 = vmax.f32 %v770, 0.0
        %v803 = vmax.f32 %v771, 0.0
        %v804 = vmax.f32 %v772, 0.0
        %v805 = vmax.f32 %v773, 0.0
        %v806 = vmax.f32 %v774, 0.0
        %v807 = vmax.f32 %v775, 0.0
        %v808 = vmax.f32 %v776, 0.0
        %v809 = vmax.f32 %v777, 0.0
        %v810 = vmax.f32 %v778, 0.0
        %v811 = vmax.f32 %v779, 0.0
        %v812 = vmax.f32 %v780, 0.0
        %v813 = vpack.c.bf16 %v782, %v781
        %v814 = vpack.c.bf16 %v784, %v783
        %v815 = vpack.c.bf16 %v786, %v785
        %v816 = vpack.c.bf16 %v788, %v787
        %v817 = vpack.c.bf16 %v790, %v789
        %v818 = vpack.c.bf16 %v792, %v791
        %v819 = vpack.c.bf16 %v794, %v793
        %v820 = vpack.c.bf16 %v796, %v795
        %v821 = vpack.c.bf16 %v798, %v797
        %v822 = vpack.c.bf16 %v800, %v799
        %v823 = vpack.c.bf16 %v802, %v801
        %v824 = vpack.c.bf16 %v804, %v803
        %v825 = vpack.c.bf16 %v806, %v805
        %v826 = vpack.c.bf16 %v808, %v807
        %v827 = vpack.c.bf16 %v810, %v809
        %v828 = vpack.c.bf16 %v812, %v811
        %v845 = vunpack.c.l.b16 %v813
        %v846 = vunpack.c.h.b16 %v813
        %v847 = vunpack.c.l.b16 %v814
        %v848 = vunpack.c.h.b16 %v814
        %v849 = vunpack.c.l.b16 %v815
        %v850 = vunpack.c.h.b16 %v815
        %v851 = vunpack.c.l.b16 %v816
        %v852 = vunpack.c.h.b16 %v816
        %v853 = vunpack.c.l.b16 %v817
        %v854 = vunpack.c.h.b16 %v817
        %v855 = vunpack.c.l.b16 %v818
        %v856 = vunpack.c.h.b16 %v818
        %v857 = vunpack.c.l.b16 %v819
        %v858 = vunpack.c.h.b16 %v819
        %v859 = vunpack.c.l.b16 %v820
        %v860 = vunpack.c.h.b16 %v820
        %v861 = vunpack.c.l.b16 %v821
        %v862 = vunpack.c.h.b16 %v821
        %v863 = vunpack.c.l.b16 %v822
        %v864 = vunpack.c.h.b16 %v822
        %v865 = vunpack.c.l.b16 %v823
        %v866 = vunpack.c.h.b16 %v823
        %v867 = vunpack.c.l.b16 %v824
        %v868 = vunpack.c.h.b16 %v824
        %v869 = vunpack.c.l.b16 %v825
        %v870 = vunpack.c.h.b16 %v825
        %v871 = vunpack.c.l.b16 %v826
        %v872 = vunpack.c.h.b16 %v826
        %v873 = vunpack.c.l.b16 %v827
        %v874 = vunpack.c.h.b16 %v827
        %v875 = vunpack.c.l.b16 %v828
        %v876 = vunpack.c.h.b16 %v828
        %v877 = vpack.c.b16 %v845, %v845
        %v878 = vpack.c.b16 %v846, %v846
        %v879 = vpack.c.b16 %v847, %v847
        %v880 = vpack.c.b16 %v848, %v848
        %v881 = vpack.c.b16 %v849, %v849
        %v882 = vpack.c.b16 %v850, %v850
        %v883 = vpack.c.b16 %v851, %v851
        %v884 = vpack.c.b16 %v852, %v852
        %v885 = vpack.c.b16 %v853, %v853
        %v886 = vpack.c.b16 %v854, %v854
        %v887 = vpack.c.b16 %v855, %v855
        %v888 = vpack.c.b16 %v856, %v856
        %v889 = vpack.c.b16 %v857, %v857
        %v890 = vpack.c.b16 %v858, %v858
        %v891 = vpack.c.b16 %v859, %v859
        %v892 = vpack.c.b16 %v860, %v860
        %v893 = vpack.c.b16 %v861, %v861
        %v894 = vpack.c.b16 %v862, %v862
        %v895 = vpack.c.b16 %v863, %v863
        %v896 = vpack.c.b16 %v864, %v864
        %v897 = vpack.c.b16 %v865, %v865
        %v898 = vpack.c.b16 %v866, %v866
        %v899 = vpack.c.b16 %v867, %v867
        %v900 = vpack.c.b16 %v868, %v868
        %v901 = vpack.c.b16 %v869, %v869
        %v902 = vpack.c.b16 %v870, %v870
        %v903 = vpack.c.b16 %v871, %v871
        %v904 = vpack.c.b16 %v872, %v872
        %v905 = vpack.c.b16 %v873, %v873
        %v906 = vpack.c.b16 %v874, %v874
        %v907 = vpack.c.b16 %v875, %v875
        %v908 = vpack.c.b16 %v876, %v876
        %vm941 = vcmask 60416
        %942 = vst.msk [vmem:[%s217] sm:$0xf] %vm941, %v877
        %943 = vst.msk [vmem:[%s217 + $0x4] sm:$0xf] %vm941, %v878
        %944 = vst.msk [vmem:[%s217 + $0x8] sm:$0xf] %vm941, %v879
        %945 = vst.msk [vmem:[%s217 + $0xc] sm:$0xf] %vm941, %v880
        %946 = vst.msk [vmem:[%s217 + $0x10] sm:$0xf] %vm941, %v881
        %947 = vst.msk [vmem:[%s217 + $0x14] sm:$0xf] %vm941, %v882
        %948 = vst.msk [vmem:[%s217 + $0x18] sm:$0xf] %vm941, %v883
        %949 = vst.msk [vmem:[%s217 + $0x1c] sm:$0xf] %vm941, %v884
        %950 = vst.msk [vmem:[%s217 + $0x20] sm:$0xf] %vm941, %v885
        %951 = vst.msk [vmem:[%s217 + $0x24] sm:$0xf] %vm941, %v886
        %952 = vst.msk [vmem:[%s217 + $0x28] sm:$0xf] %vm941, %v887
        %953 = vst.msk [vmem:[%s217 + $0x2c] sm:$0xf] %vm941, %v888
        %954 = vst.msk [vmem:[%s217 + $0x30] sm:$0xf] %vm941, %v889
        %955 = vst.msk [vmem:[%s217 + $0x34] sm:$0xf] %vm941, %v890
        %956 = vst.msk [vmem:[%s217 + $0x38] sm:$0xf] %vm941, %v891
        %957 = vst.msk [vmem:[%s217 + $0x3c] sm:$0xf] %vm941, %v892
        %958 = vst.msk [vmem:[%s217 + $0x40] sm:$0xf] %vm941, %v893
        %959 = vst.msk [vmem:[%s217 + $0x44] sm:$0xf] %vm941, %v894
        %960 = vst.msk [vmem:[%s217 + $0x48] sm:$0xf] %vm941, %v895
        %961 = vst.msk [vmem:[%s217 + $0x4c] sm:$0xf] %vm941, %v896
        %962 = vst.msk [vmem:[%s217 + $0x50] sm:$0xf] %vm941, %v897
        %963 = vst.msk [vmem:[%s217 + $0x54] sm:$0xf] %vm941, %v898
        %964 = vst.msk [vmem:[%s217 + $0x58] sm:$0xf] %vm941, %v899
        %965 = vst.msk [vmem:[%s217 + $0x5c] sm:$0xf] %vm941, %v900
        %966 = vst.msk [vmem:[%s217 + $0x60] sm:$0xf] %vm941, %v901
        %967 = vst.msk [vmem:[%s217 + $0x64] sm:$0xf] %vm941, %v902
        %968 = vst.msk [vmem:[%s217 + $0x68] sm:$0xf] %vm941, %v903
        %969 = vst.msk [vmem:[%s217 + $0x6c] sm:$0xf] %vm941, %v904
        %970 = vst.msk [vmem:[%s217 + $0x70] sm:$0xf] %vm941, %v905
        %971 = vst.msk [vmem:[%s217 + $0x74] sm:$0xf] %vm941, %v906
        %972 = vst.msk [vmem:[%s217 + $0x78] sm:$0xf] %vm941, %v907
        %973 = vst.msk [vmem:[%s217 + $0x7c] sm:$0xf] %vm941, %v908
      $region40: #{detail_capture_forward.8} parent=31 // pred_fallthru
        _
      %s974 = smul.u32 32, %s18
      %p975 = scmp.lt.s32.totalorder %s974, 63
      %s976 = scalar_select %p975, %s974, 63
      %s977 = smul.addr %s976, 4
      %s978 = scalar_lea.vmem %s3, %s977
      // Predicated region
      $region41: #{detail_capture_forward.8} parent=31 // pred_check
        %p979 = pneg %p119
      $region42: #{detail_capture_forward.8} parent=31 // pred_check_branch
        %981 = sbr.rel (%p979) target = $region44
      $region43: #{detail_capture_forward.8} parent=31 // pred_region
        %s982 = smul.u32 32, %s18
      $region44: #{detail_capture_forward.8} parent=31 // pred_fallthru
        _
    $region32: #{detail_capture_forward.8} parent=5 // pred_fallthru
      _
    %p983 = scmp.le.s32.totalorder 2, %s9
    // Predicated region
    $region45: #{detail_capture_forward.8} parent=5 // pred_check
      %p984 = pneg %p983
    $region46: #{detail_capture_forward.8} parent=5 // pred_check_branch
      %986 = sbr.rel (%p984) target = $region48
    $region47: #{detail_capture_forward.8} parent=5 // pred_region
      %s987 = ssub.s32 %s9, 2
      // Predicated region
      $region49: #{detail_capture_forward.8} parent=47 // pred_check
        %p988 = pneg %p125
      $region50: #{detail_capture_forward.8} parent=47 // pred_check_branch
        %990 = sbr.rel (%p988) target = $region52
      $region51: #{detail_capture_forward.8} parent=47 // pred_region
        %s991 = smul.u32 32, %s20
        %p992 = scmp.lt.s32.totalorder %s991, 63
        %s993 = scalar_select %p992, %s991, 63
        %s994 = smul.addr %s993, 4
        %s995 = scalar_lea.vmem %s3, %s994
      $region52: #{detail_capture_forward.8} parent=47 // pred_fallthru
        _
    $region48: #{detail_capture_forward.8} parent=5 // pred_fallthru
      _
  $region6: #{detail_capture_forward.8} parent=0 // loop_footer
    %s13 = sadd.s32 1, %s9
  $region7: #{detail_capture_forward.8} parent=0 // loop_footer_branch
    %8 = sbr.rel target = $region3
  $region8: #{detail_capture_forward.8} parent=0 // loop_exit
    _

// kernel: detail_capture_forward.9
$region0: #{detail_capture_forward.9}
  #allocation0 [shape = 'u32[]', space=smem, size = 0x4, offset = 0x4, fixed_abs, tag = 'smem constant byte address 0x4 - core index']
  #allocation1 [shape = 'u32[144,128]{1,0:T(1,128)}', space=vmem, size = 0x12000, scoped, tag = 'internal scratch']
  #allocation2 [shape = 'f32[128,16]{1,0:T(8,128)}', space=vmem, size = 0x10000, scoped, tag = 'scratch operand']
  %s0 = inlined_call_operand.vmem [shape: bf16[128,128], index: 0, kind: input, shape index: {}]
  %s1 = inlined_call_operand.vmem [shape: bf16[128,16], index: 1, kind: input, shape index: {}]
  %s2 = inlined_call_operand.vmem [shape: f32[1,16], index: 2, kind: input, shape index: {}]
  %s3 = inlined_call_operand.vmem [shape: bf16[128,16], index: 3, kind: output, shape index: {}]
  %s4 = sld [smem:[#allocation0]]
  $region30: #{detail_capture_forward.9} parent=0
    _
  %s6 = ssub.s32 1, %s4
  %s7 = scalar_select 0, %s6, %s4
  // Predicated region
  $region2: #{detail_capture_forward.9} parent=0 // pred_check
    _
  $region3: #{detail_capture_forward.9} parent=0 // pred_check_branch
    %9 = sbr.rel (0) target = $region5
  $region4: #{detail_capture_forward.9} parent=0 // pred_region
    _
  $region5: #{detail_capture_forward.9} parent=0 // pred_fallthru
    _
  // Predicated region
  $region6: #{detail_capture_forward.9} parent=0 // pred_check
    _
  $region7: #{detail_capture_forward.9} parent=0 // pred_check_branch
    %11 = sbr.rel (0) target = $region9
  $region8: #{detail_capture_forward.9} parent=0 // pred_region
    _
  $region9: #{detail_capture_forward.9} parent=0 // pred_fallthru
    _
  // Predicated region
  $region10: #{detail_capture_forward.9} parent=0 // pred_check
    _
  $region11: #{detail_capture_forward.9} parent=0 // pred_check_branch
    %13 = sbr.rel (0) target = $region13
  $region12: #{detail_capture_forward.9} parent=0 // pred_region
    _
  $region13: #{detail_capture_forward.9} parent=0 // pred_fallthru
    _
  %p15 = scmp.eq.s32.totalorder 0, 0
  // Predicated region
  $region14: #{detail_capture_forward.9} parent=0 // pred_check
    %p16 = pneg %p15
  $region15: #{detail_capture_forward.9} parent=0 // pred_check_branch
    %18 = sbr.rel (%p16) target = $region17
  $region16: #{detail_capture_forward.9} parent=0 // pred_region
    %vm19 = vcmask 130048
    %20 = vst.msk [vmem:[#allocation2] sm:$0xff] %vm19, 0.0
    %21 = vst.msk [vmem:[#allocation2 + $0x8] sm:$0xff] %vm19, 0.0
    %22 = vst.msk [vmem:[#allocation2 + $0x10] sm:$0xff] %vm19, 0.0
    %23 = vst.msk [vmem:[#allocation2 + $0x18] sm:$0xff] %vm19, 0.0
    %24 = vst.msk [vmem:[#allocation2 + $0x20] sm:$0xff] %vm19, 0.0
    %25 = vst.msk [vmem:[#allocation2 + $0x28] sm:$0xff] %vm19, 0.0
    %26 = vst.msk [vmem:[#allocation2 + $0x30] sm:$0xff] %vm19, 0.0
    %27 = vst.msk [vmem:[#allocation2 + $0x38] sm:$0xff] %vm19, 0.0
    %28 = vst.msk [vmem:[#allocation2 + $0x40] sm:$0xff] %vm19, 0.0
    %29 = vst.msk [vmem:[#allocation2 + $0x48] sm:$0xff] %vm19, 0.0
    %30 = vst.msk [vmem:[#allocation2 + $0x50] sm:$0xff] %vm19, 0.0
    %31 = vst.msk [vmem:[#allocation2 + $0x58] sm:$0xff] %vm19, 0.0
    %32 = vst.msk [vmem:[#allocation2 + $0x60] sm:$0xff] %vm19, 0.0
    %33 = vst.msk [vmem:[#allocation2 + $0x68] sm:$0xff] %vm19, 0.0
    %34 = vst.msk [vmem:[#allocation2 + $0x70] sm:$0xff] %vm19, 0.0
    %35 = vst.msk [vmem:[#allocation2 + $0x78] sm:$0xff] %vm19, 0.0
  $region17: #{detail_capture_forward.9} parent=0 // pred_fallthru
    _
  %v36 = vld [vmem:[#allocation2] sm:$0xff]
  %v37 = vld [vmem:[#allocation2 + $0x8] sm:$0xff]
  %v38 = vld [vmem:[#allocation2 + $0x10] sm:$0xff]
  %v39 = vld [vmem:[#allocation2 + $0x18] sm:$0xff]
  %v40 = vld [vmem:[#allocation2 + $0x20] sm:$0xff]
  %v41 = vld [vmem:[#allocation2 + $0x28] sm:$0xff]
  %v42 = vld [vmem:[#allocation2 + $0x30] sm:$0xff]
  %v43 = vld [vmem:[#allocation2 + $0x38] sm:$0xff]
  %v44 = vld [vmem:[#allocation2 + $0x40] sm:$0xff]
  %v45 = vld [vmem:[#allocation2 + $0x48] sm:$0xff]
  %v46 = vld [vmem:[#allocation2 + $0x50] sm:$0xff]
  %v47 = vld [vmem:[#allocation2 + $0x58] sm:$0xff]
  %v48 = vld [vmem:[#allocation2 + $0x60] sm:$0xff]
  %v49 = vld [vmem:[#allocation2 + $0x68] sm:$0xff]
  %v50 = vld [vmem:[#allocation2 + $0x70] sm:$0xff]
  %v51 = vld [vmem:[#allocation2 + $0x78] sm:$0xff]
  %v52 = vld [vmem:[%s0] sm:$0xf]
  %v53 = vld [vmem:[%s0 + $0x4] sm:$0xf]
  %v54 = vld [vmem:[%s0 + $0x8] sm:$0xf]
  %v55 = vld [vmem:[%s0 + $0xc] sm:$0xf]
  %v56 = vld [vmem:[%s0 + $0x10] sm:$0xf]
  %v57 = vld [vmem:[%s0 + $0x14] sm:$0xf]
  %v58 = vld [vmem:[%s0 + $0x18] sm:$0xf]
  %v59 = vld [vmem:[%s0 + $0x1c] sm:$0xf]
  %v60 = vld [vmem:[%s0 + $0x20] sm:$0xf]
  %v61 = vld [vmem:[%s0 + $0x24] sm:$0xf]
  %v62 = vld [vmem:[%s0 + $0x28] sm:$0xf]
  %v63 = vld [vmem:[%s0 + $0x2c] sm:$0xf]
  %v64 = vld [vmem:[%s0 + $0x30] sm:$0xf]
  %v65 = vld [vmem:[%s0 + $0x34] sm:$0xf]
  %v66 = vld [vmem:[%s0 + $0x38] sm:$0xf]
  %v67 = vld [vmem:[%s0 + $0x3c] sm:$0xf]
  %v68 = vld [vmem:[%s1] sm:$0xf]
  %v69 = vld [vmem:[%s1 + $0x4] sm:$0xf]
  %v70 = vld [vmem:[%s1 + $0x8] sm:$0xf]
  %v71 = vld [vmem:[%s1 + $0xc] sm:$0xf]
  %v72 = vld [vmem:[%s1 + $0x10] sm:$0xf]
  %v73 = vld [vmem:[%s1 + $0x14] sm:$0xf]
  %v74 = vld [vmem:[%s1 + $0x18] sm:$0xf]
  %v75 = vld [vmem:[%s1 + $0x1c] sm:$0xf]
  %v76 = vld [vmem:[%s1 + $0x20] sm:$0xf]
  %v77 = vld [vmem:[%s1 + $0x24] sm:$0xf]
  %v78 = vld [vmem:[%s1 + $0x28] sm:$0xf]
  %v79 = vld [vmem:[%s1 + $0x2c] sm:$0xf]
  %v80 = vld [vmem:[%s1 + $0x30] sm:$0xf]
  %v81 = vld [vmem:[%s1 + $0x34] sm:$0xf]
  %v82 = vld [vmem:[%s1 + $0x38] sm:$0xf]
  %v83 = vld [vmem:[%s1 + $0x3c] sm:$0xf]
  %v100 = vunpack.c.l.b16 %v52
  %v101 = vunpack.c.l.b16 %v53
  %v102 = vunpack.c.l.b16 %v54
  %v103 = vunpack.c.l.b16 %v55
  %v104 = vunpack.c.l.b16 %v56
  %v105 = vunpack.c.l.b16 %v57
  %v106 = vunpack.c.l.b16 %v58
  %v107 = vunpack.c.l.b16 %v59
  %v108 = vunpack.c.l.b16 %v60
  %v109 = vunpack.c.l.b16 %v61
  %v110 = vunpack.c.l.b16 %v62
  %v111 = vunpack.c.l.b16 %v63
  %v112 = vunpack.c.l.b16 %v64
  %v113 = vunpack.c.l.b16 %v65
  %v114 = vunpack.c.l.b16 %v66
  %v115 = vunpack.c.l.b16 %v67
  %v116 = vpack.c.b16 %v101, %v100
  %v117 = vpack.c.b16 %v103, %v102
  %v118 = vpack.c.b16 %v105, %v104
  %v119 = vpack.c.b16 %v107, %v106
  %v120 = vpack.c.b16 %v109, %v108
  %v121 = vpack.c.b16 %v111, %v110
  %v122 = vpack.c.b16 %v113, %v112
  %v123 = vpack.c.b16 %v115, %v114
  %v148 = vunpack.c.l.b16 %v68
  %v149 = vunpack.c.l.b16 %v69
  %v150 = vunpack.c.l.b16 %v70
  %v151 = vunpack.c.l.b16 %v71
  %v152 = vunpack.c.l.b16 %v72
  %v153 = vunpack.c.l.b16 %v73
  %v154 = vunpack.c.l.b16 %v74
  %v155 = vunpack.c.l.b16 %v75
  %v156 = vunpack.c.l.b16 %v76
  %v157 = vunpack.c.l.b16 %v77
  %v158 = vunpack.c.l.b16 %v78
  %v159 = vunpack.c.l.b16 %v79
  %v160 = vunpack.c.l.b16 %v80
  %v161 = vunpack.c.l.b16 %v81
  %v162 = vunpack.c.l.b16 %v82
  %v163 = vunpack.c.l.b16 %v83
  %v164 = vpack.c.b16 %v149, %v148
  %v165 = vpack.c.b16 %v151, %v150
  %v166 = vpack.c.b16 %v153, %v152
  %v167 = vpack.c.b16 %v155, %v154
  %v168 = vpack.c.b16 %v157, %v156
  %v169 = vpack.c.b16 %v159, %v158
  %v170 = vpack.c.b16 %v161, %v160
  %v171 = vpack.c.b16 %v163, %v162
  %180 = vmatprep.subr.bf16.mxu0 0
  %181 = vmatpush1.bf16.msra.mxu0 %v171
  %182 = vmatprep.subr.bf16.mxu0 0
  %183 = vmatpush1.bf16.msra.mxu0 %v170
  %184 = vmatprep.subr.bf16.mxu0 0
  %185 = vmatpush1.bf16.msra.mxu0 %v169
  %186 = vmatprep.subr.bf16.mxu0 0
  %187 = vmatpush1.bf16.msra.mxu0 %v168
  %188 = vmatprep.subr.bf16.mxu0 0
  %189 = vmatpush1.bf16.msra.mxu0 %v167
  %190 = vmatprep.subr.bf16.mxu0 0
  %191 = vmatpush1.bf16.msra.mxu0 %v166
  %192 = vmatprep.subr.bf16.mxu0 0
  %193 = vmatpush1.bf16.msra.mxu0 %v165
  %194 = vmatprep.subr.bf16.mxu0 0
  %195 = vmatpush1.bf16.msra.mxu0 %v164
  %196 = vmatprep.subr.bf16.mxu0 0
  %197 = vmatpush2.bf16.msra.mxu0 0
  %198 = vmatprep.subr.bf16.mxu0 0
  %199 = vmatpush2.bf16.msra.mxu0 0
  %200 = vmatprep.subr.bf16.mxu0 0
  %201 = vmatpush2.bf16.msra.mxu0 0
  %202 = vmatprep.subr.bf16.mxu0 0
  %203 = vmatpush2.bf16.msra.mxu0 0
  %204 = vmatprep.subr.bf16.mxu0 0
  %205 = vmatpush2.bf16.msra.mxu0 0
  %206 = vmatprep.subr.bf16.mxu0 0
  %207 = vmatpush2.bf16.msra.mxu0 0
  %208 = vmatprep.subr.bf16.mxu0 0
  %209 = vmatpush2.bf16.msra.mxu0 0
  %210 = vmatprep.subr.bf16.mxu0 0
  %211 = vmatpush2.bf16.msra.mxu0 0
  %212 = vmatprep.mubr.bf16.mxu0 0
  %213 = vmatmul.mubr.bf16.gmra.mxu0 %v116
  %v214 = vpop.f32.mrf.mxu0
  %v215 = vadd.f32 0.0, %v214
  %v216 = vpop.f32.mrf.mxu0
  %v217 = vpop.f32.mrf.mxu0
  %v218 = vadd.f32 0.0, %v217
  %v219 = vpop.f32.mrf.mxu0
  %220 = vmatprep.mubr.bf16.mxu0 0
  %221 = vmatmul.mubr.bf16.gmra.mxu0 %v117
  %v222 = vpop.f32.mrf.mxu0
  %v223 = vadd.f32 0.0, %v222
  %v224 = vpop.f32.mrf.mxu0
  %v225 = vpop.f32.mrf.mxu0
  %v226 = vadd.f32 0.0, %v225
  %v227 = vpop.f32.mrf.mxu0
  %228 = vmatprep.mubr.bf16.mxu0 0
  %229 = vmatmul.mubr.bf16.gmra.mxu0 %v118
  %v230 = vpop.f32.mrf.mxu0
  %v231 = vadd.f32 0.0, %v230
  %v232 = vpop.f32.mrf.mxu0
  %v233 = vpop.f32.mrf.mxu0
  %v234 = vadd.f32 0.0, %v233
  %v235 = vpop.f32.mrf.mxu0
  %236 = vmatprep.mubr.bf16.mxu0 0
  %237 = vmatmul.mubr.bf16.gmra.mxu0 %v119
  %v238 = vpop.f32.mrf.mxu0
  %v239 = vadd.f32 0.0, %v238
  %v240 = vpop.f32.mrf.mxu0
  %v241 = vpop.f32.mrf.mxu0
  %v242 = vadd.f32 0.0, %v241
  %v243 = vpop.f32.mrf.mxu0
  %244 = vmatprep.mubr.bf16.mxu0 0
  %245 = vmatmul.mubr.bf16.gmra.mxu0 %v120
  %v246 = vpop.f32.mrf.mxu0
  %v247 = vadd.f32 0.0, %v246
  %v248 = vpop.f32.mrf.mxu0
  %v249 = vpop.f32.mrf.mxu0
  %v250 = vadd.f32 0.0, %v249
  %v251 = vpop.f32.mrf.mxu0
  %252 = vmatprep.mubr.bf16.mxu0 0
  %253 = vmatmul.mubr.bf16.gmra.mxu0 %v121
  %v254 = vpop.f32.mrf.mxu0
  %v255 = vadd.f32 0.0, %v254
  %v256 = vpop.f32.mrf.mxu0
  %v257 = vpop.f32.mrf.mxu0
  %v258 = vadd.f32 0.0, %v257
  %v259 = vpop.f32.mrf.mxu0
  %260 = vmatprep.mubr.bf16.mxu0 0
  %261 = vmatmul.mubr.bf16.gmra.mxu0 %v122
  %v262 = vpop.f32.mrf.mxu0
  %v263 = vadd.f32 0.0, %v262
  %v264 = vpop.f32.mrf.mxu0
  %v265 = vpop.f32.mrf.mxu0
  %v266 = vadd.f32 0.0, %v265
  %v267 = vpop.f32.mrf.mxu0
  %268 = vmatprep.mubr.bf16.mxu0 0
  %269 = vmatmul.mubr.bf16.gmra.mxu0 %v123
  %v270 = vpop.f32.mrf.mxu0
  %v271 = vadd.f32 0.0, %v270
  %v272 = vpop.f32.mrf.mxu0
  %v273 = vpop.f32.mrf.mxu0
  %v274 = vadd.f32 0.0, %v273
  %v275 = vpop.f32.mrf.mxu0
  %276 = vdwg.mxu0
  %v277 = vadd.f32 %v36, %v215
  %v278 = vadd.f32 %v37, %v218
  %v279 = vadd.f32 %v38, %v223
  %v280 = vadd.f32 %v39, %v226
  %v281 = vadd.f32 %v40, %v231
  %v282 = vadd.f32 %v41, %v234
  %v283 = vadd.f32 %v42, %v239
  %v284 = vadd.f32 %v43, %v242
  %v285 = vadd.f32 %v44, %v247
  %v286 = vadd.f32 %v45, %v250
  %v287 = vadd.f32 %v46, %v255
  %v288 = vadd.f32 %v47, %v258
  %v289 = vadd.f32 %v48, %v263
  %v290 = vadd.f32 %v49, %v266
  %v291 = vadd.f32 %v50, %v271
  %v292 = vadd.f32 %v51, %v274
  %vm293 = vcmask 130048
  %294 = vst.msk [vmem:[#allocation2] sm:$0xff] %vm293, %v277
  %295 = vst.msk [vmem:[#allocation2 + $0x8] sm:$0xff] %vm293, %v278
  %296 = vst.msk [vmem:[#allocation2 + $0x10] sm:$0xff] %vm293, %v279
  %297 = vst.msk [vmem:[#allocation2 + $0x18] sm:$0xff] %vm293, %v280
  %298 = vst.msk [vmem:[#allocation2 + $0x20] sm:$0xff] %vm293, %v281
  %299 = vst.msk [vmem:[#allocation2 + $0x28] sm:$0xff] %vm293, %v282
  %300 = vst.msk [vmem:[#allocation2 + $0x30] sm:$0xff] %vm293, %v283
  %301 = vst.msk [vmem:[#allocation2 + $0x38] sm:$0xff] %vm293, %v284
  %302 = vst.msk [vmem:[#allocation2 + $0x40] sm:$0xff] %vm293, %v285
  %303 = vst.msk [vmem:[#allocation2 + $0x48] sm:$0xff] %vm293, %v286
  %304 = vst.msk [vmem:[#allocation2 + $0x50] sm:$0xff] %vm293, %v287
  %305 = vst.msk [vmem:[#allocation2 + $0x58] sm:$0xff] %vm293, %v288
  %306 = vst.msk [vmem:[#allocation2 + $0x60] sm:$0xff] %vm293, %v289
  %307 = vst.msk [vmem:[#allocation2 + $0x68] sm:$0xff] %vm293, %v290
  %308 = vst.msk [vmem:[#allocation2 + $0x70] sm:$0xff] %vm293, %v291
  %309 = vst.msk [vmem:[#allocation2 + $0x78] sm:$0xff] %vm293, %v292
  // Predicated region
  $region18: #{detail_capture_forward.9} parent=0 // pred_check
    %p310 = pneg %p15
  $region19: #{detail_capture_forward.9} parent=0 // pred_check_branch
    %312 = sbr.rel (%p310) target = $region21
  $region20: #{detail_capture_forward.9} parent=0 // pred_region
    %v313 = vld [vmem:[#allocation2] sm:$0xff]
    %v314 = vld [vmem:[#allocation2 + $0x8] sm:$0xff]
    %v315 = vld [vmem:[#allocation2 + $0x10] sm:$0xff]
    %v316 = vld [vmem:[#allocation2 + $0x18] sm:$0xff]
    %v317 = vld [vmem:[#allocation2 + $0x20] sm:$0xff]
    %v318 = vld [vmem:[#allocation2 + $0x28] sm:$0xff]
    %v319 = vld [vmem:[#allocation2 + $0x30] sm:$0xff]
    %v320 = vld [vmem:[#allocation2 + $0x38] sm:$0xff]
    %v321 = vld [vmem:[#allocation2 + $0x40] sm:$0xff]
    %v322 = vld [vmem:[#allocation2 + $0x48] sm:$0xff]
    %v323 = vld [vmem:[#allocation2 + $0x50] sm:$0xff]
    %v324 = vld [vmem:[#allocation2 + $0x58] sm:$0xff]
    %v325 = vld [vmem:[#allocation2 + $0x60] sm:$0xff]
    %v326 = vld [vmem:[#allocation2 + $0x68] sm:$0xff]
    %v327 = vld [vmem:[#allocation2 + $0x70] sm:$0xff]
    %v328 = vld [vmem:[#allocation2 + $0x78] sm:$0xff]
    %v329 = vld [vmem:[%s2] sm:$0x1]
    %v331 = vlaneseq
    %v332 = vshrl.u32 %v331, 7
    %v333 = vsub.s32 0, %v332
    %v334 = vrot.slane %v329, %v333
    %v336 = vadd.f32 %v313, %v334
    %v337 = vadd.f32 %v314, %v334
    %v338 = vadd.f32 %v315, %v334
    %v339 = vadd.f32 %v316, %v334
    %v340 = vadd.f32 %v317, %v334
    %v341 = vadd.f32 %v318, %v334
    %v342 = vadd.f32 %v319, %v334
    %v343 = vadd.f32 %v320, %v334
    %v344 = vadd.f32 %v321, %v334
    %v345 = vadd.f32 %v322, %v334
    %v346 = vadd.f32 %v323, %v334
    %v347 = vadd.f32 %v324, %v334
    %v348 = vadd.f32 %v325, %v334
    %v349 = vadd.f32 %v326, %v334
    %v350 = vadd.f32 %v327, %v334
    %v351 = vadd.f32 %v328, %v334
    %v352 = vmax.f32 %v336, 0.0
    %v353 = vmax.f32 %v337, 0.0
    %v354 = vmax.f32 %v338, 0.0
    %v355 = vmax.f32 %v339, 0.0
    %v356 = vmax.f32 %v340, 0.0
    %v357 = vmax.f32 %v341, 0.0
    %v358 = vmax.f32 %v342, 0.0
    %v359 = vmax.f32 %v343, 0.0
    %v360 = vmax.f32 %v344, 0.0
    %v361 = vmax.f32 %v345, 0.0
    %v362 = vmax.f32 %v346, 0.0
    %v363 = vmax.f32 %v347, 0.0
    %v364 = vmax.f32 %v348, 0.0
    %v365 = vmax.f32 %v349, 0.0
    %v366 = vmax.f32 %v350, 0.0
    %v367 = vmax.f32 %v351, 0.0
    %v368 = vpack.c.bf16 %v353, %v352
    %v369 = vpack.c.bf16 %v355, %v354
    %v370 = vpack.c.bf16 %v357, %v356
    %v371 = vpack.c.bf16 %v359, %v358
    %v372 = vpack.c.bf16 %v361, %v360
    %v373 = vpack.c.bf16 %v363, %v362
    %v374 = vpack.c.bf16 %v365, %v364
    %v375 = vpack.c.bf16 %v367, %v366
    %v384 = vunpack.c.l.b16 %v368
    %v385 = vunpack.c.h.b16 %v368
    %v386 = vunpack.c.l.b16 %v369
    %v387 = vunpack.c.h.b16 %v369
    %v388 = vunpack.c.l.b16 %v370
    %v389 = vunpack.c.h.b16 %v370
    %v390 = vunpack.c.l.b16 %v371
    %v391 = vunpack.c.h.b16 %v371
    %v392 = vunpack.c.l.b16 %v372
    %v393 = vunpack.c.h.b16 %v372
    %v394 = vunpack.c.l.b16 %v373
    %v395 = vunpack.c.h.b16 %v373
    %v396 = vunpack.c.l.b16 %v374
    %v397 = vunpack.c.h.b16 %v374
    %v398 = vunpack.c.l.b16 %v375
    %v399 = vunpack.c.h.b16 %v375
    %v400 = vpack.c.b16 %v384, %v384
    %v401 = vpack.c.b16 %v385, %v385
    %v402 = vpack.c.b16 %v386, %v386
    %v403 = vpack.c.b16 %v387, %v387
    %v404 = vpack.c.b16 %v388, %v388
    %v405 = vpack.c.b16 %v389, %v389
    %v406 = vpack.c.b16 %v390, %v390
    %v407 = vpack.c.b16 %v391, %v391
    %v408 = vpack.c.b16 %v392, %v392
    %v409 = vpack.c.b16 %v393, %v393
    %v410 = vpack.c.b16 %v394, %v394
    %v411 = vpack.c.b16 %v395, %v395
    %v412 = vpack.c.b16 %v396, %v396
    %v413 = vpack.c.b16 %v397, %v397
    %v414 = vpack.c.b16 %v398, %v398
    %v415 = vpack.c.b16 %v399, %v399
    %vm432 = vcmask 125952
    %433 = vst.msk [vmem:[%s3] sm:$0xf] %vm432, %v400
    %434 = vst.msk [vmem:[%s3 + $0x4] sm:$0xf] %vm432, %v401
    %435 = vst.msk [vmem:[%s3 + $0x8] sm:$0xf] %vm432, %v402
    %436 = vst.msk [vmem:[%s3 + $0xc] sm:$0xf] %vm432, %v403
    %437 = vst.msk [vmem:[%s3 + $0x10] sm:$0xf] %vm432, %v404
    %438 = vst.msk [vmem:[%s3 + $0x14] sm:$0xf] %vm432, %v405
    %439 = vst.msk [vmem:[%s3 + $0x18] sm:$0xf] %vm432, %v406
    %440 = vst.msk [vmem:[%s3 + $0x1c] sm:$0xf] %vm432, %v407
    %441 = vst.msk [vmem:[%s3 + $0x20] sm:$0xf] %vm432, %v408
    %442 = vst.msk [vmem:[%s3 + $0x24] sm:$0xf] %vm432, %v409
    %443 = vst.msk [vmem:[%s3 + $0x28] sm:$0xf] %vm432, %v410
    %444 = vst.msk [vmem:[%s3 + $0x2c] sm:$0xf] %vm432, %v411
    %445 = vst.msk [vmem:[%s3 + $0x30] sm:$0xf] %vm432, %v412
    %446 = vst.msk [vmem:[%s3 + $0x34] sm:$0xf] %vm432, %v413
    %447 = vst.msk [vmem:[%s3 + $0x38] sm:$0xf] %vm432, %v414
    %448 = vst.msk [vmem:[%s3 + $0x3c] sm:$0xf] %vm432, %v415
  $region21: #{detail_capture_forward.9} parent=0 // pred_fallthru
    _
  // Predicated region
  $region22: #{detail_capture_forward.9} parent=0 // pred_check
    _
  $region23: #{detail_capture_forward.9} parent=0 // pred_check_branch
    %450 = sbr.rel (0) target = $region25
  $region24: #{detail_capture_forward.9} parent=0 // pred_region
    _
  $region25: #{detail_capture_forward.9} parent=0 // pred_fallthru
    _
  // Predicated region
  $region26: #{detail_capture_forward.9} parent=0 // pred_check
    _
  $region27: #{detail_capture_forward.9} parent=0 // pred_check_branch
    %452 = sbr.rel (0) target = $region29
  $region28: #{detail_capture_forward.9} parent=0 // pred_region
    _
  $region29: #{detail_capture_forward.9} parent=0 // pred_fallthru
    _

// kernel: detail_capture_forward.10
$region0: #{detail_capture_forward.10}
  #allocation0 [shape = 'u32[]', space=smem, size = 0x4, offset = 0x4, fixed_abs, tag = 'smem constant byte address 0x4 - core index']
  #allocation1 [shape = 'u32[144,128]{1,0:T(1,128)}', space=vmem, size = 0x12000, scoped, tag = 'internal scratch']
  #allocation2 [shape = 'f32[32,32]{1,0:T(8,128)}', space=vmem, size = 0x4000, scoped, tag = 'scratch operand']
  %s0 = inlined_call_operand.vmem [shape: bf16[32,256], index: 0, kind: input, shape index: {}]
  %s1 = inlined_call_operand.vmem [shape: bf16[256,32], index: 1, kind: input, shape index: {}]
  %s2 = inlined_call_operand.vmem [shape: f32[1,32], index: 2, kind: input, shape index: {}]
  %s3 = inlined_call_operand.vmem [shape: bf16[32,32], index: 3, kind: output, shape index: {}]
  %s4 = sld [smem:[#allocation0]]
  $region30: #{detail_capture_forward.10} parent=0
    _
  %s6 = ssub.s32 1, %s4
  %s7 = scalar_select 0, %s6, %s4
  // Predicated region
  $region2: #{detail_capture_forward.10} parent=0 // pred_check
    _
  $region3: #{detail_capture_forward.10} parent=0 // pred_check_branch
    %9 = sbr.rel (0) target = $region5
  $region4: #{detail_capture_forward.10} parent=0 // pred_region
    _
  $region5: #{detail_capture_forward.10} parent=0 // pred_fallthru
    _
  // Predicated region
  $region6: #{detail_capture_forward.10} parent=0 // pred_check
    _
  $region7: #{detail_capture_forward.10} parent=0 // pred_check_branch
    %11 = sbr.rel (0) target = $region9
  $region8: #{detail_capture_forward.10} parent=0 // pred_region
    _
  $region9: #{detail_capture_forward.10} parent=0 // pred_fallthru
    _
  // Predicated region
  $region10: #{detail_capture_forward.10} parent=0 // pred_check
    _
  $region11: #{detail_capture_forward.10} parent=0 // pred_check_branch
    %13 = sbr.rel (0) target = $region13
  $region12: #{detail_capture_forward.10} parent=0 // pred_region
    _
  $region13: #{detail_capture_forward.10} parent=0 // pred_fallthru
    _
  %p15 = scmp.eq.s32.totalorder 0, 0
  // Predicated region
  $region14: #{detail_capture_forward.10} parent=0 // pred_check
    %p16 = pneg %p15
  $region15: #{detail_capture_forward.10} parent=0 // pred_check_branch
    %18 = sbr.rel (%p16) target = $region17
  $region16: #{detail_capture_forward.10} parent=0 // pred_region
    %vm19 = vcmask 261120
    %20 = vst.msk [vmem:[#allocation2] sm:$0xff] %vm19, 0.0
    %21 = vst.msk [vmem:[#allocation2 + $0x8] sm:$0xff] %vm19, 0.0
    %22 = vst.msk [vmem:[#allocation2 + $0x10] sm:$0xff] %vm19, 0.0
    %23 = vst.msk [vmem:[#allocation2 + $0x18] sm:$0xff] %vm19, 0.0
  $region17: #{detail_capture_forward.10} parent=0 // pred_fallthru
    _
  %v24 = vld [vmem:[#allocation2] sm:$0xff]
  %v25 = vld [vmem:[#allocation2 + $0x8] sm:$0xff]
  %v26 = vld [vmem:[#allocation2 + $0x10] sm:$0xff]
  %v27 = vld [vmem:[#allocation2 + $0x18] sm:$0xff]
  %v28 = vld [vmem:[%s0] sm:$0xff]
  %v29 = vld [vmem:[%s0 + $0x8] sm:$0xff]
  %v30 = vld [vmem:[%s0 + $0x10] sm:$0xff]
  %v31 = vld [vmem:[%s0 + $0x18] sm:$0xff]
  %v32 = vld [vmem:[%s1] sm:$0xf]
  %v33 = vld [vmem:[%s1 + $0x4] sm:$0xf]
  %v34 = vld [vmem:[%s1 + $0x8] sm:$0xf]
  %v35 = vld [vmem:[%s1 + $0xc] sm:$0xf]
  %v36 = vld [vmem:[%s1 + $0x10] sm:$0xf]
  %v37 = vld [vmem:[%s1 + $0x14] sm:$0xf]
  %v38 = vld [vmem:[%s1 + $0x18] sm:$0xf]
  %v39 = vld [vmem:[%s1 + $0x1c] sm:$0xf]
  %v40 = vld [vmem:[%s1 + $0x20] sm:$0xf]
  %v41 = vld [vmem:[%s1 + $0x24] sm:$0xf]
  %v42 = vld [vmem:[%s1 + $0x28] sm:$0xf]
  %v43 = vld [vmem:[%s1 + $0x2c] sm:$0xf]
  %v44 = vld [vmem:[%s1 + $0x30] sm:$0xf]
  %v45 = vld [vmem:[%s1 + $0x34] sm:$0xf]
  %v46 = vld [vmem:[%s1 + $0x38] sm:$0xf]
  %v47 = vld [vmem:[%s1 + $0x3c] sm:$0xf]
  %v48 = vld [vmem:[%s1 + $0x40] sm:$0xf]
  %v49 = vld [vmem:[%s1 + $0x44] sm:$0xf]
  %v50 = vld [vmem:[%s1 + $0x48] sm:$0xf]
  %v51 = vld [vmem:[%s1 + $0x4c] sm:$0xf]
  %v52 = vld [vmem:[%s1 + $0x50] sm:$0xf]
  %v53 = vld [vmem:[%s1 + $0x54] sm:$0xf]
  %v54 = vld [vmem:[%s1 + $0x58] sm:$0xf]
  %v55 = vld [vmem:[%s1 + $0x5c] sm:$0xf]
  %v56 = vld [vmem:[%s1 + $0x60] sm:$0xf]
  %v57 = vld [vmem:[%s1 + $0x64] sm:$0xf]
  %v58 = vld [vmem:[%s1 + $0x68] sm:$0xf]
  %v59 = vld [vmem:[%s1 + $0x6c] sm:$0xf]
  %v60 = vld [vmem:[%s1 + $0x70] sm:$0xf]
  %v61 = vld [vmem:[%s1 + $0x74] sm:$0xf]
  %v62 = vld [vmem:[%s1 + $0x78] sm:$0xf]
  %v63 = vld [vmem:[%s1 + $0x7c] sm:$0xf]
  %v68 = vunpack.c.l.b16 %v28
  %v69 = vunpack.c.h.b16 %v28
  %v70 = vunpack.c.l.b16 %v29
  %v71 = vunpack.c.h.b16 %v29
  %v72 = vunpack.c.l.b16 %v30
  %v73 = vunpack.c.h.b16 %v30
  %v74 = vunpack.c.l.b16 %v31
  %v75 = vunpack.c.h.b16 %v31
  %v76 = vpack.c.b16 %v70, %v68
  %v77 = vpack.c.b16 %v71, %v69
  %v78 = vpack.c.b16 %v74, %v72
  %v79 = vpack.c.b16 %v75, %v73
  %v116 = vunpack.c.l.b16 %v32
  %v117 = vunpack.c.l.b16 %v33
  %v118 = vunpack.c.l.b16 %v34
  %v119 = vunpack.c.l.b16 %v35
  %v120 = vunpack.c.l.b16 %v36
  %v121 = vunpack.c.l.b16 %v37
  %v122 = vunpack.c.l.b16 %v38
  %v123 = vunpack.c.l.b16 %v39
  %v124 = vunpack.c.l.b16 %v40
  %v125 = vunpack.c.l.b16 %v41
  %v126 = vunpack.c.l.b16 %v42
  %v127 = vunpack.c.l.b16 %v43
  %v128 = vunpack.c.l.b16 %v44
  %v129 = vunpack.c.l.b16 %v45
  %v130 = vunpack.c.l.b16 %v46
  %v131 = vunpack.c.l.b16 %v47
  %v132 = vunpack.c.l.b16 %v48
  %v133 = vunpack.c.l.b16 %v49
  %v134 = vunpack.c.l.b16 %v50
  %v135 = vunpack.c.l.b16 %v51
  %v136 = vunpack.c.l.b16 %v52
  %v137 = vunpack.c.l.b16 %v53
  %v138 = vunpack.c.l.b16 %v54
  %v139 = vunpack.c.l.b16 %v55
  %v140 = vunpack.c.l.b16 %v56
  %v141 = vunpack.c.l.b16 %v57
  %v142 = vunpack.c.l.b16 %v58
  %v143 = vunpack.c.l.b16 %v59
  %v144 = vunpack.c.l.b16 %v60
  %v145 = vunpack.c.l.b16 %v61
  %v146 = vunpack.c.l.b16 %v62
  %v147 = vunpack.c.l.b16 %v63
  %v148 = vpack.c.b16 %v117, %v116
  %v149 = vpack.c.b16 %v119, %v118
  %v150 = vpack.c.b16 %v121, %v120
  %v151 = vpack.c.b16 %v123, %v122
  %v152 = vpack.c.b16 %v125, %v124
  %v153 = vpack.c.b16 %v127, %v126
  %v154 = vpack.c.b16 %v129, %v128
  %v155 = vpack.c.b16 %v131, %v130
  %v156 = vpack.c.b16 %v133, %v132
  %v157 = vpack.c.b16 %v135, %v134
  %v158 = vpack.c.b16 %v137, %v136
  %v159 = vpack.c.b16 %v139, %v138
  %v160 = vpack.c.b16 %v141, %v140
  %v161 = vpack.c.b16 %v143, %v142
  %v162 = vpack.c.b16 %v145, %v144
  %v163 = vpack.c.b16 %v147, %v146
  %180 = vmatprep.subr.bf16.mxu0 0
  %181 = vmatpush1.bf16.msra.mxu0 %v155
  %182 = vmatprep.subr.bf16.mxu0 0
  %183 = vmatpush1.bf16.msra.mxu0 %v154
  %184 = vmatprep.subr.bf16.mxu0 0
  %185 = vmatpush1.bf16.msra.mxu0 %v153
  %186 = vmatprep.subr.bf16.mxu0 0
  %187 = vmatpush1.bf16.msra.mxu0 %v152
  %188 = vmatprep.subr.bf16.mxu0 0
  %189 = vmatpush1.bf16.msra.mxu0 %v151
  %190 = vmatprep.subr.bf16.mxu0 0
  %191 = vmatpush1.bf16.msra.mxu0 %v150
  %192 = vmatprep.subr.bf16.mxu0 0
  %193 = vmatpush1.bf16.msra.mxu0 %v149
  %194 = vmatprep.subr.bf16.mxu0 0
  %195 = vmatpush1.bf16.msra.mxu0 %v148
  %196 = vmatprep.subr.bf16.mxu0 0
  %197 = vmatpush2.bf16.msra.mxu0 %v163
  %198 = vmatprep.subr.bf16.mxu0 0
  %199 = vmatpush2.bf16.msra.mxu0 %v162
  %200 = vmatprep.subr.bf16.mxu0 0
  %201 = vmatpush2.bf16.msra.mxu0 %v161
  %202 = vmatprep.subr.bf16.mxu0 0
  %203 = vmatpush2.bf16.msra.mxu0 %v160
  %204 = vmatprep.subr.bf16.mxu0 0
  %205 = vmatpush2.bf16.msra.mxu0 %v159
  %206 = vmatprep.subr.bf16.mxu0 0
  %207 = vmatpush2.bf16.msra.mxu0 %v158
  %208 = vmatprep.subr.bf16.mxu0 0
  %209 = vmatpush2.bf16.msra.mxu0 %v157
  %210 = vmatprep.subr.bf16.mxu0 0
  %211 = vmatpush2.bf16.msra.mxu0 %v156
  %212 = vmatprep.mubr.bf16.mxu0 %v77
  %213 = vmatmul.mubr.bf16.gmra.mxu0 %v76
  %v214 = vpop.f32.mrf.mxu0
  %v215 = vadd.f32 0.0, %v214
  %v216 = vpop.f32.mrf.mxu0
  %v217 = vpop.f32.mrf.mxu0
  %v218 = vadd.f32 0.0, %v217
  %v219 = vpop.f32.mrf.mxu0
  %220 = vmatprep.mubr.bf16.mxu0 %v79
  %221 = vmatmul.mubr.bf16.gmra.mxu0 %v78
  %v222 = vpop.f32.mrf.mxu0
  %v223 = vadd.f32 0.0, %v222
  %v224 = vpop.f32.mrf.mxu0
  %v225 = vpop.f32.mrf.mxu0
  %v226 = vadd.f32 0.0, %v225
  %v227 = vpop.f32.mrf.mxu0
  %228 = vdwg.mxu0
  %v229 = vadd.f32 %v24, %v215
  %v230 = vadd.f32 %v25, %v218
  %v231 = vadd.f32 %v26, %v223
  %v232 = vadd.f32 %v27, %v226
  %vm233 = vcmask 261120
  %234 = vst.msk [vmem:[#allocation2] sm:$0xff] %vm233, %v229
  %235 = vst.msk [vmem:[#allocation2 + $0x8] sm:$0xff] %vm233, %v230
  %236 = vst.msk [vmem:[#allocation2 + $0x10] sm:$0xff] %vm233, %v231
  %237 = vst.msk [vmem:[#allocation2 + $0x18] sm:$0xff] %vm233, %v232
  // Predicated region
  $region18: #{detail_capture_forward.10} parent=0 // pred_check
    %p238 = pneg %p15
  $region19: #{detail_capture_forward.10} parent=0 // pred_check_branch
    %240 = sbr.rel (%p238) target = $region21
  $region20: #{detail_capture_forward.10} parent=0 // pred_region
    %v241 = vld [vmem:[#allocation2] sm:$0xff]
    %v242 = vld [vmem:[#allocation2 + $0x8] sm:$0xff]
    %v243 = vld [vmem:[#allocation2 + $0x10] sm:$0xff]
    %v244 = vld [vmem:[#allocation2 + $0x18] sm:$0xff]
    %v245 = vld [vmem:[%s2] sm:$0x1]
    %v247 = vlaneseq
    %v248 = vshrl.u32 %v247, 7
    %v249 = vsub.s32 0, %v248
    %v250 = vrot.slane %v245, %v249
    %v252 = vadd.f32 %v241, %v250
    %v253 = vadd.f32 %v242, %v250
    %v254 = vadd.f32 %v243, %v250
    %v255 = vadd.f32 %v244, %v250
    %v256 = vmax.f32 %v252, 0.0
    %v257 = vmax.f32 %v253, 0.0
    %v258 = vmax.f32 %v254, 0.0
    %v259 = vmax.f32 %v255, 0.0
    %v260 = vpack.c.bf16 %v257, %v256
    %v261 = vpack.c.bf16 %v259, %v258
    %v264 = vunpack.c.l.b16 %v260
    %v265 = vunpack.c.h.b16 %v260
    %v266 = vunpack.c.l.b16 %v261
    %v267 = vunpack.c.h.b16 %v261
    %v268 = vpack.c.b16 %v264, %v264
    %v269 = vpack.c.b16 %v265, %v265
    %v270 = vpack.c.b16 %v266, %v266
    %v271 = vpack.c.b16 %v267, %v267
    %vm276 = vcmask 257024
    %277 = vst.msk [vmem:[%s3] sm:$0xf] %vm276, %v268
    %278 = vst.msk [vmem:[%s3 + $0x4] sm:$0xf] %vm276, %v269
    %279 = vst.msk [vmem:[%s3 + $0x8] sm:$0xf] %vm276, %v270
    %280 = vst.msk [vmem:[%s3 + $0xc] sm:$0xf] %vm276, %v271
  $region21: #{detail_capture_forward.10} parent=0 // pred_fallthru
    _
  // Predicated region
  $region22: #{detail_capture_forward.10} parent=0 // pred_check
    _
  $region23: #{detail_capture_forward.10} parent=0 // pred_check_branch
    %282 = sbr.rel (0) target = $region25
  $region24: #{detail_capture_forward.10} parent=0 // pred_region
    _
  $region25: #{detail_capture_forward.10} parent=0 // pred_fallthru
    _
  // Predicated region
  $region26: #{detail_capture_forward.10} parent=0 // pred_check
    _
  $region27: #{detail_capture_forward.10} parent=0 // pred_check_branch
    %284 = sbr.rel (0) target = $region29
  $region28: #{detail_capture_forward.10} parent=0 // pred_region
    _
  $region29: #{detail_capture_forward.10} parent=0 // pred_fallthru
    _

// kernel: detail_capture_forward.11
$region0: #{detail_capture_forward.11}
  #allocation0 [shape = 'u32[]', space=smem, size = 0x4, offset = 0x4, fixed_abs, tag = 'smem constant byte address 0x4 - core index']
  #allocation1 [shape = 'u32[144,128]{1,0:T(1,128)}', space=vmem, size = 0x12000, scoped, tag = 'internal scratch']
  #allocation2 [shape = 'f32[32,32]{1,0:T(8,128)}', space=vmem, size = 0x4000, scoped, tag = 'scratch operand']
  %s0 = inlined_call_operand.vmem [shape: bf16[32,640], index: 0, kind: input, shape index: {}]
  %s1 = inlined_call_operand.vmem [shape: bf16[640,32], index: 1, kind: input, shape index: {}]
  %s2 = inlined_call_operand.vmem [shape: f32[1,32], index: 2, kind: input, shape index: {}]
  %s3 = inlined_call_operand.vmem [shape: bf16[32,32], index: 3, kind: output, shape index: {}]
  %s4 = sld [smem:[#allocation0]]
  $region30: #{detail_capture_forward.11} parent=0
    _
  %s6 = ssub.s32 1, %s4
  %s7 = scalar_select 0, %s6, %s4
  // Predicated region
  $region2: #{detail_capture_forward.11} parent=0 // pred_check
    _
  $region3: #{detail_capture_forward.11} parent=0 // pred_check_branch
    %9 = sbr.rel (0) target = $region5
  $region4: #{detail_capture_forward.11} parent=0 // pred_region
    _
  $region5: #{detail_capture_forward.11} parent=0 // pred_fallthru
    _
  // Predicated region
  $region6: #{detail_capture_forward.11} parent=0 // pred_check
    _
  $region7: #{detail_capture_forward.11} parent=0 // pred_check_branch
    %11 = sbr.rel (0) target = $region9
  $region8: #{detail_capture_forward.11} parent=0 // pred_region
    _
  $region9: #{detail_capture_forward.11} parent=0 // pred_fallthru
    _
  // Predicated region
  $region10: #{detail_capture_forward.11} parent=0 // pred_check
    _
  $region11: #{detail_capture_forward.11} parent=0 // pred_check_branch
    %13 = sbr.rel (0) target = $region13
  $region12: #{detail_capture_forward.11} parent=0 // pred_region
    _
  $region13: #{detail_capture_forward.11} parent=0 // pred_fallthru
    _
  %p15 = scmp.eq.s32.totalorder 0, 0
  // Predicated region
  $region14: #{detail_capture_forward.11} parent=0 // pred_check
    %p16 = pneg %p15
  $region15: #{detail_capture_forward.11} parent=0 // pred_check_branch
    %18 = sbr.rel (%p16) target = $region17
  $region16: #{detail_capture_forward.11} parent=0 // pred_region
    %vm19 = vcmask 261120
    %20 = vst.msk [vmem:[#allocation2] sm:$0xff] %vm19, 0.0
    %21 = vst.msk [vmem:[#allocation2 + $0x8] sm:$0xff] %vm19, 0.0
    %22 = vst.msk [vmem:[#allocation2 + $0x10] sm:$0xff] %vm19, 0.0
    %23 = vst.msk [vmem:[#allocation2 + $0x18] sm:$0xff] %vm19, 0.0
  $region17: #{detail_capture_forward.11} parent=0 // pred_fallthru
    _
  %v24 = vld [vmem:[#allocation2] sm:$0xff]
  %v25 = vld [vmem:[#allocation2 + $0x8] sm:$0xff]
  %v26 = vld [vmem:[#allocation2 + $0x10] sm:$0xff]
  %v27 = vld [vmem:[#allocation2 + $0x18] sm:$0xff]
  %v28 = vld [vmem:[%s0] sm:$0xff]
  %v29 = vld [vmem:[%s0 + $0x8] sm:$0xff]
  %v30 = vld [vmem:[%s0 + $0x10] sm:$0xf]
  %v31 = vld [vmem:[%s0 + $0x14] sm:$0xff]
  %v32 = vld [vmem:[%s0 + $0x1c] sm:$0xff]
  %v33 = vld [vmem:[%s0 + $0x24] sm:$0xf]
  %v34 = vld [vmem:[%s0 + $0x28] sm:$0xff]
  %v35 = vld [vmem:[%s0 + $0x30] sm:$0xff]
  %v36 = vld [vmem:[%s0 + $0x38] sm:$0xf]
  %v37 = vld [vmem:[%s0 + $0x3c] sm:$0xff]
  %v38 = vld [vmem:[%s0 + $0x44] sm:$0xff]
  %v39 = vld [vmem:[%s0 + $0x4c] sm:$0xf]
  %v40 = vld [vmem:[%s1] sm:$0xf]
  %v41 = vld [vmem:[%s1 + $0x4] sm:$0xf]
  %v42 = vld [vmem:[%s1 + $0x8] sm:$0xf]
  %v43 = vld [vmem:[%s1 + $0xc] sm:$0xf]
  %v44 = vld [vmem:[%s1 + $0x10] sm:$0xf]
  %v45 = vld [vmem:[%s1 + $0x14] sm:$0xf]
  %v46 = vld [vmem:[%s1 + $0x18] sm:$0xf]
  %v47 = vld [vmem:[%s1 + $0x1c] sm:$0xf]
  %v48 = vld [vmem:[%s1 + $0x20] sm:$0xf]
  %v49 = vld [vmem:[%s1 + $0x24] sm:$0xf]
  %v50 = vld [vmem:[%s1 + $0x28] sm:$0xf]
  %v51 = vld [vmem:[%s1 + $0x2c] sm:$0xf]
  %v52 = vld [vmem:[%s1 + $0x30] sm:$0xf]
  %v53 = vld [vmem:[%s1 + $0x34] sm:$0xf]
  %v54 = vld [vmem:[%s1 + $0x38] sm:$0xf]
  %v55 = vld [vmem:[%s1 + $0x3c] sm:$0xf]
  %v56 = vld [vmem:[%s1 + $0x40] sm:$0xf]
  %v57 = vld [vmem:[%s1 + $0x44] sm:$0xf]
  %v58 = vld [vmem:[%s1 + $0x48] sm:$0xf]
  %v59 = vld [vmem:[%s1 + $0x4c] sm:$0xf]
  %v60 = vld [vmem:[%s1 + $0x50] sm:$0xf]
  %v61 = vld [vmem:[%s1 + $0x54] sm:$0xf]
  %v62 = vld [vmem:[%s1 + $0x58] sm:$0xf]
  %v63 = vld [vmem:[%s1 + $0x5c] sm:$0xf]
  %v64 = vld [vmem:[%s1 + $0x60] sm:$0xf]
  %v65 = vld [vmem:[%s1 + $0x64] sm:$0xf]
  %v66 = vld [vmem:[%s1 + $0x68] sm:$0xf]
  %v67 = vld [vmem:[%s1 + $0x6c] sm:$0xf]
  %v68 = vld [vmem:[%s1 + $0x70] sm:$0xf]
  %v69 = vld [vmem:[%s1 + $0x74] sm:$0xf]
  %v70 = vld [vmem:[%s1 + $0x78] sm:$0xf]
  %v71 = vld [vmem:[%s1 + $0x7c] sm:$0xf]
  %v72 = vld [vmem:[%s1 + $0x80] sm:$0xf]
  %v73 = vld [vmem:[%s1 + $0x84] sm:$0xf]
  %v74 = vld [vmem:[%s1 + $0x88] sm:$0xf]
  %v75 = vld [vmem:[%s1 + $0x8c] sm:$0xf]
  %v76 = vld [vmem:[%s1 + $0x90] sm:$0xf]
  %v77 = vld [vmem:[%s1 + $0x94] sm:$0xf]
  %v78 = vld [vmem:[%s1 + $0x98] sm:$0xf]
  %v79 = vld [vmem:[%s1 + $0x9c] sm:$0xf]
  %v80 = vld [vmem:[%s1 + $0xa0] sm:$0xf]
  %v81 = vld [vmem:[%s1 + $0xa4] sm:$0xf]
  %v82 = vld [vmem:[%s1 + $0xa8] sm:$0xf]
  %v83 = vld [vmem:[%s1 + $0xac] sm:$0xf]
  %v84 = vld [vmem:[%s1 + $0xb0] sm:$0xf]
  %v85 = vld [vmem:[%s1 + $0xb4] sm:$0xf]
  %v86 = vld [vmem:[%s1 + $0xb8] sm:$0xf]
  %v87 = vld [vmem:[%s1 + $0xbc] sm:$0xf]
  %v88 = vld [vmem:[%s1 + $0xc0] sm:$0xf]
  %v89 = vld [vmem:[%s1 + $0xc4] sm:$0xf]
  %v90 = vld [vmem:[%s1 + $0xc8] sm:$0xf]
  %v91 = vld [vmem:[%s1 + $0xcc] sm:$0xf]
  %v92 = vld [vmem:[%s1 + $0xd0] sm:$0xf]
  %v93 = vld [vmem:[%s1 + $0xd4] sm:$0xf]
  %v94 = vld [vmem:[%s1 + $0xd8] sm:$0xf]
  %v95 = vld [vmem:[%s1 + $0xdc] sm:$0xf]
  %v96 = vld [vmem:[%s1 + $0xe0] sm:$0xf]
  %v97 = vld [vmem:[%s1 + $0xe4] sm:$0xf]
  %v98 = vld [vmem:[%s1 + $0xe8] sm:$0xf]
  %v99 = vld [vmem:[%s1 + $0xec] sm:$0xf]
  %v100 = vld [vmem:[%s1 + $0xf0] sm:$0xf]
  %v101 = vld [vmem:[%s1 + $0xf4] sm:$0xf]
  %v102 = vld [vmem:[%s1 + $0xf8] sm:$0xf]
  %v103 = vld [vmem:[%s1 + $0xfc] sm:$0xf]
  %v104 = vld [vmem:[%s1 + $0x100] sm:$0xf]
  %v105 = vld [vmem:[%s1 + $0x104] sm:$0xf]
  %v106 = vld [vmem:[%s1 + $0x108] sm:$0xf]
  %v107 = vld [vmem:[%s1 + $0x10c] sm:$0xf]
  %v108 = vld [vmem:[%s1 + $0x110] sm:$0xf]
  %v109 = vld [vmem:[%s1 + $0x114] sm:$0xf]
  %v110 = vld [vmem:[%s1 + $0x118] sm:$0xf]
  %v111 = vld [vmem:[%s1 + $0x11c] sm:$0xf]
  %v112 = vld [vmem:[%s1 + $0x120] sm:$0xf]
  %v113 = vld [vmem:[%s1 + $0x124] sm:$0xf]
  %v114 = vld [vmem:[%s1 + $0x128] sm:$0xf]
  %v115 = vld [vmem:[%s1 + $0x12c] sm:$0xf]
  %v116 = vld [vmem:[%s1 + $0x130] sm:$0xf]
  %v117 = vld [vmem:[%s1 + $0x134] sm:$0xf]
  %v118 = vld [vmem:[%s1 + $0x138] sm:$0xf]
  %v119 = vld [vmem:[%s1 + $0x13c] sm:$0xf]
  %v132 = vunpack.c.l.b16 %v28
  %v133 = vunpack.c.h.b16 %v28
  %v134 = vunpack.c.l.b16 %v29
  %v135 = vunpack.c.h.b16 %v29
  %v136 = vunpack.c.l.b16 %v30
  %v137 = vunpack.c.l.b16 %v31
  %v138 = vunpack.c.h.b16 %v31
  %v139 = vunpack.c.l.b16 %v32
  %v140 = vunpack.c.h.b16 %v32
  %v141 = vunpack.c.l.b16 %v33
  %v142 = vunpack.c.l.b16 %v34
  %v143 = vunpack.c.h.b16 %v34
  %v144 = vunpack.c.l.b16 %v35
  %v145 = vunpack.c.h.b16 %v35
  %v146 = vunpack.c.l.b16 %v36
  %v147 = vunpack.c.l.b16 %v37
  %v148 = vunpack.c.h.b16 %v37
  %v149 = vunpack.c.l.b16 %v38
  %v150 = vunpack.c.h.b16 %v38
  %v151 = vunpack.c.l.b16 %v39
  %v152 = vpack.c.b16 %v137, %v132
  %v153 = vpack.c.b16 %v138, %v133
  %v154 = vpack.c.b16 %v139, %v134
  %v155 = vpack.c.b16 %v140, %v135
  %v156 = vpack.c.b16 %v141, %v136
  %v157 = vpack.c.b16 %v147, %v142
  %v158 = vpack.c.b16 %v148, %v143
  %v159 = vpack.c.b16 %v149, %v144
  %v160 = vpack.c.b16 %v150, %v145
  %v161 = vpack.c.b16 %v151, %v146
  %v252 = vunpack.c.l.b16 %v40
  %v253 = vunpack.c.l.b16 %v41
  %v254 = vunpack.c.l.b16 %v42
  %v255 = vunpack.c.l.b16 %v43
  %v256 = vunpack.c.l.b16 %v44
  %v257 = vunpack.c.l.b16 %v45
  %v258 = vunpack.c.l.b16 %v46
  %v259 = vunpack.c.l.b16 %v47
  %v260 = vunpack.c.l.b16 %v48
  %v261 = vunpack.c.l.b16 %v49
  %v262 = vunpack.c.l.b16 %v50
  %v263 = vunpack.c.l.b16 %v51
  %v264 = vunpack.c.l.b16 %v52
  %v265 = vunpack.c.l.b16 %v53
  %v266 = vunpack.c.l.b16 %v54
  %v267 = vunpack.c.l.b16 %v55
  %v268 = vunpack.c.l.b16 %v56
  %v269 = vunpack.c.l.b16 %v57
  %v270 = vunpack.c.l.b16 %v58
  %v271 = vunpack.c.l.b16 %v59
  %v272 = vunpack.c.l.b16 %v60
  %v273 = vunpack.c.l.b16 %v61
  %v274 = vunpack.c.l.b16 %v62
  %v275 = vunpack.c.l.b16 %v63
  %v276 = vunpack.c.l.b16 %v64
  %v277 = vunpack.c.l.b16 %v65
  %v278 = vunpack.c.l.b16 %v66
  %v279 = vunpack.c.l.b16 %v67
  %v280 = vunpack.c.l.b16 %v68
  %v281 = vunpack.c.l.b16 %v69
  %v282 = vunpack.c.l.b16 %v70
  %v283 = vunpack.c.l.b16 %v71
  %v284 = vunpack.c.l.b16 %v72
  %v285 = vunpack.c.l.b16 %v73
  %v286 = vunpack.c.l.b16 %v74
  %v287 = vunpack.c.l.b16 %v75
  %v288 = vunpack.c.l.b16 %v76
  %v289 = vunpack.c.l.b16 %v77
  %v290 = vunpack.c.l.b16 %v78
  %v291 = vunpack.c.l.b16 %v79
  %v292 = vunpack.c.l.b16 %v80
  %v293 = vunpack.c.l.b16 %v81
  %v294 = vunpack.c.l.b16 %v82
  %v295 = vunpack.c.l.b16 %v83
  %v296 = vunpack.c.l.b16 %v84
  %v297 = vunpack.c.l.b16 %v85
  %v298 = vunpack.c.l.b16 %v86
  %v299 = vunpack.c.l.b16 %v87
  %v300 = vunpack.c.l.b16 %v88
  %v301 = vunpack.c.l.b16 %v89
  %v302 = vunpack.c.l.b16 %v90
  %v303 = vunpack.c.l.b16 %v91
  %v304 = vunpack.c.l.b16 %v92
  %v305 = vunpack.c.l.b16 %v93
  %v306 = vunpack.c.l.b16 %v94
  %v307 = vunpack.c.l.b16 %v95
  %v308 = vunpack.c.l.b16 %v96
  %v309 = vunpack.c.l.b16 %v97
  %v310 = vunpack.c.l.b16 %v98
  %v311 = vunpack.c.l.b16 %v99
  %v312 = vunpack.c.l.b16 %v100
  %v313 = vunpack.c.l.b16 %v101
  %v314 = vunpack.c.l.b16 %v102
  %v315 = vunpack.c.l.b16 %v103
  %v316 = vunpack.c.l.b16 %v104
  %v317 = vunpack.c.l.b16 %v105
  %v318 = vunpack.c.l.b16 %v106
  %v319 = vunpack.c.l.b16 %v107
  %v320 = vunpack.c.l.b16 %v108
  %v321 = vunpack.c.l.b16 %v109
  %v322 = vunpack.c.l.b16 %v110
  %v323 = vunpack.c.l.b16 %v111
  %v324 = vunpack.c.l.b16 %v112
  %v325 = vunpack.c.l.b16 %v113
  %v326 = vunpack.c.l.b16 %v114
  %v327 = vunpack.c.l.b16 %v115
  %v328 = vunpack.c.l.b16 %v116
  %v329 = vunpack.c.l.b16 %v117
  %v330 = vunpack.c.l.b16 %v118
  %v331 = vunpack.c.l.b16 %v119
  %v332 = vpack.c.b16 %v253, %v252
  %v333 = vpack.c.b16 %v255, %v254
  %v334 = vpack.c.b16 %v257, %v256
  %v335 = vpack.c.b16 %v259, %v258
  %v336 = vpack.c.b16 %v261, %v260
  %v337 = vpack.c.b16 %v263, %v262
  %v338 = vpack.c.b16 %v265, %v264
  %v339 = vpack.c.b16 %v267, %v266
  %v340 = vpack.c.b16 %v269, %v268
  %v341 = vpack.c.b16 %v271, %v270
  %v342 = vpack.c.b16 %v273, %v272
  %v343 = vpack.c.b16 %v275, %v274
  %v344 = vpack.c.b16 %v277, %v276
  %v345 = vpack.c.b16 %v279, %v278
  %v346 = vpack.c.b16 %v281, %v280
  %v347 = vpack.c.b16 %v283, %v282
  %v348 = vpack.c.b16 %v285, %v284
  %v349 = vpack.c.b16 %v287, %v286
  %v350 = vpack.c.b16 %v289, %v288
  %v351 = vpack.c.b16 %v291, %v290
  %v352 = vpack.c.b16 %v293, %v292
  %v353 = vpack.c.b16 %v295, %v294
  %v354 = vpack.c.b16 %v297, %v296
  %v355 = vpack.c.b16 %v299, %v298
  %v356 = vpack.c.b16 %v301, %v300
  %v357 = vpack.c.b16 %v303, %v302
  %v358 = vpack.c.b16 %v305, %v304
  %v359 = vpack.c.b16 %v307, %v306
  %v360 = vpack.c.b16 %v309, %v308
  %v361 = vpack.c.b16 %v311, %v310
  %v362 = vpack.c.b16 %v313, %v312
  %v363 = vpack.c.b16 %v315, %v314
  %v364 = vpack.c.b16 %v317, %v316
  %v365 = vpack.c.b16 %v319, %v318
  %v366 = vpack.c.b16 %v321, %v320
  %v367 = vpack.c.b16 %v323, %v322
  %v368 = vpack.c.b16 %v325, %v324
  %v369 = vpack.c.b16 %v327, %v326
  %v370 = vpack.c.b16 %v329, %v328
  %v371 = vpack.c.b16 %v331, %v330
  %412 = vmatprep.subr.bf16.mxu0 0
  %413 = vmatpush1.bf16.msra.mxu0 %v339
  %414 = vmatprep.subr.bf16.mxu0 0
  %415 = vmatpush1.bf16.msra.mxu0 %v338
  %416 = vmatprep.subr.bf16.mxu0 0
  %417 = vmatpush1.bf16.msra.mxu0 %v337
  %418 = vmatprep.subr.bf16.mxu0 0
  %419 = vmatpush1.bf16.msra.mxu0 %v336
  %420 = vmatprep.subr.bf16.mxu0 0
  %421 = vmatpush1.bf16.msra.mxu0 %v335
  %422 = vmatprep.subr.bf16.mxu0 0
  %423 = vmatpush1.bf16.msra.mxu0 %v334
  %424 = vmatprep.subr.bf16.mxu0 0
  %425 = vmatpush1.bf16.msra.mxu0 %v333
  %426 = vmatprep.subr.bf16.mxu0 0
  %427 = vmatpush1.bf16.msra.mxu0 %v332
  %428 = vmatprep.subr.bf16.mxu0 0
  %429 = vmatpush2.bf16.msra.mxu0 %v347
  %430 = vmatprep.subr.bf16.mxu0 0
  %431 = vmatpush2.bf16.msra.mxu0 %v346
  %432 = vmatprep.subr.bf16.mxu0 0
  %433 = vmatpush2.bf16.msra.mxu0 %v345
  %434 = vmatprep.subr.bf16.mxu0 0
  %435 = vmatpush2.bf16.msra.mxu0 %v344
  %436 = vmatprep.subr.bf16.mxu0 0
  %437 = vmatpush2.bf16.msra.mxu0 %v343
  %438 = vmatprep.subr.bf16.mxu0 0
  %439 = vmatpush2.bf16.msra.mxu0 %v342
  %440 = vmatprep.subr.bf16.mxu0 0
  %441 = vmatpush2.bf16.msra.mxu0 %v341
  %442 = vmatprep.subr.bf16.mxu0 0
  %443 = vmatpush2.bf16.msra.mxu0 %v340
  %444 = vmatprep.mubr.bf16.mxu0 %v153
  %445 = vmatmul.mubr.bf16.gmra.mxu0 %v152
  %v446 = vpop.f32.mrf.mxu0
  %v447 = vadd.f32 0.0, %v446
  %v448 = vpop.f32.mrf.mxu0
  %v449 = vpop.f32.mrf.mxu0
  %v450 = vadd.f32 0.0, %v449
  %v451 = vpop.f32.mrf.mxu0
  %452 = vmatprep.mubr.bf16.mxu0 %v158
  %453 = vmatmul.mubr.bf16.gmra.mxu0 %v157
  %v454 = vpop.f32.mrf.mxu0
  %v455 = vadd.f32 0.0, %v454
  %v456 = vpop.f32.mrf.mxu0
  %v457 = vpop.f32.mrf.mxu0
  %v458 = vadd.f32 0.0, %v457
  %v459 = vpop.f32.mrf.mxu0
  %460 = vdwg.mxu0
  %461 = vmatprep.subr.bf16.mxu0 0
  %462 = vmatpush1.bf16.msra.mxu0 %v355
  %463 = vmatprep.subr.bf16.mxu0 0
  %464 = vmatpush1.bf16.msra.mxu0 %v354
  %465 = vmatprep.subr.bf16.mxu0 0
  %466 = vmatpush1.bf16.msra.mxu0 %v353
  %467 = vmatprep.subr.bf16.mxu0 0
  %468 = vmatpush1.bf16.msra.mxu0 %v352
  %469 = vmatprep.subr.bf16.mxu0 0
  %470 = vmatpush1.bf16.msra.mxu0 %v351
  %471 = vmatprep.subr.bf16.mxu0 0
  %472 = vmatpush1.bf16.msra.mxu0 %v350
  %473 = vmatprep.subr.bf16.mxu0 0
  %474 = vmatpush1.bf16.msra.mxu0 %v349
  %475 = vmatprep.subr.bf16.mxu0 0
  %476 = vmatpush1.bf16.msra.mxu0 %v348
  %477 = vmatprep.subr.bf16.mxu0 0
  %478 = vmatpush2.bf16.msra.mxu0 %v363
  %479 = vmatprep.subr.bf16.mxu0 0
  %480 = vmatpush2.bf16.msra.mxu0 %v362
  %481 = vmatprep.subr.bf16.mxu0 0
  %482 = vmatpush2.bf16.msra.mxu0 %v361
  %483 = vmatprep.subr.bf16.mxu0 0
  %484 = vmatpush2.bf16.msra.mxu0 %v360
  %485 = vmatprep.subr.bf16.mxu0 0
  %486 = vmatpush2.bf16.msra.mxu0 %v359
  %487 = vmatprep.subr.bf16.mxu0 0
  %488 = vmatpush2.bf16.msra.mxu0 %v358
  %489 = vmatprep.subr.bf16.mxu0 0
  %490 = vmatpush2.bf16.msra.mxu0 %v357
  %491 = vmatprep.subr.bf16.mxu0 0
  %492 = vmatpush2.bf16.msra.mxu0 %v356
  %493 = vmatprep.mubr.bf16.mxu0 %v155
  %494 = vmatmul.mubr.bf16.gmra.mxu0 %v154
  %v495 = vpop.f32.mrf.mxu0
  %v496 = vadd.f32 %v447, %v495
  %v497 = vpop.f32.mrf.mxu0
  %v498 = vpop.f32.mrf.mxu0
  %v499 = vadd.f32 %v450, %v498
  %v500 = vpop.f32.mrf.mxu0
  %501 = vmatprep.mubr.bf16.mxu0 %v160
  %502 = vmatmul.mubr.bf16.gmra.mxu0 %v159
  %v503 = vpop.f32.mrf.mxu0
  %v504 = vadd.f32 %v455, %v503
  %v505 = vpop.f32.mrf.mxu0
  %v506 = vpop.f32.mrf.mxu0
  %v507 = vadd.f32 %v458, %v506
  %v508 = vpop.f32.mrf.mxu0
  %509 = vdwg.mxu0
  %510 = vmatprep.subr.bf16.mxu0 0
  %511 = vmatpush1.bf16.msra.mxu0 %v371
  %512 = vmatprep.subr.bf16.mxu0 0
  %513 = vmatpush1.bf16.msra.mxu0 %v370
  %514 = vmatprep.subr.bf16.mxu0 0
  %515 = vmatpush1.bf16.msra.mxu0 %v369
  %516 = vmatprep.subr.bf16.mxu0 0
  %517 = vmatpush1.bf16.msra.mxu0 %v368
  %518 = vmatprep.subr.bf16.mxu0 0
  %519 = vmatpush1.bf16.msra.mxu0 %v367
  %520 = vmatprep.subr.bf16.mxu0 0
  %521 = vmatpush1.bf16.msra.mxu0 %v366
  %522 = vmatprep.subr.bf16.mxu0 0
  %523 = vmatpush1.bf16.msra.mxu0 %v365
  %524 = vmatprep.subr.bf16.mxu0 0
  %525 = vmatpush1.bf16.msra.mxu0 %v364
  %526 = vmatprep.subr.bf16.mxu0 0
  %527 = vmatpush2.bf16.msra.mxu0 0
  %528 = vmatprep.subr.bf16.mxu0 0
  %529 = vmatpush2.bf16.msra.mxu0 0
  %530 = vmatprep.subr.bf16.mxu0 0
  %531 = vmatpush2.bf16.msra.mxu0 0
  %532 = vmatprep.subr.bf16.mxu0 0
  %533 = vmatpush2.bf16.msra.mxu0 0
  %534 = vmatprep.subr.bf16.mxu0 0
  %535 = vmatpush2.bf16.msra.mxu0 0
  %536 = vmatprep.subr.bf16.mxu0 0
  %537 = vmatpush2.bf16.msra.mxu0 0
  %538 = vmatprep.subr.bf16.mxu0 0
  %539 = vmatpush2.bf16.msra.mxu0 0
  %540 = vmatprep.subr.bf16.mxu0 0
  %541 = vmatpush2.bf16.msra.mxu0 0
  %542 = vmatprep.mubr.bf16.mxu0 0
  %543 = vmatmul.mubr.bf16.gmra.mxu0 %v156
  %v544 = vpop.f32.mrf.mxu0
  %v545 = vadd.f32 %v496, %v544
  %v546 = vpop.f32.mrf.mxu0
  %v547 = vpop.f32.mrf.mxu0
  %v548 = vadd.f32 %v499, %v547
  %v549 = vpop.f32.mrf.mxu0
  %550 = vmatprep.mubr.bf16.mxu0 0
  %551 = vmatmul.mubr.bf16.gmra.mxu0 %v161
  %v552 = vpop.f32.mrf.mxu0
  %v553 = vadd.f32 %v504, %v552
  %v554 = vpop.f32.mrf.mxu0
  %v555 = vpop.f32.mrf.mxu0
  %v556 = vadd.f32 %v507, %v555
  %v557 = vpop.f32.mrf.mxu0
  %558 = vdwg.mxu0
  %v559 = vadd.f32 %v24, %v545
  %v560 = vadd.f32 %v25, %v548
  %v561 = vadd.f32 %v26, %v553
  %v562 = vadd.f32 %v27, %v556
  %vm563 = vcmask 261120
  %564 = vst.msk [vmem:[#allocation2] sm:$0xff] %vm563, %v559
  %565 = vst.msk [vmem:[#allocation2 + $0x8] sm:$0xff] %vm563, %v560
  %566 = vst.msk [vmem:[#allocation2 + $0x10] sm:$0xff] %vm563, %v561
  %567 = vst.msk [vmem:[#allocation2 + $0x18] sm:$0xff] %vm563, %v562
  // Predicated region
  $region18: #{detail_capture_forward.11} parent=0 // pred_check
    %p568 = pneg %p15
  $region19: #{detail_capture_forward.11} parent=0 // pred_check_branch
    %570 = sbr.rel (%p568) target = $region21
  $region20: #{detail_capture_forward.11} parent=0 // pred_region
    %v571 = vld [vmem:[#allocation2] sm:$0xff]
    %v572 = vld [vmem:[#allocation2 + $0x8] sm:$0xff]
    %v573 = vld [vmem:[#allocation2 + $0x10] sm:$0xff]
    %v574 = vld [vmem:[#allocation2 + $0x18] sm:$0xff]
    %v575 = vld [vmem:[%s2] sm:$0x1]
    %v577 = vlaneseq
    %v578 = vshrl.u32 %v577, 7
    %v579 = vsub.s32 0, %v578
    %v580 = vrot.slane %v575, %v579
    %v582 = vadd.f32 %v571, %v580
    %v583 = vadd.f32 %v572, %v580
    %v584 = vadd.f32 %v573, %v580
    %v585 = vadd.f32 %v574, %v580
    %v586 = vmax.f32 %v582, 0.0
    %v587 = vmax.f32 %v583, 0.0
    %v588 = vmax.f32 %v584, 0.0
    %v589 = vmax.f32 %v585, 0.0
    %v590 = vpack.c.bf16 %v587, %v586
    %v591 = vpack.c.bf16 %v589, %v588
    %v594 = vunpack.c.l.b16 %v590
    %v595 = vunpack.c.h.b16 %v590
    %v596 = vunpack.c.l.b16 %v591
    %v597 = vunpack.c.h.b16 %v591
    %v598 = vpack.c.b16 %v594, %v594
    %v599 = vpack.c.b16 %v595, %v595
    %v600 = vpack.c.b16 %v596, %v596
    %v601 = vpack.c.b16 %v597, %v597
    %vm606 = vcmask 257024
    %607 = vst.msk [vmem:[%s3] sm:$0xf] %vm606, %v598
    %608 = vst.msk [vmem:[%s3 + $0x4] sm:$0xf] %vm606, %v599
    %609 = vst.msk [vmem:[%s3 + $0x8] sm:$0xf] %vm606, %v600
    %610 = vst.msk [vmem:[%s3 + $0xc] sm:$0xf] %vm606, %v601
  $region21: #{detail_capture_forward.11} parent=0 // pred_fallthru
    _
  // Predicated region
  $region22: #{detail_capture_forward.11} parent=0 // pred_check
    _
  $region23: #{detail_capture_forward.11} parent=0 // pred_check_branch
    %612 = sbr.rel (0) target = $region25
  $region24: #{detail_capture_forward.11} parent=0 // pred_region
    _
  $region25: #{detail_capture_forward.11} parent=0 // pred_fallthru
    _
  // Predicated region
  $region26: #{detail_capture_forward.11} parent=0 // pred_check
    _
  $region27: #{detail_capture_forward.11} parent=0 // pred_check_branch
    %614 = sbr.rel (0) target = $region29
  $region28: #{detail_capture_forward.11} parent=0 // pred_region
    _
  $region29: #{detail_capture_forward.11} parent=0 // pred_fallthru
    _

// kernel: detail_capture_forward.12
$region0: #{detail_capture_forward.12}
  #allocation0 [shape = 'u32[]', space=smem, size = 0x4, offset = 0x4, fixed_abs, tag = 'smem constant byte address 0x4 - core index']
  #allocation1 [shape = 'u32[144,128]{1,0:T(1,128)}', space=vmem, size = 0x12000, scoped, tag = 'internal scratch']
  #allocation2 [shape = 'f32[128,16]{1,0:T(8,128)}', space=vmem, size = 0x10000, scoped, tag = 'scratch operand']
  %s0 = inlined_call_operand.vmem [shape: bf16[128,512], index: 0, kind: input, shape index: {}]
  %s1 = inlined_call_operand.vmem [shape: bf16[512,16], index: 1, kind: input, shape index: {}]
  %s2 = inlined_call_operand.vmem [shape: f32[1,16], index: 2, kind: input, shape index: {}]
  %s3 = inlined_call_operand.vmem [shape: bf16[128,16], index: 3, kind: output, shape index: {}]
  %s4 = sld [smem:[#allocation0]]
  $region30: #{detail_capture_forward.12} parent=0
    _
  %s6 = ssub.s32 1, %s4
  %s7 = scalar_select 0, %s6, %s4
  // Predicated region
  $region2: #{detail_capture_forward.12} parent=0 // pred_check
    _
  $region3: #{detail_capture_forward.12} parent=0 // pred_check_branch
    %9 = sbr.rel (0) target = $region5
  $region4: #{detail_capture_forward.12} parent=0 // pred_region
    _
  $region5: #{detail_capture_forward.12} parent=0 // pred_fallthru
    _
  // Predicated region
  $region6: #{detail_capture_forward.12} parent=0 // pred_check
    _
  $region7: #{detail_capture_forward.12} parent=0 // pred_check_branch
    %11 = sbr.rel (0) target = $region9
  $region8: #{detail_capture_forward.12} parent=0 // pred_region
    _
  $region9: #{detail_capture_forward.12} parent=0 // pred_fallthru
    _
  // Predicated region
  $region10: #{detail_capture_forward.12} parent=0 // pred_check
    _
  $region11: #{detail_capture_forward.12} parent=0 // pred_check_branch
    %13 = sbr.rel (0) target = $region13
  $region12: #{detail_capture_forward.12} parent=0 // pred_region
    _
  $region13: #{detail_capture_forward.12} parent=0 // pred_fallthru
    _
  %p15 = scmp.eq.s32.totalorder 0, 0
  // Predicated region
  $region14: #{detail_capture_forward.12} parent=0 // pred_check
    %p16 = pneg %p15
  $region15: #{detail_capture_forward.12} parent=0 // pred_check_branch
    %18 = sbr.rel (%p16) target = $region17
  $region16: #{detail_capture_forward.12} parent=0 // pred_region
    %vm19 = vcmask 130048
    %20 = vst.msk [vmem:[#allocation2] sm:$0xff] %vm19, 0.0
    %21 = vst.msk [vmem:[#allocation2 + $0x8] sm:$0xff] %vm19, 0.0
    %22 = vst.msk [vmem:[#allocation2 + $0x10] sm:$0xff] %vm19, 0.0
    %23 = vst.msk [vmem:[#allocation2 + $0x18] sm:$0xff] %vm19, 0.0
    %24 = vst.msk [vmem:[#allocation2 + $0x20] sm:$0xff] %vm19, 0.0
    %25 = vst.msk [vmem:[#allocation2 + $0x28] sm:$0xff] %vm19, 0.0
    %26 = vst.msk [vmem:[#allocation2 + $0x30] sm:$0xff] %vm19, 0.0
    %27 = vst.msk [vmem:[#allocation2 + $0x38] sm:$0xff] %vm19, 0.0
    %28 = vst.msk [vmem:[#allocation2 + $0x40] sm:$0xff] %vm19, 0.0
    %29 = vst.msk [vmem:[#allocation2 + $0x48] sm:$0xff] %vm19, 0.0
    %30 = vst.msk [vmem:[#allocation2 + $0x50] sm:$0xff] %vm19, 0.0
    %31 = vst.msk [vmem:[#allocation2 + $0x58] sm:$0xff] %vm19, 0.0
    %32 = vst.msk [vmem:[#allocation2 + $0x60] sm:$0xff] %vm19, 0.0
    %33 = vst.msk [vmem:[#allocation2 + $0x68] sm:$0xff] %vm19, 0.0
    %34 = vst.msk [vmem:[#allocation2 + $0x70] sm:$0xff] %vm19, 0.0
    %35 = vst.msk [vmem:[#allocation2 + $0x78] sm:$0xff] %vm19, 0.0
  $region17: #{detail_capture_forward.12} parent=0 // pred_fallthru
    _
  %v36 = vld [vmem:[#allocation2] sm:$0xff]
  %v37 = vld [vmem:[#allocation2 + $0x8] sm:$0xff]
  %v38 = vld [vmem:[#allocation2 + $0x10] sm:$0xff]
  %v39 = vld [vmem:[#allocation2 + $0x18] sm:$0xff]
  %v40 = vld [vmem:[#allocation2 + $0x20] sm:$0xff]
  %v41 = vld [vmem:[#allocation2 + $0x28] sm:$0xff]
  %v42 = vld [vmem:[#allocation2 + $0x30] sm:$0xff]
  %v43 = vld [vmem:[#allocation2 + $0x38] sm:$0xff]
  %v44 = vld [vmem:[#allocation2 + $0x40] sm:$0xff]
  %v45 = vld [vmem:[#allocation2 + $0x48] sm:$0xff]
  %v46 = vld [vmem:[#allocation2 + $0x50] sm:$0xff]
  %v47 = vld [vmem:[#allocation2 + $0x58] sm:$0xff]
  %v48 = vld [vmem:[#allocation2 + $0x60] sm:$0xff]
  %v49 = vld [vmem:[#allocation2 + $0x68] sm:$0xff]
  %v50 = vld [vmem:[#allocation2 + $0x70] sm:$0xff]
  %v51 = vld [vmem:[#allocation2 + $0x78] sm:$0xff]
  %v52 = vld [vmem:[%s0] sm:$0xff]
  %v53 = vld [vmem:[%s0 + $0x8] sm:$0xff]
  %v54 = vld [vmem:[%s0 + $0x10] sm:$0xff]
  %v55 = vld [vmem:[%s0 + $0x18] sm:$0xff]
  %v56 = vld [vmem:[%s0 + $0x20] sm:$0xff]
  %v57 = vld [vmem:[%s0 + $0x28] sm:$0xff]
  %v58 = vld [vmem:[%s0 + $0x30] sm:$0xff]
  %v59 = vld [vmem:[%s0 + $0x38] sm:$0xff]
  %v60 = vld [vmem:[%s0 + $0x40] sm:$0xff]
  %v61 = vld [vmem:[%s0 + $0x48] sm:$0xff]
  %v62 = vld [vmem:[%s0 + $0x50] sm:$0xff]
  %v63 = vld [vmem:[%s0 + $0x58] sm:$0xff]
  %v64 = vld [vmem:[%s0 + $0x60] sm:$0xff]
  %v65 = vld [vmem:[%s0 + $0x68] sm:$0xff]
  %v66 = vld [vmem:[%s0 + $0x70] sm:$0xff]
  %v67 = vld [vmem:[%s0 + $0x78] sm:$0xff]
  %v68 = vld [vmem:[%s0 + $0x80] sm:$0xff]
  %v69 = vld [vmem:[%s0 + $0x88] sm:$0xff]
  %v70 = vld [vmem:[%s0 + $0x90] sm:$0xff]
  %v71 = vld [vmem:[%s0 + $0x98] sm:$0xff]
  %v72 = vld [vmem:[%s0 + $0xa0] sm:$0xff]
  %v73 = vld [vmem:[%s0 + $0xa8] sm:$0xff]
  %v74 = vld [vmem:[%s0 + $0xb0] sm:$0xff]
  %v75 = vld [vmem:[%s0 + $0xb8] sm:$0xff]
  %v76 = vld [vmem:[%s0 + $0xc0] sm:$0xff]
  %v77 = vld [vmem:[%s0 + $0xc8] sm:$0xff]
  %v78 = vld [vmem:[%s0 + $0xd0] sm:$0xff]
  %v79 = vld [vmem:[%s0 + $0xd8] sm:$0xff]
  %v80 = vld [vmem:[%s0 + $0xe0] sm:$0xff]
  %v81 = vld [vmem:[%s0 + $0xe8] sm:$0xff]
  %v82 = vld [vmem:[%s0 + $0xf0] sm:$0xff]
  %v83 = vld [vmem:[%s0 + $0xf8] sm:$0xff]
  %v84 = vld [vmem:[%s1] sm:$0xf]
  %v85 = vld [vmem:[%s1 + $0x4] sm:$0xf]
  %v86 = vld [vmem:[%s1 + $0x8] sm:$0xf]
  %v87 = vld [vmem:[%s1 + $0xc] sm:$0xf]
  %v88 = vld [vmem:[%s1 + $0x10] sm:$0xf]
  %v89 = vld [vmem:[%s1 + $0x14] sm:$0xf]
  %v90 = vld [vmem:[%s1 + $0x18] sm:$0xf]
  %v91 = vld [vmem:[%s1 + $0x1c] sm:$0xf]
  %v92 = vld [vmem:[%s1 + $0x20] sm:$0xf]
  %v93 = vld [vmem:[%s1 + $0x24] sm:$0xf]
  %v94 = vld [vmem:[%s1 + $0x28] sm:$0xf]
  %v95 = vld [vmem:[%s1 + $0x2c] sm:$0xf]
  %v96 = vld [vmem:[%s1 + $0x30] sm:$0xf]
  %v97 = vld [vmem:[%s1 + $0x34] sm:$0xf]
  %v98 = vld [vmem:[%s1 + $0x38] sm:$0xf]
  %v99 = vld [vmem:[%s1 + $0x3c] sm:$0xf]
  %v100 = vld [vmem:[%s1 + $0x40] sm:$0xf]
  %v101 = vld [vmem:[%s1 + $0x44] sm:$0xf]
  %v102 = vld [vmem:[%s1 + $0x48] sm:$0xf]
  %v103 = vld [vmem:[%s1 + $0x4c] sm:$0xf]
  %v104 = vld [vmem:[%s1 + $0x50] sm:$0xf]
  %v105 = vld [vmem:[%s1 + $0x54] sm:$0xf]
  %v106 = vld [vmem:[%s1 + $0x58] sm:$0xf]
  %v107 = vld [vmem:[%s1 + $0x5c] sm:$0xf]
  %v108 = vld [vmem:[%s1 + $0x60] sm:$0xf]
  %v109 = vld [vmem:[%s1 + $0x64] sm:$0xf]
  %v110 = vld [vmem:[%s1 + $0x68] sm:$0xf]
  %v111 = vld [vmem:[%s1 + $0x6c] sm:$0xf]
  %v112 = vld [vmem:[%s1 + $0x70] sm:$0xf]
  %v113 = vld [vmem:[%s1 + $0x74] sm:$0xf]
  %v114 = vld [vmem:[%s1 + $0x78] sm:$0xf]
  %v115 = vld [vmem:[%s1 + $0x7c] sm:$0xf]
  %v116 = vld [vmem:[%s1 + $0x80] sm:$0xf]
  %v117 = vld [vmem:[%s1 + $0x84] sm:$0xf]
  %v118 = vld [vmem:[%s1 + $0x88] sm:$0xf]
  %v119 = vld [vmem:[%s1 + $0x8c] sm:$0xf]
  %v120 = vld [vmem:[%s1 + $0x90] sm:$0xf]
  %v121 = vld [vmem:[%s1 + $0x94] sm:$0xf]
  %v122 = vld [vmem:[%s1 + $0x98] sm:$0xf]
  %v123 = vld [vmem:[%s1 + $0x9c] sm:$0xf]
  %v124 = vld [vmem:[%s1 + $0xa0] sm:$0xf]
  %v125 = vld [vmem:[%s1 + $0xa4] sm:$0xf]
  %v126 = vld [vmem:[%s1 + $0xa8] sm:$0xf]
  %v127 = vld [vmem:[%s1 + $0xac] sm:$0xf]
  %v128 = vld [vmem:[%s1 + $0xb0] sm:$0xf]
  %v129 = vld [vmem:[%s1 + $0xb4] sm:$0xf]
  %v130 = vld [vmem:[%s1 + $0xb8] sm:$0xf]
  %v131 = vld [vmem:[%s1 + $0xbc] sm:$0xf]
  %v132 = vld [vmem:[%s1 + $0xc0] sm:$0xf]
  %v133 = vld [vmem:[%s1 + $0xc4] sm:$0xf]
  %v134 = vld [vmem:[%s1 + $0xc8] sm:$0xf]
  %v135 = vld [vmem:[%s1 + $0xcc] sm:$0xf]
  %v136 = vld [vmem:[%s1 + $0xd0] sm:$0xf]
  %v137 = vld [vmem:[%s1 + $0xd4] sm:$0xf]
  %v138 = vld [vmem:[%s1 + $0xd8] sm:$0xf]
  %v139 = vld [vmem:[%s1 + $0xdc] sm:$0xf]
  %v140 = vld [vmem:[%s1 + $0xe0] sm:$0xf]
  %v141 = vld [vmem:[%s1 + $0xe4] sm:$0xf]
  %v142 = vld [vmem:[%s1 + $0xe8] sm:$0xf]
  %v143 = vld [vmem:[%s1 + $0xec] sm:$0xf]
  %v144 = vld [vmem:[%s1 + $0xf0] sm:$0xf]
  %v145 = vld [vmem:[%s1 + $0xf4] sm:$0xf]
  %v146 = vld [vmem:[%s1 + $0xf8] sm:$0xf]
  %v147 = vld [vmem:[%s1 + $0xfc] sm:$0xf]
  %v180 = vunpack.c.l.b16 %v52
  %v181 = vunpack.c.h.b16 %v52
  %v182 = vunpack.c.l.b16 %v53
  %v183 = vunpack.c.h.b16 %v53
  %v184 = vunpack.c.l.b16 %v54
  %v185 = vunpack.c.h.b16 %v54
  %v186 = vunpack.c.l.b16 %v55
  %v187 = vunpack.c.h.b16 %v55
  %v188 = vunpack.c.l.b16 %v56
  %v189 = vunpack.c.h.b16 %v56
  %v190 = vunpack.c.l.b16 %v57
  %v191 = vunpack.c.h.b16 %v57
  %v192 = vunpack.c.l.b16 %v58
  %v193 = vunpack.c.h.b16 %v58
  %v194 = vunpack.c.l.b16 %v59
  %v195 = vunpack.c.h.b16 %v59
  %v196 = vunpack.c.l.b16 %v60
  %v197 = vunpack.c.h.b16 %v60
  %v198 = vunpack.c.l.b16 %v61
  %v199 = vunpack.c.h.b16 %v61
  %v200 = vunpack.c.l.b16 %v62
  %v201 = vunpack.c.h.b16 %v62
  %v202 = vunpack.c.l.b16 %v63
  %v203 = vunpack.c.h.b16 %v63
  %v204 = vunpack.c.l.b16 %v64
  %v205 = vunpack.c.h.b16 %v64
  %v206 = vunpack.c.l.b16 %v65
  %v207 = vunpack.c.h.b16 %v65
  %v208 = vunpack.c.l.b16 %v66
  %v209 = vunpack.c.h.b16 %v66
  %v210 = vunpack.c.l.b16 %v67
  %v211 = vunpack.c.h.b16 %v67
  %v212 = vunpack.c.l.b16 %v68
  %v213 = vunpack.c.h.b16 %v68
  %v214 = vunpack.c.l.b16 %v69
  %v215 = vunpack.c.h.b16 %v69
  %v216 = vunpack.c.l.b16 %v70
  %v217 = vunpack.c.h.b16 %v70
  %v218 = vunpack.c.l.b16 %v71
  %v219 = vunpack.c.h.b16 %v71
  %v220 = vunpack.c.l.b16 %v72
  %v221 = vunpack.c.h.b16 %v72
  %v222 = vunpack.c.l.b16 %v73
  %v223 = vunpack.c.h.b16 %v73
  %v224 = vunpack.c.l.b16 %v74
  %v225 = vunpack.c.h.b16 %v74
  %v226 = vunpack.c.l.b16 %v75
  %v227 = vunpack.c.h.b16 %v75
  %v228 = vunpack.c.l.b16 %v76
  %v229 = vunpack.c.h.b16 %v76
  %v230 = vunpack.c.l.b16 %v77
  %v231 = vunpack.c.h.b16 %v77
  %v232 = vunpack.c.l.b16 %v78
  %v233 = vunpack.c.h.b16 %v78
  %v234 = vunpack.c.l.b16 %v79
  %v235 = vunpack.c.h.b16 %v79
  %v236 = vunpack.c.l.b16 %v80
  %v237 = vunpack.c.h.b16 %v80
  %v238 = vunpack.c.l.b16 %v81
  %v239 = vunpack.c.h.b16 %v81
  %v240 = vunpack.c.l.b16 %v82
  %v241 = vunpack.c.h.b16 %v82
  %v242 = vunpack.c.l.b16 %v83
  %v243 = vunpack.c.h.b16 %v83
  %v244 = vpack.c.b16 %v184, %v180
  %v245 = vpack.c.b16 %v185, %v181
  %v246 = vpack.c.b16 %v186, %v182
  %v247 = vpack.c.b16 %v187, %v183
  %v248 = vpack.c.b16 %v192, %v188
  %v249 = vpack.c.b16 %v193, %v189
  %v250 = vpack.c.b16 %v194, %v190
  %v251 = vpack.c.b16 %v195, %v191
  %v252 = vpack.c.b16 %v200, %v196
  %v253 = vpack.c.b16 %v201, %v197
  %v254 = vpack.c.b16 %v202, %v198
  %v255 = vpack.c.b16 %v203, %v199
  %v256 = vpack.c.b16 %v208, %v204
  %v257 = vpack.c.b16 %v209, %v205
  %v258 = vpack.c.b16 %v210, %v206
  %v259 = vpack.c.b16 %v211, %v207
  %v260 = vpack.c.b16 %v216, %v212
  %v261 = vpack.c.b16 %v217, %v213
  %v262 = vpack.c.b16 %v218, %v214
  %v263 = vpack.c.b16 %v219, %v215
  %v264 = vpack.c.b16 %v224, %v220
  %v265 = vpack.c.b16 %v225, %v221
  %v266 = vpack.c.b16 %v226, %v222
  %v267 = vpack.c.b16 %v227, %v223
  %v268 = vpack.c.b16 %v232, %v228
  %v269 = vpack.c.b16 %v233, %v229
  %v270 = vpack.c.b16 %v234, %v230
  %v271 = vpack.c.b16 %v235, %v231
  %v272 = vpack.c.b16 %v240, %v236
  %v273 = vpack.c.b16 %v241, %v237
  %v274 = vpack.c.b16 %v242, %v238
  %v275 = vpack.c.b16 %v243, %v239
  %v372 = vunpack.c.l.b16 %v84
  %v373 = vunpack.c.l.b16 %v85
  %v374 = vunpack.c.l.b16 %v86
  %v375 = vunpack.c.l.b16 %v87
  %v376 = vunpack.c.l.b16 %v88
  %v377 = vunpack.c.l.b16 %v89
  %v378 = vunpack.c.l.b16 %v90
  %v379 = vunpack.c.l.b16 %v91
  %v380 = vunpack.c.l.b16 %v92
  %v381 = vunpack.c.l.b16 %v93
  %v382 = vunpack.c.l.b16 %v94
  %v383 = vunpack.c.l.b16 %v95
  %v384 = vunpack.c.l.b16 %v96
  %v385 = vunpack.c.l.b16 %v97
  %v386 = vunpack.c.l.b16 %v98
  %v387 = vunpack.c.l.b16 %v99
  %v388 = vunpack.c.l.b16 %v100
  %v389 = vunpack.c.l.b16 %v101
  %v390 = vunpack.c.l.b16 %v102
  %v391 = vunpack.c.l.b16 %v103
  %v392 = vunpack.c.l.b16 %v104
  %v393 = vunpack.c.l.b16 %v105
  %v394 = vunpack.c.l.b16 %v106
  %v395 = vunpack.c.l.b16 %v107
  %v396 = vunpack.c.l.b16 %v108
  %v397 = vunpack.c.l.b16 %v109
  %v398 = vunpack.c.l.b16 %v110
  %v399 = vunpack.c.l.b16 %v111
  %v400 = vunpack.c.l.b16 %v112
  %v401 = vunpack.c.l.b16 %v113
  %v402 = vunpack.c.l.b16 %v114
  %v403 = vunpack.c.l.b16 %v115
  %v404 = vunpack.c.l.b16 %v116
  %v405 = vunpack.c.l.b16 %v117
  %v406 = vunpack.c.l.b16 %v118
  %v407 = vunpack.c.l.b16 %v119
  %v408 = vunpack.c.l.b16 %v120
  %v409 = vunpack.c.l.b16 %v121
  %v410 = vunpack.c.l.b16 %v122
  %v411 = vunpack.c.l.b16 %v123
  %v412 = vunpack.c.l.b16 %v124
  %v413 = vunpack.c.l.b16 %v125
  %v414 = vunpack.c.l.b16 %v126
  %v415 = vunpack.c.l.b16 %v127
  %v416 = vunpack.c.l.b16 %v128
  %v417 = vunpack.c.l.b16 %v129
  %v418 = vunpack.c.l.b16 %v130
  %v419 = vunpack.c.l.b16 %v131
  %v420 = vunpack.c.l.b16 %v132
  %v421 = vunpack.c.l.b16 %v133
  %v422 = vunpack.c.l.b16 %v134
  %v423 = vunpack.c.l.b16 %v135
  %v424 = vunpack.c.l.b16 %v136
  %v425 = vunpack.c.l.b16 %v137
  %v426 = vunpack.c.l.b16 %v138
  %v427 = vunpack.c.l.b16 %v139
  %v428 = vunpack.c.l.b16 %v140
  %v429 = vunpack.c.l.b16 %v141
  %v430 = vunpack.c.l.b16 %v142
  %v431 = vunpack.c.l.b16 %v143
  %v432 = vunpack.c.l.b16 %v144
  %v433 = vunpack.c.l.b16 %v145
  %v434 = vunpack.c.l.b16 %v146
  %v435 = vunpack.c.l.b16 %v147
  %v436 = vpack.c.b16 %v373, %v372
  %v437 = vpack.c.b16 %v375, %v374
  %v438 = vpack.c.b16 %v377, %v376
  %v439 = vpack.c.b16 %v379, %v378
  %v440 = vpack.c.b16 %v381, %v380
  %v441 = vpack.c.b16 %v383, %v382
  %v442 = vpack.c.b16 %v385, %v384
  %v443 = vpack.c.b16 %v387, %v386
  %v444 = vpack.c.b16 %v389, %v388
  %v445 = vpack.c.b16 %v391, %v390
  %v446 = vpack.c.b16 %v393, %v392
  %v447 = vpack.c.b16 %v395, %v394
  %v448 = vpack.c.b16 %v397, %v396
  %v449 = vpack.c.b16 %v399, %v398
  %v450 = vpack.c.b16 %v401, %v400
  %v451 = vpack.c.b16 %v403, %v402
  %v452 = vpack.c.b16 %v405, %v404
  %v453 = vpack.c.b16 %v407, %v406
  %v454 = vpack.c.b16 %v409, %v408
  %v455 = vpack.c.b16 %v411, %v410
  %v456 = vpack.c.b16 %v413, %v412
  %v457 = vpack.c.b16 %v415, %v414
  %v458 = vpack.c.b16 %v417, %v416
  %v459 = vpack.c.b16 %v419, %v418
  %v460 = vpack.c.b16 %v421, %v420
  %v461 = vpack.c.b16 %v423, %v422
  %v462 = vpack.c.b16 %v425, %v424
  %v463 = vpack.c.b16 %v427, %v426
  %v464 = vpack.c.b16 %v429, %v428
  %v465 = vpack.c.b16 %v431, %v430
  %v466 = vpack.c.b16 %v433, %v432
  %v467 = vpack.c.b16 %v435, %v434
  %500 = vmatprep.subr.bf16.mxu0 0
  %501 = vmatpush1.bf16.msra.mxu0 %v443
  %502 = vmatprep.subr.bf16.mxu0 0
  %503 = vmatpush1.bf16.msra.mxu0 %v442
  %504 = vmatprep.subr.bf16.mxu0 0
  %505 = vmatpush1.bf16.msra.mxu0 %v441
  %506 = vmatprep.subr.bf16.mxu0 0
  %507 = vmatpush1.bf16.msra.mxu0 %v440
  %508 = vmatprep.subr.bf16.mxu0 0
  %509 = vmatpush1.bf16.msra.mxu0 %v439
  %510 = vmatprep.subr.bf16.mxu0 0
  %511 = vmatpush1.bf16.msra.mxu0 %v438
  %512 = vmatprep.subr.bf16.mxu0 0
  %513 = vmatpush1.bf16.msra.mxu0 %v437
  %514 = vmatprep.subr.bf16.mxu0 0
  %515 = vmatpush1.bf16.msra.mxu0 %v436
  %516 = vmatprep.subr.bf16.mxu0 0
  %517 = vmatpush2.bf16.msra.mxu0 %v451
  %518 = vmatprep.subr.bf16.mxu0 0
  %519 = vmatpush2.bf16.msra.mxu0 %v450
  %520 = vmatprep.subr.bf16.mxu0 0
  %521 = vmatpush2.bf16.msra.mxu0 %v449
  %522 = vmatprep.subr.bf16.mxu0 0
  %523 = vmatpush2.bf16.msra.mxu0 %v448
  %524 = vmatprep.subr.bf16.mxu0 0
  %525 = vmatpush2.bf16.msra.mxu0 %v447
  %526 = vmatprep.subr.bf16.mxu0 0
  %527 = vmatpush2.bf16.msra.mxu0 %v446
  %528 = vmatprep.subr.bf16.mxu0 0
  %529 = vmatpush2.bf16.msra.mxu0 %v445
  %530 = vmatprep.subr.bf16.mxu0 0
  %531 = vmatpush2.bf16.msra.mxu0 %v444
  %532 = vmatprep.mubr.bf16.mxu0 %v245
  %533 = vmatmul.mubr.bf16.gmra.mxu0 %v244
  %v534 = vpop.f32.mrf.mxu0
  %v535 = vadd.f32 0.0, %v534
  %v536 = vpop.f32.mrf.mxu0
  %v537 = vpop.f32.mrf.mxu0
  %v538 = vadd.f32 0.0, %v537
  %v539 = vpop.f32.mrf.mxu0
  %540 = vmatprep.mubr.bf16.mxu0 %v249
  %541 = vmatmul.mubr.bf16.gmra.mxu0 %v248
  %v542 = vpop.f32.mrf.mxu0
  %v543 = vadd.f32 0.0, %v542
  %v544 = vpop.f32.mrf.mxu0
  %v545 = vpop.f32.mrf.mxu0
  %v546 = vadd.f32 0.0, %v545
  %v547 = vpop.f32.mrf.mxu0
  %548 = vmatprep.mubr.bf16.mxu0 %v253
  %549 = vmatmul.mubr.bf16.gmra.mxu0 %v252
  %v550 = vpop.f32.mrf.mxu0
  %v551 = vadd.f32 0.0, %v550
  %v552 = vpop.f32.mrf.mxu0
  %v553 = vpop.f32.mrf.mxu0
  %v554 = vadd.f32 0.0, %v553
  %v555 = vpop.f32.mrf.mxu0
  %556 = vmatprep.mubr.bf16.mxu0 %v257
  %557 = vmatmul.mubr.bf16.gmra.mxu0 %v256
  %v558 = vpop.f32.mrf.mxu0
  %v559 = vadd.f32 0.0, %v558
  %v560 = vpop.f32.mrf.mxu0
  %v561 = vpop.f32.mrf.mxu0
  %v562 = vadd.f32 0.0, %v561
  %v563 = vpop.f32.mrf.mxu0
  %564 = vmatprep.mubr.bf16.mxu0 %v261
  %565 = vmatmul.mubr.bf16.gmra.mxu0 %v260
  %v566 = vpop.f32.mrf.mxu0
  %v567 = vadd.f32 0.0, %v566
  %v568 = vpop.f32.mrf.mxu0
  %v569 = vpop.f32.mrf.mxu0
  %v570 = vadd.f32 0.0, %v569
  %v571 = vpop.f32.mrf.mxu0
  %572 = vmatprep.mubr.bf16.mxu0 %v265
  %573 = vmatmul.mubr.bf16.gmra.mxu0 %v264
  %v574 = vpop.f32.mrf.mxu0
  %v575 = vadd.f32 0.0, %v574
  %v576 = vpop.f32.mrf.mxu0
  %v577 = vpop.f32.mrf.mxu0
  %v578 = vadd.f32 0.0, %v577
  %v579 = vpop.f32.mrf.mxu0
  %580 = vmatprep.mubr.bf16.mxu0 %v269
  %581 = vmatmul.mubr.bf16.gmra.mxu0 %v268
  %v582 = vpop.f32.mrf.mxu0
  %v583 = vadd.f32 0.0, %v582
  %v584 = vpop.f32.mrf.mxu0
  %v585 = vpop.f32.mrf.mxu0
  %v586 = vadd.f32 0.0, %v585
  %v587 = vpop.f32.mrf.mxu0
  %588 = vmatprep.mubr.bf16.mxu0 %v273
  %589 = vmatmul.mubr.bf16.gmra.mxu0 %v272
  %v590 = vpop.f32.mrf.mxu0
  %v591 = vadd.f32 0.0, %v590
  %v592 = vpop.f32.mrf.mxu0
  %v593 = vpop.f32.mrf.mxu0
  %v594 = vadd.f32 0.0, %v593
  %v595 = vpop.f32.mrf.mxu0
  %596 = vdwg.mxu0
  %597 = vmatprep.subr.bf16.mxu0 0
  %598 = vmatpush1.bf16.msra.mxu0 %v459
  %599 = vmatprep.subr.bf16.mxu0 0
  %600 = vmatpush1.bf16.msra.mxu0 %v458
  %601 = vmatprep.subr.bf16.mxu0 0
  %602 = vmatpush1.bf16.msra.mxu0 %v457
  %603 = vmatprep.subr.bf16.mxu0 0
  %604 = vmatpush1.bf16.msra.mxu0 %v456
  %605 = vmatprep.subr.bf16.mxu0 0
  %606 = vmatpush1.bf16.msra.mxu0 %v455
  %607 = vmatprep.subr.bf16.mxu0 0
  %608 = vmatpush1.bf16.msra.mxu0 %v454
  %609 = vmatprep.subr.bf16.mxu0 0
  %610 = vmatpush1.bf16.msra.mxu0 %v453
  %611 = vmatprep.subr.bf16.mxu0 0
  %612 = vmatpush1.bf16.msra.mxu0 %v452
  %613 = vmatprep.subr.bf16.mxu0 0
  %614 = vmatpush2.bf16.msra.mxu0 %v467
  %615 = vmatprep.subr.bf16.mxu0 0
  %616 = vmatpush2.bf16.msra.mxu0 %v466
  %617 = vmatprep.subr.bf16.mxu0 0
  %618 = vmatpush2.bf16.msra.mxu0 %v465
  %619 = vmatprep.subr.bf16.mxu0 0
  %620 = vmatpush2.bf16.msra.mxu0 %v464
  %621 = vmatprep.subr.bf16.mxu0 0
  %622 = vmatpush2.bf16.msra.mxu0 %v463
  %623 = vmatprep.subr.bf16.mxu0 0
  %624 = vmatpush2.bf16.msra.mxu0 %v462
  %625 = vmatprep.subr.bf16.mxu0 0
  %626 = vmatpush2.bf16.msra.mxu0 %v461
  %627 = vmatprep.subr.bf16.mxu0 0
  %628 = vmatpush2.bf16.msra.mxu0 %v460
  %629 = vmatprep.mubr.bf16.mxu0 %v247
  %630 = vmatmul.mubr.bf16.gmra.mxu0 %v246
  %v631 = vpop.f32.mrf.mxu0
  %v632 = vadd.f32 %v535, %v631
  %v633 = vpop.f32.mrf.mxu0
  %v634 = vpop.f32.mrf.mxu0
  %v635 = vadd.f32 %v538, %v634
  %v636 = vpop.f32.mrf.mxu0
  %637 = vmatprep.mubr.bf16.mxu0 %v251
  %638 = vmatmul.mubr.bf16.gmra.mxu0 %v250
  %v639 = vpop.f32.mrf.mxu0
  %v640 = vadd.f32 %v543, %v639
  %v641 = vpop.f32.mrf.mxu0
  %v642 = vpop.f32.mrf.mxu0
  %v643 = vadd.f32 %v546, %v642
  %v644 = vpop.f32.mrf.mxu0
  %645 = vmatprep.mubr.bf16.mxu0 %v255
  %646 = vmatmul.mubr.bf16.gmra.mxu0 %v254
  %v647 = vpop.f32.mrf.mxu0
  %v648 = vadd.f32 %v551, %v647
  %v649 = vpop.f32.mrf.mxu0
  %v650 = vpop.f32.mrf.mxu0
  %v651 = vadd.f32 %v554, %v650
  %v652 = vpop.f32.mrf.mxu0
  %653 = vmatprep.mubr.bf16.mxu0 %v259
  %654 = vmatmul.mubr.bf16.gmra.mxu0 %v258
  %v655 = vpop.f32.mrf.mxu0
  %v656 = vadd.f32 %v559, %v655
  %v657 = vpop.f32.mrf.mxu0
  %v658 = vpop.f32.mrf.mxu0
  %v659 = vadd.f32 %v562, %v658
  %v660 = vpop.f32.mrf.mxu0
  %661 = vmatprep.mubr.bf16.mxu0 %v263
  %662 = vmatmul.mubr.bf16.gmra.mxu0 %v262
  %v663 = vpop.f32.mrf.mxu0
  %v664 = vadd.f32 %v567, %v663
  %v665 = vpop.f32.mrf.mxu0
  %v666 = vpop.f32.mrf.mxu0
  %v667 = vadd.f32 %v570, %v666
  %v668 = vpop.f32.mrf.mxu0
  %669 = vmatprep.mubr.bf16.mxu0 %v267
  %670 = vmatmul.mubr.bf16.gmra.mxu0 %v266
  %v671 = vpop.f32.mrf.mxu0
  %v672 = vadd.f32 %v575, %v671
  %v673 = vpop.f32.mrf.mxu0
  %v674 = vpop.f32.mrf.mxu0
  %v675 = vadd.f32 %v578, %v674
  %v676 = vpop.f32.mrf.mxu0
  %677 = vmatprep.mubr.bf16.mxu0 %v271
  %678 = vmatmul.mubr.bf16.gmra.mxu0 %v270
  %v679 = vpop.f32.mrf.mxu0
  %v680 = vadd.f32 %v583, %v679
  %v681 = vpop.f32.mrf.mxu0
  %v682 = vpop.f32.mrf.mxu0
  %v683 = vadd.f32 %v586, %v682
  %v684 = vpop.f32.mrf.mxu0
  %685 = vmatprep.mubr.bf16.mxu0 %v275
  %686 = vmatmul.mubr.bf16.gmra.mxu0 %v274
  %v687 = vpop.f32.mrf.mxu0
  %v688 = vadd.f32 %v591, %v687
  %v689 = vpop.f32.mrf.mxu0
  %v690 = vpop.f32.mrf.mxu0
  %v691 = vadd.f32 %v594, %v690
  %v692 = vpop.f32.mrf.mxu0
  %693 = vdwg.mxu0
  %v694 = vadd.f32 %v36, %v632
  %v695 = vadd.f32 %v37, %v635
  %v696 = vadd.f32 %v38, %v640
  %v697 = vadd.f32 %v39, %v643
  %v698 = vadd.f32 %v40, %v648
  %v699 = vadd.f32 %v41, %v651
  %v700 = vadd.f32 %v42, %v656
  %v701 = vadd.f32 %v43, %v659
  %v702 = vadd.f32 %v44, %v664
  %v703 = vadd.f32 %v45, %v667
  %v704 = vadd.f32 %v46, %v672
  %v705 = vadd.f32 %v47, %v675
  %v706 = vadd.f32 %v48, %v680
  %v707 = vadd.f32 %v49, %v683
  %v708 = vadd.f32 %v50, %v688
  %v709 = vadd.f32 %v51, %v691
  %vm710 = vcmask 130048
  %711 = vst.msk [vmem:[#allocation2] sm:$0xff] %vm710, %v694
  %712 = vst.msk [vmem:[#allocation2 + $0x8] sm:$0xff] %vm710, %v695
  %713 = vst.msk [vmem:[#allocation2 + $0x10] sm:$0xff] %vm710, %v696
  %714 = vst.msk [vmem:[#allocation2 + $0x18] sm:$0xff] %vm710, %v697
  %715 = vst.msk [vmem:[#allocation2 + $0x20] sm:$0xff] %vm710, %v698
  %716 = vst.msk [vmem:[#allocation2 + $0x28] sm:$0xff] %vm710, %v699
  %717 = vst.msk [vmem:[#allocation2 + $0x30] sm:$0xff] %vm710, %v700
  %718 = vst.msk [vmem:[#allocation2 + $0x38] sm:$0xff] %vm710, %v701
  %719 = vst.msk [vmem:[#allocation2 + $0x40] sm:$0xff] %vm710, %v702
  %720 = vst.msk [vmem:[#allocation2 + $0x48] sm:$0xff] %vm710, %v703
  %721 = vst.msk [vmem:[#allocation2 + $0x50] sm:$0xff] %vm710, %v704
  %722 = vst.msk [vmem:[#allocation2 + $0x58] sm:$0xff] %vm710, %v705
  %723 = vst.msk [vmem:[#allocation2 + $0x60] sm:$0xff] %vm710, %v706
  %724 = vst.msk [vmem:[#allocation2 + $0x68] sm:$0xff] %vm710, %v707
  %725 = vst.msk [vmem:[#allocation2 + $0x70] sm:$0xff] %vm710, %v708
  %726 = vst.msk [vmem:[#allocation2 + $0x78] sm:$0xff] %vm710, %v709
  // Predicated region
  $region18: #{detail_capture_forward.12} parent=0 // pred_check
    %p727 = pneg %p15
  $region19: #{detail_capture_forward.12} parent=0 // pred_check_branch
    %729 = sbr.rel (%p727) target = $region21
  $region20: #{detail_capture_forward.12} parent=0 // pred_region
    %v730 = vld [vmem:[#allocation2] sm:$0xff]
    %v731 = vld [vmem:[#allocation2 + $0x8] sm:$0xff]
    %v732 = vld [vmem:[#allocation2 + $0x10] sm:$0xff]
    %v733 = vld [vmem:[#allocation2 + $0x18] sm:$0xff]
    %v734 = vld [vmem:[#allocation2 + $0x20] sm:$0xff]
    %v735 = vld [vmem:[#allocation2 + $0x28] sm:$0xff]
    %v736 = vld [vmem:[#allocation2 + $0x30] sm:$0xff]
    %v737 = vld [vmem:[#allocation2 + $0x38] sm:$0xff]
    %v738 = vld [vmem:[#allocation2 + $0x40] sm:$0xff]
    %v739 = vld [vmem:[#allocation2 + $0x48] sm:$0xff]
    %v740 = vld [vmem:[#allocation2 + $0x50] sm:$0xff]
    %v741 = vld [vmem:[#allocation2 + $0x58] sm:$0xff]
    %v742 = vld [vmem:[#allocation2 + $0x60] sm:$0xff]
    %v743 = vld [vmem:[#allocation2 + $0x68] sm:$0xff]
    %v744 = vld [vmem:[#allocation2 + $0x70] sm:$0xff]
    %v745 = vld [vmem:[#allocation2 + $0x78] sm:$0xff]
    %v746 = vld [vmem:[%s2] sm:$0x1]
    %v748 = vlaneseq
    %v749 = vshrl.u32 %v748, 7
    %v750 = vsub.s32 0, %v749
    %v751 = vrot.slane %v746, %v750
    %v753 = vadd.f32 %v730, %v751
    %v754 = vadd.f32 %v731, %v751
    %v755 = vadd.f32 %v732, %v751
    %v756 = vadd.f32 %v733, %v751
    %v757 = vadd.f32 %v734, %v751
    %v758 = vadd.f32 %v735, %v751
    %v759 = vadd.f32 %v736, %v751
    %v760 = vadd.f32 %v737, %v751
    %v761 = vadd.f32 %v738, %v751
    %v762 = vadd.f32 %v739, %v751
    %v763 = vadd.f32 %v740, %v751
    %v764 = vadd.f32 %v741, %v751
    %v765 = vadd.f32 %v742, %v751
    %v766 = vadd.f32 %v743, %v751
    %v767 = vadd.f32 %v744, %v751
    %v768 = vadd.f32 %v745, %v751
    %v769 = vmax.f32 %v753, 0.0
    %v770 = vmax.f32 %v754, 0.0
    %v771 = vmax.f32 %v755, 0.0
    %v772 = vmax.f32 %v756, 0.0
    %v773 = vmax.f32 %v757, 0.0
    %v774 = vmax.f32 %v758, 0.0
    %v775 = vmax.f32 %v759, 0.0
    %v776 = vmax.f32 %v760, 0.0
    %v777 = vmax.f32 %v761, 0.0
    %v778 = vmax.f32 %v762, 0.0
    %v779 = vmax.f32 %v763, 0.0
    %v780 = vmax.f32 %v764, 0.0
    %v781 = vmax.f32 %v765, 0.0
    %v782 = vmax.f32 %v766, 0.0
    %v783 = vmax.f32 %v767, 0.0
    %v784 = vmax.f32 %v768, 0.0
    %v785 = vpack.c.bf16 %v770, %v769
    %v786 = vpack.c.bf16 %v772, %v771
    %v787 = vpack.c.bf16 %v774, %v773
    %v788 = vpack.c.bf16 %v776, %v775
    %v789 = vpack.c.bf16 %v778, %v777
    %v790 = vpack.c.bf16 %v780, %v779
    %v791 = vpack.c.bf16 %v782, %v781
    %v792 = vpack.c.bf16 %v784, %v783
    %v801 = vunpack.c.l.b16 %v785
    %v802 = vunpack.c.h.b16 %v785
    %v803 = vunpack.c.l.b16 %v786
    %v804 = vunpack.c.h.b16 %v786
    %v805 = vunpack.c.l.b16 %v787
    %v806 = vunpack.c.h.b16 %v787
    %v807 = vunpack.c.l.b16 %v788
    %v808 = vunpack.c.h.b16 %v788
    %v809 = vunpack.c.l.b16 %v789
    %v810 = vunpack.c.h.b16 %v789
    %v811 = vunpack.c.l.b16 %v790
    %v812 = vunpack.c.h.b16 %v790
    %v813 = vunpack.c.l.b16 %v791
    %v814 = vunpack.c.h.b16 %v791
    %v815 = vunpack.c.l.b16 %v792
    %v816 = vunpack.c.h.b16 %v792
    %v817 = vpack.c.b16 %v801, %v801
    %v818 = vpack.c.b16 %v802, %v802
    %v819 = vpack.c.b16 %v803, %v803
    %v820 = vpack.c.b16 %v804, %v804
    %v821 = vpack.c.b16 %v805, %v805
    %v822 = vpack.c.b16 %v806, %v806
    %v823 = vpack.c.b16 %v807, %v807
    %v824 = vpack.c.b16 %v808, %v808
    %v825 = vpack.c.b16 %v809, %v809
    %v826 = vpack.c.b16 %v810, %v810
    %v827 = vpack.c.b16 %v811, %v811
    %v828 = vpack.c.b16 %v812, %v812
    %v829 = vpack.c.b16 %v813, %v813
    %v830 = vpack.c.b16 %v814, %v814
    %v831 = vpack.c.b16 %v815, %v815
    %v832 = vpack.c.b16 %v816, %v816
    %vm849 = vcmask 125952
    %850 = vst.msk [vmem:[%s3] sm:$0xf] %vm849, %v817
    %851 = vst.msk [vmem:[%s3 + $0x4] sm:$0xf] %vm849, %v818
    %852 = vst.msk [vmem:[%s3 + $0x8] sm:$0xf] %vm849, %v819
    %853 = vst.msk [vmem:[%s3 + $0xc] sm:$0xf] %vm849, %v820
    %854 = vst.msk [vmem:[%s3 + $0x10] sm:$0xf] %vm849, %v821
    %855 = vst.msk [vmem:[%s3 + $0x14] sm:$0xf] %vm849, %v822
    %856 = vst.msk [vmem:[%s3 + $0x18] sm:$0xf] %vm849, %v823
    %857 = vst.msk [vmem:[%s3 + $0x1c] sm:$0xf] %vm849, %v824
    %858 = vst.msk [vmem:[%s3 + $0x20] sm:$0xf] %vm849, %v825
    %859 = vst.msk [vmem:[%s3 + $0x24] sm:$0xf] %vm849, %v826
    %860 = vst.msk [vmem:[%s3 + $0x28] sm:$0xf] %vm849, %v827
    %861 = vst.msk [vmem:[%s3 + $0x2c] sm:$0xf] %vm849, %v828
    %862 = vst.msk [vmem:[%s3 + $0x30] sm:$0xf] %vm849, %v829
    %863 = vst.msk [vmem:[%s3 + $0x34] sm:$0xf] %vm849, %v830
    %864 = vst.msk [vmem:[%s3 + $0x38] sm:$0xf] %vm849, %v831
    %865 = vst.msk [vmem:[%s3 + $0x3c] sm:$0xf] %vm849, %v832
  $region21: #{detail_capture_forward.12} parent=0 // pred_fallthru
    _
  // Predicated region
  $region22: #{detail_capture_forward.12} parent=0 // pred_check
    _
  $region23: #{detail_capture_forward.12} parent=0 // pred_check_branch
    %867 = sbr.rel (0) target = $region25
  $region24: #{detail_capture_forward.12} parent=0 // pred_region
    _
  $region25: #{detail_capture_forward.12} parent=0 // pred_fallthru
    _
  // Predicated region
  $region26: #{detail_capture_forward.12} parent=0 // pred_check
    _
  $region27: #{detail_capture_forward.12} parent=0 // pred_check_branch
    %869 = sbr.rel (0) target = $region29
  $region28: #{detail_capture_forward.12} parent=0 // pred_region
    _
  $region29: #{detail_capture_forward.12} parent=0 // pred_fallthru
    _

// kernel: detail_capture_forward.13
$region0: #{detail_capture_forward.13}
  #allocation0 [shape = 'u32[]', space=smem, size = 0x4, offset = 0x4, fixed_abs, tag = 'smem constant byte address 0x4 - core index']
  #allocation1 [shape = 'u32[144,128]{1,0:T(1,128)}', space=vmem, size = 0x12000, scoped, tag = 'internal scratch']
  #allocation2 [shape = 'f32[256,8]{1,0:T(8,128)}', space=vmem, size = 0x20000, scoped, tag = 'scratch operand']
  %s0 = inlined_call_operand.vmem [shape: bf16[512,256], index: 0, kind: input, shape index: {}]
  %s1 = inlined_call_operand.vmem [shape: bf16[256,8], index: 1, kind: input, shape index: {}]
  %s2 = inlined_call_operand.vmem [shape: f32[1,8], index: 2, kind: input, shape index: {}]
  %s3 = inlined_call_operand.vmem [shape: bf16[512,8], index: 3, kind: output, shape index: {}]
  %s4 = sld [smem:[#allocation0]]
  $region53: #{detail_capture_forward.13} parent=0
    _
  %s6 = ssub.s32 1, %s4
  %s7 = scalar_select 0, %s6, %s4
  loop: start=0, step=1, limit=4
  $region2: #{detail_capture_forward.13} parent=0 // loop_pre_header
    _
  $region3: #{detail_capture_forward.13} parent=0 // loop_header
    %s9 = sphi 0, %s13
    %p10 = scmp.ge.s32.totalorder %s9, 4
    %s16 = sphi 0, %s28
    %s17 = sphi 0, %s24
    %s18 = sphi 0, %s16
    %s19 = sphi 0, %s17
    %s20 = sphi 0, %s18
    %s21 = sphi 0, %s19
    %s33 = sphi 0, %s35
    %s36 = sphi 0, %s33
    %s37 = sphi 0, %s36
    %s53 = sphi 0, %s37
    %s59 = sphi 0, %s61
    %s62 = sphi 0, %s59
    %s63 = sphi 0, %s62
    %s79 = sphi 0, %s63
    %s83 = sphi 0, %s83
    %s85 = sphi 0, %s83
    %s86 = sphi 0, %s85
    %s100 = sphi 0, %s86
    %s106 = sphi 0, %s108
    %s109 = sphi 0, %s106
    %s110 = sphi 0, %s109
    %s126 = sphi 0, %s110
  $region4: #{detail_capture_forward.13} parent=0 // loop_header_branch
    %12 = sbr.rel (%p10) target = $region8
  $region5: #{detail_capture_forward.13} parent=0 // loop_body
    %s14 = ssub.s32 %s9, 1
    %s15 = ssub.s32 %s9, 2
    %s22 = sadd.s32 1, %s17
    %p23 = scmp.ge.s32.totalorder %s22, 1
    %s24 = scalar_select %p23, 0, %s22
    %s25 = sadd.s32 1, %s16
    %s26 = scalar_select %p23, %s25, %s16
    %p27 = scmp.ge.s32.totalorder %s26, 2
    %s28 = scalar_select %p27, 0, %s26
    %s29 = ssub.s32 %s16, %s28
    %s30 = ssub.s32 %s17, %s24
    %s31 = sor.u32 %s29, %s30
    %p32 = scmp.eq.s32.totalorder %s31, 0
    %s34 = sadd.s32 %s33, 1
    %s35 = scalar_select %p32, %s33, %s34
    %p38 = pneg %p32
    %p39 = scmp.eq.s32.totalorder %s9, 1
    %p40 = por %p38, %p39
    %p41 = scmp.ne.s32.totalorder %s33, %s36
    %p42 = scmp.eq.s32.totalorder %s9, 0
    %p43 = por %p41, %p42
    %p44 = scmp.ne.s32.totalorder %s33, %s36
    %p45 = scmp.eq.s32.totalorder %s14, 1
    %p46 = por %p44, %p45
    %p47 = scmp.ne.s32.totalorder %s36, %s37
    %p48 = scmp.eq.s32.totalorder %s14, 0
    %p49 = por %p47, %p48
    %p50 = scmp.ne.s32.totalorder %s36, %s37
    %p51 = scmp.eq.s32.totalorder %s15, 1
    %p52 = por %p50, %p51
    %p54 = scmp.ne.s32.totalorder %s37, %s53
    %p55 = scmp.eq.s32.totalorder %s15, 0
    %p56 = por %p54, %p55
    %s57 = ssub.s32 %s17, %s24
    %p58 = scmp.eq.s32.totalorder %s57, 0
    %s60 = sadd.s32 %s59, 1
    %s61 = scalar_select %p58, %s59, %s60
    %p64 = pneg %p58
    %p65 = scmp.eq.s32.totalorder %s9, 1
    %p66 = por %p64, %p65
    %p67 = scmp.ne.s32.totalorder %s59, %s62
    %p68 = scmp.eq.s32.totalorder %s9, 0
    %p69 = por %p67, %p68
    %p70 = scmp.ne.s32.totalorder %s59, %s62
    %p71 = scmp.eq.s32.totalorder %s14, 1
    %p72 = por %p70, %p71
    %p73 = scmp.ne.s32.totalorder %s62, %s63
    %p74 = scmp.eq.s32.totalorder %s14, 0
    %p75 = por %p73, %p74
    %p76 = scmp.ne.s32.totalorder %s62, %s63
    %p77 = scmp.eq.s32.totalorder %s15, 1
    %p78 = por %p76, %p77
    %p80 = scmp.ne.s32.totalorder %s63, %s79
    %p81 = scmp.eq.s32.totalorder %s15, 0
    %p82 = por %p80, %p81
    %s84 = sadd.s32 %s83, 1
    %p87 = scmp.eq.s32.totalorder %s9, 1
    %p88 = scmp.ne.s32.totalorder %s83, %s85
    %p89 = scmp.eq.s32.totalorder %s9, 0
    %p90 = por %p88, %p89
    %p91 = scmp.ne.s32.totalorder %s83, %s85
    %p92 = scmp.eq.s32.totalorder %s14, 1
    %p93 = por %p91, %p92
    %p94 = scmp.ne.s32.totalorder %s85, %s86
    %p95 = scmp.eq.s32.totalorder %s14, 0
    %p96 = por %p94, %p95
    %p97 = scmp.ne.s32.totalorder %s85, %s86
    %p98 = scmp.eq.s32.totalorder %s15, 1
    %p99 = por %p97, %p98
    %p101 = scmp.ne.s32.totalorder %s86, %s100
    %p102 = scmp.eq.s32.totalorder %s15, 0
    %p103 = por %p101, %p102
    %s104 = ssub.s32 %s16, %s28
    %p105 = scmp.eq.s32.totalorder %s104, 0
    %s107 = sadd.s32 %s106, 1
    %s108 = scalar_select %p105, %s106, %s107
    %p111 = pneg %p105
    %p112 = scmp.eq.s32.totalorder %s9, 1
    %p113 = por %p111, %p112
    %p114 = scmp.ne.s32.totalorder %s106, %s109
    %p115 = scmp.eq.s32.totalorder %s9, 0
    %p116 = por %p114, %p115
    %p117 = scmp.ne.s32.totalorder %s106, %s109
    %p118 = scmp.eq.s32.totalorder %s14, 1
    %p119 = por %p117, %p118
    %p120 = scmp.ne.s32.totalorder %s109, %s110
    %p121 = scmp.eq.s32.totalorder %s14, 0
    %p122 = por %p120, %p121
    %p123 = scmp.ne.s32.totalorder %s109, %s110
    %p124 = scmp.eq.s32.totalorder %s15, 1
    %p125 = por %p123, %p124
    %p127 = scmp.ne.s32.totalorder %s110, %s126
    %p128 = scmp.eq.s32.totalorder %s15, 0
    %p129 = por %p127, %p128
    %p130 = scmp.le.s32.totalorder 1, %s9
    %p131 = scmp.lt.s32.totalorder %s9, 3
    %p132 = pnand %p130, %p131
    %p133 = pneg %p132
    // Predicated region
    $region9: #{detail_capture_forward.13} parent=5 // pred_check
      _
    $region10: #{detail_capture_forward.13} parent=5 // pred_check_branch
      %135 = sbr.rel (%p132) target = $region12
    $region11: #{detail_capture_forward.13} parent=5 // pred_region
      %s136 = ssub.s32 %s9, 1
      // Predicated region
      $region13: #{detail_capture_forward.13} parent=11 // pred_check
        %p137 = pneg %p75
      $region14: #{detail_capture_forward.13} parent=11 // pred_check_branch
        %139 = sbr.rel (%p137) target = $region16
      $region15: #{detail_capture_forward.13} parent=11 // pred_region
        %s140 = smul.u32 32, %s19
        %p141 = scmp.lt.s32.totalorder %s140, 31
        %s142 = scalar_select %p141, %s140, 31
        %s143 = smul.addr %s142, 4
        %s144 = scalar_lea.vmem %s1, %s143
        %s145 = smul.u32 32, %s19
      $region16: #{detail_capture_forward.13} parent=11 // pred_fallthru
        _
      // Predicated region
      $region17: #{detail_capture_forward.13} parent=11 // pred_check
        %p146 = pneg %p96
      $region18: #{detail_capture_forward.13} parent=11 // pred_check_branch
        %148 = sbr.rel (%p146) target = $region20
      $region19: #{detail_capture_forward.13} parent=11 // pred_region
        _
      $region20: #{detail_capture_forward.13} parent=11 // pred_fallthru
        _
    $region12: #{detail_capture_forward.13} parent=5 // pred_fallthru
      _
    %p149 = scmp.lt.s32.totalorder %s9, 2
    // Predicated region
    $region21: #{detail_capture_forward.13} parent=5 // pred_check
      %p150 = pneg %p149
    $region22: #{detail_capture_forward.13} parent=5 // pred_check_branch
      %152 = sbr.rel (%p150) target = $region24
    $region23: #{detail_capture_forward.13} parent=5 // pred_region
      // Predicated region
      $region25: #{detail_capture_forward.13} parent=23 // pred_check
        %p153 = pneg %p43
      $region26: #{detail_capture_forward.13} parent=23 // pred_check_branch
        %155 = sbr.rel (%p153) target = $region28
      $region27: #{detail_capture_forward.13} parent=23 // pred_region
        %s156 = smul.u32 32, %s16
        %s157 = smul.u32 2, %s17
        %p158 = scmp.lt.s32.totalorder %s156, 63
        %s159 = scalar_select %p158, %s156, 63
        %p160 = scmp.lt.s32.totalorder %s157, 1
        %s161 = scalar_select %p160, %s157, 1
        %s162 = smul.addr %s159, 2
        %s163 = sadd.s32 %s161, %s162
        %s164 = smul.addr %s163, 4
        %s165 = scalar_lea.vmem %s0, %s164
        %s166 = smul.u32 32, %s16
        %s167 = smul.u32 2, %s17
      $region28: #{detail_capture_forward.13} parent=23 // pred_fallthru
        _
    $region24: #{detail_capture_forward.13} parent=5 // pred_fallthru
      _
    %p168 = scmp.le.s32.totalorder 1, %s9
    %p169 = scmp.lt.s32.totalorder %s9, 3
    %p170 = pnand %p168, %p169
    %p171 = pneg %p170
    // Predicated region
    $region29: #{detail_capture_forward.13} parent=5 // pred_check
      _
    $region30: #{detail_capture_forward.13} parent=5 // pred_check_branch
      %173 = sbr.rel (%p170) target = $region32
    $region31: #{detail_capture_forward.13} parent=5 // pred_region
      %s174 = ssub.s32 %s9, 1
      %s175 = smul.u32 32, %s18
      %s176 = smul.u32 2, %s19
      %p177 = scmp.lt.s32.totalorder %s175, 63
      %s178 = scalar_select %p177, %s175, 63
      %p179 = scmp.lt.s32.totalorder %s176, 1
      %s180 = scalar_select %p179, %s176, 1
      %s181 = smul.addr %s178, 2
      %s182 = sadd.s32 %s180, %s181
      %s183 = smul.addr %s182, 4
      %s184 = scalar_lea.vmem %s0, %s183
      %p185 = pneg %p49
      %p186 = pneg %p46
      %s187 = smul.u32 32, %s19
      %p188 = scmp.lt.s32.totalorder %s187, 31
      %s189 = scalar_select %p188, %s187, 31
      %s190 = smul.addr %s189, 4
      %s191 = scalar_lea.vmem %s1, %s190
      %p192 = pneg %p75
      %p193 = pneg %p72
      %p194 = pneg %p96
      %p195 = pneg %p93
      %p196 = pneg %p122
      %p197 = pneg %p119
      %s198 = smul.u32 32, %s18
      %p199 = scmp.lt.s32.totalorder %s198, 63
      %s200 = scalar_select %p199, %s198, 63
      %s201 = smul.addr %s200, 4
      %s202 = scalar_lea.vmem %s3, %s201
      %s203 = smul.u32 32, %s18
      %s204 = smul.u32 2, %s19
      %p205 = scmp.lt.s32.totalorder %s203, 63
      %s206 = scalar_select %p205, %s203, 63
      %p207 = scmp.lt.s32.totalorder %s204, 1
      %s208 = scalar_select %p207, %s204, 1
      %s209 = smul.addr %s206, 2
      %s210 = sadd.s32 %s208, %s209
      %s211 = smul.addr %s210, 4
      %s212 = scalar_lea.vmem %s0, %s211
      %s213 = smul.u32 32, %s18
      %s214 = smul.u32 2, %s19
      %s215 = smul.u32 32, %s19
      %p216 = scmp.lt.s32.totalorder %s215, 31
      %s217 = scalar_select %p216, %s215, 31
      %s218 = smul.addr %s217, 4
      %s219 = scalar_lea.vmem %s1, %s218
      %s220 = smul.u32 32, %s19
      %s221 = smul.u32 32, %s18
      %p222 = scmp.lt.s32.totalorder %s221, 63
      %s223 = scalar_select %p222, %s221, 63
      %s224 = smul.addr %s223, 4
      %s225 = scalar_lea.vmem %s3, %s224
      %s226 = smul.u32 32, %s18
      %p228 = scmp.eq.s32.totalorder %s19, 0
      // Predicated region
      $region33: #{detail_capture_forward.13} parent=31 // pred_check
        %p229 = pneg %p228
      $region34: #{detail_capture_forward.13} parent=31 // pred_check_branch
        %231 = sbr.rel (%p229) target = $region36
      $region35: #{detail_capture_forward.13} parent=31 // pred_region
        %vm232 = vcmask 64512
        %233 = vst.msk [vmem:[#allocation2] sm:$0xff] %vm232, 0.0
        %234 = vst.msk [vmem:[#allocation2 + $0x8] sm:$0xff] %vm232, 0.0
        %235 = vst.msk [vmem:[#allocation2 + $0x10] sm:$0xff] %vm232, 0.0
        %236 = vst.msk [vmem:[#allocation2 + $0x18] sm:$0xff] %vm232, 0.0
        %237 = vst.msk [vmem:[#allocation2 + $0x20] sm:$0xff] %vm232, 0.0
        %238 = vst.msk [vmem:[#allocation2 + $0x28] sm:$0xff] %vm232, 0.0
        %239 = vst.msk [vmem:[#allocation2 + $0x30] sm:$0xff] %vm232, 0.0
        %240 = vst.msk [vmem:[#allocation2 + $0x38] sm:$0xff] %vm232, 0.0
        %241 = vst.msk [vmem:[#allocation2 + $0x40] sm:$0xff] %vm232, 0.0
        %242 = vst.msk [vmem:[#allocation2 + $0x48] sm:$0xff] %vm232, 0.0
        %243 = vst.msk [vmem:[#allocation2 + $0x50] sm:$0xff] %vm232, 0.0
        %244 = vst.msk [vmem:[#allocation2 + $0x58] sm:$0xff] %vm232, 0.0
        %245 = vst.msk [vmem:[#allocation2 + $0x60] sm:$0xff] %vm232, 0.0
        %246 = vst.msk [vmem:[#allocation2 + $0x68] sm:$0xff] %vm232, 0.0
        %247 = vst.msk [vmem:[#allocation2 + $0x70] sm:$0xff] %vm232, 0.0
        %248 = vst.msk [vmem:[#allocation2 + $0x78] sm:$0xff] %vm232, 0.0
        %249 = vst.msk [vmem:[#allocation2 + $0x80] sm:$0xff] %vm232, 0.0
        %250 = vst.msk [vmem:[#allocation2 + $0x88] sm:$0xff] %vm232, 0.0
        %251 = vst.msk [vmem:[#allocation2 + $0x90] sm:$0xff] %vm232, 0.0
        %252 = vst.msk [vmem:[#allocation2 + $0x98] sm:$0xff] %vm232, 0.0
        %253 = vst.msk [vmem:[#allocation2 + $0xa0] sm:$0xff] %vm232, 0.0
        %254 = vst.msk [vmem:[#allocation2 + $0xa8] sm:$0xff] %vm232, 0.0
        %255 = vst.msk [vmem:[#allocation2 + $0xb0] sm:$0xff] %vm232, 0.0
        %256 = vst.msk [vmem:[#allocation2 + $0xb8] sm:$0xff] %vm232, 0.0
        %257 = vst.msk [vmem:[#allocation2 + $0xc0] sm:$0xff] %vm232, 0.0
        %258 = vst.msk [vmem:[#allocation2 + $0xc8] sm:$0xff] %vm232, 0.0
        %259 = vst.msk [vmem:[#allocation2 + $0xd0] sm:$0xff] %vm232, 0.0
        %260 = vst.msk [vmem:[#allocation2 + $0xd8] sm:$0xff] %vm232, 0.0
        %261 = vst.msk [vmem:[#allocation2 + $0xe0] sm:$0xff] %vm232, 0.0
        %262 = vst.msk [vmem:[#allocation2 + $0xe8] sm:$0xff] %vm232, 0.0
        %263 = vst.msk [vmem:[#allocation2 + $0xf0] sm:$0xff] %vm232, 0.0
        %264 = vst.msk [vmem:[#allocation2 + $0xf8] sm:$0xff] %vm232, 0.0
      $region36: #{detail_capture_forward.13} parent=31 // pred_fallthru
        _
      %v265 = vld [vmem:[#allocation2] sm:$0xff]
      %v266 = vld [vmem:[#allocation2 + $0x8] sm:$0xff]
      %v267 = vld [vmem:[#allocation2 + $0x10] sm:$0xff]
      %v268 = vld [vmem:[#allocation2 + $0x18] sm:$0xff]
      %v269 = vld [vmem:[#allocation2 + $0x20] sm:$0xff]
      %v270 = vld [vmem:[#allocation2 + $0x28] sm:$0xff]
      %v271 = vld [vmem:[#allocation2 + $0x30] sm:$0xff]
      %v272 = vld [vmem:[#allocation2 + $0x38] sm:$0xff]
      %v273 = vld [vmem:[#allocation2 + $0x40] sm:$0xff]
      %v274 = vld [vmem:[#allocation2 + $0x48] sm:$0xff]
      %v275 = vld [vmem:[#allocation2 + $0x50] sm:$0xff]
      %v276 = vld [vmem:[#allocation2 + $0x58] sm:$0xff]
      %v277 = vld [vmem:[#allocation2 + $0x60] sm:$0xff]
      %v278 = vld [vmem:[#allocation2 + $0x68] sm:$0xff]
      %v279 = vld [vmem:[#allocation2 + $0x70] sm:$0xff]
      %v280 = vld [vmem:[#allocation2 + $0x78] sm:$0xff]
      %v281 = vld [vmem:[#allocation2 + $0x80] sm:$0xff]
      %v282 = vld [vmem:[#allocation2 + $0x88] sm:$0xff]
      %v283 = vld [vmem:[#allocation2 + $0x90] sm:$0xff]
      %v284 = vld [vmem:[#allocation2 + $0x98] sm:$0xff]
      %v285 = vld [vmem:[#allocation2 + $0xa0] sm:$0xff]
      %v286 = vld [vmem:[#allocation2 + $0xa8] sm:$0xff]
      %v287 = vld [vmem:[#allocation2 + $0xb0] sm:$0xff]
      %v288 = vld [vmem:[#allocation2 + $0xb8] sm:$0xff]
      %v289 = vld [vmem:[#allocation2 + $0xc0] sm:$0xff]
      %v290 = vld [vmem:[#allocation2 + $0xc8] sm:$0xff]
      %v291 = vld [vmem:[#allocation2 + $0xd0] sm:$0xff]
      %v292 = vld [vmem:[#allocation2 + $0xd8] sm:$0xff]
      %v293 = vld [vmem:[#allocation2 + $0xe0] sm:$0xff]
      %v294 = vld [vmem:[#allocation2 + $0xe8] sm:$0xff]
      %v295 = vld [vmem:[#allocation2 + $0xf0] sm:$0xff]
      %v296 = vld [vmem:[#allocation2 + $0xf8] sm:$0xff]
      %v297 = vld [vmem:[%s212] sm:$0xff]
      %v298 = vld [vmem:[%s212 + $0x8] sm:$0xff]
      %v299 = vld [vmem:[%s212 + $0x10] sm:$0xff]
      %v300 = vld [vmem:[%s212 + $0x18] sm:$0xff]
      %v301 = vld [vmem:[%s212 + $0x20] sm:$0xff]
      %v302 = vld [vmem:[%s212 + $0x28] sm:$0xff]
      %v303 = vld [vmem:[%s212 + $0x30] sm:$0xff]
      %v304 = vld [vmem:[%s212 + $0x38] sm:$0xff]
      %v305 = vld [vmem:[%s212 + $0x40] sm:$0xff]
      %v306 = vld [vmem:[%s212 + $0x48] sm:$0xff]
      %v307 = vld [vmem:[%s212 + $0x50] sm:$0xff]
      %v308 = vld [vmem:[%s212 + $0x58] sm:$0xff]
      %v309 = vld [vmem:[%s212 + $0x60] sm:$0xff]
      %v310 = vld [vmem:[%s212 + $0x68] sm:$0xff]
      %v311 = vld [vmem:[%s212 + $0x70] sm:$0xff]
      %v312 = vld [vmem:[%s212 + $0x78] sm:$0xff]
      %v313 = vld [vmem:[%s212 + $0x80] sm:$0xff]
      %v314 = vld [vmem:[%s212 + $0x88] sm:$0xff]
      %v315 = vld [vmem:[%s212 + $0x90] sm:$0xff]
      %v316 = vld [vmem:[%s212 + $0x98] sm:$0xff]
      %v317 = vld [vmem:[%s212 + $0xa0] sm:$0xff]
      %v318 = vld [vmem:[%s212 + $0xa8] sm:$0xff]
      %v319 = vld [vmem:[%s212 + $0xb0] sm:$0xff]
      %v320 = vld [vmem:[%s212 + $0xb8] sm:$0xff]
      %v321 = vld [vmem:[%s212 + $0xc0] sm:$0xff]
      %v322 = vld [vmem:[%s212 + $0xc8] sm:$0xff]
      %v323 = vld [vmem:[%s212 + $0xd0] sm:$0xff]
      %v324 = vld [vmem:[%s212 + $0xd8] sm:$0xff]
      %v325 = vld [vmem:[%s212 + $0xe0] sm:$0xff]
      %v326 = vld [vmem:[%s212 + $0xe8] sm:$0xff]
      %v327 = vld [vmem:[%s212 + $0xf0] sm:$0xff]
      %v328 = vld [vmem:[%s212 + $0xf8] sm:$0xff]
      %v329 = vld [vmem:[%s219] sm:$0xf]
      %v330 = vld [vmem:[%s219 + $0x4] sm:$0xf]
      %v331 = vld [vmem:[%s219 + $0x8] sm:$0xf]
      %v332 = vld [vmem:[%s219 + $0xc] sm:$0xf]
      %v333 = vld [vmem:[%s219 + $0x10] sm:$0xf]
      %v334 = vld [vmem:[%s219 + $0x14] sm:$0xf]
      %v335 = vld [vmem:[%s219 + $0x18] sm:$0xf]
      %v336 = vld [vmem:[%s219 + $0x1c] sm:$0xf]
      %v337 = vld [vmem:[%s219 + $0x20] sm:$0xf]
      %v338 = vld [vmem:[%s219 + $0x24] sm:$0xf]
      %v339 = vld [vmem:[%s219 + $0x28] sm:$0xf]
      %v340 = vld [vmem:[%s219 + $0x2c] sm:$0xf]
      %v341 = vld [vmem:[%s219 + $0x30] sm:$0xf]
      %v342 = vld [vmem:[%s219 + $0x34] sm:$0xf]
      %v343 = vld [vmem:[%s219 + $0x38] sm:$0xf]
      %v344 = vld [vmem:[%s219 + $0x3c] sm:$0xf]
      %v345 = vld [vmem:[%s219 + $0x40] sm:$0xf]
      %v346 = vld [vmem:[%s219 + $0x44] sm:$0xf]
      %v347 = vld [vmem:[%s219 + $0x48] sm:$0xf]
      %v348 = vld [vmem:[%s219 + $0x4c] sm:$0xf]
      %v349 = vld [vmem:[%s219 + $0x50] sm:$0xf]
      %v350 = vld [vmem:[%s219 + $0x54] sm:$0xf]
      %v351 = vld [vmem:[%s219 + $0x58] sm:$0xf]
      %v352 = vld [vmem:[%s219 + $0x5c] sm:$0xf]
      %v353 = vld [vmem:[%s219 + $0x60] sm:$0xf]
      %v354 = vld [vmem:[%s219 + $0x64] sm:$0xf]
      %v355 = vld [vmem:[%s219 + $0x68] sm:$0xf]
      %v356 = vld [vmem:[%s219 + $0x6c] sm:$0xf]
      %v357 = vld [vmem:[%s219 + $0x70] sm:$0xf]
      %v358 = vld [vmem:[%s219 + $0x74] sm:$0xf]
      %v359 = vld [vmem:[%s219 + $0x78] sm:$0xf]
      %v360 = vld [vmem:[%s219 + $0x7c] sm:$0xf]
      %v393 = vunpack.c.l.b16 %v297
      %v394 = vunpack.c.h.b16 %v297
      %v395 = vunpack.c.l.b16 %v298
      %v396 = vunpack.c.h.b16 %v298
      %v397 = vunpack.c.l.b16 %v299
      %v398 = vunpack.c.h.b16 %v299
      %v399 = vunpack.c.l.b16 %v300
      %v400 = vunpack.c.h.b16 %v300
      %v401 = vunpack.c.l.b16 %v301
      %v402 = vunpack.c.h.b16 %v301
      %v403 = vunpack.c.l.b16 %v302
      %v404 = vunpack.c.h.b16 %v302
      %v405 = vunpack.c.l.b16 %v303
      %v406 = vunpack.c.h.b16 %v303
      %v407 = vunpack.c.l.b16 %v304
      %v408 = vunpack.c.h.b16 %v304
      %v409 = vunpack.c.l.b16 %v305
      %v410 = vunpack.c.h.b16 %v305
      %v411 = vunpack.c.l.b16 %v306
      %v412 = vunpack.c.h.b16 %v306
      %v413 = vunpack.c.l.b16 %v307
      %v414 = vunpack.c.h.b16 %v307
      %v415 = vunpack.c.l.b16 %v308
      %v416 = vunpack.c.h.b16 %v308
      %v417 = vunpack.c.l.b16 %v309
      %v418 = vunpack.c.h.b16 %v309
      %v419 = vunpack.c.l.b16 %v310
      %v420 = vunpack.c.h.b16 %v310
      %v421 = vunpack.c.l.b16 %v311
      %v422 = vunpack.c.h.b16 %v311
      %v423 = vunpack.c.l.b16 %v312
      %v424 = vunpack.c.h.b16 %v312
      %v425 = vunpack.c.l.b16 %v313
      %v426 = vunpack.c.h.b16 %v313
      %v427 = vunpack.c.l.b16 %v314
      %v428 = vunpack.c.h.b16 %v314
      %v429 = vunpack.c.l.b16 %v315
      %v430 = vunpack.c.h.b16 %v315
      %v431 = vunpack.c.l.b16 %v316
      %v432 = vunpack.c.h.b16 %v316
      %v433 = vunpack.c.l.b16 %v317
      %v434 = vunpack.c.h.b16 %v317
      %v435 = vunpack.c.l.b16 %v318
      %v436 = vunpack.c.h.b16 %v318
      %v437 = vunpack.c.l.b16 %v319
      %v438 = vunpack.c.h.b16 %v319
      %v439 = vunpack.c.l.b16 %v320
      %v440 = vunpack.c.h.b16 %v320
      %v441 = vunpack.c.l.b16 %v321
      %v442 = vunpack.c.h.b16 %v321
      %v443 = vunpack.c.l.b16 %v322
      %v444 = vunpack.c.h.b16 %v322
      %v445 = vunpack.c.l.b16 %v323
      %v446 = vunpack.c.h.b16 %v323
      %v447 = vunpack.c.l.b16 %v324
      %v448 = vunpack.c.h.b16 %v324
      %v449 = vunpack.c.l.b16 %v325
      %v450 = vunpack.c.h.b16 %v325
      %v451 = vunpack.c.l.b16 %v326
      %v452 = vunpack.c.h.b16 %v326
      %v453 = vunpack.c.l.b16 %v327
      %v454 = vunpack.c.h.b16 %v327
      %v455 = vunpack.c.l.b16 %v328
      %v456 = vunpack.c.h.b16 %v328
      %v457 = vpack.c.b16 %v395, %v393
      %v458 = vpack.c.b16 %v396, %v394
      %v459 = vpack.c.b16 %v399, %v397
      %v460 = vpack.c.b16 %v400, %v398
      %v461 = vpack.c.b16 %v403, %v401
      %v462 = vpack.c.b16 %v404, %v402
      %v463 = vpack.c.b16 %v407, %v405
      %v464 = vpack.c.b16 %v408, %v406
      %v465 = vpack.c.b16 %v411, %v409
      %v466 = vpack.c.b16 %v412, %v410
      %v467 = vpack.c.b16 %v415, %v413
      %v468 = vpack.c.b16 %v416, %v414
      %v469 = vpack.c.b16 %v419, %v417
      %v470 = vpack.c.b16 %v420, %v418
      %v471 = vpack.c.b16 %v423, %v421
      %v472 = vpack.c.b16 %v424, %v422
      %v473 = vpack.c.b16 %v427, %v425
      %v474 = vpack.c.b16 %v428, %v426
      %v475 = vpack.c.b16 %v431, %v429
      %v476 = vpack.c.b16 %v432, %v430
      %v477 = vpack.c.b16 %v435, %v433
      %v478 = vpack.c.b16 %v436, %v434
      %v479 = vpack.c.b16 %v439, %v437
      %v480 = vpack.c.b16 %v440, %v438
      %v481 = vpack.c.b16 %v443, %v441
      %v482 = vpack.c.b16 %v444, %v442
      %v483 = vpack.c.b16 %v447, %v445
      %v484 = vpack.c.b16 %v448, %v446
      %v485 = vpack.c.b16 %v451, %v449
      %v486 = vpack.c.b16 %v452, %v450
      %v487 = vpack.c.b16 %v455, %v453
      %v488 = vpack.c.b16 %v456, %v454
      %v553 = vunpack.c.l.b16 %v329
      %v554 = vunpack.c.l.b16 %v330
      %v555 = vunpack.c.l.b16 %v331
      %v556 = vunpack.c.l.b16 %v332
      %v557 = vunpack.c.l.b16 %v333
      %v558 = vunpack.c.l.b16 %v334
      %v559 = vunpack.c.l.b16 %v335
      %v560 = vunpack.c.l.b16 %v336
      %v561 = vunpack.c.l.b16 %v337
      %v562 = vunpack.c.l.b16 %v338
      %v563 = vunpack.c.l.b16 %v339
      %v564 = vunpack.c.l.b16 %v340
      %v565 = vunpack.c.l.b16 %v341
      %v566 = vunpack.c.l.b16 %v342
      %v567 = vunpack.c.l.b16 %v343
      %v568 = vunpack.c.l.b16 %v344
      %v569 = vunpack.c.l.b16 %v345
      %v570 = vunpack.c.l.b16 %v346
      %v571 = vunpack.c.l.b16 %v347
      %v572 = vunpack.c.l.b16 %v348
      %v573 = vunpack.c.l.b16 %v349
      %v574 = vunpack.c.l.b16 %v350
      %v575 = vunpack.c.l.b16 %v351
      %v576 = vunpack.c.l.b16 %v352
      %v577 = vunpack.c.l.b16 %v353
      %v578 = vunpack.c.l.b16 %v354
      %v579 = vunpack.c.l.b16 %v355
      %v580 = vunpack.c.l.b16 %v356
      %v581 = vunpack.c.l.b16 %v357
      %v582 = vunpack.c.l.b16 %v358
      %v583 = vunpack.c.l.b16 %v359
      %v584 = vunpack.c.l.b16 %v360
      %v585 = vpack.c.b16 %v554, %v553
      %v586 = vpack.c.b16 %v556, %v555
      %v587 = vpack.c.b16 %v558, %v557
      %v588 = vpack.c.b16 %v560, %v559
      %v589 = vpack.c.b16 %v562, %v561
      %v590 = vpack.c.b16 %v564, %v563
      %v591 = vpack.c.b16 %v566, %v565
      %v592 = vpack.c.b16 %v568, %v567
      %v593 = vpack.c.b16 %v570, %v569
      %v594 = vpack.c.b16 %v572, %v571
      %v595 = vpack.c.b16 %v574, %v573
      %v596 = vpack.c.b16 %v576, %v575
      %v597 = vpack.c.b16 %v578, %v577
      %v598 = vpack.c.b16 %v580, %v579
      %v599 = vpack.c.b16 %v582, %v581
      %v600 = vpack.c.b16 %v584, %v583
      %617 = vmatprep.subr.bf16.mxu0 0
      %618 = vmatpush1.bf16.msra.mxu0 %v592
      %619 = vmatprep.subr.bf16.mxu0 0
      %620 = vmatpush1.bf16.msra.mxu0 %v591
      %621 = vmatprep.subr.bf16.mxu0 0
      %622 = vmatpush1.bf16.msra.mxu0 %v590
      %623 = vmatprep.subr.bf16.mxu0 0
      %624 = vmatpush1.bf16.msra.mxu0 %v589
      %625 = vmatprep.subr.bf16.mxu0 0
      %626 = vmatpush1.bf16.msra.mxu0 %v588
      %627 = vmatprep.subr.bf16.mxu0 0
      %628 = vmatpush1.bf16.msra.mxu0 %v587
      %629 = vmatprep.subr.bf16.mxu0 0
      %630 = vmatpush1.bf16.msra.mxu0 %v586
      %631 = vmatprep.subr.bf16.mxu0 0
      %632 = vmatpush1.bf16.msra.mxu0 %v585
      %633 = vmatprep.subr.bf16.mxu0 0
      %634 = vmatpush2.bf16.msra.mxu0 %v600
      %635 = vmatprep.subr.bf16.mxu0 0
      %636 = vmatpush2.bf16.msra.mxu0 %v599
      %637 = vmatprep.subr.bf16.mxu0 0
      %638 = vmatpush2.bf16.msra.mxu0 %v598
      %639 = vmatprep.subr.bf16.mxu0 0
      %640 = vmatpush2.bf16.msra.mxu0 %v597
      %641 = vmatprep.subr.bf16.mxu0 0
      %642 = vmatpush2.bf16.msra.mxu0 %v596
      %643 = vmatprep.subr.bf16.mxu0 0
      %644 = vmatpush2.bf16.msra.mxu0 %v595
      %645 = vmatprep.subr.bf16.mxu0 0
      %646 = vmatpush2.bf16.msra.mxu0 %v594
      %647 = vmatprep.subr.bf16.mxu0 0
      %648 = vmatpush2.bf16.msra.mxu0 %v593
      %649 = vmatprep.mubr.bf16.mxu0 %v458
      %650 = vmatmul.mubr.bf16.gmra.mxu0 %v457
      %v651 = vpop.f32.mrf.mxu0
      %v652 = vadd.f32 0.0, %v651
      %v653 = vpop.f32.mrf.mxu0
      %v654 = vpop.f32.mrf.mxu0
      %v655 = vadd.f32 0.0, %v654
      %v656 = vpop.f32.mrf.mxu0
      %657 = vmatprep.mubr.bf16.mxu0 %v460
      %658 = vmatmul.mubr.bf16.gmra.mxu0 %v459
      %v659 = vpop.f32.mrf.mxu0
      %v660 = vadd.f32 0.0, %v659
      %v661 = vpop.f32.mrf.mxu0
      %v662 = vpop.f32.mrf.mxu0
      %v663 = vadd.f32 0.0, %v662
      %v664 = vpop.f32.mrf.mxu0
      %665 = vmatprep.mubr.bf16.mxu0 %v462
      %666 = vmatmul.mubr.bf16.gmra.mxu0 %v461
      %v667 = vpop.f32.mrf.mxu0
      %v668 = vadd.f32 0.0, %v667
      %v669 = vpop.f32.mrf.mxu0
      %v670 = vpop.f32.mrf.mxu0
      %v671 = vadd.f32 0.0, %v670
      %v672 = vpop.f32.mrf.mxu0
      %673 = vmatprep.mubr.bf16.mxu0 %v464
      %674 = vmatmul.mubr.bf16.gmra.mxu0 %v463
      %v675 = vpop.f32.mrf.mxu0
      %v676 = vadd.f32 0.0, %v675
      %v677 = vpop.f32.mrf.mxu0
      %v678 = vpop.f32.mrf.mxu0
      %v679 = vadd.f32 0.0, %v678
      %v680 = vpop.f32.mrf.mxu0
      %681 = vmatprep.mubr.bf16.mxu0 %v466
      %682 = vmatmul.mubr.bf16.gmra.mxu0 %v465
      %v683 = vpop.f32.mrf.mxu0
      %v684 = vadd.f32 0.0, %v683
      %v685 = vpop.f32.mrf.mxu0
      %v686 = vpop.f32.mrf.mxu0
      %v687 = vadd.f32 0.0, %v686
      %v688 = vpop.f32.mrf.mxu0
      %689 = vmatprep.mubr.bf16.mxu0 %v468
      %690 = vmatmul.mubr.bf16.gmra.mxu0 %v467
      %v691 = vpop.f32.mrf.mxu0
      %v692 = vadd.f32 0.0, %v691
      %v693 = vpop.f32.mrf.mxu0
      %v694 = vpop.f32.mrf.mxu0
      %v695 = vadd.f32 0.0, %v694
      %v696 = vpop.f32.mrf.mxu0
      %697 = vmatprep.mubr.bf16.mxu0 %v470
      %698 = vmatmul.mubr.bf16.gmra.mxu0 %v469
      %v699 = vpop.f32.mrf.mxu0
      %v700 = vadd.f32 0.0, %v699
      %v701 = vpop.f32.mrf.mxu0
      %v702 = vpop.f32.mrf.mxu0
      %v703 = vadd.f32 0.0, %v702
      %v704 = vpop.f32.mrf.mxu0
      %705 = vmatprep.mubr.bf16.mxu0 %v472
      %706 = vmatmul.mubr.bf16.gmra.mxu0 %v471
      %v707 = vpop.f32.mrf.mxu0
      %v708 = vadd.f32 0.0, %v707
      %v709 = vpop.f32.mrf.mxu0
      %v710 = vpop.f32.mrf.mxu0
      %v711 = vadd.f32 0.0, %v710
      %v712 = vpop.f32.mrf.mxu0
      %713 = vmatprep.mubr.bf16.mxu0 %v474
      %714 = vmatmul.mubr.bf16.gmra.mxu0 %v473
      %v715 = vpop.f32.mrf.mxu0
      %v716 = vadd.f32 0.0, %v715
      %v717 = vpop.f32.mrf.mxu0
      %v718 = vpop.f32.mrf.mxu0
      %v719 = vadd.f32 0.0, %v718
      %v720 = vpop.f32.mrf.mxu0
      %721 = vmatprep.mubr.bf16.mxu0 %v476
      %722 = vmatmul.mubr.bf16.gmra.mxu0 %v475
      %v723 = vpop.f32.mrf.mxu0
      %v724 = vadd.f32 0.0, %v723
      %v725 = vpop.f32.mrf.mxu0
      %v726 = vpop.f32.mrf.mxu0
      %v727 = vadd.f32 0.0, %v726
      %v728 = vpop.f32.mrf.mxu0
      %729 = vmatprep.mubr.bf16.mxu0 %v478
      %730 = vmatmul.mubr.bf16.gmra.mxu0 %v477
      %v731 = vpop.f32.mrf.mxu0
      %v732 = vadd.f32 0.0, %v731
      %v733 = vpop.f32.mrf.mxu0
      %v734 = vpop.f32.mrf.mxu0
      %v735 = vadd.f32 0.0, %v734
      %v736 = vpop.f32.mrf.mxu0
      %737 = vmatprep.mubr.bf16.mxu0 %v480
      %738 = vmatmul.mubr.bf16.gmra.mxu0 %v479
      %v739 = vpop.f32.mrf.mxu0
      %v740 = vadd.f32 0.0, %v739
      %v741 = vpop.f32.mrf.mxu0
      %v742 = vpop.f32.mrf.mxu0
      %v743 = vadd.f32 0.0, %v742
      %v744 = vpop.f32.mrf.mxu0
      %745 = vmatprep.mubr.bf16.mxu0 %v482
      %746 = vmatmul.mubr.bf16.gmra.mxu0 %v481
      %v747 = vpop.f32.mrf.mxu0
      %v748 = vadd.f32 0.0, %v747
      %v749 = vpop.f32.mrf.mxu0
      %v750 = vpop.f32.mrf.mxu0
      %v751 = vadd.f32 0.0, %v750
      %v752 = vpop.f32.mrf.mxu0
      %753 = vmatprep.mubr.bf16.mxu0 %v484
      %754 = vmatmul.mubr.bf16.gmra.mxu0 %v483
      %v755 = vpop.f32.mrf.mxu0
      %v756 = vadd.f32 0.0, %v755
      %v757 = vpop.f32.mrf.mxu0
      %v758 = vpop.f32.mrf.mxu0
      %v759 = vadd.f32 0.0, %v758
      %v760 = vpop.f32.mrf.mxu0
      %761 = vmatprep.mubr.bf16.mxu0 %v486
      %762 = vmatmul.mubr.bf16.gmra.mxu0 %v485
      %v763 = vpop.f32.mrf.mxu0
      %v764 = vadd.f32 0.0, %v763
      %v765 = vpop.f32.mrf.mxu0
      %v766 = vpop.f32.mrf.mxu0
      %v767 = vadd.f32 0.0, %v766
      %v768 = vpop.f32.mrf.mxu0
      %769 = vmatprep.mubr.bf16.mxu0 %v488
      %770 = vmatmul.mubr.bf16.gmra.mxu0 %v487
      %v771 = vpop.f32.mrf.mxu0
      %v772 = vadd.f32 0.0, %v771
      %v773 = vpop.f32.mrf.mxu0
      %v774 = vpop.f32.mrf.mxu0
      %v775 = vadd.f32 0.0, %v774
      %v776 = vpop.f32.mrf.mxu0
      %777 = vdwg.mxu0
      %v778 = vadd.f32 %v265, %v652
      %v779 = vadd.f32 %v266, %v655
      %v780 = vadd.f32 %v267, %v660
      %v781 = vadd.f32 %v268, %v663
      %v782 = vadd.f32 %v269, %v668
      %v783 = vadd.f32 %v270, %v671
      %v784 = vadd.f32 %v271, %v676
      %v785 = vadd.f32 %v272, %v679
      %v786 = vadd.f32 %v273, %v684
      %v787 = vadd.f32 %v274, %v687
      %v788 = vadd.f32 %v275, %v692
      %v789 = vadd.f32 %v276, %v695
      %v790 = vadd.f32 %v277, %v700
      %v791 = vadd.f32 %v278, %v703
      %v792 = vadd.f32 %v279, %v708
      %v793 = vadd.f32 %v280, %v711
      %v794 = vadd.f32 %v281, %v716
      %v795 = vadd.f32 %v282, %v719
      %v796 = vadd.f32 %v283, %v724
      %v797 = vadd.f32 %v284, %v727
      %v798 = vadd.f32 %v285, %v732
      %v799 = vadd.f32 %v286, %v735
      %v800 = vadd.f32 %v287, %v740
      %v801 = vadd.f32 %v288, %v743
      %v802 = vadd.f32 %v289, %v748
      %v803 = vadd.f32 %v290, %v751
      %v804 = vadd.f32 %v291, %v756
      %v805 = vadd.f32 %v292, %v759
      %v806 = vadd.f32 %v293, %v764
      %v807 = vadd.f32 %v294, %v767
      %v808 = vadd.f32 %v295, %v772
      %v809 = vadd.f32 %v296, %v775
      %vm810 = vcmask 64512
      %811 = vst.msk [vmem:[#allocation2] sm:$0xff] %vm810, %v778
      %812 = vst.msk [vmem:[#allocation2 + $0x8] sm:$0xff] %vm810, %v779
      %813 = vst.msk [vmem:[#allocation2 + $0x10] sm:$0xff] %vm810, %v780
      %814 = vst.msk [vmem:[#allocation2 + $0x18] sm:$0xff] %vm810, %v781
      %815 = vst.msk [vmem:[#allocation2 + $0x20] sm:$0xff] %vm810, %v782
      %816 = vst.msk [vmem:[#allocation2 + $0x28] sm:$0xff] %vm810, %v783
      %817 = vst.msk [vmem:[#allocation2 + $0x30] sm:$0xff] %vm810, %v784
      %818 = vst.msk [vmem:[#allocation2 + $0x38] sm:$0xff] %vm810, %v785
      %819 = vst.msk [vmem:[#allocation2 + $0x40] sm:$0xff] %vm810, %v786
      %820 = vst.msk [vmem:[#allocation2 + $0x48] sm:$0xff] %vm810, %v787
      %821 = vst.msk [vmem:[#allocation2 + $0x50] sm:$0xff] %vm810, %v788
      %822 = vst.msk [vmem:[#allocation2 + $0x58] sm:$0xff] %vm810, %v789
      %823 = vst.msk [vmem:[#allocation2 + $0x60] sm:$0xff] %vm810, %v790
      %824 = vst.msk [vmem:[#allocation2 + $0x68] sm:$0xff] %vm810, %v791
      %825 = vst.msk [vmem:[#allocation2 + $0x70] sm:$0xff] %vm810, %v792
      %826 = vst.msk [vmem:[#allocation2 + $0x78] sm:$0xff] %vm810, %v793
      %827 = vst.msk [vmem:[#allocation2 + $0x80] sm:$0xff] %vm810, %v794
      %828 = vst.msk [vmem:[#allocation2 + $0x88] sm:$0xff] %vm810, %v795
      %829 = vst.msk [vmem:[#allocation2 + $0x90] sm:$0xff] %vm810, %v796
      %830 = vst.msk [vmem:[#allocation2 + $0x98] sm:$0xff] %vm810, %v797
      %831 = vst.msk [vmem:[#allocation2 + $0xa0] sm:$0xff] %vm810, %v798
      %832 = vst.msk [vmem:[#allocation2 + $0xa8] sm:$0xff] %vm810, %v799
      %833 = vst.msk [vmem:[#allocation2 + $0xb0] sm:$0xff] %vm810, %v800
      %834 = vst.msk [vmem:[#allocation2 + $0xb8] sm:$0xff] %vm810, %v801
      %835 = vst.msk [vmem:[#allocation2 + $0xc0] sm:$0xff] %vm810, %v802
      %836 = vst.msk [vmem:[#allocation2 + $0xc8] sm:$0xff] %vm810, %v803
      %837 = vst.msk [vmem:[#allocation2 + $0xd0] sm:$0xff] %vm810, %v804
      %838 = vst.msk [vmem:[#allocation2 + $0xd8] sm:$0xff] %vm810, %v805
      %839 = vst.msk [vmem:[#allocation2 + $0xe0] sm:$0xff] %vm810, %v806
      %840 = vst.msk [vmem:[#allocation2 + $0xe8] sm:$0xff] %vm810, %v807
      %841 = vst.msk [vmem:[#allocation2 + $0xf0] sm:$0xff] %vm810, %v808
      %842 = vst.msk [vmem:[#allocation2 + $0xf8] sm:$0xff] %vm810, %v809
      // Predicated region
      $region37: #{detail_capture_forward.13} parent=31 // pred_check
        %p843 = pneg %p228
      $region38: #{detail_capture_forward.13} parent=31 // pred_check_branch
        %845 = sbr.rel (%p843) target = $region40
      $region39: #{detail_capture_forward.13} parent=31 // pred_region
        %v846 = vld [vmem:[#allocation2] sm:$0xff]
        %v847 = vld [vmem:[#allocation2 + $0x8] sm:$0xff]
        %v848 = vld [vmem:[#allocation2 + $0x10] sm:$0xff]
        %v849 = vld [vmem:[#allocation2 + $0x18] sm:$0xff]
        %v850 = vld [vmem:[#allocation2 + $0x20] sm:$0xff]
        %v851 = vld [vmem:[#allocation2 + $0x28] sm:$0xff]
        %v852 = vld [vmem:[#allocation2 + $0x30] sm:$0xff]
        %v853 = vld [vmem:[#allocation2 + $0x38] sm:$0xff]
        %v854 = vld [vmem:[#allocation2 + $0x40] sm:$0xff]
        %v855 = vld [vmem:[#allocation2 + $0x48] sm:$0xff]
        %v856 = vld [vmem:[#allocation2 + $0x50] sm:$0xff]
        %v857 = vld [vmem:[#allocation2 + $0x58] sm:$0xff]
        %v858 = vld [vmem:[#allocation2 + $0x60] sm:$0xff]
        %v859 = vld [vmem:[#allocation2 + $0x68] sm:$0xff]
        %v860 = vld [vmem:[#allocation2 + $0x70] sm:$0xff]
        %v861 = vld [vmem:[#allocation2 + $0x78] sm:$0xff]
        %v862 = vld [vmem:[#allocation2 + $0x80] sm:$0xff]
        %v863 = vld [vmem:[#allocation2 + $0x88] sm:$0xff]
        %v864 = vld [vmem:[#allocation2 + $0x90] sm:$0xff]
        %v865 = vld [vmem:[#allocation2 + $0x98] sm:$0xff]
        %v866 = vld [vmem:[#allocation2 + $0xa0] sm:$0xff]
        %v867 = vld [vmem:[#allocation2 + $0xa8] sm:$0xff]
        %v868 = vld [vmem:[#allocation2 + $0xb0] sm:$0xff]
        %v869 = vld [vmem:[#allocation2 + $0xb8] sm:$0xff]
        %v870 = vld [vmem:[#allocation2 + $0xc0] sm:$0xff]
        %v871 = vld [vmem:[#allocation2 + $0xc8] sm:$0xff]
        %v872 = vld [vmem:[#allocation2 + $0xd0] sm:$0xff]
        %v873 = vld [vmem:[#allocation2 + $0xd8] sm:$0xff]
        %v874 = vld [vmem:[#allocation2 + $0xe0] sm:$0xff]
        %v875 = vld [vmem:[#allocation2 + $0xe8] sm:$0xff]
        %v876 = vld [vmem:[#allocation2 + $0xf0] sm:$0xff]
        %v877 = vld [vmem:[#allocation2 + $0xf8] sm:$0xff]
        %v878 = vld [vmem:[%s2] sm:$0x1]
        %v880 = vlaneseq
        %v881 = vshrl.u32 %v880, 7
        %v882 = vsub.s32 0, %v881
        %v883 = vrot.slane %v878, %v882
        %v885 = vadd.f32 %v846, %v883
        %v886 = vadd.f32 %v847, %v883
        %v887 = vadd.f32 %v848, %v883
        %v888 = vadd.f32 %v849, %v883
        %v889 = vadd.f32 %v850, %v883
        %v890 = vadd.f32 %v851, %v883
        %v891 = vadd.f32 %v852, %v883
        %v892 = vadd.f32 %v853, %v883
        %v893 = vadd.f32 %v854, %v883
        %v894 = vadd.f32 %v855, %v883
        %v895 = vadd.f32 %v856, %v883
        %v896 = vadd.f32 %v857, %v883
        %v897 = vadd.f32 %v858, %v883
        %v898 = vadd.f32 %v859, %v883
        %v899 = vadd.f32 %v860, %v883
        %v900 = vadd.f32 %v861, %v883
        %v901 = vadd.f32 %v862, %v883
        %v902 = vadd.f32 %v863, %v883
        %v903 = vadd.f32 %v864, %v883
        %v904 = vadd.f32 %v865, %v883
        %v905 = vadd.f32 %v866, %v883
        %v906 = vadd.f32 %v867, %v883
        %v907 = vadd.f32 %v868, %v883
        %v908 = vadd.f32 %v869, %v883
        %v909 = vadd.f32 %v870, %v883
        %v910 = vadd.f32 %v871, %v883
        %v911 = vadd.f32 %v872, %v883
        %v912 = vadd.f32 %v873, %v883
        %v913 = vadd.f32 %v874, %v883
        %v914 = vadd.f32 %v875, %v883
        %v915 = vadd.f32 %v876, %v883
        %v916 = vadd.f32 %v877, %v883
        %v917 = vmax.f32 %v885, 0.0
        %v918 = vmax.f32 %v886, 0.0
        %v919 = vmax.f32 %v887, 0.0
        %v920 = vmax.f32 %v888, 0.0
        %v921 = vmax.f32 %v889, 0.0
        %v922 = vmax.f32 %v890, 0.0
        %v923 = vmax.f32 %v891, 0.0
        %v924 = vmax.f32 %v892, 0.0
        %v925 = vmax.f32 %v893, 0.0
        %v926 = vmax.f32 %v894, 0.0
        %v927 = vmax.f32 %v895, 0.0
        %v928 = vmax.f32 %v896, 0.0
        %v929 = vmax.f32 %v897, 0.0
        %v930 = vmax.f32 %v898, 0.0
        %v931 = vmax.f32 %v899, 0.0
        %v932 = vmax.f32 %v900, 0.0
        %v933 = vmax.f32 %v901, 0.0
        %v934 = vmax.f32 %v902, 0.0
        %v935 = vmax.f32 %v903, 0.0
        %v936 = vmax.f32 %v904, 0.0
        %v937 = vmax.f32 %v905, 0.0
        %v938 = vmax.f32 %v906, 0.0
        %v939 = vmax.f32 %v907, 0.0
        %v940 = vmax.f32 %v908, 0.0
        %v941 = vmax.f32 %v909, 0.0
        %v942 = vmax.f32 %v910, 0.0
        %v943 = vmax.f32 %v911, 0.0
        %v944 = vmax.f32 %v912, 0.0
        %v945 = vmax.f32 %v913, 0.0
        %v946 = vmax.f32 %v914, 0.0
        %v947 = vmax.f32 %v915, 0.0
        %v948 = vmax.f32 %v916, 0.0
        %v949 = vpack.c.bf16 %v918, %v917
        %v950 = vpack.c.bf16 %v920, %v919
        %v951 = vpack.c.bf16 %v922, %v921
        %v952 = vpack.c.bf16 %v924, %v923
        %v953 = vpack.c.bf16 %v926, %v925
        %v954 = vpack.c.bf16 %v928, %v927
        %v955 = vpack.c.bf16 %v930, %v929
        %v956 = vpack.c.bf16 %v932, %v931
        %v957 = vpack.c.bf16 %v934, %v933
        %v958 = vpack.c.bf16 %v936, %v935
        %v959 = vpack.c.bf16 %v938, %v937
        %v960 = vpack.c.bf16 %v940, %v939
        %v961 = vpack.c.bf16 %v942, %v941
        %v962 = vpack.c.bf16 %v944, %v943
        %v963 = vpack.c.bf16 %v946, %v945
        %v964 = vpack.c.bf16 %v948, %v947
        %v981 = vunpack.c.l.b16 %v949
        %v982 = vunpack.c.h.b16 %v949
        %v983 = vunpack.c.l.b16 %v950
        %v984 = vunpack.c.h.b16 %v950
        %v985 = vunpack.c.l.b16 %v951
        %v986 = vunpack.c.h.b16 %v951
        %v987 = vunpack.c.l.b16 %v952
        %v988 = vunpack.c.h.b16 %v952
        %v989 = vunpack.c.l.b16 %v953
        %v990 = vunpack.c.h.b16 %v953
        %v991 = vunpack.c.l.b16 %v954
        %v992 = vunpack.c.h.b16 %v954
        %v993 = vunpack.c.l.b16 %v955
        %v994 = vunpack.c.h.b16 %v955
        %v995 = vunpack.c.l.b16 %v956
        %v996 = vunpack.c.h.b16 %v956
        %v997 = vunpack.c.l.b16 %v957
        %v998 = vunpack.c.h.b16 %v957
        %v999 = vunpack.c.l.b16 %v958
        %v1000 = vunpack.c.h.b16 %v958
        %v1001 = vunpack.c.l.b16 %v959
        %v1002 = vunpack.c.h.b16 %v959
        %v1003 = vunpack.c.l.b16 %v960
        %v1004 = vunpack.c.h.b16 %v960
        %v1005 = vunpack.c.l.b16 %v961
        %v1006 = vunpack.c.h.b16 %v961
        %v1007 = vunpack.c.l.b16 %v962
        %v1008 = vunpack.c.h.b16 %v962
        %v1009 = vunpack.c.l.b16 %v963
        %v1010 = vunpack.c.h.b16 %v963
        %v1011 = vunpack.c.l.b16 %v964
        %v1012 = vunpack.c.h.b16 %v964
        %v1013 = vpack.c.b16 %v981, %v981
        %v1014 = vpack.c.b16 %v982, %v982
        %v1015 = vpack.c.b16 %v983, %v983
        %v1016 = vpack.c.b16 %v984, %v984
        %v1017 = vpack.c.b16 %v985, %v985
        %v1018 = vpack.c.b16 %v986, %v986
        %v1019 = vpack.c.b16 %v987, %v987
        %v1020 = vpack.c.b16 %v988, %v988
        %v1021 = vpack.c.b16 %v989, %v989
        %v1022 = vpack.c.b16 %v990, %v990
        %v1023 = vpack.c.b16 %v991, %v991
        %v1024 = vpack.c.b16 %v992, %v992
        %v1025 = vpack.c.b16 %v993, %v993
        %v1026 = vpack.c.b16 %v994, %v994
        %v1027 = vpack.c.b16 %v995, %v995
        %v1028 = vpack.c.b16 %v996, %v996
        %v1029 = vpack.c.b16 %v997, %v997
        %v1030 = vpack.c.b16 %v998, %v998
        %v1031 = vpack.c.b16 %v999, %v999
        %v1032 = vpack.c.b16 %v1000, %v1000
        %v1033 = vpack.c.b16 %v1001, %v1001
        %v1034 = vpack.c.b16 %v1002, %v1002
        %v1035 = vpack.c.b16 %v1003, %v1003
        %v1036 = vpack.c.b16 %v1004, %v1004
        %v1037 = vpack.c.b16 %v1005, %v1005
        %v1038 = vpack.c.b16 %v1006, %v1006
        %v1039 = vpack.c.b16 %v1007, %v1007
        %v1040 = vpack.c.b16 %v1008, %v1008
        %v1041 = vpack.c.b16 %v1009, %v1009
        %v1042 = vpack.c.b16 %v1010, %v1010
        %v1043 = vpack.c.b16 %v1011, %v1011
        %v1044 = vpack.c.b16 %v1012, %v1012
        %vm1077 = vcmask 60416
        %1078 = vst.msk [vmem:[%s225] sm:$0xf] %vm1077, %v1013
        %1079 = vst.msk [vmem:[%s225 + $0x4] sm:$0xf] %vm1077, %v1014
        %1080 = vst.msk [vmem:[%s225 + $0x8] sm:$0xf] %vm1077, %v1015
        %1081 = vst.msk [vmem:[%s225 + $0xc] sm:$0xf] %vm1077, %v1016
        %1082 = vst.msk [vmem:[%s225 + $0x10] sm:$0xf] %vm1077, %v1017
        %1083 = vst.msk [vmem:[%s225 + $0x14] sm:$0xf] %vm1077, %v1018
        %1084 = vst.msk [vmem:[%s225 + $0x18] sm:$0xf] %vm1077, %v1019
        %1085 = vst.msk [vmem:[%s225 + $0x1c] sm:$0xf] %vm1077, %v1020
        %1086 = vst.msk [vmem:[%s225 + $0x20] sm:$0xf] %vm1077, %v1021
        %1087 = vst.msk [vmem:[%s225 + $0x24] sm:$0xf] %vm1077, %v1022
        %1088 = vst.msk [vmem:[%s225 + $0x28] sm:$0xf] %vm1077, %v1023
        %1089 = vst.msk [vmem:[%s225 + $0x2c] sm:$0xf] %vm1077, %v1024
        %1090 = vst.msk [vmem:[%s225 + $0x30] sm:$0xf] %vm1077, %v1025
        %1091 = vst.msk [vmem:[%s225 + $0x34] sm:$0xf] %vm1077, %v1026
        %1092 = vst.msk [vmem:[%s225 + $0x38] sm:$0xf] %vm1077, %v1027
        %1093 = vst.msk [vmem:[%s225 + $0x3c] sm:$0xf] %vm1077, %v1028
        %1094 = vst.msk [vmem:[%s225 + $0x40] sm:$0xf] %vm1077, %v1029
        %1095 = vst.msk [vmem:[%s225 + $0x44] sm:$0xf] %vm1077, %v1030
        %1096 = vst.msk [vmem:[%s225 + $0x48] sm:$0xf] %vm1077, %v1031
        %1097 = vst.msk [vmem:[%s225 + $0x4c] sm:$0xf] %vm1077, %v1032
        %1098 = vst.msk [vmem:[%s225 + $0x50] sm:$0xf] %vm1077, %v1033
        %1099 = vst.msk [vmem:[%s225 + $0x54] sm:$0xf] %vm1077, %v1034
        %1100 = vst.msk [vmem:[%s225 + $0x58] sm:$0xf] %vm1077, %v1035
        %1101 = vst.msk [vmem:[%s225 + $0x5c] sm:$0xf] %vm1077, %v1036
        %1102 = vst.msk [vmem:[%s225 + $0x60] sm:$0xf] %vm1077, %v1037
        %1103 = vst.msk [vmem:[%s225 + $0x64] sm:$0xf] %vm1077, %v1038
        %1104 = vst.msk [vmem:[%s225 + $0x68] sm:$0xf] %vm1077, %v1039
        %1105 = vst.msk [vmem:[%s225 + $0x6c] sm:$0xf] %vm1077, %v1040
        %1106 = vst.msk [vmem:[%s225 + $0x70] sm:$0xf] %vm1077, %v1041
        %1107 = vst.msk [vmem:[%s225 + $0x74] sm:$0xf] %vm1077, %v1042
        %1108 = vst.msk [vmem:[%s225 + $0x78] sm:$0xf] %vm1077, %v1043
        %1109 = vst.msk [vmem:[%s225 + $0x7c] sm:$0xf] %vm1077, %v1044
      $region40: #{detail_capture_forward.13} parent=31 // pred_fallthru
        _
      %s1110 = smul.u32 32, %s18
      %p1111 = scmp.lt.s32.totalorder %s1110, 63
      %s1112 = scalar_select %p1111, %s1110, 63
      %s1113 = smul.addr %s1112, 4
      %s1114 = scalar_lea.vmem %s3, %s1113
      // Predicated region
      $region41: #{detail_capture_forward.13} parent=31 // pred_check
        %p1115 = pneg %p119
      $region42: #{detail_capture_forward.13} parent=31 // pred_check_branch
        %1117 = sbr.rel (%p1115) target = $region44
      $region43: #{detail_capture_forward.13} parent=31 // pred_region
        %s1118 = smul.u32 32, %s18
      $region44: #{detail_capture_forward.13} parent=31 // pred_fallthru
        _
    $region32: #{detail_capture_forward.13} parent=5 // pred_fallthru
      _
    %p1119 = scmp.le.s32.totalorder 2, %s9
    // Predicated region
    $region45: #{detail_capture_forward.13} parent=5 // pred_check
      %p1120 = pneg %p1119
    $region46: #{detail_capture_forward.13} parent=5 // pred_check_branch
      %1122 = sbr.rel (%p1120) target = $region48
    $region47: #{detail_capture_forward.13} parent=5 // pred_region
      %s1123 = ssub.s32 %s9, 2
      // Predicated region
      $region49: #{detail_capture_forward.13} parent=47 // pred_check
        %p1124 = pneg %p125
      $region50: #{detail_capture_forward.13} parent=47 // pred_check_branch
        %1126 = sbr.rel (%p1124) target = $region52
      $region51: #{detail_capture_forward.13} parent=47 // pred_region
        %s1127 = smul.u32 32, %s20
        %p1128 = scmp.lt.s32.totalorder %s1127, 63
        %s1129 = scalar_select %p1128, %s1127, 63
        %s1130 = smul.addr %s1129, 4
        %s1131 = scalar_lea.vmem %s3, %s1130
      $region52: #{detail_capture_forward.13} parent=47 // pred_fallthru
        _
    $region48: #{detail_capture_forward.13} parent=5 // pred_fallthru
      _
  $region6: #{detail_capture_forward.13} parent=0 // loop_footer
    %s13 = sadd.s32 1, %s9
  $region7: #{detail_capture_forward.13} parent=0 // loop_footer_branch
    %8 = sbr.rel target = $region3
  $region8: #{detail_capture_forward.13} parent=0 // loop_exit
    _

// kernel: detail_capture_forward.14
$region0: #{detail_capture_forward.14}
  #allocation0 [shape = 'u32[]', space=smem, size = 0x4, offset = 0x4, fixed_abs, tag = 'smem constant byte address 0x4 - core index']
  #allocation1 [shape = 'u32[144,128]{1,0:T(1,128)}', space=vmem, size = 0x12000, scoped, tag = 'internal scratch']
  #allocation2 [shape = 'f32[512,8]{1,0:T(8,128)}', space=vmem, size = 0x40000, scoped, tag = 'scratch operand']
  %s0 = inlined_call_operand.vmem [shape: bf16[2048,128], index: 0, kind: input, shape index: {}]
  %s1 = inlined_call_operand.vmem [shape: bf16[128,8], index: 1, kind: input, shape index: {}]
  %s2 = inlined_call_operand.vmem [shape: f32[1,8], index: 2, kind: input, shape index: {}]
  %s3 = inlined_call_operand.vmem [shape: bf16[2048,8], index: 3, kind: output, shape index: {}]
  %s4 = sld [smem:[#allocation0]]
  $region53: #{detail_capture_forward.14} parent=0
    _
  %s6 = ssub.s32 1, %s4
  %s7 = scalar_select 0, %s6, %s4
  loop: start=0, step=1, limit=6
  $region2: #{detail_capture_forward.14} parent=0 // loop_pre_header
    _
  $region3: #{detail_capture_forward.14} parent=0 // loop_header
    %s9 = sphi 0, %s13
    %p10 = scmp.ge.s32.totalorder %s9, 6
    %s16 = sphi 0, %s28
    %s17 = sphi 0, %s24
    %s18 = sphi 0, %s16
    %s19 = sphi 0, %s17
    %s20 = sphi 0, %s18
    %s21 = sphi 0, %s19
    %s33 = sphi 0, %s35
    %s36 = sphi 0, %s33
    %s37 = sphi 0, %s36
    %s53 = sphi 0, %s37
    %s59 = sphi 0, %s61
    %s62 = sphi 0, %s59
    %s63 = sphi 0, %s62
    %s79 = sphi 0, %s63
    %s83 = sphi 0, %s83
    %s85 = sphi 0, %s83
    %s86 = sphi 0, %s85
    %s100 = sphi 0, %s86
    %s106 = sphi 0, %s108
    %s109 = sphi 0, %s106
    %s110 = sphi 0, %s109
    %s126 = sphi 0, %s110
  $region4: #{detail_capture_forward.14} parent=0 // loop_header_branch
    %12 = sbr.rel (%p10) target = $region8
  $region5: #{detail_capture_forward.14} parent=0 // loop_body
    %s14 = ssub.s32 %s9, 1
    %s15 = ssub.s32 %s9, 2
    %s22 = sadd.s32 1, %s17
    %p23 = scmp.ge.s32.totalorder %s22, 1
    %s24 = scalar_select %p23, 0, %s22
    %s25 = sadd.s32 1, %s16
    %s26 = scalar_select %p23, %s25, %s16
    %p27 = scmp.ge.s32.totalorder %s26, 4
    %s28 = scalar_select %p27, 0, %s26
    %s29 = ssub.s32 %s16, %s28
    %s30 = ssub.s32 %s17, %s24
    %s31 = sor.u32 %s29, %s30
    %p32 = scmp.eq.s32.totalorder %s31, 0
    %s34 = sadd.s32 %s33, 1
    %s35 = scalar_select %p32, %s33, %s34
    %p38 = pneg %p32
    %p39 = scmp.eq.s32.totalorder %s9, 3
    %p40 = por %p38, %p39
    %p41 = scmp.ne.s32.totalorder %s33, %s36
    %p42 = scmp.eq.s32.totalorder %s9, 0
    %p43 = por %p41, %p42
    %p44 = scmp.ne.s32.totalorder %s33, %s36
    %p45 = scmp.eq.s32.totalorder %s14, 3
    %p46 = por %p44, %p45
    %p47 = scmp.ne.s32.totalorder %s36, %s37
    %p48 = scmp.eq.s32.totalorder %s14, 0
    %p49 = por %p47, %p48
    %p50 = scmp.ne.s32.totalorder %s36, %s37
    %p51 = scmp.eq.s32.totalorder %s15, 3
    %p52 = por %p50, %p51
    %p54 = scmp.ne.s32.totalorder %s37, %s53
    %p55 = scmp.eq.s32.totalorder %s15, 0
    %p56 = por %p54, %p55
    %s57 = ssub.s32 %s17, %s24
    %p58 = scmp.eq.s32.totalorder %s57, 0
    %s60 = sadd.s32 %s59, 1
    %s61 = scalar_select %p58, %s59, %s60
    %p64 = pneg %p58
    %p65 = scmp.eq.s32.totalorder %s9, 3
    %p66 = por %p64, %p65
    %p67 = scmp.ne.s32.totalorder %s59, %s62
    %p68 = scmp.eq.s32.totalorder %s9, 0
    %p69 = por %p67, %p68
    %p70 = scmp.ne.s32.totalorder %s59, %s62
    %p71 = scmp.eq.s32.totalorder %s14, 3
    %p72 = por %p70, %p71
    %p73 = scmp.ne.s32.totalorder %s62, %s63
    %p74 = scmp.eq.s32.totalorder %s14, 0
    %p75 = por %p73, %p74
    %p76 = scmp.ne.s32.totalorder %s62, %s63
    %p77 = scmp.eq.s32.totalorder %s15, 3
    %p78 = por %p76, %p77
    %p80 = scmp.ne.s32.totalorder %s63, %s79
    %p81 = scmp.eq.s32.totalorder %s15, 0
    %p82 = por %p80, %p81
    %s84 = sadd.s32 %s83, 1
    %p87 = scmp.eq.s32.totalorder %s9, 3
    %p88 = scmp.ne.s32.totalorder %s83, %s85
    %p89 = scmp.eq.s32.totalorder %s9, 0
    %p90 = por %p88, %p89
    %p91 = scmp.ne.s32.totalorder %s83, %s85
    %p92 = scmp.eq.s32.totalorder %s14, 3
    %p93 = por %p91, %p92
    %p94 = scmp.ne.s32.totalorder %s85, %s86
    %p95 = scmp.eq.s32.totalorder %s14, 0
    %p96 = por %p94, %p95
    %p97 = scmp.ne.s32.totalorder %s85, %s86
    %p98 = scmp.eq.s32.totalorder %s15, 3
    %p99 = por %p97, %p98
    %p101 = scmp.ne.s32.totalorder %s86, %s100
    %p102 = scmp.eq.s32.totalorder %s15, 0
    %p103 = por %p101, %p102
    %s104 = ssub.s32 %s16, %s28
    %p105 = scmp.eq.s32.totalorder %s104, 0
    %s107 = sadd.s32 %s106, 1
    %s108 = scalar_select %p105, %s106, %s107
    %p111 = pneg %p105
    %p112 = scmp.eq.s32.totalorder %s9, 3
    %p113 = por %p111, %p112
    %p114 = scmp.ne.s32.totalorder %s106, %s109
    %p115 = scmp.eq.s32.totalorder %s9, 0
    %p116 = por %p114, %p115
    %p117 = scmp.ne.s32.totalorder %s106, %s109
    %p118 = scmp.eq.s32.totalorder %s14, 3
    %p119 = por %p117, %p118
    %p120 = scmp.ne.s32.totalorder %s109, %s110
    %p121 = scmp.eq.s32.totalorder %s14, 0
    %p122 = por %p120, %p121
    %p123 = scmp.ne.s32.totalorder %s109, %s110
    %p124 = scmp.eq.s32.totalorder %s15, 3
    %p125 = por %p123, %p124
    %p127 = scmp.ne.s32.totalorder %s110, %s126
    %p128 = scmp.eq.s32.totalorder %s15, 0
    %p129 = por %p127, %p128
    %p130 = scmp.le.s32.totalorder 1, %s9
    %p131 = scmp.lt.s32.totalorder %s9, 5
    %p132 = pnand %p130, %p131
    %p133 = pneg %p132
    // Predicated region
    $region9: #{detail_capture_forward.14} parent=5 // pred_check
      _
    $region10: #{detail_capture_forward.14} parent=5 // pred_check_branch
      %135 = sbr.rel (%p132) target = $region12
    $region11: #{detail_capture_forward.14} parent=5 // pred_region
      %s136 = ssub.s32 %s9, 1
      // Predicated region
      $region13: #{detail_capture_forward.14} parent=11 // pred_check
        %p137 = pneg %p75
      $region14: #{detail_capture_forward.14} parent=11 // pred_check_branch
        %139 = sbr.rel (%p137) target = $region16
      $region15: #{detail_capture_forward.14} parent=11 // pred_region
        %s140 = smul.u32 16, %s19
        %p141 = scmp.lt.s32.totalorder %s140, 15
        %s142 = scalar_select %p141, %s140, 15
        %s143 = smul.addr %s142, 4
        %s144 = scalar_lea.vmem %s1, %s143
        %s145 = smul.u32 16, %s19
      $region16: #{detail_capture_forward.14} parent=11 // pred_fallthru
        _
      // Predicated region
      $region17: #{detail_capture_forward.14} parent=11 // pred_check
        %p146 = pneg %p96
      $region18: #{detail_capture_forward.14} parent=11 // pred_check_branch
        %148 = sbr.rel (%p146) target = $region20
      $region19: #{detail_capture_forward.14} parent=11 // pred_region
        _
      $region20: #{detail_capture_forward.14} parent=11 // pred_fallthru
        _
    $region12: #{detail_capture_forward.14} parent=5 // pred_fallthru
      _
    %p149 = scmp.lt.s32.totalorder %s9, 4
    // Predicated region
    $region21: #{detail_capture_forward.14} parent=5 // pred_check
      %p150 = pneg %p149
    $region22: #{detail_capture_forward.14} parent=5 // pred_check_branch
      %152 = sbr.rel (%p150) target = $region24
    $region23: #{detail_capture_forward.14} parent=5 // pred_region
      // Predicated region
      $region25: #{detail_capture_forward.14} parent=23 // pred_check
        %p153 = pneg %p43
      $region26: #{detail_capture_forward.14} parent=23 // pred_check_branch
        %155 = sbr.rel (%p153) target = $region28
      $region27: #{detail_capture_forward.14} parent=23 // pred_region
        %s156 = smul.u32 64, %s16
        %p157 = scmp.lt.s32.totalorder %s156, 255
        %s158 = scalar_select %p157, %s156, 255
        %p159 = scmp.lt.s32.totalorder %s17, 0
        %s160 = scalar_select %p159, %s17, 0
        %s161 = sadd.s32 %s160, %s158
        %s162 = smul.addr %s161, 4
        %s163 = scalar_lea.vmem %s0, %s162
        %s164 = smul.u32 64, %s16
      $region28: #{detail_capture_forward.14} parent=23 // pred_fallthru
        _
    $region24: #{detail_capture_forward.14} parent=5 // pred_fallthru
      _
    %p165 = scmp.le.s32.totalorder 1, %s9
    %p166 = scmp.lt.s32.totalorder %s9, 5
    %p167 = pnand %p165, %p166
    %p168 = pneg %p167
    // Predicated region
    $region29: #{detail_capture_forward.14} parent=5 // pred_check
      _
    $region30: #{detail_capture_forward.14} parent=5 // pred_check_branch
      %170 = sbr.rel (%p167) target = $region32
    $region31: #{detail_capture_forward.14} parent=5 // pred_region
      %s171 = ssub.s32 %s9, 1
      %s172 = smul.u32 64, %s18
      %p173 = scmp.lt.s32.totalorder %s172, 255
      %s174 = scalar_select %p173, %s172, 255
      %p175 = scmp.lt.s32.totalorder %s19, 0
      %s176 = scalar_select %p175, %s19, 0
      %s177 = sadd.s32 %s176, %s174
      %s178 = smul.addr %s177, 4
      %s179 = scalar_lea.vmem %s0, %s178
      %p180 = pneg %p49
      %p181 = pneg %p46
      %s182 = smul.u32 16, %s19
      %p183 = scmp.lt.s32.totalorder %s182, 15
      %s184 = scalar_select %p183, %s182, 15
      %s185 = smul.addr %s184, 4
      %s186 = scalar_lea.vmem %s1, %s185
      %p187 = pneg %p75
      %p188 = pneg %p72
      %p189 = pneg %p96
      %p190 = pneg %p93
      %p191 = pneg %p122
      %p192 = pneg %p119
      %s193 = smul.u32 64, %s18
      %p194 = scmp.lt.s32.totalorder %s193, 255
      %s195 = scalar_select %p194, %s193, 255
      %s196 = smul.addr %s195, 4
      %s197 = scalar_lea.vmem %s3, %s196
      %s198 = smul.u32 64, %s18
      %p199 = scmp.lt.s32.totalorder %s198, 255
      %s200 = scalar_select %p199, %s198, 255
      %p201 = scmp.lt.s32.totalorder %s19, 0
      %s202 = scalar_select %p201, %s19, 0
      %s203 = sadd.s32 %s202, %s200
      %s204 = smul.addr %s203, 4
      %s205 = scalar_lea.vmem %s0, %s204
      %s206 = smul.u32 64, %s18
      %s207 = smul.u32 16, %s19
      %p208 = scmp.lt.s32.totalorder %s207, 15
      %s209 = scalar_select %p208, %s207, 15
      %s210 = smul.addr %s209, 4
      %s211 = scalar_lea.vmem %s1, %s210
      %s212 = smul.u32 16, %s19
      %s213 = smul.u32 64, %s18
      %p214 = scmp.lt.s32.totalorder %s213, 255
      %s215 = scalar_select %p214, %s213, 255
      %s216 = smul.addr %s215, 4
      %s217 = scalar_lea.vmem %s3, %s216
      %s218 = smul.u32 64, %s18
      %p220 = scmp.eq.s32.totalorder %s19, 0
      // Predicated region
      $region33: #{detail_capture_forward.14} parent=31 // pred_check
        %p221 = pneg %p220
      $region34: #{detail_capture_forward.14} parent=31 // pred_check_branch
        %223 = sbr.rel (%p221) target = $region36
      $region35: #{detail_capture_forward.14} parent=31 // pred_region
        %vm224 = vcmask 64512
        %225 = vst.msk [vmem:[#allocation2] sm:$0xff] %vm224, 0.0
        %226 = vst.msk [vmem:[#allocation2 + $0x8] sm:$0xff] %vm224, 0.0
        %227 = vst.msk [vmem:[#allocation2 + $0x10] sm:$0xff] %vm224, 0.0
        %228 = vst.msk [vmem:[#allocation2 + $0x18] sm:$0xff] %vm224, 0.0
        %229 = vst.msk [vmem:[#allocation2 + $0x20] sm:$0xff] %vm224, 0.0
        %230 = vst.msk [vmem:[#allocation2 + $0x28] sm:$0xff] %vm224, 0.0
        %231 = vst.msk [vmem:[#allocation2 + $0x30] sm:$0xff] %vm224, 0.0
        %232 = vst.msk [vmem:[#allocation2 + $0x38] sm:$0xff] %vm224, 0.0
        %233 = vst.msk [vmem:[#allocation2 + $0x40] sm:$0xff] %vm224, 0.0
        %234 = vst.msk [vmem:[#allocation2 + $0x48] sm:$0xff] %vm224, 0.0
        %235 = vst.msk [vmem:[#allocation2 + $0x50] sm:$0xff] %vm224, 0.0
        %236 = vst.msk [vmem:[#allocation2 + $0x58] sm:$0xff] %vm224, 0.0
        %237 = vst.msk [vmem:[#allocation2 + $0x60] sm:$0xff] %vm224, 0.0
        %238 = vst.msk [vmem:[#allocation2 + $0x68] sm:$0xff] %vm224, 0.0
        %239 = vst.msk [vmem:[#allocation2 + $0x70] sm:$0xff] %vm224, 0.0
        %240 = vst.msk [vmem:[#allocation2 + $0x78] sm:$0xff] %vm224, 0.0
        %241 = vst.msk [vmem:[#allocation2 + $0x80] sm:$0xff] %vm224, 0.0
        %242 = vst.msk [vmem:[#allocation2 + $0x88] sm:$0xff] %vm224, 0.0
        %243 = vst.msk [vmem:[#allocation2 + $0x90] sm:$0xff] %vm224, 0.0
        %244 = vst.msk [vmem:[#allocation2 + $0x98] sm:$0xff] %vm224, 0.0
        %245 = vst.msk [vmem:[#allocation2 + $0xa0] sm:$0xff] %vm224, 0.0
        %246 = vst.msk [vmem:[#allocation2 + $0xa8] sm:$0xff] %vm224, 0.0
        %247 = vst.msk [vmem:[#allocation2 + $0xb0] sm:$0xff] %vm224, 0.0
        %248 = vst.msk [vmem:[#allocation2 + $0xb8] sm:$0xff] %vm224, 0.0
        %249 = vst.msk [vmem:[#allocation2 + $0xc0] sm:$0xff] %vm224, 0.0
        %250 = vst.msk [vmem:[#allocation2 + $0xc8] sm:$0xff] %vm224, 0.0
        %251 = vst.msk [vmem:[#allocation2 + $0xd0] sm:$0xff] %vm224, 0.0
        %252 = vst.msk [vmem:[#allocation2 + $0xd8] sm:$0xff] %vm224, 0.0
        %253 = vst.msk [vmem:[#allocation2 + $0xe0] sm:$0xff] %vm224, 0.0
        %254 = vst.msk [vmem:[#allocation2 + $0xe8] sm:$0xff] %vm224, 0.0
        %255 = vst.msk [vmem:[#allocation2 + $0xf0] sm:$0xff] %vm224, 0.0
        %256 = vst.msk [vmem:[#allocation2 + $0xf8] sm:$0xff] %vm224, 0.0
        %257 = vst.msk [vmem:[#allocation2 + $0x100] sm:$0xff] %vm224, 0.0
        %258 = vst.msk [vmem:[#allocation2 + $0x108] sm:$0xff] %vm224, 0.0
        %259 = vst.msk [vmem:[#allocation2 + $0x110] sm:$0xff] %vm224, 0.0
        %260 = vst.msk [vmem:[#allocation2 + $0x118] sm:$0xff] %vm224, 0.0
        %261 = vst.msk [vmem:[#allocation2 + $0x120] sm:$0xff] %vm224, 0.0
        %262 = vst.msk [vmem:[#allocation2 + $0x128] sm:$0xff] %vm224, 0.0
        %263 = vst.msk [vmem:[#allocation2 + $0x130] sm:$0xff] %vm224, 0.0
        %264 = vst.msk [vmem:[#allocation2 + $0x138] sm:$0xff] %vm224, 0.0
        %265 = vst.msk [vmem:[#allocation2 + $0x140] sm:$0xff] %vm224, 0.0
        %266 = vst.msk [vmem:[#allocation2 + $0x148] sm:$0xff] %vm224, 0.0
        %267 = vst.msk [vmem:[#allocation2 + $0x150] sm:$0xff] %vm224, 0.0
        %268 = vst.msk [vmem:[#allocation2 + $0x158] sm:$0xff] %vm224, 0.0
        %269 = vst.msk [vmem:[#allocation2 + $0x160] sm:$0xff] %vm224, 0.0
        %270 = vst.msk [vmem:[#allocation2 + $0x168] sm:$0xff] %vm224, 0.0
        %271 = vst.msk [vmem:[#allocation2 + $0x170] sm:$0xff] %vm224, 0.0
        %272 = vst.msk [vmem:[#allocation2 + $0x178] sm:$0xff] %vm224, 0.0
        %273 = vst.msk [vmem:[#allocation2 + $0x180] sm:$0xff] %vm224, 0.0
        %274 = vst.msk [vmem:[#allocation2 + $0x188] sm:$0xff] %vm224, 0.0
        %275 = vst.msk [vmem:[#allocation2 + $0x190] sm:$0xff] %vm224, 0.0
        %276 = vst.msk [vmem:[#allocation2 + $0x198] sm:$0xff] %vm224, 0.0
        %277 = vst.msk [vmem:[#allocation2 + $0x1a0] sm:$0xff] %vm224, 0.0
        %278 = vst.msk [vmem:[#allocation2 + $0x1a8] sm:$0xff] %vm224, 0.0
        %279 = vst.msk [vmem:[#allocation2 + $0x1b0] sm:$0xff] %vm224, 0.0
        %280 = vst.msk [vmem:[#allocation2 + $0x1b8] sm:$0xff] %vm224, 0.0
        %281 = vst.msk [vmem:[#allocation2 + $0x1c0] sm:$0xff] %vm224, 0.0
        %282 = vst.msk [vmem:[#allocation2 + $0x1c8] sm:$0xff] %vm224, 0.0
        %283 = vst.msk [vmem:[#allocation2 + $0x1d0] sm:$0xff] %vm224, 0.0
        %284 = vst.msk [vmem:[#allocation2 + $0x1d8] sm:$0xff] %vm224, 0.0
        %285 = vst.msk [vmem:[#allocation2 + $0x1e0] sm:$0xff] %vm224, 0.0
        %286 = vst.msk [vmem:[#allocation2 + $0x1e8] sm:$0xff] %vm224, 0.0
        %287 = vst.msk [vmem:[#allocation2 + $0x1f0] sm:$0xff] %vm224, 0.0
        %288 = vst.msk [vmem:[#allocation2 + $0x1f8] sm:$0xff] %vm224, 0.0
      $region36: #{detail_capture_forward.14} parent=31 // pred_fallthru
        _
      %v289 = vld [vmem:[#allocation2] sm:$0xff]
      %v290 = vld [vmem:[#allocation2 + $0x8] sm:$0xff]
      %v291 = vld [vmem:[#allocation2 + $0x10] sm:$0xff]
      %v292 = vld [vmem:[#allocation2 + $0x18] sm:$0xff]
      %v293 = vld [vmem:[#allocation2 + $0x20] sm:$0xff]
      %v294 = vld [vmem:[#allocation2 + $0x28] sm:$0xff]
      %v295 = vld [vmem:[#allocation2 + $0x30] sm:$0xff]
      %v296 = vld [vmem:[#allocation2 + $0x38] sm:$0xff]
      %v297 = vld [vmem:[#allocation2 + $0x40] sm:$0xff]
      %v298 = vld [vmem:[#allocation2 + $0x48] sm:$0xff]
      %v299 = vld [vmem:[#allocation2 + $0x50] sm:$0xff]
      %v300 = vld [vmem:[#allocation2 + $0x58] sm:$0xff]
      %v301 = vld [vmem:[#allocation2 + $0x60] sm:$0xff]
      %v302 = vld [vmem:[#allocation2 + $0x68] sm:$0xff]
      %v303 = vld [vmem:[#allocation2 + $0x70] sm:$0xff]
      %v304 = vld [vmem:[#allocation2 + $0x78] sm:$0xff]
      %v305 = vld [vmem:[#allocation2 + $0x80] sm:$0xff]
      %v306 = vld [vmem:[#allocation2 + $0x88] sm:$0xff]
      %v307 = vld [vmem:[#allocation2 + $0x90] sm:$0xff]
      %v308 = vld [vmem:[#allocation2 + $0x98] sm:$0xff]
      %v309 = vld [vmem:[#allocation2 + $0xa0] sm:$0xff]
      %v310 = vld [vmem:[#allocation2 + $0xa8] sm:$0xff]
      %v311 = vld [vmem:[#allocation2 + $0xb0] sm:$0xff]
      %v312 = vld [vmem:[#allocation2 + $0xb8] sm:$0xff]
      %v313 = vld [vmem:[#allocation2 + $0xc0] sm:$0xff]
      %v314 = vld [vmem:[#allocation2 + $0xc8] sm:$0xff]
      %v315 = vld [vmem:[#allocation2 + $0xd0] sm:$0xff]
      %v316 = vld [vmem:[#allocation2 + $0xd8] sm:$0xff]
      %v317 = vld [vmem:[#allocation2 + $0xe0] sm:$0xff]
      %v318 = vld [vmem:[#allocation2 + $0xe8] sm:$0xff]
      %v319 = vld [vmem:[#allocation2 + $0xf0] sm:$0xff]
      %v320 = vld [vmem:[#allocation2 + $0xf8] sm:$0xff]
      %v321 = vld [vmem:[#allocation2 + $0x100] sm:$0xff]
      %v322 = vld [vmem:[#allocation2 + $0x108] sm:$0xff]
      %v323 = vld [vmem:[#allocation2 + $0x110] sm:$0xff]
      %v324 = vld [vmem:[#allocation2 + $0x118] sm:$0xff]
      %v325 = vld [vmem:[#allocation2 + $0x120] sm:$0xff]
      %v326 = vld [vmem:[#allocation2 + $0x128] sm:$0xff]
      %v327 = vld [vmem:[#allocation2 + $0x130] sm:$0xff]
      %v328 = vld [vmem:[#allocation2 + $0x138] sm:$0xff]
      %v329 = vld [vmem:[#allocation2 + $0x140] sm:$0xff]
      %v330 = vld [vmem:[#allocation2 + $0x148] sm:$0xff]
      %v331 = vld [vmem:[#allocation2 + $0x150] sm:$0xff]
      %v332 = vld [vmem:[#allocation2 + $0x158] sm:$0xff]
      %v333 = vld [vmem:[#allocation2 + $0x160] sm:$0xff]
      %v334 = vld [vmem:[#allocation2 + $0x168] sm:$0xff]
      %v335 = vld [vmem:[#allocation2 + $0x170] sm:$0xff]
      %v336 = vld [vmem:[#allocation2 + $0x178] sm:$0xff]
      %v337 = vld [vmem:[#allocation2 + $0x180] sm:$0xff]
      %v338 = vld [vmem:[#allocation2 + $0x188] sm:$0xff]
      %v339 = vld [vmem:[#allocation2 + $0x190] sm:$0xff]
      %v340 = vld [vmem:[#allocation2 + $0x198] sm:$0xff]
      %v341 = vld [vmem:[#allocation2 + $0x1a0] sm:$0xff]
      %v342 = vld [vmem:[#allocation2 + $0x1a8] sm:$0xff]
      %v343 = vld [vmem:[#allocation2 + $0x1b0] sm:$0xff]
      %v344 = vld [vmem:[#allocation2 + $0x1b8] sm:$0xff]
      %v345 = vld [vmem:[#allocation2 + $0x1c0] sm:$0xff]
      %v346 = vld [vmem:[#allocation2 + $0x1c8] sm:$0xff]
      %v347 = vld [vmem:[#allocation2 + $0x1d0] sm:$0xff]
      %v348 = vld [vmem:[#allocation2 + $0x1d8] sm:$0xff]
      %v349 = vld [vmem:[#allocation2 + $0x1e0] sm:$0xff]
      %v350 = vld [vmem:[#allocation2 + $0x1e8] sm:$0xff]
      %v351 = vld [vmem:[#allocation2 + $0x1f0] sm:$0xff]
      %v352 = vld [vmem:[#allocation2 + $0x1f8] sm:$0xff]
      %v353 = vld [vmem:[%s205] sm:$0xf]
      %v354 = vld [vmem:[%s205 + $0x4] sm:$0xf]
      %v355 = vld [vmem:[%s205 + $0x8] sm:$0xf]
      %v356 = vld [vmem:[%s205 + $0xc] sm:$0xf]
      %v357 = vld [vmem:[%s205 + $0x10] sm:$0xf]
      %v358 = vld [vmem:[%s205 + $0x14] sm:$0xf]
      %v359 = vld [vmem:[%s205 + $0x18] sm:$0xf]
      %v360 = vld [vmem:[%s205 + $0x1c] sm:$0xf]
      %v361 = vld [vmem:[%s205 + $0x20] sm:$0xf]
      %v362 = vld [vmem:[%s205 + $0x24] sm:$0xf]
      %v363 = vld [vmem:[%s205 + $0x28] sm:$0xf]
      %v364 = vld [vmem:[%s205 + $0x2c] sm:$0xf]
      %v365 = vld [vmem:[%s205 + $0x30] sm:$0xf]
      %v366 = vld [vmem:[%s205 + $0x34] sm:$0xf]
      %v367 = vld [vmem:[%s205 + $0x38] sm:$0xf]
      %v368 = vld [vmem:[%s205 + $0x3c] sm:$0xf]
      %v369 = vld [vmem:[%s205 + $0x40] sm:$0xf]
      %v370 = vld [vmem:[%s205 + $0x44] sm:$0xf]
      %v371 = vld [vmem:[%s205 + $0x48] sm:$0xf]
      %v372 = vld [vmem:[%s205 + $0x4c] sm:$0xf]
      %v373 = vld [vmem:[%s205 + $0x50] sm:$0xf]
      %v374 = vld [vmem:[%s205 + $0x54] sm:$0xf]
      %v375 = vld [vmem:[%s205 + $0x58] sm:$0xf]
      %v376 = vld [vmem:[%s205 + $0x5c] sm:$0xf]
      %v377 = vld [vmem:[%s205 + $0x60] sm:$0xf]
      %v378 = vld [vmem:[%s205 + $0x64] sm:$0xf]
      %v379 = vld [vmem:[%s205 + $0x68] sm:$0xf]
      %v380 = vld [vmem:[%s205 + $0x6c] sm:$0xf]
      %v381 = vld [vmem:[%s205 + $0x70] sm:$0xf]
      %v382 = vld [vmem:[%s205 + $0x74] sm:$0xf]
      %v383 = vld [vmem:[%s205 + $0x78] sm:$0xf]
      %v384 = vld [vmem:[%s205 + $0x7c] sm:$0xf]
      %v385 = vld [vmem:[%s205 + $0x80] sm:$0xf]
      %v386 = vld [vmem:[%s205 + $0x84] sm:$0xf]
      %v387 = vld [vmem:[%s205 + $0x88] sm:$0xf]
      %v388 = vld [vmem:[%s205 + $0x8c] sm:$0xf]
      %v389 = vld [vmem:[%s205 + $0x90] sm:$0xf]
      %v390 = vld [vmem:[%s205 + $0x94] sm:$0xf]
      %v391 = vld [vmem:[%s205 + $0x98] sm:$0xf]
      %v392 = vld [vmem:[%s205 + $0x9c] sm:$0xf]
      %v393 = vld [vmem:[%s205 + $0xa0] sm:$0xf]
      %v394 = vld [vmem:[%s205 + $0xa4] sm:$0xf]
      %v395 = vld [vmem:[%s205 + $0xa8] sm:$0xf]
      %v396 = vld [vmem:[%s205 + $0xac] sm:$0xf]
      %v397 = vld [vmem:[%s205 + $0xb0] sm:$0xf]
      %v398 = vld [vmem:[%s205 + $0xb4] sm:$0xf]
      %v399 = vld [vmem:[%s205 + $0xb8] sm:$0xf]
      %v400 = vld [vmem:[%s205 + $0xbc] sm:$0xf]
      %v401 = vld [vmem:[%s205 + $0xc0] sm:$0xf]
      %v402 = vld [vmem:[%s205 + $0xc4] sm:$0xf]
      %v403 = vld [vmem:[%s205 + $0xc8] sm:$0xf]
      %v404 = vld [vmem:[%s205 + $0xcc] sm:$0xf]
      %v405 = vld [vmem:[%s205 + $0xd0] sm:$0xf]
      %v406 = vld [vmem:[%s205 + $0xd4] sm:$0xf]
      %v407 = vld [vmem:[%s205 + $0xd8] sm:$0xf]
      %v408 = vld [vmem:[%s205 + $0xdc] sm:$0xf]
      %v409 = vld [vmem:[%s205 + $0xe0] sm:$0xf]
      %v410 = vld [vmem:[%s205 + $0xe4] sm:$0xf]
      %v411 = vld [vmem:[%s205 + $0xe8] sm:$0xf]
      %v412 = vld [vmem:[%s205 + $0xec] sm:$0xf]
      %v413 = vld [vmem:[%s205 + $0xf0] sm:$0xf]
      %v414 = vld [vmem:[%s205 + $0xf4] sm:$0xf]
      %v415 = vld [vmem:[%s205 + $0xf8] sm:$0xf]
      %v416 = vld [vmem:[%s205 + $0xfc] sm:$0xf]
      %v417 = vld [vmem:[%s211] sm:$0xf]
      %v418 = vld [vmem:[%s211 + $0x4] sm:$0xf]
      %v419 = vld [vmem:[%s211 + $0x8] sm:$0xf]
      %v420 = vld [vmem:[%s211 + $0xc] sm:$0xf]
      %v421 = vld [vmem:[%s211 + $0x10] sm:$0xf]
      %v422 = vld [vmem:[%s211 + $0x14] sm:$0xf]
      %v423 = vld [vmem:[%s211 + $0x18] sm:$0xf]
      %v424 = vld [vmem:[%s211 + $0x1c] sm:$0xf]
      %v425 = vld [vmem:[%s211 + $0x20] sm:$0xf]
      %v426 = vld [vmem:[%s211 + $0x24] sm:$0xf]
      %v427 = vld [vmem:[%s211 + $0x28] sm:$0xf]
      %v428 = vld [vmem:[%s211 + $0x2c] sm:$0xf]
      %v429 = vld [vmem:[%s211 + $0x30] sm:$0xf]
      %v430 = vld [vmem:[%s211 + $0x34] sm:$0xf]
      %v431 = vld [vmem:[%s211 + $0x38] sm:$0xf]
      %v432 = vld [vmem:[%s211 + $0x3c] sm:$0xf]
      %v497 = vunpack.c.l.b16 %v353
      %v498 = vunpack.c.l.b16 %v354
      %v499 = vunpack.c.l.b16 %v355
      %v500 = vunpack.c.l.b16 %v356
      %v501 = vunpack.c.l.b16 %v357
      %v502 = vunpack.c.l.b16 %v358
      %v503 = vunpack.c.l.b16 %v359
      %v504 = vunpack.c.l.b16 %v360
      %v505 = vunpack.c.l.b16 %v361
      %v506 = vunpack.c.l.b16 %v362
      %v507 = vunpack.c.l.b16 %v363
      %v508 = vunpack.c.l.b16 %v364
      %v509 = vunpack.c.l.b16 %v365
      %v510 = vunpack.c.l.b16 %v366
      %v511 = vunpack.c.l.b16 %v367
      %v512 = vunpack.c.l.b16 %v368
      %v513 = vunpack.c.l.b16 %v369
      %v514 = vunpack.c.l.b16 %v370
      %v515 = vunpack.c.l.b16 %v371
      %v516 = vunpack.c.l.b16 %v372
      %v517 = vunpack.c.l.b16 %v373
      %v518 = vunpack.c.l.b16 %v374
      %v519 = vunpack.c.l.b16 %v375
      %v520 = vunpack.c.l.b16 %v376
      %v521 = vunpack.c.l.b16 %v377
      %v522 = vunpack.c.l.b16 %v378
      %v523 = vunpack.c.l.b16 %v379
      %v524 = vunpack.c.l.b16 %v380
      %v525 = vunpack.c.l.b16 %v381
      %v526 = vunpack.c.l.b16 %v382
      %v527 = vunpack.c.l.b16 %v383
      %v528 = vunpack.c.l.b16 %v384
      %v529 = vunpack.c.l.b16 %v385
      %v530 = vunpack.c.l.b16 %v386
      %v531 = vunpack.c.l.b16 %v387
      %v532 = vunpack.c.l.b16 %v388
      %v533 = vunpack.c.l.b16 %v389
      %v534 = vunpack.c.l.b16 %v390
      %v535 = vunpack.c.l.b16 %v391
      %v536 = vunpack.c.l.b16 %v392
      %v537 = vunpack.c.l.b16 %v393
      %v538 = vunpack.c.l.b16 %v394
      %v539 = vunpack.c.l.b16 %v395
      %v540 = vunpack.c.l.b16 %v396
      %v541 = vunpack.c.l.b16 %v397
      %v542 = vunpack.c.l.b16 %v398
      %v543 = vunpack.c.l.b16 %v399
      %v544 = vunpack.c.l.b16 %v400
      %v545 = vunpack.c.l.b16 %v401
      %v546 = vunpack.c.l.b16 %v402
      %v547 = vunpack.c.l.b16 %v403
      %v548 = vunpack.c.l.b16 %v404
      %v549 = vunpack.c.l.b16 %v405
      %v550 = vunpack.c.l.b16 %v406
      %v551 = vunpack.c.l.b16 %v407
      %v552 = vunpack.c.l.b16 %v408
      %v553 = vunpack.c.l.b16 %v409
      %v554 = vunpack.c.l.b16 %v410
      %v555 = vunpack.c.l.b16 %v411
      %v556 = vunpack.c.l.b16 %v412
      %v557 = vunpack.c.l.b16 %v413
      %v558 = vunpack.c.l.b16 %v414
      %v559 = vunpack.c.l.b16 %v415
      %v560 = vunpack.c.l.b16 %v416
      %v561 = vpack.c.b16 %v498, %v497
      %v562 = vpack.c.b16 %v500, %v499
      %v563 = vpack.c.b16 %v502, %v501
      %v564 = vpack.c.b16 %v504, %v503
      %v565 = vpack.c.b16 %v506, %v505
      %v566 = vpack.c.b16 %v508, %v507
      %v567 = vpack.c.b16 %v510, %v509
      %v568 = vpack.c.b16 %v512, %v511
      %v569 = vpack.c.b16 %v514, %v513
      %v570 = vpack.c.b16 %v516, %v515
      %v571 = vpack.c.b16 %v518, %v517
      %v572 = vpack.c.b16 %v520, %v519
      %v573 = vpack.c.b16 %v522, %v521
      %v574 = vpack.c.b16 %v524, %v523
      %v575 = vpack.c.b16 %v526, %v525
      %v576 = vpack.c.b16 %v528, %v527
      %v577 = vpack.c.b16 %v530, %v529
      %v578 = vpack.c.b16 %v532, %v531
      %v579 = vpack.c.b16 %v534, %v533
      %v580 = vpack.c.b16 %v536, %v535
      %v581 = vpack.c.b16 %v538, %v537
      %v582 = vpack.c.b16 %v540, %v539
      %v583 = vpack.c.b16 %v542, %v541
      %v584 = vpack.c.b16 %v544, %v543
      %v585 = vpack.c.b16 %v546, %v545
      %v586 = vpack.c.b16 %v548, %v547
      %v587 = vpack.c.b16 %v550, %v549
      %v588 = vpack.c.b16 %v552, %v551
      %v589 = vpack.c.b16 %v554, %v553
      %v590 = vpack.c.b16 %v556, %v555
      %v591 = vpack.c.b16 %v558, %v557
      %v592 = vpack.c.b16 %v560, %v559
      %v641 = vunpack.c.l.b16 %v417
      %v642 = vunpack.c.l.b16 %v418
      %v643 = vunpack.c.l.b16 %v419
      %v644 = vunpack.c.l.b16 %v420
      %v645 = vunpack.c.l.b16 %v421
      %v646 = vunpack.c.l.b16 %v422
      %v647 = vunpack.c.l.b16 %v423
      %v648 = vunpack.c.l.b16 %v424
      %v649 = vunpack.c.l.b16 %v425
      %v650 = vunpack.c.l.b16 %v426
      %v651 = vunpack.c.l.b16 %v427
      %v652 = vunpack.c.l.b16 %v428
      %v653 = vunpack.c.l.b16 %v429
      %v654 = vunpack.c.l.b16 %v430
      %v655 = vunpack.c.l.b16 %v431
      %v656 = vunpack.c.l.b16 %v432
      %v657 = vpack.c.b16 %v642, %v641
      %v658 = vpack.c.b16 %v644, %v643
      %v659 = vpack.c.b16 %v646, %v645
      %v660 = vpack.c.b16 %v648, %v647
      %v661 = vpack.c.b16 %v650, %v649
      %v662 = vpack.c.b16 %v652, %v651
      %v663 = vpack.c.b16 %v654, %v653
      %v664 = vpack.c.b16 %v656, %v655
      %673 = vmatprep.subr.bf16.mxu0 0
      %674 = vmatpush1.bf16.msra.mxu0 %v664
      %675 = vmatprep.subr.bf16.mxu0 0
      %676 = vmatpush1.bf16.msra.mxu0 %v663
      %677 = vmatprep.subr.bf16.mxu0 0
      %678 = vmatpush1.bf16.msra.mxu0 %v662
      %679 = vmatprep.subr.bf16.mxu0 0
      %680 = vmatpush1.bf16.msra.mxu0 %v661
      %681 = vmatprep.subr.bf16.mxu0 0
      %682 = vmatpush1.bf16.msra.mxu0 %v660
      %683 = vmatprep.subr.bf16.mxu0 0
      %684 = vmatpush1.bf16.msra.mxu0 %v659
      %685 = vmatprep.subr.bf16.mxu0 0
      %686 = vmatpush1.bf16.msra.mxu0 %v658
      %687 = vmatprep.subr.bf16.mxu0 0
      %688 = vmatpush1.bf16.msra.mxu0 %v657
      %689 = vmatprep.subr.bf16.mxu0 0
      %690 = vmatpush2.bf16.msra.mxu0 0
      %691 = vmatprep.subr.bf16.mxu0 0
      %692 = vmatpush2.bf16.msra.mxu0 0
      %693 = vmatprep.subr.bf16.mxu0 0
      %694 = vmatpush2.bf16.msra.mxu0 0
      %695 = vmatprep.subr.bf16.mxu0 0
      %696 = vmatpush2.bf16.msra.mxu0 0
      %697 = vmatprep.subr.bf16.mxu0 0
      %698 = vmatpush2.bf16.msra.mxu0 0
      %699 = vmatprep.subr.bf16.mxu0 0
      %700 = vmatpush2.bf16.msra.mxu0 0
      %701 = vmatprep.subr.bf16.mxu0 0
      %702 = vmatpush2.bf16.msra.mxu0 0
      %703 = vmatprep.subr.bf16.mxu0 0
      %704 = vmatpush2.bf16.msra.mxu0 0
      %705 = vmatprep.mubr.bf16.mxu0 0
      %706 = vmatmul.mubr.bf16.gmra.mxu0 %v561
      %v707 = vpop.f32.mrf.mxu0
      %v708 = vadd.f32 0.0, %v707
      %v709 = vpop.f32.mrf.mxu0
      %v710 = vpop.f32.mrf.mxu0
      %v711 = vadd.f32 0.0, %v710
      %v712 = vpop.f32.mrf.mxu0
      %713 = vmatprep.mubr.bf16.mxu0 0
      %714 = vmatmul.mubr.bf16.gmra.mxu0 %v562
      %v715 = vpop.f32.mrf.mxu0
      %v716 = vadd.f32 0.0, %v715
      %v717 = vpop.f32.mrf.mxu0
      %v718 = vpop.f32.mrf.mxu0
      %v719 = vadd.f32 0.0, %v718
      %v720 = vpop.f32.mrf.mxu0
      %721 = vmatprep.mubr.bf16.mxu0 0
      %722 = vmatmul.mubr.bf16.gmra.mxu0 %v563
      %v723 = vpop.f32.mrf.mxu0
      %v724 = vadd.f32 0.0, %v723
      %v725 = vpop.f32.mrf.mxu0
      %v726 = vpop.f32.mrf.mxu0
      %v727 = vadd.f32 0.0, %v726
      %v728 = vpop.f32.mrf.mxu0
      %729 = vmatprep.mubr.bf16.mxu0 0
      %730 = vmatmul.mubr.bf16.gmra.mxu0 %v564
      %v731 = vpop.f32.mrf.mxu0
      %v732 = vadd.f32 0.0, %v731
      %v733 = vpop.f32.mrf.mxu0
      %v734 = vpop.f32.mrf.mxu0
      %v735 = vadd.f32 0.0, %v734
      %v736 = vpop.f32.mrf.mxu0
      %737 = vmatprep.mubr.bf16.mxu0 0
      %738 = vmatmul.mubr.bf16.gmra.mxu0 %v565
      %v739 = vpop.f32.mrf.mxu0
      %v740 = vadd.f32 0.0, %v739
      %v741 = vpop.f32.mrf.mxu0
      %v742 = vpop.f32.mrf.mxu0
      %v743 = vadd.f32 0.0, %v742
      %v744 = vpop.f32.mrf.mxu0
      %745 = vmatprep.mubr.bf16.mxu0 0
      %746 = vmatmul.mubr.bf16.gmra.mxu0 %v566
      %v747 = vpop.f32.mrf.mxu0
      %v748 = vadd.f32 0.0, %v747
      %v749 = vpop.f32.mrf.mxu0
      %v750 = vpop.f32.mrf.mxu0
      %v751 = vadd.f32 0.0, %v750
      %v752 = vpop.f32.mrf.mxu0
      %753 = vmatprep.mubr.bf16.mxu0 0
      %754 = vmatmul.mubr.bf16.gmra.mxu0 %v567
      %v755 = vpop.f32.mrf.mxu0
      %v756 = vadd.f32 0.0, %v755
      %v757 = vpop.f32.mrf.mxu0
      %v758 = vpop.f32.mrf.mxu0
      %v759 = vadd.f32 0.0, %v758
      %v760 = vpop.f32.mrf.mxu0
      %761 = vmatprep.mubr.bf16.mxu0 0
      %762 = vmatmul.mubr.bf16.gmra.mxu0 %v568
      %v763 = vpop.f32.mrf.mxu0
      %v764 = vadd.f32 0.0, %v763
      %v765 = vpop.f32.mrf.mxu0
      %v766 = vpop.f32.mrf.mxu0
      %v767 = vadd.f32 0.0, %v766
      %v768 = vpop.f32.mrf.mxu0
      %769 = vmatprep.mubr.bf16.mxu0 0
      %770 = vmatmul.mubr.bf16.gmra.mxu0 %v569
      %v771 = vpop.f32.mrf.mxu0
      %v772 = vadd.f32 0.0, %v771
      %v773 = vpop.f32.mrf.mxu0
      %v774 = vpop.f32.mrf.mxu0
      %v775 = vadd.f32 0.0, %v774
      %v776 = vpop.f32.mrf.mxu0
      %777 = vmatprep.mubr.bf16.mxu0 0
      %778 = vmatmul.mubr.bf16.gmra.mxu0 %v570
      %v779 = vpop.f32.mrf.mxu0
      %v780 = vadd.f32 0.0, %v779
      %v781 = vpop.f32.mrf.mxu0
      %v782 = vpop.f32.mrf.mxu0
      %v783 = vadd.f32 0.0, %v782
      %v784 = vpop.f32.mrf.mxu0
      %785 = vmatprep.mubr.bf16.mxu0 0
      %786 = vmatmul.mubr.bf16.gmra.mxu0 %v571
      %v787 = vpop.f32.mrf.mxu0
      %v788 = vadd.f32 0.0, %v787
      %v789 = vpop.f32.mrf.mxu0
      %v790 = vpop.f32.mrf.mxu0
      %v791 = vadd.f32 0.0, %v790
      %v792 = vpop.f32.mrf.mxu0
      %793 = vmatprep.mubr.bf16.mxu0 0
      %794 = vmatmul.mubr.bf16.gmra.mxu0 %v572
      %v795 = vpop.f32.mrf.mxu0
      %v796 = vadd.f32 0.0, %v795
      %v797 = vpop.f32.mrf.mxu0
      %v798 = vpop.f32.mrf.mxu0
      %v799 = vadd.f32 0.0, %v798
      %v800 = vpop.f32.mrf.mxu0
      %801 = vmatprep.mubr.bf16.mxu0 0
      %802 = vmatmul.mubr.bf16.gmra.mxu0 %v573
      %v803 = vpop.f32.mrf.mxu0
      %v804 = vadd.f32 0.0, %v803
      %v805 = vpop.f32.mrf.mxu0
      %v806 = vpop.f32.mrf.mxu0
      %v807 = vadd.f32 0.0, %v806
      %v808 = vpop.f32.mrf.mxu0
      %809 = vmatprep.mubr.bf16.mxu0 0
      %810 = vmatmul.mubr.bf16.gmra.mxu0 %v574
      %v811 = vpop.f32.mrf.mxu0
      %v812 = vadd.f32 0.0, %v811
      %v813 = vpop.f32.mrf.mxu0
      %v814 = vpop.f32.mrf.mxu0
      %v815 = vadd.f32 0.0, %v814
      %v816 = vpop.f32.mrf.mxu0
      %817 = vmatprep.mubr.bf16.mxu0 0
      %818 = vmatmul.mubr.bf16.gmra.mxu0 %v575
      %v819 = vpop.f32.mrf.mxu0
      %v820 = vadd.f32 0.0, %v819
      %v821 = vpop.f32.mrf.mxu0
      %v822 = vpop.f32.mrf.mxu0
      %v823 = vadd.f32 0.0, %v822
      %v824 = vpop.f32.mrf.mxu0
      %825 = vmatprep.mubr.bf16.mxu0 0
      %826 = vmatmul.mubr.bf16.gmra.mxu0 %v576
      %v827 = vpop.f32.mrf.mxu0
      %v828 = vadd.f32 0.0, %v827
      %v829 = vpop.f32.mrf.mxu0
      %v830 = vpop.f32.mrf.mxu0
      %v831 = vadd.f32 0.0, %v830
      %v832 = vpop.f32.mrf.mxu0
      %833 = vmatprep.mubr.bf16.mxu0 0
      %834 = vmatmul.mubr.bf16.gmra.mxu0 %v577
      %v835 = vpop.f32.mrf.mxu0
      %v836 = vadd.f32 0.0, %v835
      %v837 = vpop.f32.mrf.mxu0
      %v838 = vpop.f32.mrf.mxu0
      %v839 = vadd.f32 0.0, %v838
      %v840 = vpop.f32.mrf.mxu0
      %841 = vmatprep.mubr.bf16.mxu0 0
      %842 = vmatmul.mubr.bf16.gmra.mxu0 %v578
      %v843 = vpop.f32.mrf.mxu0
      %v844 = vadd.f32 0.0, %v843
      %v845 = vpop.f32.mrf.mxu0
      %v846 = vpop.f32.mrf.mxu0
      %v847 = vadd.f32 0.0, %v846
      %v848 = vpop.f32.mrf.mxu0
      %849 = vmatprep.mubr.bf16.mxu0 0
      %850 = vmatmul.mubr.bf16.gmra.mxu0 %v579
      %v851 = vpop.f32.mrf.mxu0
      %v852 = vadd.f32 0.0, %v851
      %v853 = vpop.f32.mrf.mxu0
      %v854 = vpop.f32.mrf.mxu0
      %v855 = vadd.f32 0.0, %v854
      %v856 = vpop.f32.mrf.mxu0
      %857 = vmatprep.mubr.bf16.mxu0 0
      %858 = vmatmul.mubr.bf16.gmra.mxu0 %v580
      %v859 = vpop.f32.mrf.mxu0
      %v860 = vadd.f32 0.0, %v859
      %v861 = vpop.f32.mrf.mxu0
      %v862 = vpop.f32.mrf.mxu0
      %v863 = vadd.f32 0.0, %v862
      %v864 = vpop.f32.mrf.mxu0
      %865 = vmatprep.mubr.bf16.mxu0 0
      %866 = vmatmul.mubr.bf16.gmra.mxu0 %v581
      %v867 = vpop.f32.mrf.mxu0
      %v868 = vadd.f32 0.0, %v867
      %v869 = vpop.f32.mrf.mxu0
      %v870 = vpop.f32.mrf.mxu0
      %v871 = vadd.f32 0.0, %v870
      %v872 = vpop.f32.mrf.mxu0
      %873 = vmatprep.mubr.bf16.mxu0 0
      %874 = vmatmul.mubr.bf16.gmra.mxu0 %v582
      %v875 = vpop.f32.mrf.mxu0
      %v876 = vadd.f32 0.0, %v875
      %v877 = vpop.f32.mrf.mxu0
      %v878 = vpop.f32.mrf.mxu0
      %v879 = vadd.f32 0.0, %v878
      %v880 = vpop.f32.mrf.mxu0
      %881 = vmatprep.mubr.bf16.mxu0 0
      %882 = vmatmul.mubr.bf16.gmra.mxu0 %v583
      %v883 = vpop.f32.mrf.mxu0
      %v884 = vadd.f32 0.0, %v883
      %v885 = vpop.f32.mrf.mxu0
      %v886 = vpop.f32.mrf.mxu0
      %v887 = vadd.f32 0.0, %v886
      %v888 = vpop.f32.mrf.mxu0
      %889 = vmatprep.mubr.bf16.mxu0 0
      %890 = vmatmul.mubr.bf16.gmra.mxu0 %v584
      %v891 = vpop.f32.mrf.mxu0
      %v892 = vadd.f32 0.0, %v891
      %v893 = vpop.f32.mrf.mxu0
      %v894 = vpop.f32.mrf.mxu0
      %v895 = vadd.f32 0.0, %v894
      %v896 = vpop.f32.mrf.mxu0
      %897 = vmatprep.mubr.bf16.mxu0 0
      %898 = vmatmul.mubr.bf16.gmra.mxu0 %v585
      %v899 = vpop.f32.mrf.mxu0
      %v900 = vadd.f32 0.0, %v899
      %v901 = vpop.f32.mrf.mxu0
      %v902 = vpop.f32.mrf.mxu0
      %v903 = vadd.f32 0.0, %v902
      %v904 = vpop.f32.mrf.mxu0
      %905 = vmatprep.mubr.bf16.mxu0 0
      %906 = vmatmul.mubr.bf16.gmra.mxu0 %v586
      %v907 = vpop.f32.mrf.mxu0
      %v908 = vadd.f32 0.0, %v907
      %v909 = vpop.f32.mrf.mxu0
      %v910 = vpop.f32.mrf.mxu0
      %v911 = vadd.f32 0.0, %v910
      %v912 = vpop.f32.mrf.mxu0
      %913 = vmatprep.mubr.bf16.mxu0 0
      %914 = vmatmul.mubr.bf16.gmra.mxu0 %v587
      %v915 = vpop.f32.mrf.mxu0
      %v916 = vadd.f32 0.0, %v915
      %v917 = vpop.f32.mrf.mxu0
      %v918 = vpop.f32.mrf.mxu0
      %v919 = vadd.f32 0.0, %v918
      %v920 = vpop.f32.mrf.mxu0
      %921 = vmatprep.mubr.bf16.mxu0 0
      %922 = vmatmul.mubr.bf16.gmra.mxu0 %v588
      %v923 = vpop.f32.mrf.mxu0
      %v924 = vadd.f32 0.0, %v923
      %v925 = vpop.f32.mrf.mxu0
      %v926 = vpop.f32.mrf.mxu0
      %v927 = vadd.f32 0.0, %v926
      %v928 = vpop.f32.mrf.mxu0
      %929 = vmatprep.mubr.bf16.mxu0 0
      %930 = vmatmul.mubr.bf16.gmra.mxu0 %v589
      %v931 = vpop.f32.mrf.mxu0
      %v932 = vadd.f32 0.0, %v931
      %v933 = vpop.f32.mrf.mxu0
      %v934 = vpop.f32.mrf.mxu0
      %v935 = vadd.f32 0.0, %v934
      %v936 = vpop.f32.mrf.mxu0
      %937 = vmatprep.mubr.bf16.mxu0 0
      %938 = vmatmul.mubr.bf16.gmra.mxu0 %v590
      %v939 = vpop.f32.mrf.mxu0
      %v940 = vadd.f32 0.0, %v939
      %v941 = vpop.f32.mrf.mxu0
      %v942 = vpop.f32.mrf.mxu0
      %v943 = vadd.f32 0.0, %v942
      %v944 = vpop.f32.mrf.mxu0
      %945 = vmatprep.mubr.bf16.mxu0 0
      %946 = vmatmul.mubr.bf16.gmra.mxu0 %v591
      %v947 = vpop.f32.mrf.mxu0
      %v948 = vadd.f32 0.0, %v947
      %v949 = vpop.f32.mrf.mxu0
      %v950 = vpop.f32.mrf.mxu0
      %v951 = vadd.f32 0.0, %v950
      %v952 = vpop.f32.mrf.mxu0
      %953 = vmatprep.mubr.bf16.mxu0 0
      %954 = vmatmul.mubr.bf16.gmra.mxu0 %v592
      %v955 = vpop.f32.mrf.mxu0
      %v956 = vadd.f32 0.0, %v955
      %v957 = vpop.f32.mrf.mxu0
      %v958 = vpop.f32.mrf.mxu0
      %v959 = vadd.f32 0.0, %v958
      %v960 = vpop.f32.mrf.mxu0
      %961 = vdwg.mxu0
      %v962 = vadd.f32 %v289, %v708
      %v963 = vadd.f32 %v290, %v711
      %v964 = vadd.f32 %v291, %v716
      %v965 = vadd.f32 %v292, %v719
      %v966 = vadd.f32 %v293, %v724
      %v967 = vadd.f32 %v294, %v727
      %v968 = vadd.f32 %v295, %v732
      %v969 = vadd.f32 %v296, %v735
      %v970 = vadd.f32 %v297, %v740
      %v971 = vadd.f32 %v298, %v743
      %v972 = vadd.f32 %v299, %v748
      %v973 = vadd.f32 %v300, %v751
      %v974 = vadd.f32 %v301, %v756
      %v975 = vadd.f32 %v302, %v759
      %v976 = vadd.f32 %v303, %v764
      %v977 = vadd.f32 %v304, %v767
      %v978 = vadd.f32 %v305, %v772
      %v979 = vadd.f32 %v306, %v775
      %v980 = vadd.f32 %v307, %v780
      %v981 = vadd.f32 %v308, %v783
      %v982 = vadd.f32 %v309, %v788
      %v983 = vadd.f32 %v310, %v791
      %v984 = vadd.f32 %v311, %v796
      %v985 = vadd.f32 %v312, %v799
      %v986 = vadd.f32 %v313, %v804
      %v987 = vadd.f32 %v314, %v807
      %v988 = vadd.f32 %v315, %v812
      %v989 = vadd.f32 %v316, %v815
      %v990 = vadd.f32 %v317, %v820
      %v991 = vadd.f32 %v318, %v823
      %v992 = vadd.f32 %v319, %v828
      %v993 = vadd.f32 %v320, %v831
      %v994 = vadd.f32 %v321, %v836
      %v995 = vadd.f32 %v322, %v839
      %v996 = vadd.f32 %v323, %v844
      %v997 = vadd.f32 %v324, %v847
      %v998 = vadd.f32 %v325, %v852
      %v999 = vadd.f32 %v326, %v855
      %v1000 = vadd.f32 %v327, %v860
      %v1001 = vadd.f32 %v328, %v863
      %v1002 = vadd.f32 %v329, %v868
      %v1003 = vadd.f32 %v330, %v871
      %v1004 = vadd.f32 %v331, %v876
      %v1005 = vadd.f32 %v332, %v879
      %v1006 = vadd.f32 %v333, %v884
      %v1007 = vadd.f32 %v334, %v887
      %v1008 = vadd.f32 %v335, %v892
      %v1009 = vadd.f32 %v336, %v895
      %v1010 = vadd.f32 %v337, %v900
      %v1011 = vadd.f32 %v338, %v903
      %v1012 = vadd.f32 %v339, %v908
      %v1013 = vadd.f32 %v340, %v911
      %v1014 = vadd.f32 %v341, %v916
      %v1015 = vadd.f32 %v342, %v919
      %v1016 = vadd.f32 %v343, %v924
      %v1017 = vadd.f32 %v344, %v927
      %v1018 = vadd.f32 %v345, %v932
      %v1019 = vadd.f32 %v346, %v935
      %v1020 = vadd.f32 %v347, %v940
      %v1021 = vadd.f32 %v348, %v943
      %v1022 = vadd.f32 %v349, %v948
      %v1023 = vadd.f32 %v350, %v951
      %v1024 = vadd.f32 %v351, %v956
      %v1025 = vadd.f32 %v352, %v959
      %vm1026 = vcmask 64512
      %1027 = vst.msk [vmem:[#allocation2] sm:$0xff] %vm1026, %v962
      %1028 = vst.msk [vmem:[#allocation2 + $0x8] sm:$0xff] %vm1026, %v963
      %1029 = vst.msk [vmem:[#allocation2 + $0x10] sm:$0xff] %vm1026, %v964
      %1030 = vst.msk [vmem:[#allocation2 + $0x18] sm:$0xff] %vm1026, %v965
      %1031 = vst.msk [vmem:[#allocation2 + $0x20] sm:$0xff] %vm1026, %v966
      %1032 = vst.msk [vmem:[#allocation2 + $0x28] sm:$0xff] %vm1026, %v967
      %1033 = vst.msk [vmem:[#allocation2 + $0x30] sm:$0xff] %vm1026, %v968
      %1034 = vst.msk [vmem:[#allocation2 + $0x38] sm:$0xff] %vm1026, %v969
      %1035 = vst.msk [vmem:[#allocation2 + $0x40] sm:$0xff] %vm1026, %v970
      %1036 = vst.msk [vmem:[#allocation2 + $0x48] sm:$0xff] %vm1026, %v971
      %1037 = vst.msk [vmem:[#allocation2 + $0x50] sm:$0xff] %vm1026, %v972
      %1038 = vst.msk [vmem:[#allocation2 + $0x58] sm:$0xff] %vm1026, %v973
      %1039 = vst.msk [vmem:[#allocation2 + $0x60] sm:$0xff] %vm1026, %v974
      %1040 = vst.msk [vmem:[#allocation2 + $0x68] sm:$0xff] %vm1026, %v975
      %1041 = vst.msk [vmem:[#allocation2 + $0x70] sm:$0xff] %vm1026, %v976
      %1042 = vst.msk [vmem:[#allocation2 + $0x78] sm:$0xff] %vm1026, %v977
      %1043 = vst.msk [vmem:[#allocation2 + $0x80] sm:$0xff] %vm1026, %v978
      %1044 = vst.msk [vmem:[#allocation2 + $0x88] sm:$0xff] %vm1026, %v979
      %1045 = vst.msk [vmem:[#allocation2 + $0x90] sm:$0xff] %vm1026, %v980
      %1046 = vst.msk [vmem:[#allocation2 + $0x98] sm:$0xff] %vm1026, %v981
      %1047 = vst.msk [vmem:[#allocation2 + $0xa0] sm:$0xff] %vm1026, %v982
      %1048 = vst.msk [vmem:[#allocation2 + $0xa8] sm:$0xff] %vm1026, %v983
      %1049 = vst.msk [vmem:[#allocation2 + $0xb0] sm:$0xff] %vm1026, %v984
      %1050 = vst.msk [vmem:[#allocation2 + $0xb8] sm:$0xff] %vm1026, %v985
      %1051 = vst.msk [vmem:[#allocation2 + $0xc0] sm:$0xff] %vm1026, %v986
      %1052 = vst.msk [vmem:[#allocation2 + $0xc8] sm:$0xff] %vm1026, %v987
      %1053 = vst.msk [vmem:[#allocation2 + $0xd0] sm:$0xff] %vm1026, %v988
      %1054 = vst.msk [vmem:[#allocation2 + $0xd8] sm:$0xff] %vm1026, %v989
      %1055 = vst.msk [vmem:[#allocation2 + $0xe0] sm:$0xff] %vm1026, %v990
      %1056 = vst.msk [vmem:[#allocation2 + $0xe8] sm:$0xff] %vm1026, %v991
      %1057 = vst.msk [vmem:[#allocation2 + $0xf0] sm:$0xff] %vm1026, %v992
      %1058 = vst.msk [vmem:[#allocation2 + $0xf8] sm:$0xff] %vm1026, %v993
      %1059 = vst.msk [vmem:[#allocation2 + $0x100] sm:$0xff] %vm1026, %v994
      %1060 = vst.msk [vmem:[#allocation2 + $0x108] sm:$0xff] %vm1026, %v995
      %1061 = vst.msk [vmem:[#allocation2 + $0x110] sm:$0xff] %vm1026, %v996
      %1062 = vst.msk [vmem:[#allocation2 + $0x118] sm:$0xff] %vm1026, %v997
      %1063 = vst.msk [vmem:[#allocation2 + $0x120] sm:$0xff] %vm1026, %v998
      %1064 = vst.msk [vmem:[#allocation2 + $0x128] sm:$0xff] %vm1026, %v999
      %1065 = vst.msk [vmem:[#allocation2 + $0x130] sm:$0xff] %vm1026, %v1000
      %1066 = vst.msk [vmem:[#allocation2 + $0x138] sm:$0xff] %vm1026, %v1001
      %1067 = vst.msk [vmem:[#allocation2 + $0x140] sm:$0xff] %vm1026, %v1002
      %1068 = vst.msk [vmem:[#allocation2 + $0x148] sm:$0xff] %vm1026, %v1003
      %1069 = vst.msk [vmem:[#allocation2 + $0x150] sm:$0xff] %vm1026, %v1004
      %1070 = vst.msk [vmem:[#allocation2 + $0x158] sm:$0xff] %vm1026, %v1005
      %1071 = vst.msk [vmem:[#allocation2 + $0x160] sm:$0xff] %vm1026, %v1006
      %1072 = vst.msk [vmem:[#allocation2 + $0x168] sm:$0xff] %vm1026, %v1007
      %1073 = vst.msk [vmem:[#allocation2 + $0x170] sm:$0xff] %vm1026, %v1008
      %1074 = vst.msk [vmem:[#allocation2 + $0x178] sm:$0xff] %vm1026, %v1009
      %1075 = vst.msk [vmem:[#allocation2 + $0x180] sm:$0xff] %vm1026, %v1010
      %1076 = vst.msk [vmem:[#allocation2 + $0x188] sm:$0xff] %vm1026, %v1011
      %1077 = vst.msk [vmem:[#allocation2 + $0x190] sm:$0xff] %vm1026, %v1012
      %1078 = vst.msk [vmem:[#allocation2 + $0x198] sm:$0xff] %vm1026, %v1013
      %1079 = vst.msk [vmem:[#allocation2 + $0x1a0] sm:$0xff] %vm1026, %v1014
      %1080 = vst.msk [vmem:[#allocation2 + $0x1a8] sm:$0xff] %vm1026, %v1015
      %1081 = vst.msk [vmem:[#allocation2 + $0x1b0] sm:$0xff] %vm1026, %v1016
      %1082 = vst.msk [vmem:[#allocation2 + $0x1b8] sm:$0xff] %vm1026, %v1017
      %1083 = vst.msk [vmem:[#allocation2 + $0x1c0] sm:$0xff] %vm1026, %v1018
      %1084 = vst.msk [vmem:[#allocation2 + $0x1c8] sm:$0xff] %vm1026, %v1019
      %1085 = vst.msk [vmem:[#allocation2 + $0x1d0] sm:$0xff] %vm1026, %v1020
      %1086 = vst.msk [vmem:[#allocation2 + $0x1d8] sm:$0xff] %vm1026, %v1021
      %1087 = vst.msk [vmem:[#allocation2 + $0x1e0] sm:$0xff] %vm1026, %v1022
      %1088 = vst.msk [vmem:[#allocation2 + $0x1e8] sm:$0xff] %vm1026, %v1023
      %1089 = vst.msk [vmem:[#allocation2 + $0x1f0] sm:$0xff] %vm1026, %v1024
      %1090 = vst.msk [vmem:[#allocation2 + $0x1f8] sm:$0xff] %vm1026, %v1025
      // Predicated region
      $region37: #{detail_capture_forward.14} parent=31 // pred_check
        %p1091 = pneg %p220
      $region38: #{detail_capture_forward.14} parent=31 // pred_check_branch
        %1093 = sbr.rel (%p1091) target = $region40
      $region39: #{detail_capture_forward.14} parent=31 // pred_region
        %v1094 = vld [vmem:[#allocation2] sm:$0xff]
        %v1095 = vld [vmem:[#allocation2 + $0x8] sm:$0xff]
        %v1096 = vld [vmem:[#allocation2 + $0x10] sm:$0xff]
        %v1097 = vld [vmem:[#allocation2 + $0x18] sm:$0xff]
        %v1098 = vld [vmem:[#allocation2 + $0x20] sm:$0xff]
        %v1099 = vld [vmem:[#allocation2 + $0x28] sm:$0xff]
        %v1100 = vld [vmem:[#allocation2 + $0x30] sm:$0xff]
        %v1101 = vld [vmem:[#allocation2 + $0x38] sm:$0xff]
        %v1102 = vld [vmem:[#allocation2 + $0x40] sm:$0xff]
        %v1103 = vld [vmem:[#allocation2 + $0x48] sm:$0xff]
        %v1104 = vld [vmem:[#allocation2 + $0x50] sm:$0xff]
        %v1105 = vld [vmem:[#allocation2 + $0x58] sm:$0xff]
        %v1106 = vld [vmem:[#allocation2 + $0x60] sm:$0xff]
        %v1107 = vld [vmem:[#allocation2 + $0x68] sm:$0xff]
        %v1108 = vld [vmem:[#allocation2 + $0x70] sm:$0xff]
        %v1109 = vld [vmem:[#allocation2 + $0x78] sm:$0xff]
        %v1110 = vld [vmem:[#allocation2 + $0x80] sm:$0xff]
        %v1111 = vld [vmem:[#allocation2 + $0x88] sm:$0xff]
        %v1112 = vld [vmem:[#allocation2 + $0x90] sm:$0xff]
        %v1113 = vld [vmem:[#allocation2 + $0x98] sm:$0xff]
        %v1114 = vld [vmem:[#allocation2 + $0xa0] sm:$0xff]
        %v1115 = vld [vmem:[#allocation2 + $0xa8] sm:$0xff]
        %v1116 = vld [vmem:[#allocation2 + $0xb0] sm:$0xff]
        %v1117 = vld [vmem:[#allocation2 + $0xb8] sm:$0xff]
        %v1118 = vld [vmem:[#allocation2 + $0xc0] sm:$0xff]
        %v1119 = vld [vmem:[#allocation2 + $0xc8] sm:$0xff]
        %v1120 = vld [vmem:[#allocation2 + $0xd0] sm:$0xff]
        %v1121 = vld [vmem:[#allocation2 + $0xd8] sm:$0xff]
        %v1122 = vld [vmem:[#allocation2 + $0xe0] sm:$0xff]
        %v1123 = vld [vmem:[#allocation2 + $0xe8] sm:$0xff]
        %v1124 = vld [vmem:[#allocation2 + $0xf0] sm:$0xff]
        %v1125 = vld [vmem:[#allocation2 + $0xf8] sm:$0xff]
        %v1126 = vld [vmem:[#allocation2 + $0x100] sm:$0xff]
        %v1127 = vld [vmem:[#allocation2 + $0x108] sm:$0xff]
        %v1128 = vld [vmem:[#allocation2 + $0x110] sm:$0xff]
        %v1129 = vld [vmem:[#allocation2 + $0x118] sm:$0xff]
        %v1130 = vld [vmem:[#allocation2 + $0x120] sm:$0xff]
        %v1131 = vld [vmem:[#allocation2 + $0x128] sm:$0xff]
        %v1132 = vld [vmem:[#allocation2 + $0x130] sm:$0xff]
        %v1133 = vld [vmem:[#allocation2 + $0x138] sm:$0xff]
        %v1134 = vld [vmem:[#allocation2 + $0x140] sm:$0xff]
        %v1135 = vld [vmem:[#allocation2 + $0x148] sm:$0xff]
        %v1136 = vld [vmem:[#allocation2 + $0x150] sm:$0xff]
        %v1137 = vld [vmem:[#allocation2 + $0x158] sm:$0xff]
        %v1138 = vld [vmem:[#allocation2 + $0x160] sm:$0xff]
        %v1139 = vld [vmem:[#allocation2 + $0x168] sm:$0xff]
        %v1140 = vld [vmem:[#allocation2 + $0x170] sm:$0xff]
        %v1141 = vld [vmem:[#allocation2 + $0x178] sm:$0xff]
        %v1142 = vld [vmem:[#allocation2 + $0x180] sm:$0xff]
        %v1143 = vld [vmem:[#allocation2 + $0x188] sm:$0xff]
        %v1144 = vld [vmem:[#allocation2 + $0x190] sm:$0xff]
        %v1145 = vld [vmem:[#allocation2 + $0x198] sm:$0xff]
        %v1146 = vld [vmem:[#allocation2 + $0x1a0] sm:$0xff]
        %v1147 = vld [vmem:[#allocation2 + $0x1a8] sm:$0xff]
        %v1148 = vld [vmem:[#allocation2 + $0x1b0] sm:$0xff]
        %v1149 = vld [vmem:[#allocation2 + $0x1b8] sm:$0xff]
        %v1150 = vld [vmem:[#allocation2 + $0x1c0] sm:$0xff]
        %v1151 = vld [vmem:[#allocation2 + $0x1c8] sm:$0xff]
        %v1152 = vld [vmem:[#allocation2 + $0x1d0] sm:$0xff]
        %v1153 = vld [vmem:[#allocation2 + $0x1d8] sm:$0xff]
        %v1154 = vld [vmem:[#allocation2 + $0x1e0] sm:$0xff]
        %v1155 = vld [vmem:[#allocation2 + $0x1e8] sm:$0xff]
        %v1156 = vld [vmem:[#allocation2 + $0x1f0] sm:$0xff]
        %v1157 = vld [vmem:[#allocation2 + $0x1f8] sm:$0xff]
        %v1158 = vld [vmem:[%s2] sm:$0x1]
        %v1160 = vlaneseq
        %v1161 = vshrl.u32 %v1160, 7
        %v1162 = vsub.s32 0, %v1161
        %v1163 = vrot.slane %v1158, %v1162
        %v1165 = vadd.f32 %v1094, %v1163
        %v1166 = vadd.f32 %v1095, %v1163
        %v1167 = vadd.f32 %v1096, %v1163
        %v1168 = vadd.f32 %v1097, %v1163
        %v1169 = vadd.f32 %v1098, %v1163
        %v1170 = vadd.f32 %v1099, %v1163
        %v1171 = vadd.f32 %v1100, %v1163
        %v1172 = vadd.f32 %v1101, %v1163
        %v1173 = vadd.f32 %v1102, %v1163
        %v1174 = vadd.f32 %v1103, %v1163
        %v1175 = vadd.f32 %v1104, %v1163
        %v1176 = vadd.f32 %v1105, %v1163
        %v1177 = vadd.f32 %v1106, %v1163
        %v1178 = vadd.f32 %v1107, %v1163
        %v1179 = vadd.f32 %v1108, %v1163
        %v1180 = vadd.f32 %v1109, %v1163
        %v1181 = vadd.f32 %v1110, %v1163
        %v1182 = vadd.f32 %v1111, %v1163
        %v1183 = vadd.f32 %v1112, %v1163
        %v1184 = vadd.f32 %v1113, %v1163
        %v1185 = vadd.f32 %v1114, %v1163
        %v1186 = vadd.f32 %v1115, %v1163
        %v1187 = vadd.f32 %v1116, %v1163
        %v1188 = vadd.f32 %v1117, %v1163
        %v1189 = vadd.f32 %v1118, %v1163
        %v1190 = vadd.f32 %v1119, %v1163
        %v1191 = vadd.f32 %v1120, %v1163
        %v1192 = vadd.f32 %v1121, %v1163
        %v1193 = vadd.f32 %v1122, %v1163
        %v1194 = vadd.f32 %v1123, %v1163
        %v1195 = vadd.f32 %v1124, %v1163
        %v1196 = vadd.f32 %v1125, %v1163
        %v1197 = vadd.f32 %v1126, %v1163
        %v1198 = vadd.f32 %v1127, %v1163
        %v1199 = vadd.f32 %v1128, %v1163
        %v1200 = vadd.f32 %v1129, %v1163
        %v1201 = vadd.f32 %v1130, %v1163
        %v1202 = vadd.f32 %v1131, %v1163
        %v1203 = vadd.f32 %v1132, %v1163
        %v1204 = vadd.f32 %v1133, %v1163
        %v1205 = vadd.f32 %v1134, %v1163
        %v1206 = vadd.f32 %v1135, %v1163
        %v1207 = vadd.f32 %v1136, %v1163
        %v1208 = vadd.f32 %v1137, %v1163
        %v1209 = vadd.f32 %v1138, %v1163
        %v1210 = vadd.f32 %v1139, %v1163
        %v1211 = vadd.f32 %v1140, %v1163
        %v1212 = vadd.f32 %v1141, %v1163
        %v1213 = vadd.f32 %v1142, %v1163
        %v1214 = vadd.f32 %v1143, %v1163
        %v1215 = vadd.f32 %v1144, %v1163
        %v1216 = vadd.f32 %v1145, %v1163
        %v1217 = vadd.f32 %v1146, %v1163
        %v1218 = vadd.f32 %v1147, %v1163
        %v1219 = vadd.f32 %v1148, %v1163
        %v1220 = vadd.f32 %v1149, %v1163
        %v1221 = vadd.f32 %v1150, %v1163
        %v1222 = vadd.f32 %v1151, %v1163
        %v1223 = vadd.f32 %v1152, %v1163
        %v1224 = vadd.f32 %v1153, %v1163
        %v1225 = vadd.f32 %v1154, %v1163
        %v1226 = vadd.f32 %v1155, %v1163
        %v1227 = vadd.f32 %v1156, %v1163
        %v1228 = vadd.f32 %v1157, %v1163
        %v1229 = vmax.f32 %v1165, 0.0
        %v1230 = vmax.f32 %v1166, 0.0
        %v1231 = vmax.f32 %v1167, 0.0
        %v1232 = vmax.f32 %v1168, 0.0
        %v1233 = vmax.f32 %v1169, 0.0
        %v1234 = vmax.f32 %v1170, 0.0
        %v1235 = vmax.f32 %v1171, 0.0
        %v1236 = vmax.f32 %v1172, 0.0
        %v1237 = vmax.f32 %v1173, 0.0
        %v1238 = vmax.f32 %v1174, 0.0
        %v1239 = vmax.f32 %v1175, 0.0
        %v1240 = vmax.f32 %v1176, 0.0
        %v1241 = vmax.f32 %v1177, 0.0
        %v1242 = vmax.f32 %v1178, 0.0
        %v1243 = vmax.f32 %v1179, 0.0
        %v1244 = vmax.f32 %v1180, 0.0
        %v1245 = vmax.f32 %v1181, 0.0
        %v1246 = vmax.f32 %v1182, 0.0
        %v1247 = vmax.f32 %v1183, 0.0
        %v1248 = vmax.f32 %v1184, 0.0
        %v1249 = vmax.f32 %v1185, 0.0
        %v1250 = vmax.f32 %v1186, 0.0
        %v1251 = vmax.f32 %v1187, 0.0
        %v1252 = vmax.f32 %v1188, 0.0
        %v1253 = vmax.f32 %v1189, 0.0
        %v1254 = vmax.f32 %v1190, 0.0
        %v1255 = vmax.f32 %v1191, 0.0
        %v1256 = vmax.f32 %v1192, 0.0
        %v1257 = vmax.f32 %v1193, 0.0
        %v1258 = vmax.f32 %v1194, 0.0
        %v1259 = vmax.f32 %v1195, 0.0
        %v1260 = vmax.f32 %v1196, 0.0
        %v1261 = vmax.f32 %v1197, 0.0
        %v1262 = vmax.f32 %v1198, 0.0
        %v1263 = vmax.f32 %v1199, 0.0
        %v1264 = vmax.f32 %v1200, 0.0
        %v1265 = vmax.f32 %v1201, 0.0
        %v1266 = vmax.f32 %v1202, 0.0
        %v1267 = vmax.f32 %v1203, 0.0
        %v1268 = vmax.f32 %v1204, 0.0
        %v1269 = vmax.f32 %v1205, 0.0
        %v1270 = vmax.f32 %v1206, 0.0
        %v1271 = vmax.f32 %v1207, 0.0
        %v1272 = vmax.f32 %v1208, 0.0
        %v1273 = vmax.f32 %v1209, 0.0
        %v1274 = vmax.f32 %v1210, 0.0
        %v1275 = vmax.f32 %v1211, 0.0
        %v1276 = vmax.f32 %v1212, 0.0
        %v1277 = vmax.f32 %v1213, 0.0
        %v1278 = vmax.f32 %v1214, 0.0
        %v1279 = vmax.f32 %v1215, 0.0
        %v1280 = vmax.f32 %v1216, 0.0
        %v1281 = vmax.f32 %v1217, 0.0
        %v1282 = vmax.f32 %v1218, 0.0
        %v1283 = vmax.f32 %v1219, 0.0
        %v1284 = vmax.f32 %v1220, 0.0
        %v1285 = vmax.f32 %v1221, 0.0
        %v1286 = vmax.f32 %v1222, 0.0
        %v1287 = vmax.f32 %v1223, 0.0
        %v1288 = vmax.f32 %v1224, 0.0
        %v1289 = vmax.f32 %v1225, 0.0
        %v1290 = vmax.f32 %v1226, 0.0
        %v1291 = vmax.f32 %v1227, 0.0
        %v1292 = vmax.f32 %v1228, 0.0
        %v1293 = vpack.c.bf16 %v1230, %v1229
        %v1294 = vpack.c.bf16 %v1232, %v1231
        %v1295 = vpack.c.bf16 %v1234, %v1233
        %v1296 = vpack.c.bf16 %v1236, %v1235
        %v1297 = vpack.c.bf16 %v1238, %v1237
        %v1298 = vpack.c.bf16 %v1240, %v1239
        %v1299 = vpack.c.bf16 %v1242, %v1241
        %v1300 = vpack.c.bf16 %v1244, %v1243
        %v1301 = vpack.c.bf16 %v1246, %v1245
        %v1302 = vpack.c.bf16 %v1248, %v1247
        %v1303 = vpack.c.bf16 %v1250, %v1249
        %v1304 = vpack.c.bf16 %v1252, %v1251
        %v1305 = vpack.c.bf16 %v1254, %v1253
        %v1306 = vpack.c.bf16 %v1256, %v1255
        %v1307 = vpack.c.bf16 %v1258, %v1257
        %v1308 = vpack.c.bf16 %v1260, %v1259
        %v1309 = vpack.c.bf16 %v1262, %v1261
        %v1310 = vpack.c.bf16 %v1264, %v1263
        %v1311 = vpack.c.bf16 %v1266, %v1265
        %v1312 = vpack.c.bf16 %v1268, %v1267
        %v1313 = vpack.c.bf16 %v1270, %v1269
        %v1314 = vpack.c.bf16 %v1272, %v1271
        %v1315 = vpack.c.bf16 %v1274, %v1273
        %v1316 = vpack.c.bf16 %v1276, %v1275
        %v1317 = vpack.c.bf16 %v1278, %v1277
        %v1318 = vpack.c.bf16 %v1280, %v1279
        %v1319 = vpack.c.bf16 %v1282, %v1281
        %v1320 = vpack.c.bf16 %v1284, %v1283
        %v1321 = vpack.c.bf16 %v1286, %v1285
        %v1322 = vpack.c.bf16 %v1288, %v1287
        %v1323 = vpack.c.bf16 %v1290, %v1289
        %v1324 = vpack.c.bf16 %v1292, %v1291
        %v1357 = vunpack.c.l.b16 %v1293
        %v1358 = vunpack.c.h.b16 %v1293
        %v1359 = vunpack.c.l.b16 %v1294
        %v1360 = vunpack.c.h.b16 %v1294
        %v1361 = vunpack.c.l.b16 %v1295
        %v1362 = vunpack.c.h.b16 %v1295
        %v1363 = vunpack.c.l.b16 %v1296
        %v1364 = vunpack.c.h.b16 %v1296
        %v1365 = vunpack.c.l.b16 %v1297
        %v1366 = vunpack.c.h.b16 %v1297
        %v1367 = vunpack.c.l.b16 %v1298
        %v1368 = vunpack.c.h.b16 %v1298
        %v1369 = vunpack.c.l.b16 %v1299
        %v1370 = vunpack.c.h.b16 %v1299
        %v1371 = vunpack.c.l.b16 %v1300
        %v1372 = vunpack.c.h.b16 %v1300
        %v1373 = vunpack.c.l.b16 %v1301
        %v1374 = vunpack.c.h.b16 %v1301
        %v1375 = vunpack.c.l.b16 %v1302
        %v1376 = vunpack.c.h.b16 %v1302
        %v1377 = vunpack.c.l.b16 %v1303
        %v1378 = vunpack.c.h.b16 %v1303
        %v1379 = vunpack.c.l.b16 %v1304
        %v1380 = vunpack.c.h.b16 %v1304
        %v1381 = vunpack.c.l.b16 %v1305
        %v1382 = vunpack.c.h.b16 %v1305
        %v1383 = vunpack.c.l.b16 %v1306
        %v1384 = vunpack.c.h.b16 %v1306
        %v1385 = vunpack.c.l.b16 %v1307
        %v1386 = vunpack.c.h.b16 %v1307
        %v1387 = vunpack.c.l.b16 %v1308
        %v1388 = vunpack.c.h.b16 %v1308
        %v1389 = vunpack.c.l.b16 %v1309
        %v1390 = vunpack.c.h.b16 %v1309
        %v1391 = vunpack.c.l.b16 %v1310
        %v1392 = vunpack.c.h.b16 %v1310
        %v1393 = vunpack.c.l.b16 %v1311
        %v1394 = vunpack.c.h.b16 %v1311
        %v1395 = vunpack.c.l.b16 %v1312
        %v1396 = vunpack.c.h.b16 %v1312
        %v1397 = vunpack.c.l.b16 %v1313
        %v1398 = vunpack.c.h.b16 %v1313
        %v1399 = vunpack.c.l.b16 %v1314
        %v1400 = vunpack.c.h.b16 %v1314
        %v1401 = vunpack.c.l.b16 %v1315
        %v1402 = vunpack.c.h.b16 %v1315
        %v1403 = vunpack.c.l.b16 %v1316
        %v1404 = vunpack.c.h.b16 %v1316
        %v1405 = vunpack.c.l.b16 %v1317
        %v1406 = vunpack.c.h.b16 %v1317
        %v1407 = vunpack.c.l.b16 %v1318
        %v1408 = vunpack.c.h.b16 %v1318
        %v1409 = vunpack.c.l.b16 %v1319
        %v1410 = vunpack.c.h.b16 %v1319
        %v1411 = vunpack.c.l.b16 %v1320
        %v1412 = vunpack.c.h.b16 %v1320
        %v1413 = vunpack.c.l.b16 %v1321
        %v1414 = vunpack.c.h.b16 %v1321
        %v1415 = vunpack.c.l.b16 %v1322
        %v1416 = vunpack.c.h.b16 %v1322
        %v1417 = vunpack.c.l.b16 %v1323
        %v1418 = vunpack.c.h.b16 %v1323
        %v1419 = vunpack.c.l.b16 %v1324
        %v1420 = vunpack.c.h.b16 %v1324
        %v1421 = vpack.c.b16 %v1357, %v1357
        %v1422 = vpack.c.b16 %v1358, %v1358
        %v1423 = vpack.c.b16 %v1359, %v1359
        %v1424 = vpack.c.b16 %v1360, %v1360
        %v1425 = vpack.c.b16 %v1361, %v1361
        %v1426 = vpack.c.b16 %v1362, %v1362
        %v1427 = vpack.c.b16 %v1363, %v1363
        %v1428 = vpack.c.b16 %v1364, %v1364
        %v1429 = vpack.c.b16 %v1365, %v1365
        %v1430 = vpack.c.b16 %v1366, %v1366
        %v1431 = vpack.c.b16 %v1367, %v1367
        %v1432 = vpack.c.b16 %v1368, %v1368
        %v1433 = vpack.c.b16 %v1369, %v1369
        %v1434 = vpack.c.b16 %v1370, %v1370
        %v1435 = vpack.c.b16 %v1371, %v1371
        %v1436 = vpack.c.b16 %v1372, %v1372
        %v1437 = vpack.c.b16 %v1373, %v1373
        %v1438 = vpack.c.b16 %v1374, %v1374
        %v1439 = vpack.c.b16 %v1375, %v1375
        %v1440 = vpack.c.b16 %v1376, %v1376
        %v1441 = vpack.c.b16 %v1377, %v1377
        %v1442 = vpack.c.b16 %v1378, %v1378
        %v1443 = vpack.c.b16 %v1379, %v1379
        %v1444 = vpack.c.b16 %v1380, %v1380
        %v1445 = vpack.c.b16 %v1381, %v1381
        %v1446 = vpack.c.b16 %v1382, %v1382
        %v1447 = vpack.c.b16 %v1383, %v1383
        %v1448 = vpack.c.b16 %v1384, %v1384
        %v1449 = vpack.c.b16 %v1385, %v1385
        %v1450 = vpack.c.b16 %v1386, %v1386
        %v1451 = vpack.c.b16 %v1387, %v1387
        %v1452 = vpack.c.b16 %v1388, %v1388
        %v1453 = vpack.c.b16 %v1389, %v1389
        %v1454 = vpack.c.b16 %v1390, %v1390
        %v1455 = vpack.c.b16 %v1391, %v1391
        %v1456 = vpack.c.b16 %v1392, %v1392
        %v1457 = vpack.c.b16 %v1393, %v1393
        %v1458 = vpack.c.b16 %v1394, %v1394
        %v1459 = vpack.c.b16 %v1395, %v1395
        %v1460 = vpack.c.b16 %v1396, %v1396
        %v1461 = vpack.c.b16 %v1397, %v1397
        %v1462 = vpack.c.b16 %v1398, %v1398
        %v1463 = vpack.c.b16 %v1399, %v1399
        %v1464 = vpack.c.b16 %v1400, %v1400
        %v1465 = vpack.c.b16 %v1401, %v1401
        %v1466 = vpack.c.b16 %v1402, %v1402
        %v1467 = vpack.c.b16 %v1403, %v1403
        %v1468 = vpack.c.b16 %v1404, %v1404
        %v1469 = vpack.c.b16 %v1405, %v1405
        %v1470 = vpack.c.b16 %v1406, %v1406
        %v1471 = vpack.c.b16 %v1407, %v1407
        %v1472 = vpack.c.b16 %v1408, %v1408
        %v1473 = vpack.c.b16 %v1409, %v1409
        %v1474 = vpack.c.b16 %v1410, %v1410
        %v1475 = vpack.c.b16 %v1411, %v1411
        %v1476 = vpack.c.b16 %v1412, %v1412
        %v1477 = vpack.c.b16 %v1413, %v1413
        %v1478 = vpack.c.b16 %v1414, %v1414
        %v1479 = vpack.c.b16 %v1415, %v1415
        %v1480 = vpack.c.b16 %v1416, %v1416
        %v1481 = vpack.c.b16 %v1417, %v1417
        %v1482 = vpack.c.b16 %v1418, %v1418
        %v1483 = vpack.c.b16 %v1419, %v1419
        %v1484 = vpack.c.b16 %v1420, %v1420
        %vm1549 = vcmask 60416
        %1550 = vst.msk [vmem:[%s217] sm:$0xf] %vm1549, %v1421
        %1551 = vst.msk [vmem:[%s217 + $0x4] sm:$0xf] %vm1549, %v1422
        %1552 = vst.msk [vmem:[%s217 + $0x8] sm:$0xf] %vm1549, %v1423
        %1553 = vst.msk [vmem:[%s217 + $0xc] sm:$0xf] %vm1549, %v1424
        %1554 = vst.msk [vmem:[%s217 + $0x10] sm:$0xf] %vm1549, %v1425
        %1555 = vst.msk [vmem:[%s217 + $0x14] sm:$0xf] %vm1549, %v1426
        %1556 = vst.msk [vmem:[%s217 + $0x18] sm:$0xf] %vm1549, %v1427
        %1557 = vst.msk [vmem:[%s217 + $0x1c] sm:$0xf] %vm1549, %v1428
        %1558 = vst.msk [vmem:[%s217 + $0x20] sm:$0xf] %vm1549, %v1429
        %1559 = vst.msk [vmem:[%s217 + $0x24] sm:$0xf] %vm1549, %v1430
        %1560 = vst.msk [vmem:[%s217 + $0x28] sm:$0xf] %vm1549, %v1431
        %1561 = vst.msk [vmem:[%s217 + $0x2c] sm:$0xf] %vm1549, %v1432
        %1562 = vst.msk [vmem:[%s217 + $0x30] sm:$0xf] %vm1549, %v1433
        %1563 = vst.msk [vmem:[%s217 + $0x34] sm:$0xf] %vm1549, %v1434
        %1564 = vst.msk [vmem:[%s217 + $0x38] sm:$0xf] %vm1549, %v1435
        %1565 = vst.msk [vmem:[%s217 + $0x3c] sm:$0xf] %vm1549, %v1436
        %1566 = vst.msk [vmem:[%s217 + $0x40] sm:$0xf] %vm1549, %v1437
        %1567 = vst.msk [vmem:[%s217 + $0x44] sm:$0xf] %vm1549, %v1438
        %1568 = vst.msk [vmem:[%s217 + $0x48] sm:$0xf] %vm1549, %v1439
        %1569 = vst.msk [vmem:[%s217 + $0x4c] sm:$0xf] %vm1549, %v1440
        %1570 = vst.msk [vmem:[%s217 + $0x50] sm:$0xf] %vm1549, %v1441
        %1571 = vst.msk [vmem:[%s217 + $0x54] sm:$0xf] %vm1549, %v1442
        %1572 = vst.msk [vmem:[%s217 + $0x58] sm:$0xf] %vm1549, %v1443
        %1573 = vst.msk [vmem:[%s217 + $0x5c] sm:$0xf] %vm1549, %v1444
        %1574 = vst.msk [vmem:[%s217 + $0x60] sm:$0xf] %vm1549, %v1445
        %1575 = vst.msk [vmem:[%s217 + $0x64] sm:$0xf] %vm1549, %v1446
        %1576 = vst.msk [vmem:[%s217 + $0x68] sm:$0xf] %vm1549, %v1447
        %1577 = vst.msk [vmem:[%s217 + $0x6c] sm:$0xf] %vm1549, %v1448
        %1578 = vst.msk [vmem:[%s217 + $0x70] sm:$0xf] %vm1549, %v1449
        %1579 = vst.msk [vmem:[%s217 + $0x74] sm:$0xf] %vm1549, %v1450
        %1580 = vst.msk [vmem:[%s217 + $0x78] sm:$0xf] %vm1549, %v1451
        %1581 = vst.msk [vmem:[%s217 + $0x7c] sm:$0xf] %vm1549, %v1452
        %1582 = vst.msk [vmem:[%s217 + $0x80] sm:$0xf] %vm1549, %v1453
        %1583 = vst.msk [vmem:[%s217 + $0x84] sm:$0xf] %vm1549, %v1454
        %1584 = vst.msk [vmem:[%s217 + $0x88] sm:$0xf] %vm1549, %v1455
        %1585 = vst.msk [vmem:[%s217 + $0x8c] sm:$0xf] %vm1549, %v1456
        %1586 = vst.msk [vmem:[%s217 + $0x90] sm:$0xf] %vm1549, %v1457
        %1587 = vst.msk [vmem:[%s217 + $0x94] sm:$0xf] %vm1549, %v1458
        %1588 = vst.msk [vmem:[%s217 + $0x98] sm:$0xf] %vm1549, %v1459
        %1589 = vst.msk [vmem:[%s217 + $0x9c] sm:$0xf] %vm1549, %v1460
        %1590 = vst.msk [vmem:[%s217 + $0xa0] sm:$0xf] %vm1549, %v1461
        %1591 = vst.msk [vmem:[%s217 + $0xa4] sm:$0xf] %vm1549, %v1462
        %1592 = vst.msk [vmem:[%s217 + $0xa8] sm:$0xf] %vm1549, %v1463
        %1593 = vst.msk [vmem:[%s217 + $0xac] sm:$0xf] %vm1549, %v1464
        %1594 = vst.msk [vmem:[%s217 + $0xb0] sm:$0xf] %vm1549, %v1465
        %1595 = vst.msk [vmem:[%s217 + $0xb4] sm:$0xf] %vm1549, %v1466
        %1596 = vst.msk [vmem:[%s217 + $0xb8] sm:$0xf] %vm1549, %v1467
        %1597 = vst.msk [vmem:[%s217 + $0xbc] sm:$0xf] %vm1549, %v1468
        %1598 = vst.msk [vmem:[%s217 + $0xc0] sm:$0xf] %vm1549, %v1469
        %1599 = vst.msk [vmem:[%s217 + $0xc4] sm:$0xf] %vm1549, %v1470
        %1600 = vst.msk [vmem:[%s217 + $0xc8] sm:$0xf] %vm1549, %v1471
        %1601 = vst.msk [vmem:[%s217 + $0xcc] sm:$0xf] %vm1549, %v1472
        %1602 = vst.msk [vmem:[%s217 + $0xd0] sm:$0xf] %vm1549, %v1473
        %1603 = vst.msk [vmem:[%s217 + $0xd4] sm:$0xf] %vm1549, %v1474
        %1604 = vst.msk [vmem:[%s217 + $0xd8] sm:$0xf] %vm1549, %v1475
        %1605 = vst.msk [vmem:[%s217 + $0xdc] sm:$0xf] %vm1549, %v1476
        %1606 = vst.msk [vmem:[%s217 + $0xe0] sm:$0xf] %vm1549, %v1477
        %1607 = vst.msk [vmem:[%s217 + $0xe4] sm:$0xf] %vm1549, %v1478
        %1608 = vst.msk [vmem:[%s217 + $0xe8] sm:$0xf] %vm1549, %v1479
        %1609 = vst.msk [vmem:[%s217 + $0xec] sm:$0xf] %vm1549, %v1480
        %1610 = vst.msk [vmem:[%s217 + $0xf0] sm:$0xf] %vm1549, %v1481
        %1611 = vst.msk [vmem:[%s217 + $0xf4] sm:$0xf] %vm1549, %v1482
        %1612 = vst.msk [vmem:[%s217 + $0xf8] sm:$0xf] %vm1549, %v1483
        %1613 = vst.msk [vmem:[%s217 + $0xfc] sm:$0xf] %vm1549, %v1484
      $region40: #{detail_capture_forward.14} parent=31 // pred_fallthru
        _
      %s1614 = smul.u32 64, %s18
      %p1615 = scmp.lt.s32.totalorder %s1614, 255
      %s1616 = scalar_select %p1615, %s1614, 255
      %s1617 = smul.addr %s1616, 4
      %s1618 = scalar_lea.vmem %s3, %s1617
      // Predicated region
      $region41: #{detail_capture_forward.14} parent=31 // pred_check
        %p1619 = pneg %p119
      $region42: #{detail_capture_forward.14} parent=31 // pred_check_branch
        %1621 = sbr.rel (%p1619) target = $region44
      $region43: #{detail_capture_forward.14} parent=31 // pred_region
        %s1622 = smul.u32 64, %s18
      $region44: #{detail_capture_forward.14} parent=31 // pred_fallthru
        _
    $region32: #{detail_capture_forward.14} parent=5 // pred_fallthru
      _
    %p1623 = scmp.le.s32.totalorder 2, %s9
    // Predicated region
    $region45: #{detail_capture_forward.14} parent=5 // pred_check
      %p1624 = pneg %p1623
    $region46: #{detail_capture_forward.14} parent=5 // pred_check_branch
      %1626 = sbr.rel (%p1624) target = $region48
    $region47: #{detail_capture_forward.14} parent=5 // pred_region
      %s1627 = ssub.s32 %s9, 2
      // Predicated region
      $region49: #{detail_capture_forward.14} parent=47 // pred_check
        %p1628 = pneg %p125
      $region50: #{detail_capture_forward.14} parent=47 // pred_check_branch
        %1630 = sbr.rel (%p1628) target = $region52
      $region51: #{detail_capture_forward.14} parent=47 // pred_region
        %s1631 = smul.u32 64, %s20
        %p1632 = scmp.lt.s32.totalorder %s1631, 255
        %s1633 = scalar_select %p1632, %s1631, 255
        %s1634 = smul.addr %s1633, 4
        %s1635 = scalar_lea.vmem %s3, %s1634
      $region52: #{detail_capture_forward.14} parent=47 // pred_fallthru
        _
    $region48: #{detail_capture_forward.14} parent=5 // pred_fallthru
      _
  $region6: #{detail_capture_forward.14} parent=0 // loop_footer
    %s13 = sadd.s32 1, %s9
  $region7: #{detail_capture_forward.14} parent=0 // loop_footer_branch
    %8 = sbr.rel target = $region3
  $region8: #{detail_capture_forward.14} parent=0 // loop_exit
    _

// kernel: detail_capture_forward.15
$region0: #{detail_capture_forward.15}
  #allocation0 [shape = 'u32[]', space=smem, size = 0x4, offset = 0x4, fixed_abs, tag = 'smem constant byte address 0x4 - core index']
  #allocation1 [shape = 'u32[144,128]{1,0:T(1,128)}', space=vmem, size = 0x12000, scoped, tag = 'internal scratch']
  #allocation2 [shape = 'f32[512,8]{1,0:T(8,128)}', space=vmem, size = 0x40000, scoped, tag = 'scratch operand']
  #allocation3 [shape = 'f32[1,1]{1,0:T(1,128)S(1)}', space=vmem, size = 0x200, scoped, tag = 'scoped memory for detail_capture_forward.15']
  %s0 = inlined_call_operand.vmem [shape: bf16[2048,128], index: 0, kind: input, shape index: {}]
  %s1 = inlined_call_operand.vmem [shape: bf16[128,8], index: 1, kind: input, shape index: {}]
  %s2 = inlined_call_operand.vmem [shape: f32[1,8], index: 2, kind: input, shape index: {}]
  %s3 = inlined_call_operand.vmem [shape: f32[1,8], index: 3, kind: input, shape index: {}]
  %s4 = inlined_call_operand.<no memory space> [shape: f32[1,1], index: 4, kind: input, shape index: {}]
  %s5 = inlined_call_operand.vmem [shape: f32[2048,1], index: 5, kind: output, shape index: {}]
  %s6 = sld [smem:[#allocation0]]
  $region61: #{detail_capture_forward.15} parent=0
    _
  %s8 = ssub.s32 1, %s6
  %s9 = scalar_select 0, %s8, %s6
  %v10 = vstv %s4
  %11 = vst [vmem:[#allocation3] sm:$0x1] %v10
  loop: start=0, step=1, limit=6
  $region2: #{detail_capture_forward.15} parent=0 // loop_pre_header
    _
  $region3: #{detail_capture_forward.15} parent=0 // loop_header
    %s13 = sphi 0, %s17
    %p14 = scmp.ge.s32.totalorder %s13, 6
    %s20 = sphi 0, %s32
    %s21 = sphi 0, %s28
    %s22 = sphi 0, %s20
    %s23 = sphi 0, %s21
    %s24 = sphi 0, %s22
    %s25 = sphi 0, %s23
    %s37 = sphi 0, %s39
    %s40 = sphi 0, %s37
    %s41 = sphi 0, %s40
    %s57 = sphi 0, %s41
    %s63 = sphi 0, %s65
    %s66 = sphi 0, %s63
    %s67 = sphi 0, %s66
    %s83 = sphi 0, %s67
    %s87 = sphi 0, %s87
    %s89 = sphi 0, %s87
    %s90 = sphi 0, %s89
    %s104 = sphi 0, %s90
    %s108 = sphi 0, %s108
    %s110 = sphi 0, %s108
    %s111 = sphi 0, %s110
    %s125 = sphi 0, %s111
    %s129 = sphi 0, %s129
    %s131 = sphi 0, %s129
    %s132 = sphi 0, %s131
    %s146 = sphi 0, %s132
    %s152 = sphi 0, %s154
    %s155 = sphi 0, %s152
    %s156 = sphi 0, %s155
    %s172 = sphi 0, %s156
  $region4: #{detail_capture_forward.15} parent=0 // loop_header_branch
    %16 = sbr.rel (%p14) target = $region8
  $region5: #{detail_capture_forward.15} parent=0 // loop_body
    %s18 = ssub.s32 %s13, 1
    %s19 = ssub.s32 %s13, 2
    %s26 = sadd.s32 1, %s21
    %p27 = scmp.ge.s32.totalorder %s26, 1
    %s28 = scalar_select %p27, 0, %s26
    %s29 = sadd.s32 1, %s20
    %s30 = scalar_select %p27, %s29, %s20
    %p31 = scmp.ge.s32.totalorder %s30, 4
    %s32 = scalar_select %p31, 0, %s30
    %s33 = ssub.s32 %s20, %s32
    %s34 = ssub.s32 %s21, %s28
    %s35 = sor.u32 %s33, %s34
    %p36 = scmp.eq.s32.totalorder %s35, 0
    %s38 = sadd.s32 %s37, 1
    %s39 = scalar_select %p36, %s37, %s38
    %p42 = pneg %p36
    %p43 = scmp.eq.s32.totalorder %s13, 3
    %p44 = por %p42, %p43
    %p45 = scmp.ne.s32.totalorder %s37, %s40
    %p46 = scmp.eq.s32.totalorder %s13, 0
    %p47 = por %p45, %p46
    %p48 = scmp.ne.s32.totalorder %s37, %s40
    %p49 = scmp.eq.s32.totalorder %s18, 3
    %p50 = por %p48, %p49
    %p51 = scmp.ne.s32.totalorder %s40, %s41
    %p52 = scmp.eq.s32.totalorder %s18, 0
    %p53 = por %p51, %p52
    %p54 = scmp.ne.s32.totalorder %s40, %s41
    %p55 = scmp.eq.s32.totalorder %s19, 3
    %p56 = por %p54, %p55
    %p58 = scmp.ne.s32.totalorder %s41, %s57
    %p59 = scmp.eq.s32.totalorder %s19, 0
    %p60 = por %p58, %p59
    %s61 = ssub.s32 %s21, %s28
    %p62 = scmp.eq.s32.totalorder %s61, 0
    %s64 = sadd.s32 %s63, 1
    %s65 = scalar_select %p62, %s63, %s64
    %p68 = pneg %p62
    %p69 = scmp.eq.s32.totalorder %s13, 3
    %p70 = por %p68, %p69
    %p71 = scmp.ne.s32.totalorder %s63, %s66
    %p72 = scmp.eq.s32.totalorder %s13, 0
    %p73 = por %p71, %p72
    %p74 = scmp.ne.s32.totalorder %s63, %s66
    %p75 = scmp.eq.s32.totalorder %s18, 3
    %p76 = por %p74, %p75
    %p77 = scmp.ne.s32.totalorder %s66, %s67
    %p78 = scmp.eq.s32.totalorder %s18, 0
    %p79 = por %p77, %p78
    %p80 = scmp.ne.s32.totalorder %s66, %s67
    %p81 = scmp.eq.s32.totalorder %s19, 3
    %p82 = por %p80, %p81
    %p84 = scmp.ne.s32.totalorder %s67, %s83
    %p85 = scmp.eq.s32.totalorder %s19, 0
    %p86 = por %p84, %p85
    %s88 = sadd.s32 %s87, 1
    %p91 = scmp.eq.s32.totalorder %s13, 3
    %p92 = scmp.ne.s32.totalorder %s87, %s89
    %p93 = scmp.eq.s32.totalorder %s13, 0
    %p94 = por %p92, %p93
    %p95 = scmp.ne.s32.totalorder %s87, %s89
    %p96 = scmp.eq.s32.totalorder %s18, 3
    %p97 = por %p95, %p96
    %p98 = scmp.ne.s32.totalorder %s89, %s90
    %p99 = scmp.eq.s32.totalorder %s18, 0
    %p100 = por %p98, %p99
    %p101 = scmp.ne.s32.totalorder %s89, %s90
    %p102 = scmp.eq.s32.totalorder %s19, 3
    %p103 = por %p101, %p102
    %p105 = scmp.ne.s32.totalorder %s90, %s104
    %p106 = scmp.eq.s32.totalorder %s19, 0
    %p107 = por %p105, %p106
    %s109 = sadd.s32 %s108, 1
    %p112 = scmp.eq.s32.totalorder %s13, 3
    %p113 = scmp.ne.s32.totalorder %s108, %s110
    %p114 = scmp.eq.s32.totalorder %s13, 0
    %p115 = por %p113, %p114
    %p116 = scmp.ne.s32.totalorder %s108, %s110
    %p117 = scmp.eq.s32.totalorder %s18, 3
    %p118 = por %p116, %p117
    %p119 = scmp.ne.s32.totalorder %s110, %s111
    %p120 = scmp.eq.s32.totalorder %s18, 0
    %p121 = por %p119, %p120
    %p122 = scmp.ne.s32.totalorder %s110, %s111
    %p123 = scmp.eq.s32.totalorder %s19, 3
    %p124 = por %p122, %p123
    %p126 = scmp.ne.s32.totalorder %s111, %s125
    %p127 = scmp.eq.s32.totalorder %s19, 0
    %p128 = por %p126, %p127
    %s130 = sadd.s32 %s129, 1
    %p133 = scmp.eq.s32.totalorder %s13, 3
    %p134 = scmp.ne.s32.totalorder %s129, %s131
    %p135 = scmp.eq.s32.totalorder %s13, 0
    %p136 = por %p134, %p135
    %p137 = scmp.ne.s32.totalorder %s129, %s131
    %p138 = scmp.eq.s32.totalorder %s18, 3
    %p139 = por %p137, %p138
    %p140 = scmp.ne.s32.totalorder %s131, %s132
    %p141 = scmp.eq.s32.totalorder %s18, 0
    %p142 = por %p140, %p141
    %p143 = scmp.ne.s32.totalorder %s131, %s132
    %p144 = scmp.eq.s32.totalorder %s19, 3
    %p145 = por %p143, %p144
    %p147 = scmp.ne.s32.totalorder %s132, %s146
    %p148 = scmp.eq.s32.totalorder %s19, 0
    %p149 = por %p147, %p148
    %s150 = ssub.s32 %s20, %s32
    %p151 = scmp.eq.s32.totalorder %s150, 0
    %s153 = sadd.s32 %s152, 1
    %s154 = scalar_select %p151, %s152, %s153
    %p157 = pneg %p151
    %p158 = scmp.eq.s32.totalorder %s13, 3
    %p159 = por %p157, %p158
    %p160 = scmp.ne.s32.totalorder %s152, %s155
    %p161 = scmp.eq.s32.totalorder %s13, 0
    %p162 = por %p160, %p161
    %p163 = scmp.ne.s32.totalorder %s152, %s155
    %p164 = scmp.eq.s32.totalorder %s18, 3
    %p165 = por %p163, %p164
    %p166 = scmp.ne.s32.totalorder %s155, %s156
    %p167 = scmp.eq.s32.totalorder %s18, 0
    %p168 = por %p166, %p167
    %p169 = scmp.ne.s32.totalorder %s155, %s156
    %p170 = scmp.eq.s32.totalorder %s19, 3
    %p171 = por %p169, %p170
    %p173 = scmp.ne.s32.totalorder %s156, %s172
    %p174 = scmp.eq.s32.totalorder %s19, 0
    %p175 = por %p173, %p174
    %p176 = scmp.le.s32.totalorder 1, %s13
    %p177 = scmp.lt.s32.totalorder %s13, 5
    %p178 = pnand %p176, %p177
    %p179 = pneg %p178
    // Predicated region
    $region9: #{detail_capture_forward.15} parent=5 // pred_check
      _
    $region10: #{detail_capture_forward.15} parent=5 // pred_check_branch
      %181 = sbr.rel (%p178) target = $region12
    $region11: #{detail_capture_forward.15} parent=5 // pred_region
      %s182 = ssub.s32 %s13, 1
      // Predicated region
      $region13: #{detail_capture_forward.15} parent=11 // pred_check
        %p183 = pneg %p79
      $region14: #{detail_capture_forward.15} parent=11 // pred_check_branch
        %185 = sbr.rel (%p183) target = $region16
      $region15: #{detail_capture_forward.15} parent=11 // pred_region
        %s186 = smul.u32 16, %s23
        %p187 = scmp.lt.s32.totalorder %s186, 15
        %s188 = scalar_select %p187, %s186, 15
        %s189 = smul.addr %s188, 4
        %s190 = scalar_lea.vmem %s1, %s189
        %s191 = smul.u32 16, %s23
      $region16: #{detail_capture_forward.15} parent=11 // pred_fallthru
        _
      // Predicated region
      $region17: #{detail_capture_forward.15} parent=11 // pred_check
        %p192 = pneg %p100
      $region18: #{detail_capture_forward.15} parent=11 // pred_check_branch
        %194 = sbr.rel (%p192) target = $region20
      $region19: #{detail_capture_forward.15} parent=11 // pred_region
        _
      $region20: #{detail_capture_forward.15} parent=11 // pred_fallthru
        _
      // Predicated region
      $region21: #{detail_capture_forward.15} parent=11 // pred_check
        %p195 = pneg %p121
      $region22: #{detail_capture_forward.15} parent=11 // pred_check_branch
        %197 = sbr.rel (%p195) target = $region24
      $region23: #{detail_capture_forward.15} parent=11 // pred_region
        _
      $region24: #{detail_capture_forward.15} parent=11 // pred_fallthru
        _
      // Predicated region
      $region25: #{detail_capture_forward.15} parent=11 // pred_check
        %p198 = pneg %p142
      $region26: #{detail_capture_forward.15} parent=11 // pred_check_branch
        %200 = sbr.rel (%p198) target = $region28
      $region27: #{detail_capture_forward.15} parent=11 // pred_region
        _
      $region28: #{detail_capture_forward.15} parent=11 // pred_fallthru
        _
    $region12: #{detail_capture_forward.15} parent=5 // pred_fallthru
      _
    %p201 = scmp.lt.s32.totalorder %s13, 4
    // Predicated region
    $region29: #{detail_capture_forward.15} parent=5 // pred_check
      %p202 = pneg %p201
    $region30: #{detail_capture_forward.15} parent=5 // pred_check_branch
      %204 = sbr.rel (%p202) target = $region32
    $region31: #{detail_capture_forward.15} parent=5 // pred_region
      // Predicated region
      $region33: #{detail_capture_forward.15} parent=31 // pred_check
        %p205 = pneg %p47
      $region34: #{detail_capture_forward.15} parent=31 // pred_check_branch
        %207 = sbr.rel (%p205) target = $region36
      $region35: #{detail_capture_forward.15} parent=31 // pred_region
        %s208 = smul.u32 64, %s20
        %p209 = scmp.lt.s32.totalorder %s208, 255
        %s210 = scalar_select %p209, %s208, 255
        %p211 = scmp.lt.s32.totalorder %s21, 0
        %s212 = scalar_select %p211, %s21, 0
        %s213 = sadd.s32 %s212, %s210
        %s214 = smul.addr %s213, 4
        %s215 = scalar_lea.vmem %s0, %s214
        %s216 = smul.u32 64, %s20
      $region36: #{detail_capture_forward.15} parent=31 // pred_fallthru
        _
    $region32: #{detail_capture_forward.15} parent=5 // pred_fallthru
      _
    %p217 = scmp.le.s32.totalorder 1, %s13
    %p218 = scmp.lt.s32.totalorder %s13, 5
    %p219 = pnand %p217, %p218
    %p220 = pneg %p219
    // Predicated region
    $region37: #{detail_capture_forward.15} parent=5 // pred_check
      _
    $region38: #{detail_capture_forward.15} parent=5 // pred_check_branch
      %222 = sbr.rel (%p219) target = $region40
    $region39: #{detail_capture_forward.15} parent=5 // pred_region
      %s223 = ssub.s32 %s13, 1
      %s224 = smul.u32 64, %s22
      %p225 = scmp.lt.s32.totalorder %s224, 255
      %s226 = scalar_select %p225, %s224, 255
      %p227 = scmp.lt.s32.totalorder %s23, 0
      %s228 = scalar_select %p227, %s23, 0
      %s229 = sadd.s32 %s228, %s226
      %s230 = smul.addr %s229, 4
      %s231 = scalar_lea.vmem %s0, %s230
      %p232 = pneg %p53
      %p233 = pneg %p50
      %s234 = smul.u32 16, %s23
      %p235 = scmp.lt.s32.totalorder %s234, 15
      %s236 = scalar_select %p235, %s234, 15
      %s237 = smul.addr %s236, 4
      %s238 = scalar_lea.vmem %s1, %s237
      %p239 = pneg %p79
      %p240 = pneg %p76
      %p241 = pneg %p100
      %p242 = pneg %p97
      %p243 = pneg %p121
      %p244 = pneg %p118
      %p245 = pneg %p142
      %p246 = pneg %p139
      %p247 = pneg %p168
      %p248 = pneg %p165
      %s249 = smul.u32 64, %s22
      %p250 = scmp.lt.s32.totalorder %s249, 255
      %s251 = scalar_select %p250, %s249, 255
      %s252 = smul.addr %s251, 8
      %s253 = scalar_lea.vmem %s5, %s252
      %s254 = smul.u32 64, %s22
      %p255 = scmp.lt.s32.totalorder %s254, 255
      %s256 = scalar_select %p255, %s254, 255
      %p257 = scmp.lt.s32.totalorder %s23, 0
      %s258 = scalar_select %p257, %s23, 0
      %s259 = sadd.s32 %s258, %s256
      %s260 = smul.addr %s259, 4
      %s261 = scalar_lea.vmem %s0, %s260
      %s262 = smul.u32 64, %s22
      %s263 = smul.u32 16, %s23
      %p264 = scmp.lt.s32.totalorder %s263, 15
      %s265 = scalar_select %p264, %s263, 15
      %s266 = smul.addr %s265, 4
      %s267 = scalar_lea.vmem %s1, %s266
      %s268 = smul.u32 16, %s23
      %s269 = smul.u32 64, %s22
      %p270 = scmp.lt.s32.totalorder %s269, 255
      %s271 = scalar_select %p270, %s269, 255
      %s272 = smul.addr %s271, 8
      %s273 = scalar_lea.vmem %s5, %s272
      %s274 = smul.u32 64, %s22
      %p276 = scmp.eq.s32.totalorder %s23, 0
      // Predicated region
      $region41: #{detail_capture_forward.15} parent=39 // pred_check
        %p277 = pneg %p276
      $region42: #{detail_capture_forward.15} parent=39 // pred_check_branch
        %279 = sbr.rel (%p277) target = $region44
      $region43: #{detail_capture_forward.15} parent=39 // pred_region
        %vm280 = vcmask 64512
        %281 = vst.msk [vmem:[#allocation2] sm:$0xff] %vm280, 0.0
        %282 = vst.msk [vmem:[#allocation2 + $0x8] sm:$0xff] %vm280, 0.0
        %283 = vst.msk [vmem:[#allocation2 + $0x10] sm:$0xff] %vm280, 0.0
        %284 = vst.msk [vmem:[#allocation2 + $0x18] sm:$0xff] %vm280, 0.0
        %285 = vst.msk [vmem:[#allocation2 + $0x20] sm:$0xff] %vm280, 0.0
        %286 = vst.msk [vmem:[#allocation2 + $0x28] sm:$0xff] %vm280, 0.0
        %287 = vst.msk [vmem:[#allocation2 + $0x30] sm:$0xff] %vm280, 0.0
        %288 = vst.msk [vmem:[#allocation2 + $0x38] sm:$0xff] %vm280, 0.0
        %289 = vst.msk [vmem:[#allocation2 + $0x40] sm:$0xff] %vm280, 0.0
        %290 = vst.msk [vmem:[#allocation2 + $0x48] sm:$0xff] %vm280, 0.0
        %291 = vst.msk [vmem:[#allocation2 + $0x50] sm:$0xff] %vm280, 0.0
        %292 = vst.msk [vmem:[#allocation2 + $0x58] sm:$0xff] %vm280, 0.0
        %293 = vst.msk [vmem:[#allocation2 + $0x60] sm:$0xff] %vm280, 0.0
        %294 = vst.msk [vmem:[#allocation2 + $0x68] sm:$0xff] %vm280, 0.0
        %295 = vst.msk [vmem:[#allocation2 + $0x70] sm:$0xff] %vm280, 0.0
        %296 = vst.msk [vmem:[#allocation2 + $0x78] sm:$0xff] %vm280, 0.0
        %297 = vst.msk [vmem:[#allocation2 + $0x80] sm:$0xff] %vm280, 0.0
        %298 = vst.msk [vmem:[#allocation2 + $0x88] sm:$0xff] %vm280, 0.0
        %299 = vst.msk [vmem:[#allocation2 + $0x90] sm:$0xff] %vm280, 0.0
        %300 = vst.msk [vmem:[#allocation2 + $0x98] sm:$0xff] %vm280, 0.0
        %301 = vst.msk [vmem:[#allocation2 + $0xa0] sm:$0xff] %vm280, 0.0
        %302 = vst.msk [vmem:[#allocation2 + $0xa8] sm:$0xff] %vm280, 0.0
        %303 = vst.msk [vmem:[#allocation2 + $0xb0] sm:$0xff] %vm280, 0.0
        %304 = vst.msk [vmem:[#allocation2 + $0xb8] sm:$0xff] %vm280, 0.0
        %305 = vst.msk [vmem:[#allocation2 + $0xc0] sm:$0xff] %vm280, 0.0
        %306 = vst.msk [vmem:[#allocation2 + $0xc8] sm:$0xff] %vm280, 0.0
        %307 = vst.msk [vmem:[#allocation2 + $0xd0] sm:$0xff] %vm280, 0.0
        %308 = vst.msk [vmem:[#allocation2 + $0xd8] sm:$0xff] %vm280, 0.0
        %309 = vst.msk [vmem:[#allocation2 + $0xe0] sm:$0xff] %vm280, 0.0
        %310 = vst.msk [vmem:[#allocation2 + $0xe8] sm:$0xff] %vm280, 0.0
        %311 = vst.msk [vmem:[#allocation2 + $0xf0] sm:$0xff] %vm280, 0.0
        %312 = vst.msk [vmem:[#allocation2 + $0xf8] sm:$0xff] %vm280, 0.0
        %313 = vst.msk [vmem:[#allocation2 + $0x100] sm:$0xff] %vm280, 0.0
        %314 = vst.msk [vmem:[#allocation2 + $0x108] sm:$0xff] %vm280, 0.0
        %315 = vst.msk [vmem:[#allocation2 + $0x110] sm:$0xff] %vm280, 0.0
        %316 = vst.msk [vmem:[#allocation2 + $0x118] sm:$0xff] %vm280, 0.0
        %317 = vst.msk [vmem:[#allocation2 + $0x120] sm:$0xff] %vm280, 0.0
        %318 = vst.msk [vmem:[#allocation2 + $0x128] sm:$0xff] %vm280, 0.0
        %319 = vst.msk [vmem:[#allocation2 + $0x130] sm:$0xff] %vm280, 0.0
        %320 = vst.msk [vmem:[#allocation2 + $0x138] sm:$0xff] %vm280, 0.0
        %321 = vst.msk [vmem:[#allocation2 + $0x140] sm:$0xff] %vm280, 0.0
        %322 = vst.msk [vmem:[#allocation2 + $0x148] sm:$0xff] %vm280, 0.0
        %323 = vst.msk [vmem:[#allocation2 + $0x150] sm:$0xff] %vm280, 0.0
        %324 = vst.msk [vmem:[#allocation2 + $0x158] sm:$0xff] %vm280, 0.0
        %325 = vst.msk [vmem:[#allocation2 + $0x160] sm:$0xff] %vm280, 0.0
        %326 = vst.msk [vmem:[#allocation2 + $0x168] sm:$0xff] %vm280, 0.0
        %327 = vst.msk [vmem:[#allocation2 + $0x170] sm:$0xff] %vm280, 0.0
        %328 = vst.msk [vmem:[#allocation2 + $0x178] sm:$0xff] %vm280, 0.0
        %329 = vst.msk [vmem:[#allocation2 + $0x180] sm:$0xff] %vm280, 0.0
        %330 = vst.msk [vmem:[#allocation2 + $0x188] sm:$0xff] %vm280, 0.0
        %331 = vst.msk [vmem:[#allocation2 + $0x190] sm:$0xff] %vm280, 0.0
        %332 = vst.msk [vmem:[#allocation2 + $0x198] sm:$0xff] %vm280, 0.0
        %333 = vst.msk [vmem:[#allocation2 + $0x1a0] sm:$0xff] %vm280, 0.0
        %334 = vst.msk [vmem:[#allocation2 + $0x1a8] sm:$0xff] %vm280, 0.0
        %335 = vst.msk [vmem:[#allocation2 + $0x1b0] sm:$0xff] %vm280, 0.0
        %336 = vst.msk [vmem:[#allocation2 + $0x1b8] sm:$0xff] %vm280, 0.0
        %337 = vst.msk [vmem:[#allocation2 + $0x1c0] sm:$0xff] %vm280, 0.0
        %338 = vst.msk [vmem:[#allocation2 + $0x1c8] sm:$0xff] %vm280, 0.0
        %339 = vst.msk [vmem:[#allocation2 + $0x1d0] sm:$0xff] %vm280, 0.0
        %340 = vst.msk [vmem:[#allocation2 + $0x1d8] sm:$0xff] %vm280, 0.0
        %341 = vst.msk [vmem:[#allocation2 + $0x1e0] sm:$0xff] %vm280, 0.0
        %342 = vst.msk [vmem:[#allocation2 + $0x1e8] sm:$0xff] %vm280, 0.0
        %343 = vst.msk [vmem:[#allocation2 + $0x1f0] sm:$0xff] %vm280, 0.0
        %344 = vst.msk [vmem:[#allocation2 + $0x1f8] sm:$0xff] %vm280, 0.0
      $region44: #{detail_capture_forward.15} parent=39 // pred_fallthru
        _
      %v345 = vld [vmem:[#allocation2] sm:$0xff]
      %v346 = vld [vmem:[#allocation2 + $0x8] sm:$0xff]
      %v347 = vld [vmem:[#allocation2 + $0x10] sm:$0xff]
      %v348 = vld [vmem:[#allocation2 + $0x18] sm:$0xff]
      %v349 = vld [vmem:[#allocation2 + $0x20] sm:$0xff]
      %v350 = vld [vmem:[#allocation2 + $0x28] sm:$0xff]
      %v351 = vld [vmem:[#allocation2 + $0x30] sm:$0xff]
      %v352 = vld [vmem:[#allocation2 + $0x38] sm:$0xff]
      %v353 = vld [vmem:[#allocation2 + $0x40] sm:$0xff]
      %v354 = vld [vmem:[#allocation2 + $0x48] sm:$0xff]
      %v355 = vld [vmem:[#allocation2 + $0x50] sm:$0xff]
      %v356 = vld [vmem:[#allocation2 + $0x58] sm:$0xff]
      %v357 = vld [vmem:[#allocation2 + $0x60] sm:$0xff]
      %v358 = vld [vmem:[#allocation2 + $0x68] sm:$0xff]
      %v359 = vld [vmem:[#allocation2 + $0x70] sm:$0xff]
      %v360 = vld [vmem:[#allocation2 + $0x78] sm:$0xff]
      %v361 = vld [vmem:[#allocation2 + $0x80] sm:$0xff]
      %v362 = vld [vmem:[#allocation2 + $0x88] sm:$0xff]
      %v363 = vld [vmem:[#allocation2 + $0x90] sm:$0xff]
      %v364 = vld [vmem:[#allocation2 + $0x98] sm:$0xff]
      %v365 = vld [vmem:[#allocation2 + $0xa0] sm:$0xff]
      %v366 = vld [vmem:[#allocation2 + $0xa8] sm:$0xff]
      %v367 = vld [vmem:[#allocation2 + $0xb0] sm:$0xff]
      %v368 = vld [vmem:[#allocation2 + $0xb8] sm:$0xff]
      %v369 = vld [vmem:[#allocation2 + $0xc0] sm:$0xff]
      %v370 = vld [vmem:[#allocation2 + $0xc8] sm:$0xff]
      %v371 = vld [vmem:[#allocation2 + $0xd0] sm:$0xff]
      %v372 = vld [vmem:[#allocation2 + $0xd8] sm:$0xff]
      %v373 = vld [vmem:[#allocation2 + $0xe0] sm:$0xff]
      %v374 = vld [vmem:[#allocation2 + $0xe8] sm:$0xff]
      %v375 = vld [vmem:[#allocation2 + $0xf0] sm:$0xff]
      %v376 = vld [vmem:[#allocation2 + $0xf8] sm:$0xff]
      %v377 = vld [vmem:[#allocation2 + $0x100] sm:$0xff]
      %v378 = vld [vmem:[#allocation2 + $0x108] sm:$0xff]
      %v379 = vld [vmem:[#allocation2 + $0x110] sm:$0xff]
      %v380 = vld [vmem:[#allocation2 + $0x118] sm:$0xff]
      %v381 = vld [vmem:[#allocation2 + $0x120] sm:$0xff]
      %v382 = vld [vmem:[#allocation2 + $0x128] sm:$0xff]
      %v383 = vld [vmem:[#allocation2 + $0x130] sm:$0xff]
      %v384 = vld [vmem:[#allocation2 + $0x138] sm:$0xff]
      %v385 = vld [vmem:[#allocation2 + $0x140] sm:$0xff]
      %v386 = vld [vmem:[#allocation2 + $0x148] sm:$0xff]
      %v387 = vld [vmem:[#allocation2 + $0x150] sm:$0xff]
      %v388 = vld [vmem:[#allocation2 + $0x158] sm:$0xff]
      %v389 = vld [vmem:[#allocation2 + $0x160] sm:$0xff]
      %v390 = vld [vmem:[#allocation2 + $0x168] sm:$0xff]
      %v391 = vld [vmem:[#allocation2 + $0x170] sm:$0xff]
      %v392 = vld [vmem:[#allocation2 + $0x178] sm:$0xff]
      %v393 = vld [vmem:[#allocation2 + $0x180] sm:$0xff]
      %v394 = vld [vmem:[#allocation2 + $0x188] sm:$0xff]
      %v395 = vld [vmem:[#allocation2 + $0x190] sm:$0xff]
      %v396 = vld [vmem:[#allocation2 + $0x198] sm:$0xff]
      %v397 = vld [vmem:[#allocation2 + $0x1a0] sm:$0xff]
      %v398 = vld [vmem:[#allocation2 + $0x1a8] sm:$0xff]
      %v399 = vld [vmem:[#allocation2 + $0x1b0] sm:$0xff]
      %v400 = vld [vmem:[#allocation2 + $0x1b8] sm:$0xff]
      %v401 = vld [vmem:[#allocation2 + $0x1c0] sm:$0xff]
      %v402 = vld [vmem:[#allocation2 + $0x1c8] sm:$0xff]
      %v403 = vld [vmem:[#allocation2 + $0x1d0] sm:$0xff]
      %v404 = vld [vmem:[#allocation2 + $0x1d8] sm:$0xff]
      %v405 = vld [vmem:[#allocation2 + $0x1e0] sm:$0xff]
      %v406 = vld [vmem:[#allocation2 + $0x1e8] sm:$0xff]
      %v407 = vld [vmem:[#allocation2 + $0x1f0] sm:$0xff]
      %v408 = vld [vmem:[#allocation2 + $0x1f8] sm:$0xff]
      %v409 = vld [vmem:[%s261] sm:$0xf]
      %v410 = vld [vmem:[%s261 + $0x4] sm:$0xf]
      %v411 = vld [vmem:[%s261 + $0x8] sm:$0xf]
      %v412 = vld [vmem:[%s261 + $0xc] sm:$0xf]
      %v413 = vld [vmem:[%s261 + $0x10] sm:$0xf]
      %v414 = vld [vmem:[%s261 + $0x14] sm:$0xf]
      %v415 = vld [vmem:[%s261 + $0x18] sm:$0xf]
      %v416 = vld [vmem:[%s261 + $0x1c] sm:$0xf]
      %v417 = vld [vmem:[%s261 + $0x20] sm:$0xf]
      %v418 = vld [vmem:[%s261 + $0x24] sm:$0xf]
      %v419 = vld [vmem:[%s261 + $0x28] sm:$0xf]
      %v420 = vld [vmem:[%s261 + $0x2c] sm:$0xf]
      %v421 = vld [vmem:[%s261 + $0x30] sm:$0xf]
      %v422 = vld [vmem:[%s261 + $0x34] sm:$0xf]
      %v423 = vld [vmem:[%s261 + $0x38] sm:$0xf]
      %v424 = vld [vmem:[%s261 + $0x3c] sm:$0xf]
      %v425 = vld [vmem:[%s261 + $0x40] sm:$0xf]
      %v426 = vld [vmem:[%s261 + $0x44] sm:$0xf]
      %v427 = vld [vmem:[%s261 + $0x48] sm:$0xf]
      %v428 = vld [vmem:[%s261 + $0x4c] sm:$0xf]
      %v429 = vld [vmem:[%s261 + $0x50] sm:$0xf]
      %v430 = vld [vmem:[%s261 + $0x54] sm:$0xf]
      %v431 = vld [vmem:[%s261 + $0x58] sm:$0xf]
      %v432 = vld [vmem:[%s261 + $0x5c] sm:$0xf]
      %v433 = vld [vmem:[%s261 + $0x60] sm:$0xf]
      %v434 = vld [vmem:[%s261 + $0x64] sm:$0xf]
      %v435 = vld [vmem:[%s261 + $0x68] sm:$0xf]
      %v436 = vld [vmem:[%s261 + $0x6c] sm:$0xf]
      %v437 = vld [vmem:[%s261 + $0x70] sm:$0xf]
      %v438 = vld [vmem:[%s261 + $0x74] sm:$0xf]
      %v439 = vld [vmem:[%s261 + $0x78] sm:$0xf]
      %v440 = vld [vmem:[%s261 + $0x7c] sm:$0xf]
      %v441 = vld [vmem:[%s261 + $0x80] sm:$0xf]
      %v442 = vld [vmem:[%s261 + $0x84] sm:$0xf]
      %v443 = vld [vmem:[%s261 + $0x88] sm:$0xf]
      %v444 = vld [vmem:[%s261 + $0x8c] sm:$0xf]
      %v445 = vld [vmem:[%s261 + $0x90] sm:$0xf]
      %v446 = vld [vmem:[%s261 + $0x94] sm:$0xf]
      %v447 = vld [vmem:[%s261 + $0x98] sm:$0xf]
      %v448 = vld [vmem:[%s261 + $0x9c] sm:$0xf]
      %v449 = vld [vmem:[%s261 + $0xa0] sm:$0xf]
      %v450 = vld [vmem:[%s261 + $0xa4] sm:$0xf]
      %v451 = vld [vmem:[%s261 + $0xa8] sm:$0xf]
      %v452 = vld [vmem:[%s261 + $0xac] sm:$0xf]
      %v453 = vld [vmem:[%s261 + $0xb0] sm:$0xf]
      %v454 = vld [vmem:[%s261 + $0xb4] sm:$0xf]
      %v455 = vld [vmem:[%s261 + $0xb8] sm:$0xf]
      %v456 = vld [vmem:[%s261 + $0xbc] sm:$0xf]
      %v457 = vld [vmem:[%s261 + $0xc0] sm:$0xf]
      %v458 = vld [vmem:[%s261 + $0xc4] sm:$0xf]
      %v459 = vld [vmem:[%s261 + $0xc8] sm:$0xf]
      %v460 = vld [vmem:[%s261 + $0xcc] sm:$0xf]
      %v461 = vld [vmem:[%s261 + $0xd0] sm:$0xf]
      %v462 = vld [vmem:[%s261 + $0xd4] sm:$0xf]
      %v463 = vld [vmem:[%s261 + $0xd8] sm:$0xf]
      %v464 = vld [vmem:[%s261 + $0xdc] sm:$0xf]
      %v465 = vld [vmem:[%s261 + $0xe0] sm:$0xf]
      %v466 = vld [vmem:[%s261 + $0xe4] sm:$0xf]
      %v467 = vld [vmem:[%s261 + $0xe8] sm:$0xf]
      %v468 = vld [vmem:[%s261 + $0xec] sm:$0xf]
      %v469 = vld [vmem:[%s261 + $0xf0] sm:$0xf]
      %v470 = vld [vmem:[%s261 + $0xf4] sm:$0xf]
      %v471 = vld [vmem:[%s261 + $0xf8] sm:$0xf]
      %v472 = vld [vmem:[%s261 + $0xfc] sm:$0xf]
      %v473 = vld [vmem:[%s267] sm:$0xf]
      %v474 = vld [vmem:[%s267 + $0x4] sm:$0xf]
      %v475 = vld [vmem:[%s267 + $0x8] sm:$0xf]
      %v476 = vld [vmem:[%s267 + $0xc] sm:$0xf]
      %v477 = vld [vmem:[%s267 + $0x10] sm:$0xf]
      %v478 = vld [vmem:[%s267 + $0x14] sm:$0xf]
      %v479 = vld [vmem:[%s267 + $0x18] sm:$0xf]
      %v480 = vld [vmem:[%s267 + $0x1c] sm:$0xf]
      %v481 = vld [vmem:[%s267 + $0x20] sm:$0xf]
      %v482 = vld [vmem:[%s267 + $0x24] sm:$0xf]
      %v483 = vld [vmem:[%s267 + $0x28] sm:$0xf]
      %v484 = vld [vmem:[%s267 + $0x2c] sm:$0xf]
      %v485 = vld [vmem:[%s267 + $0x30] sm:$0xf]
      %v486 = vld [vmem:[%s267 + $0x34] sm:$0xf]
      %v487 = vld [vmem:[%s267 + $0x38] sm:$0xf]
      %v488 = vld [vmem:[%s267 + $0x3c] sm:$0xf]
      %v553 = vunpack.c.l.b16 %v409
      %v554 = vunpack.c.l.b16 %v410
      %v555 = vunpack.c.l.b16 %v411
      %v556 = vunpack.c.l.b16 %v412
      %v557 = vunpack.c.l.b16 %v413
      %v558 = vunpack.c.l.b16 %v414
      %v559 = vunpack.c.l.b16 %v415
      %v560 = vunpack.c.l.b16 %v416
      %v561 = vunpack.c.l.b16 %v417
      %v562 = vunpack.c.l.b16 %v418
      %v563 = vunpack.c.l.b16 %v419
      %v564 = vunpack.c.l.b16 %v420
      %v565 = vunpack.c.l.b16 %v421
      %v566 = vunpack.c.l.b16 %v422
      %v567 = vunpack.c.l.b16 %v423
      %v568 = vunpack.c.l.b16 %v424
      %v569 = vunpack.c.l.b16 %v425
      %v570 = vunpack.c.l.b16 %v426
      %v571 = vunpack.c.l.b16 %v427
      %v572 = vunpack.c.l.b16 %v428
      %v573 = vunpack.c.l.b16 %v429
      %v574 = vunpack.c.l.b16 %v430
      %v575 = vunpack.c.l.b16 %v431
      %v576 = vunpack.c.l.b16 %v432
      %v577 = vunpack.c.l.b16 %v433
      %v578 = vunpack.c.l.b16 %v434
      %v579 = vunpack.c.l.b16 %v435
      %v580 = vunpack.c.l.b16 %v436
      %v581 = vunpack.c.l.b16 %v437
      %v582 = vunpack.c.l.b16 %v438
      %v583 = vunpack.c.l.b16 %v439
      %v584 = vunpack.c.l.b16 %v440
      %v585 = vunpack.c.l.b16 %v441
      %v586 = vunpack.c.l.b16 %v442
      %v587 = vunpack.c.l.b16 %v443
      %v588 = vunpack.c.l.b16 %v444
      %v589 = vunpack.c.l.b16 %v445
      %v590 = vunpack.c.l.b16 %v446
      %v591 = vunpack.c.l.b16 %v447
      %v592 = vunpack.c.l.b16 %v448
      %v593 = vunpack.c.l.b16 %v449
      %v594 = vunpack.c.l.b16 %v450
      %v595 = vunpack.c.l.b16 %v451
      %v596 = vunpack.c.l.b16 %v452
      %v597 = vunpack.c.l.b16 %v453
      %v598 = vunpack.c.l.b16 %v454
      %v599 = vunpack.c.l.b16 %v455
      %v600 = vunpack.c.l.b16 %v456
      %v601 = vunpack.c.l.b16 %v457
      %v602 = vunpack.c.l.b16 %v458
      %v603 = vunpack.c.l.b16 %v459
      %v604 = vunpack.c.l.b16 %v460
      %v605 = vunpack.c.l.b16 %v461
      %v606 = vunpack.c.l.b16 %v462
      %v607 = vunpack.c.l.b16 %v463
      %v608 = vunpack.c.l.b16 %v464
      %v609 = vunpack.c.l.b16 %v465
      %v610 = vunpack.c.l.b16 %v466
      %v611 = vunpack.c.l.b16 %v467
      %v612 = vunpack.c.l.b16 %v468
      %v613 = vunpack.c.l.b16 %v469
      %v614 = vunpack.c.l.b16 %v470
      %v615 = vunpack.c.l.b16 %v471
      %v616 = vunpack.c.l.b16 %v472
      %v617 = vpack.c.b16 %v554, %v553
      %v618 = vpack.c.b16 %v556, %v555
      %v619 = vpack.c.b16 %v558, %v557
      %v620 = vpack.c.b16 %v560, %v559
      %v621 = vpack.c.b16 %v562, %v561
      %v622 = vpack.c.b16 %v564, %v563
      %v623 = vpack.c.b16 %v566, %v565
      %v624 = vpack.c.b16 %v568, %v567
      %v625 = vpack.c.b16 %v570, %v569
      %v626 = vpack.c.b16 %v572, %v571
      %v627 = vpack.c.b16 %v574, %v573
      %v628 = vpack.c.b16 %v576, %v575
      %v629 = vpack.c.b16 %v578, %v577
      %v630 = vpack.c.b16 %v580, %v579
      %v631 = vpack.c.b16 %v582, %v581
      %v632 = vpack.c.b16 %v584, %v583
      %v633 = vpack.c.b16 %v586, %v585
      %v634 = vpack.c.b16 %v588, %v587
      %v635 = vpack.c.b16 %v590, %v589
      %v636 = vpack.c.b16 %v592, %v591
      %v637 = vpack.c.b16 %v594, %v593
      %v638 = vpack.c.b16 %v596, %v595
      %v639 = vpack.c.b16 %v598, %v597
      %v640 = vpack.c.b16 %v600, %v599
      %v641 = vpack.c.b16 %v602, %v601
      %v642 = vpack.c.b16 %v604, %v603
      %v643 = vpack.c.b16 %v606, %v605
      %v644 = vpack.c.b16 %v608, %v607
      %v645 = vpack.c.b16 %v610, %v609
      %v646 = vpack.c.b16 %v612, %v611
      %v647 = vpack.c.b16 %v614, %v613
      %v648 = vpack.c.b16 %v616, %v615
      %v697 = vunpack.c.l.b16 %v473
      %v698 = vunpack.c.l.b16 %v474
      %v699 = vunpack.c.l.b16 %v475
      %v700 = vunpack.c.l.b16 %v476
      %v701 = vunpack.c.l.b16 %v477
      %v702 = vunpack.c.l.b16 %v478
      %v703 = vunpack.c.l.b16 %v479
      %v704 = vunpack.c.l.b16 %v480
      %v705 = vunpack.c.l.b16 %v481
      %v706 = vunpack.c.l.b16 %v482
      %v707 = vunpack.c.l.b16 %v483
      %v708 = vunpack.c.l.b16 %v484
      %v709 = vunpack.c.l.b16 %v485
      %v710 = vunpack.c.l.b16 %v486
      %v711 = vunpack.c.l.b16 %v487
      %v712 = vunpack.c.l.b16 %v488
      %v713 = vpack.c.b16 %v698, %v697
      %v714 = vpack.c.b16 %v700, %v699
      %v715 = vpack.c.b16 %v702, %v701
      %v716 = vpack.c.b16 %v704, %v703
      %v717 = vpack.c.b16 %v706, %v705
      %v718 = vpack.c.b16 %v708, %v707
      %v719 = vpack.c.b16 %v710, %v709
      %v720 = vpack.c.b16 %v712, %v711
      %729 = vmatprep.subr.bf16.mxu0 0
      %730 = vmatpush1.bf16.msra.mxu0 %v720
      %731 = vmatprep.subr.bf16.mxu0 0
      %732 = vmatpush1.bf16.msra.mxu0 %v719
      %733 = vmatprep.subr.bf16.mxu0 0
      %734 = vmatpush1.bf16.msra.mxu0 %v718
      %735 = vmatprep.subr.bf16.mxu0 0
      %736 = vmatpush1.bf16.msra.mxu0 %v717
      %737 = vmatprep.subr.bf16.mxu0 0
      %738 = vmatpush1.bf16.msra.mxu0 %v716
      %739 = vmatprep.subr.bf16.mxu0 0
      %740 = vmatpush1.bf16.msra.mxu0 %v715
      %741 = vmatprep.subr.bf16.mxu0 0
      %742 = vmatpush1.bf16.msra.mxu0 %v714
      %743 = vmatprep.subr.bf16.mxu0 0
      %744 = vmatpush1.bf16.msra.mxu0 %v713
      %745 = vmatprep.subr.bf16.mxu0 0
      %746 = vmatpush2.bf16.msra.mxu0 0
      %747 = vmatprep.subr.bf16.mxu0 0
      %748 = vmatpush2.bf16.msra.mxu0 0
      %749 = vmatprep.subr.bf16.mxu0 0
      %750 = vmatpush2.bf16.msra.mxu0 0
      %751 = vmatprep.subr.bf16.mxu0 0
      %752 = vmatpush2.bf16.msra.mxu0 0
      %753 = vmatprep.subr.bf16.mxu0 0
      %754 = vmatpush2.bf16.msra.mxu0 0
      %755 = vmatprep.subr.bf16.mxu0 0
      %756 = vmatpush2.bf16.msra.mxu0 0
      %757 = vmatprep.subr.bf16.mxu0 0
      %758 = vmatpush2.bf16.msra.mxu0 0
      %759 = vmatprep.subr.bf16.mxu0 0
      %760 = vmatpush2.bf16.msra.mxu0 0
      %761 = vmatprep.mubr.bf16.mxu0 0
      %762 = vmatmul.mubr.bf16.gmra.mxu0 %v617
      %v763 = vpop.f32.mrf.mxu0
      %v764 = vadd.f32 0.0, %v763
      %v765 = vpop.f32.mrf.mxu0
      %v766 = vpop.f32.mrf.mxu0
      %v767 = vadd.f32 0.0, %v766
      %v768 = vpop.f32.mrf.mxu0
      %769 = vmatprep.mubr.bf16.mxu0 0
      %770 = vmatmul.mubr.bf16.gmra.mxu0 %v618
      %v771 = vpop.f32.mrf.mxu0
      %v772 = vadd.f32 0.0, %v771
      %v773 = vpop.f32.mrf.mxu0
      %v774 = vpop.f32.mrf.mxu0
      %v775 = vadd.f32 0.0, %v774
      %v776 = vpop.f32.mrf.mxu0
      %777 = vmatprep.mubr.bf16.mxu0 0
      %778 = vmatmul.mubr.bf16.gmra.mxu0 %v619
      %v779 = vpop.f32.mrf.mxu0
      %v780 = vadd.f32 0.0, %v779
      %v781 = vpop.f32.mrf.mxu0
      %v782 = vpop.f32.mrf.mxu0
      %v783 = vadd.f32 0.0, %v782
      %v784 = vpop.f32.mrf.mxu0
      %785 = vmatprep.mubr.bf16.mxu0 0
      %786 = vmatmul.mubr.bf16.gmra.mxu0 %v620
      %v787 = vpop.f32.mrf.mxu0
      %v788 = vadd.f32 0.0, %v787
      %v789 = vpop.f32.mrf.mxu0
      %v790 = vpop.f32.mrf.mxu0
      %v791 = vadd.f32 0.0, %v790
      %v792 = vpop.f32.mrf.mxu0
      %793 = vmatprep.mubr.bf16.mxu0 0
      %794 = vmatmul.mubr.bf16.gmra.mxu0 %v621
      %v795 = vpop.f32.mrf.mxu0
      %v796 = vadd.f32 0.0, %v795
      %v797 = vpop.f32.mrf.mxu0
      %v798 = vpop.f32.mrf.mxu0
      %v799 = vadd.f32 0.0, %v798
      %v800 = vpop.f32.mrf.mxu0
      %801 = vmatprep.mubr.bf16.mxu0 0
      %802 = vmatmul.mubr.bf16.gmra.mxu0 %v622
      %v803 = vpop.f32.mrf.mxu0
      %v804 = vadd.f32 0.0, %v803
      %v805 = vpop.f32.mrf.mxu0
      %v806 = vpop.f32.mrf.mxu0
      %v807 = vadd.f32 0.0, %v806
      %v808 = vpop.f32.mrf.mxu0
      %809 = vmatprep.mubr.bf16.mxu0 0
      %810 = vmatmul.mubr.bf16.gmra.mxu0 %v623
      %v811 = vpop.f32.mrf.mxu0
      %v812 = vadd.f32 0.0, %v811
      %v813 = vpop.f32.mrf.mxu0
      %v814 = vpop.f32.mrf.mxu0
      %v815 = vadd.f32 0.0, %v814
      %v816 = vpop.f32.mrf.mxu0
      %817 = vmatprep.mubr.bf16.mxu0 0
      %818 = vmatmul.mubr.bf16.gmra.mxu0 %v624
      %v819 = vpop.f32.mrf.mxu0
      %v820 = vadd.f32 0.0, %v819
      %v821 = vpop.f32.mrf.mxu0
      %v822 = vpop.f32.mrf.mxu0
      %v823 = vadd.f32 0.0, %v822
      %v824 = vpop.f32.mrf.mxu0
      %825 = vmatprep.mubr.bf16.mxu0 0
      %826 = vmatmul.mubr.bf16.gmra.mxu0 %v625
      %v827 = vpop.f32.mrf.mxu0
      %v828 = vadd.f32 0.0, %v827
      %v829 = vpop.f32.mrf.mxu0
      %v830 = vpop.f32.mrf.mxu0
      %v831 = vadd.f32 0.0, %v830
      %v832 = vpop.f32.mrf.mxu0
      %833 = vmatprep.mubr.bf16.mxu0 0
      %834 = vmatmul.mubr.bf16.gmra.mxu0 %v626
      %v835 = vpop.f32.mrf.mxu0
      %v836 = vadd.f32 0.0, %v835
      %v837 = vpop.f32.mrf.mxu0
      %v838 = vpop.f32.mrf.mxu0
      %v839 = vadd.f32 0.0, %v838
      %v840 = vpop.f32.mrf.mxu0
      %841 = vmatprep.mubr.bf16.mxu0 0
      %842 = vmatmul.mubr.bf16.gmra.mxu0 %v627
      %v843 = vpop.f32.mrf.mxu0
      %v844 = vadd.f32 0.0, %v843
      %v845 = vpop.f32.mrf.mxu0
      %v846 = vpop.f32.mrf.mxu0
      %v847 = vadd.f32 0.0, %v846
      %v848 = vpop.f32.mrf.mxu0
      %849 = vmatprep.mubr.bf16.mxu0 0
      %850 = vmatmul.mubr.bf16.gmra.mxu0 %v628
      %v851 = vpop.f32.mrf.mxu0
      %v852 = vadd.f32 0.0, %v851
      %v853 = vpop.f32.mrf.mxu0
      %v854 = vpop.f32.mrf.mxu0
      %v855 = vadd.f32 0.0, %v854
      %v856 = vpop.f32.mrf.mxu0
      %857 = vmatprep.mubr.bf16.mxu0 0
      %858 = vmatmul.mubr.bf16.gmra.mxu0 %v629
      %v859 = vpop.f32.mrf.mxu0
      %v860 = vadd.f32 0.0, %v859
      %v861 = vpop.f32.mrf.mxu0
      %v862 = vpop.f32.mrf.mxu0
      %v863 = vadd.f32 0.0, %v862
      %v864 = vpop.f32.mrf.mxu0
      %865 = vmatprep.mubr.bf16.mxu0 0
      %866 = vmatmul.mubr.bf16.gmra.mxu0 %v630
      %v867 = vpop.f32.mrf.mxu0
      %v868 = vadd.f32 0.0, %v867
      %v869 = vpop.f32.mrf.mxu0
      %v870 = vpop.f32.mrf.mxu0
      %v871 = vadd.f32 0.0, %v870
      %v872 = vpop.f32.mrf.mxu0
      %873 = vmatprep.mubr.bf16.mxu0 0
      %874 = vmatmul.mubr.bf16.gmra.mxu0 %v631
      %v875 = vpop.f32.mrf.mxu0
      %v876 = vadd.f32 0.0, %v875
      %v877 = vpop.f32.mrf.mxu0
      %v878 = vpop.f32.mrf.mxu0
      %v879 = vadd.f32 0.0, %v878
      %v880 = vpop.f32.mrf.mxu0
      %881 = vmatprep.mubr.bf16.mxu0 0
      %882 = vmatmul.mubr.bf16.gmra.mxu0 %v632
      %v883 = vpop.f32.mrf.mxu0
      %v884 = vadd.f32 0.0, %v883
      %v885 = vpop.f32.mrf.mxu0
      %v886 = vpop.f32.mrf.mxu0
      %v887 = vadd.f32 0.0, %v886
      %v888 = vpop.f32.mrf.mxu0
      %889 = vmatprep.mubr.bf16.mxu0 0
      %890 = vmatmul.mubr.bf16.gmra.mxu0 %v633
      %v891 = vpop.f32.mrf.mxu0
      %v892 = vadd.f32 0.0, %v891
      %v893 = vpop.f32.mrf.mxu0
      %v894 = vpop.f32.mrf.mxu0
      %v895 = vadd.f32 0.0, %v894
      %v896 = vpop.f32.mrf.mxu0
      %897 = vmatprep.mubr.bf16.mxu0 0
      %898 = vmatmul.mubr.bf16.gmra.mxu0 %v634
      %v899 = vpop.f32.mrf.mxu0
      %v900 = vadd.f32 0.0, %v899
      %v901 = vpop.f32.mrf.mxu0
      %v902 = vpop.f32.mrf.mxu0
      %v903 = vadd.f32 0.0, %v902
      %v904 = vpop.f32.mrf.mxu0
      %905 = vmatprep.mubr.bf16.mxu0 0
      %906 = vmatmul.mubr.bf16.gmra.mxu0 %v635
      %v907 = vpop.f32.mrf.mxu0
      %v908 = vadd.f32 0.0, %v907
      %v909 = vpop.f32.mrf.mxu0
      %v910 = vpop.f32.mrf.mxu0
      %v911 = vadd.f32 0.0, %v910
      %v912 = vpop.f32.mrf.mxu0
      %913 = vmatprep.mubr.bf16.mxu0 0
      %914 = vmatmul.mubr.bf16.gmra.mxu0 %v636
      %v915 = vpop.f32.mrf.mxu0
      %v916 = vadd.f32 0.0, %v915
      %v917 = vpop.f32.mrf.mxu0
      %v918 = vpop.f32.mrf.mxu0
      %v919 = vadd.f32 0.0, %v918
      %v920 = vpop.f32.mrf.mxu0
      %921 = vmatprep.mubr.bf16.mxu0 0
      %922 = vmatmul.mubr.bf16.gmra.mxu0 %v637
      %v923 = vpop.f32.mrf.mxu0
      %v924 = vadd.f32 0.0, %v923
      %v925 = vpop.f32.mrf.mxu0
      %v926 = vpop.f32.mrf.mxu0
      %v927 = vadd.f32 0.0, %v926
      %v928 = vpop.f32.mrf.mxu0
      %929 = vmatprep.mubr.bf16.mxu0 0
      %930 = vmatmul.mubr.bf16.gmra.mxu0 %v638
      %v931 = vpop.f32.mrf.mxu0
      %v932 = vadd.f32 0.0, %v931
      %v933 = vpop.f32.mrf.mxu0
      %v934 = vpop.f32.mrf.mxu0
      %v935 = vadd.f32 0.0, %v934
      %v936 = vpop.f32.mrf.mxu0
      %937 = vmatprep.mubr.bf16.mxu0 0
      %938 = vmatmul.mubr.bf16.gmra.mxu0 %v639
      %v939 = vpop.f32.mrf.mxu0
      %v940 = vadd.f32 0.0, %v939
      %v941 = vpop.f32.mrf.mxu0
      %v942 = vpop.f32.mrf.mxu0
      %v943 = vadd.f32 0.0, %v942
      %v944 = vpop.f32.mrf.mxu0
      %945 = vmatprep.mubr.bf16.mxu0 0
      %946 = vmatmul.mubr.bf16.gmra.mxu0 %v640
      %v947 = vpop.f32.mrf.mxu0
      %v948 = vadd.f32 0.0, %v947
      %v949 = vpop.f32.mrf.mxu0
      %v950 = vpop.f32.mrf.mxu0
      %v951 = vadd.f32 0.0, %v950
      %v952 = vpop.f32.mrf.mxu0
      %953 = vmatprep.mubr.bf16.mxu0 0
      %954 = vmatmul.mubr.bf16.gmra.mxu0 %v641
      %v955 = vpop.f32.mrf.mxu0
      %v956 = vadd.f32 0.0, %v955
      %v957 = vpop.f32.mrf.mxu0
      %v958 = vpop.f32.mrf.mxu0
      %v959 = vadd.f32 0.0, %v958
      %v960 = vpop.f32.mrf.mxu0
      %961 = vmatprep.mubr.bf16.mxu0 0
      %962 = vmatmul.mubr.bf16.gmra.mxu0 %v642
      %v963 = vpop.f32.mrf.mxu0
      %v964 = vadd.f32 0.0, %v963
      %v965 = vpop.f32.mrf.mxu0
      %v966 = vpop.f32.mrf.mxu0
      %v967 = vadd.f32 0.0, %v966
      %v968 = vpop.f32.mrf.mxu0
      %969 = vmatprep.mubr.bf16.mxu0 0
      %970 = vmatmul.mubr.bf16.gmra.mxu0 %v643
      %v971 = vpop.f32.mrf.mxu0
      %v972 = vadd.f32 0.0, %v971
      %v973 = vpop.f32.mrf.mxu0
      %v974 = vpop.f32.mrf.mxu0
      %v975 = vadd.f32 0.0, %v974
      %v976 = vpop.f32.mrf.mxu0
      %977 = vmatprep.mubr.bf16.mxu0 0
      %978 = vmatmul.mubr.bf16.gmra.mxu0 %v644
      %v979 = vpop.f32.mrf.mxu0
      %v980 = vadd.f32 0.0, %v979
      %v981 = vpop.f32.mrf.mxu0
      %v982 = vpop.f32.mrf.mxu0
      %v983 = vadd.f32 0.0, %v982
      %v984 = vpop.f32.mrf.mxu0
      %985 = vmatprep.mubr.bf16.mxu0 0
      %986 = vmatmul.mubr.bf16.gmra.mxu0 %v645
      %v987 = vpop.f32.mrf.mxu0
      %v988 = vadd.f32 0.0, %v987
      %v989 = vpop.f32.mrf.mxu0
      %v990 = vpop.f32.mrf.mxu0
      %v991 = vadd.f32 0.0, %v990
      %v992 = vpop.f32.mrf.mxu0
      %993 = vmatprep.mubr.bf16.mxu0 0
      %994 = vmatmul.mubr.bf16.gmra.mxu0 %v646
      %v995 = vpop.f32.mrf.mxu0
      %v996 = vadd.f32 0.0, %v995
      %v997 = vpop.f32.mrf.mxu0
      %v998 = vpop.f32.mrf.mxu0
      %v999 = vadd.f32 0.0, %v998
      %v1000 = vpop.f32.mrf.mxu0
      %1001 = vmatprep.mubr.bf16.mxu0 0
      %1002 = vmatmul.mubr.bf16.gmra.mxu0 %v647
      %v1003 = vpop.f32.mrf.mxu0
      %v1004 = vadd.f32 0.0, %v1003
      %v1005 = vpop.f32.mrf.mxu0
      %v1006 = vpop.f32.mrf.mxu0
      %v1007 = vadd.f32 0.0, %v1006
      %v1008 = vpop.f32.mrf.mxu0
      %1009 = vmatprep.mubr.bf16.mxu0 0
      %1010 = vmatmul.mubr.bf16.gmra.mxu0 %v648
      %v1011 = vpop.f32.mrf.mxu0
      %v1012 = vadd.f32 0.0, %v1011
      %v1013 = vpop.f32.mrf.mxu0
      %v1014 = vpop.f32.mrf.mxu0
      %v1015 = vadd.f32 0.0, %v1014
      %v1016 = vpop.f32.mrf.mxu0
      %1017 = vdwg.mxu0
      %v1018 = vadd.f32 %v345, %v764
      %v1019 = vadd.f32 %v346, %v767
      %v1020 = vadd.f32 %v347, %v772
      %v1021 = vadd.f32 %v348, %v775
      %v1022 = vadd.f32 %v349, %v780
      %v1023 = vadd.f32 %v350, %v783
      %v1024 = vadd.f32 %v351, %v788
      %v1025 = vadd.f32 %v352, %v791
      %v1026 = vadd.f32 %v353, %v796
      %v1027 = vadd.f32 %v354, %v799
      %v1028 = vadd.f32 %v355, %v804
      %v1029 = vadd.f32 %v356, %v807
      %v1030 = vadd.f32 %v357, %v812
      %v1031 = vadd.f32 %v358, %v815
      %v1032 = vadd.f32 %v359, %v820
      %v1033 = vadd.f32 %v360, %v823
      %v1034 = vadd.f32 %v361, %v828
      %v1035 = vadd.f32 %v362, %v831
      %v1036 = vadd.f32 %v363, %v836
      %v1037 = vadd.f32 %v364, %v839
      %v1038 = vadd.f32 %v365, %v844
      %v1039 = vadd.f32 %v366, %v847
      %v1040 = vadd.f32 %v367, %v852
      %v1041 = vadd.f32 %v368, %v855
      %v1042 = vadd.f32 %v369, %v860
      %v1043 = vadd.f32 %v370, %v863
      %v1044 = vadd.f32 %v371, %v868
      %v1045 = vadd.f32 %v372, %v871
      %v1046 = vadd.f32 %v373, %v876
      %v1047 = vadd.f32 %v374, %v879
      %v1048 = vadd.f32 %v375, %v884
      %v1049 = vadd.f32 %v376, %v887
      %v1050 = vadd.f32 %v377, %v892
      %v1051 = vadd.f32 %v378, %v895
      %v1052 = vadd.f32 %v379, %v900
      %v1053 = vadd.f32 %v380, %v903
      %v1054 = vadd.f32 %v381, %v908
      %v1055 = vadd.f32 %v382, %v911
      %v1056 = vadd.f32 %v383, %v916
      %v1057 = vadd.f32 %v384, %v919
      %v1058 = vadd.f32 %v385, %v924
      %v1059 = vadd.f32 %v386, %v927
      %v1060 = vadd.f32 %v387, %v932
      %v1061 = vadd.f32 %v388, %v935
      %v1062 = vadd.f32 %v389, %v940
      %v1063 = vadd.f32 %v390, %v943
      %v1064 = vadd.f32 %v391, %v948
      %v1065 = vadd.f32 %v392, %v951
      %v1066 = vadd.f32 %v393, %v956
      %v1067 = vadd.f32 %v394, %v959
      %v1068 = vadd.f32 %v395, %v964
      %v1069 = vadd.f32 %v396, %v967
      %v1070 = vadd.f32 %v397, %v972
      %v1071 = vadd.f32 %v398, %v975
      %v1072 = vadd.f32 %v399, %v980
      %v1073 = vadd.f32 %v400, %v983
      %v1074 = vadd.f32 %v401, %v988
      %v1075 = vadd.f32 %v402, %v991
      %v1076 = vadd.f32 %v403, %v996
      %v1077 = vadd.f32 %v404, %v999
      %v1078 = vadd.f32 %v405, %v1004
      %v1079 = vadd.f32 %v406, %v1007
      %v1080 = vadd.f32 %v407, %v1012
      %v1081 = vadd.f32 %v408, %v1015
      %vm1082 = vcmask 64512
      %1083 = vst.msk [vmem:[#allocation2] sm:$0xff] %vm1082, %v1018
      %1084 = vst.msk [vmem:[#allocation2 + $0x8] sm:$0xff] %vm1082, %v1019
      %1085 = vst.msk [vmem:[#allocation2 + $0x10] sm:$0xff] %vm1082, %v1020
      %1086 = vst.msk [vmem:[#allocation2 + $0x18] sm:$0xff] %vm1082, %v1021
      %1087 = vst.msk [vmem:[#allocation2 + $0x20] sm:$0xff] %vm1082, %v1022
      %1088 = vst.msk [vmem:[#allocation2 + $0x28] sm:$0xff] %vm1082, %v1023
      %1089 = vst.msk [vmem:[#allocation2 + $0x30] sm:$0xff] %vm1082, %v1024
      %1090 = vst.msk [vmem:[#allocation2 + $0x38] sm:$0xff] %vm1082, %v1025
      %1091 = vst.msk [vmem:[#allocation2 + $0x40] sm:$0xff] %vm1082, %v1026
      %1092 = vst.msk [vmem:[#allocation2 + $0x48] sm:$0xff] %vm1082, %v1027
      %1093 = vst.msk [vmem:[#allocation2 + $0x50] sm:$0xff] %vm1082, %v1028
      %1094 = vst.msk [vmem:[#allocation2 + $0x58] sm:$0xff] %vm1082, %v1029
      %1095 = vst.msk [vmem:[#allocation2 + $0x60] sm:$0xff] %vm1082, %v1030
      %1096 = vst.msk [vmem:[#allocation2 + $0x68] sm:$0xff] %vm1082, %v1031
      %1097 = vst.msk [vmem:[#allocation2 + $0x70] sm:$0xff] %vm1082, %v1032
      %1098 = vst.msk [vmem:[#allocation2 + $0x78] sm:$0xff] %vm1082, %v1033
      %1099 = vst.msk [vmem:[#allocation2 + $0x80] sm:$0xff] %vm1082, %v1034
      %1100 = vst.msk [vmem:[#allocation2 + $0x88] sm:$0xff] %vm1082, %v1035
      %1101 = vst.msk [vmem:[#allocation2 + $0x90] sm:$0xff] %vm1082, %v1036
      %1102 = vst.msk [vmem:[#allocation2 + $0x98] sm:$0xff] %vm1082, %v1037
      %1103 = vst.msk [vmem:[#allocation2 + $0xa0] sm:$0xff] %vm1082, %v1038
      %1104 = vst.msk [vmem:[#allocation2 + $0xa8] sm:$0xff] %vm1082, %v1039
      %1105 = vst.msk [vmem:[#allocation2 + $0xb0] sm:$0xff] %vm1082, %v1040
      %1106 = vst.msk [vmem:[#allocation2 + $0xb8] sm:$0xff] %vm1082, %v1041
      %1107 = vst.msk [vmem:[#allocation2 + $0xc0] sm:$0xff] %vm1082, %v1042
      %1108 = vst.msk [vmem:[#allocation2 + $0xc8] sm:$0xff] %vm1082, %v1043
      %1109 = vst.msk [vmem:[#allocation2 + $0xd0] sm:$0xff] %vm1082, %v1044
      %1110 = vst.msk [vmem:[#allocation2 + $0xd8] sm:$0xff] %vm1082, %v1045
      %1111 = vst.msk [vmem:[#allocation2 + $0xe0] sm:$0xff] %vm1082, %v1046
      %1112 = vst.msk [vmem:[#allocation2 + $0xe8] sm:$0xff] %vm1082, %v1047
      %1113 = vst.msk [vmem:[#allocation2 + $0xf0] sm:$0xff] %vm1082, %v1048
      %1114 = vst.msk [vmem:[#allocation2 + $0xf8] sm:$0xff] %vm1082, %v1049
      %1115 = vst.msk [vmem:[#allocation2 + $0x100] sm:$0xff] %vm1082, %v1050
      %1116 = vst.msk [vmem:[#allocation2 + $0x108] sm:$0xff] %vm1082, %v1051
      %1117 = vst.msk [vmem:[#allocation2 + $0x110] sm:$0xff] %vm1082, %v1052
      %1118 = vst.msk [vmem:[#allocation2 + $0x118] sm:$0xff] %vm1082, %v1053
      %1119 = vst.msk [vmem:[#allocation2 + $0x120] sm:$0xff] %vm1082, %v1054
      %1120 = vst.msk [vmem:[#allocation2 + $0x128] sm:$0xff] %vm1082, %v1055
      %1121 = vst.msk [vmem:[#allocation2 + $0x130] sm:$0xff] %vm1082, %v1056
      %1122 = vst.msk [vmem:[#allocation2 + $0x138] sm:$0xff] %vm1082, %v1057
      %1123 = vst.msk [vmem:[#allocation2 + $0x140] sm:$0xff] %vm1082, %v1058
      %1124 = vst.msk [vmem:[#allocation2 + $0x148] sm:$0xff] %vm1082, %v1059
      %1125 = vst.msk [vmem:[#allocation2 + $0x150] sm:$0xff] %vm1082, %v1060
      %1126 = vst.msk [vmem:[#allocation2 + $0x158] sm:$0xff] %vm1082, %v1061
      %1127 = vst.msk [vmem:[#allocation2 + $0x160] sm:$0xff] %vm1082, %v1062
      %1128 = vst.msk [vmem:[#allocation2 + $0x168] sm:$0xff] %vm1082, %v1063
      %1129 = vst.msk [vmem:[#allocation2 + $0x170] sm:$0xff] %vm1082, %v1064
      %1130 = vst.msk [vmem:[#allocation2 + $0x178] sm:$0xff] %vm1082, %v1065
      %1131 = vst.msk [vmem:[#allocation2 + $0x180] sm:$0xff] %vm1082, %v1066
      %1132 = vst.msk [vmem:[#allocation2 + $0x188] sm:$0xff] %vm1082, %v1067
      %1133 = vst.msk [vmem:[#allocation2 + $0x190] sm:$0xff] %vm1082, %v1068
      %1134 = vst.msk [vmem:[#allocation2 + $0x198] sm:$0xff] %vm1082, %v1069
      %1135 = vst.msk [vmem:[#allocation2 + $0x1a0] sm:$0xff] %vm1082, %v1070
      %1136 = vst.msk [vmem:[#allocation2 + $0x1a8] sm:$0xff] %vm1082, %v1071
      %1137 = vst.msk [vmem:[#allocation2 + $0x1b0] sm:$0xff] %vm1082, %v1072
      %1138 = vst.msk [vmem:[#allocation2 + $0x1b8] sm:$0xff] %vm1082, %v1073
      %1139 = vst.msk [vmem:[#allocation2 + $0x1c0] sm:$0xff] %vm1082, %v1074
      %1140 = vst.msk [vmem:[#allocation2 + $0x1c8] sm:$0xff] %vm1082, %v1075
      %1141 = vst.msk [vmem:[#allocation2 + $0x1d0] sm:$0xff] %vm1082, %v1076
      %1142 = vst.msk [vmem:[#allocation2 + $0x1d8] sm:$0xff] %vm1082, %v1077
      %1143 = vst.msk [vmem:[#allocation2 + $0x1e0] sm:$0xff] %vm1082, %v1078
      %1144 = vst.msk [vmem:[#allocation2 + $0x1e8] sm:$0xff] %vm1082, %v1079
      %1145 = vst.msk [vmem:[#allocation2 + $0x1f0] sm:$0xff] %vm1082, %v1080
      %1146 = vst.msk [vmem:[#allocation2 + $0x1f8] sm:$0xff] %vm1082, %v1081
      // Predicated region
      $region45: #{detail_capture_forward.15} parent=39 // pred_check
        %p1147 = pneg %p276
      $region46: #{detail_capture_forward.15} parent=39 // pred_check_branch
        %1149 = sbr.rel (%p1147) target = $region48
      $region47: #{detail_capture_forward.15} parent=39 // pred_region
        %v1150 = vld [vmem:[#allocation2] sm:$0xff]
        %v1151 = vld [vmem:[#allocation2 + $0x8] sm:$0xff]
        %v1152 = vld [vmem:[#allocation2 + $0x10] sm:$0xff]
        %v1153 = vld [vmem:[#allocation2 + $0x18] sm:$0xff]
        %v1154 = vld [vmem:[#allocation2 + $0x20] sm:$0xff]
        %v1155 = vld [vmem:[#allocation2 + $0x28] sm:$0xff]
        %v1156 = vld [vmem:[#allocation2 + $0x30] sm:$0xff]
        %v1157 = vld [vmem:[#allocation2 + $0x38] sm:$0xff]
        %v1158 = vld [vmem:[#allocation2 + $0x40] sm:$0xff]
        %v1159 = vld [vmem:[#allocation2 + $0x48] sm:$0xff]
        %v1160 = vld [vmem:[#allocation2 + $0x50] sm:$0xff]
        %v1161 = vld [vmem:[#allocation2 + $0x58] sm:$0xff]
        %v1162 = vld [vmem:[#allocation2 + $0x60] sm:$0xff]
        %v1163 = vld [vmem:[#allocation2 + $0x68] sm:$0xff]
        %v1164 = vld [vmem:[#allocation2 + $0x70] sm:$0xff]
        %v1165 = vld [vmem:[#allocation2 + $0x78] sm:$0xff]
        %v1166 = vld [vmem:[#allocation2 + $0x80] sm:$0xff]
        %v1167 = vld [vmem:[#allocation2 + $0x88] sm:$0xff]
        %v1168 = vld [vmem:[#allocation2 + $0x90] sm:$0xff]
        %v1169 = vld [vmem:[#allocation2 + $0x98] sm:$0xff]
        %v1170 = vld [vmem:[#allocation2 + $0xa0] sm:$0xff]
        %v1171 = vld [vmem:[#allocation2 + $0xa8] sm:$0xff]
        %v1172 = vld [vmem:[#allocation2 + $0xb0] sm:$0xff]
        %v1173 = vld [vmem:[#allocation2 + $0xb8] sm:$0xff]
        %v1174 = vld [vmem:[#allocation2 + $0xc0] sm:$0xff]
        %v1175 = vld [vmem:[#allocation2 + $0xc8] sm:$0xff]
        %v1176 = vld [vmem:[#allocation2 + $0xd0] sm:$0xff]
        %v1177 = vld [vmem:[#allocation2 + $0xd8] sm:$0xff]
        %v1178 = vld [vmem:[#allocation2 + $0xe0] sm:$0xff]
        %v1179 = vld [vmem:[#allocation2 + $0xe8] sm:$0xff]
        %v1180 = vld [vmem:[#allocation2 + $0xf0] sm:$0xff]
        %v1181 = vld [vmem:[#allocation2 + $0xf8] sm:$0xff]
        %v1182 = vld [vmem:[#allocation2 + $0x100] sm:$0xff]
        %v1183 = vld [vmem:[#allocation2 + $0x108] sm:$0xff]
        %v1184 = vld [vmem:[#allocation2 + $0x110] sm:$0xff]
        %v1185 = vld [vmem:[#allocation2 + $0x118] sm:$0xff]
        %v1186 = vld [vmem:[#allocation2 + $0x120] sm:$0xff]
        %v1187 = vld [vmem:[#allocation2 + $0x128] sm:$0xff]
        %v1188 = vld [vmem:[#allocation2 + $0x130] sm:$0xff]
        %v1189 = vld [vmem:[#allocation2 + $0x138] sm:$0xff]
        %v1190 = vld [vmem:[#allocation2 + $0x140] sm:$0xff]
        %v1191 = vld [vmem:[#allocation2 + $0x148] sm:$0xff]
        %v1192 = vld [vmem:[#allocation2 + $0x150] sm:$0xff]
        %v1193 = vld [vmem:[#allocation2 + $0x158] sm:$0xff]
        %v1194 = vld [vmem:[#allocation2 + $0x160] sm:$0xff]
        %v1195 = vld [vmem:[#allocation2 + $0x168] sm:$0xff]
        %v1196 = vld [vmem:[#allocation2 + $0x170] sm:$0xff]
        %v1197 = vld [vmem:[#allocation2 + $0x178] sm:$0xff]
        %v1198 = vld [vmem:[#allocation2 + $0x180] sm:$0xff]
        %v1199 = vld [vmem:[#allocation2 + $0x188] sm:$0xff]
        %v1200 = vld [vmem:[#allocation2 + $0x190] sm:$0xff]
        %v1201 = vld [vmem:[#allocation2 + $0x198] sm:$0xff]
        %v1202 = vld [vmem:[#allocation2 + $0x1a0] sm:$0xff]
        %v1203 = vld [vmem:[#allocation2 + $0x1a8] sm:$0xff]
        %v1204 = vld [vmem:[#allocation2 + $0x1b0] sm:$0xff]
        %v1205 = vld [vmem:[#allocation2 + $0x1b8] sm:$0xff]
        %v1206 = vld [vmem:[#allocation2 + $0x1c0] sm:$0xff]
        %v1207 = vld [vmem:[#allocation2 + $0x1c8] sm:$0xff]
        %v1208 = vld [vmem:[#allocation2 + $0x1d0] sm:$0xff]
        %v1209 = vld [vmem:[#allocation2 + $0x1d8] sm:$0xff]
        %v1210 = vld [vmem:[#allocation2 + $0x1e0] sm:$0xff]
        %v1211 = vld [vmem:[#allocation2 + $0x1e8] sm:$0xff]
        %v1212 = vld [vmem:[#allocation2 + $0x1f0] sm:$0xff]
        %v1213 = vld [vmem:[#allocation2 + $0x1f8] sm:$0xff]
        %v1214 = vld [vmem:[%s2] sm:$0x1]
        %v1216 = vlaneseq
        %v1217 = vshrl.u32 %v1216, 7
        %v1218 = vsub.s32 0, %v1217
        %v1219 = vrot.slane %v1214, %v1218
        %v1221 = vadd.f32 %v1150, %v1219
        %v1222 = vadd.f32 %v1151, %v1219
        %v1223 = vadd.f32 %v1152, %v1219
        %v1224 = vadd.f32 %v1153, %v1219
        %v1225 = vadd.f32 %v1154, %v1219
        %v1226 = vadd.f32 %v1155, %v1219
        %v1227 = vadd.f32 %v1156, %v1219
        %v1228 = vadd.f32 %v1157, %v1219
        %v1229 = vadd.f32 %v1158, %v1219
        %v1230 = vadd.f32 %v1159, %v1219
        %v1231 = vadd.f32 %v1160, %v1219
        %v1232 = vadd.f32 %v1161, %v1219
        %v1233 = vadd.f32 %v1162, %v1219
        %v1234 = vadd.f32 %v1163, %v1219
        %v1235 = vadd.f32 %v1164, %v1219
        %v1236 = vadd.f32 %v1165, %v1219
        %v1237 = vadd.f32 %v1166, %v1219
        %v1238 = vadd.f32 %v1167, %v1219
        %v1239 = vadd.f32 %v1168, %v1219
        %v1240 = vadd.f32 %v1169, %v1219
        %v1241 = vadd.f32 %v1170, %v1219
        %v1242 = vadd.f32 %v1171, %v1219
        %v1243 = vadd.f32 %v1172, %v1219
        %v1244 = vadd.f32 %v1173, %v1219
        %v1245 = vadd.f32 %v1174, %v1219
        %v1246 = vadd.f32 %v1175, %v1219
        %v1247 = vadd.f32 %v1176, %v1219
        %v1248 = vadd.f32 %v1177, %v1219
        %v1249 = vadd.f32 %v1178, %v1219
        %v1250 = vadd.f32 %v1179, %v1219
        %v1251 = vadd.f32 %v1180, %v1219
        %v1252 = vadd.f32 %v1181, %v1219
        %v1253 = vadd.f32 %v1182, %v1219
        %v1254 = vadd.f32 %v1183, %v1219
        %v1255 = vadd.f32 %v1184, %v1219
        %v1256 = vadd.f32 %v1185, %v1219
        %v1257 = vadd.f32 %v1186, %v1219
        %v1258 = vadd.f32 %v1187, %v1219
        %v1259 = vadd.f32 %v1188, %v1219
        %v1260 = vadd.f32 %v1189, %v1219
        %v1261 = vadd.f32 %v1190, %v1219
        %v1262 = vadd.f32 %v1191, %v1219
        %v1263 = vadd.f32 %v1192, %v1219
        %v1264 = vadd.f32 %v1193, %v1219
        %v1265 = vadd.f32 %v1194, %v1219
        %v1266 = vadd.f32 %v1195, %v1219
        %v1267 = vadd.f32 %v1196, %v1219
        %v1268 = vadd.f32 %v1197, %v1219
        %v1269 = vadd.f32 %v1198, %v1219
        %v1270 = vadd.f32 %v1199, %v1219
        %v1271 = vadd.f32 %v1200, %v1219
        %v1272 = vadd.f32 %v1201, %v1219
        %v1273 = vadd.f32 %v1202, %v1219
        %v1274 = vadd.f32 %v1203, %v1219
        %v1275 = vadd.f32 %v1204, %v1219
        %v1276 = vadd.f32 %v1205, %v1219
        %v1277 = vadd.f32 %v1206, %v1219
        %v1278 = vadd.f32 %v1207, %v1219
        %v1279 = vadd.f32 %v1208, %v1219
        %v1280 = vadd.f32 %v1209, %v1219
        %v1281 = vadd.f32 %v1210, %v1219
        %v1282 = vadd.f32 %v1211, %v1219
        %v1283 = vadd.f32 %v1212, %v1219
        %v1284 = vadd.f32 %v1213, %v1219
        %v1285 = vmax.f32 %v1221, 0.0
        %v1286 = vmax.f32 %v1222, 0.0
        %v1287 = vmax.f32 %v1223, 0.0
        %v1288 = vmax.f32 %v1224, 0.0
        %v1289 = vmax.f32 %v1225, 0.0
        %v1290 = vmax.f32 %v1226, 0.0
        %v1291 = vmax.f32 %v1227, 0.0
        %v1292 = vmax.f32 %v1228, 0.0
        %v1293 = vmax.f32 %v1229, 0.0
        %v1294 = vmax.f32 %v1230, 0.0
        %v1295 = vmax.f32 %v1231, 0.0
        %v1296 = vmax.f32 %v1232, 0.0
        %v1297 = vmax.f32 %v1233, 0.0
        %v1298 = vmax.f32 %v1234, 0.0
        %v1299 = vmax.f32 %v1235, 0.0
        %v1300 = vmax.f32 %v1236, 0.0
        %v1301 = vmax.f32 %v1237, 0.0
        %v1302 = vmax.f32 %v1238, 0.0
        %v1303 = vmax.f32 %v1239, 0.0
        %v1304 = vmax.f32 %v1240, 0.0
        %v1305 = vmax.f32 %v1241, 0.0
        %v1306 = vmax.f32 %v1242, 0.0
        %v1307 = vmax.f32 %v1243, 0.0
        %v1308 = vmax.f32 %v1244, 0.0
        %v1309 = vmax.f32 %v1245, 0.0
        %v1310 = vmax.f32 %v1246, 0.0
        %v1311 = vmax.f32 %v1247, 0.0
        %v1312 = vmax.f32 %v1248, 0.0
        %v1313 = vmax.f32 %v1249, 0.0
        %v1314 = vmax.f32 %v1250, 0.0
        %v1315 = vmax.f32 %v1251, 0.0
        %v1316 = vmax.f32 %v1252, 0.0
        %v1317 = vmax.f32 %v1253, 0.0
        %v1318 = vmax.f32 %v1254, 0.0
        %v1319 = vmax.f32 %v1255, 0.0
        %v1320 = vmax.f32 %v1256, 0.0
        %v1321 = vmax.f32 %v1257, 0.0
        %v1322 = vmax.f32 %v1258, 0.0
        %v1323 = vmax.f32 %v1259, 0.0
        %v1324 = vmax.f32 %v1260, 0.0
        %v1325 = vmax.f32 %v1261, 0.0
        %v1326 = vmax.f32 %v1262, 0.0
        %v1327 = vmax.f32 %v1263, 0.0
        %v1328 = vmax.f32 %v1264, 0.0
        %v1329 = vmax.f32 %v1265, 0.0
        %v1330 = vmax.f32 %v1266, 0.0
        %v1331 = vmax.f32 %v1267, 0.0
        %v1332 = vmax.f32 %v1268, 0.0
        %v1333 = vmax.f32 %v1269, 0.0
        %v1334 = vmax.f32 %v1270, 0.0
        %v1335 = vmax.f32 %v1271, 0.0
        %v1336 = vmax.f32 %v1272, 0.0
        %v1337 = vmax.f32 %v1273, 0.0
        %v1338 = vmax.f32 %v1274, 0.0
        %v1339 = vmax.f32 %v1275, 0.0
        %v1340 = vmax.f32 %v1276, 0.0
        %v1341 = vmax.f32 %v1277, 0.0
        %v1342 = vmax.f32 %v1278, 0.0
        %v1343 = vmax.f32 %v1279, 0.0
        %v1344 = vmax.f32 %v1280, 0.0
        %v1345 = vmax.f32 %v1281, 0.0
        %v1346 = vmax.f32 %v1282, 0.0
        %v1347 = vmax.f32 %v1283, 0.0
        %v1348 = vmax.f32 %v1284, 0.0
        %v1349 = vld [vmem:[%s3] sm:$0x1]
        %v1351 = vlaneseq
        %v1352 = vshrl.u32 %v1351, 7
        %v1353 = vsub.s32 0, %v1352
        %v1354 = vrot.slane %v1349, %v1353
        %v1356 = vmul.f32 %v1285, %v1354
        %v1357 = vmul.f32 %v1286, %v1354
        %v1358 = vmul.f32 %v1287, %v1354
        %v1359 = vmul.f32 %v1288, %v1354
        %v1360 = vmul.f32 %v1289, %v1354
        %v1361 = vmul.f32 %v1290, %v1354
        %v1362 = vmul.f32 %v1291, %v1354
        %v1363 = vmul.f32 %v1292, %v1354
        %v1364 = vmul.f32 %v1293, %v1354
        %v1365 = vmul.f32 %v1294, %v1354
        %v1366 = vmul.f32 %v1295, %v1354
        %v1367 = vmul.f32 %v1296, %v1354
        %v1368 = vmul.f32 %v1297, %v1354
        %v1369 = vmul.f32 %v1298, %v1354
        %v1370 = vmul.f32 %v1299, %v1354
        %v1371 = vmul.f32 %v1300, %v1354
        %v1372 = vmul.f32 %v1301, %v1354
        %v1373 = vmul.f32 %v1302, %v1354
        %v1374 = vmul.f32 %v1303, %v1354
        %v1375 = vmul.f32 %v1304, %v1354
        %v1376 = vmul.f32 %v1305, %v1354
        %v1377 = vmul.f32 %v1306, %v1354
        %v1378 = vmul.f32 %v1307, %v1354
        %v1379 = vmul.f32 %v1308, %v1354
        %v1380 = vmul.f32 %v1309, %v1354
        %v1381 = vmul.f32 %v1310, %v1354
        %v1382 = vmul.f32 %v1311, %v1354
        %v1383 = vmul.f32 %v1312, %v1354
        %v1384 = vmul.f32 %v1313, %v1354
        %v1385 = vmul.f32 %v1314, %v1354
        %v1386 = vmul.f32 %v1315, %v1354
        %v1387 = vmul.f32 %v1316, %v1354
        %v1388 = vmul.f32 %v1317, %v1354
        %v1389 = vmul.f32 %v1318, %v1354
        %v1390 = vmul.f32 %v1319, %v1354
        %v1391 = vmul.f32 %v1320, %v1354
        %v1392 = vmul.f32 %v1321, %v1354
        %v1393 = vmul.f32 %v1322, %v1354
        %v1394 = vmul.f32 %v1323, %v1354
        %v1395 = vmul.f32 %v1324, %v1354
        %v1396 = vmul.f32 %v1325, %v1354
        %v1397 = vmul.f32 %v1326, %v1354
        %v1398 = vmul.f32 %v1327, %v1354
        %v1399 = vmul.f32 %v1328, %v1354
        %v1400 = vmul.f32 %v1329, %v1354
        %v1401 = vmul.f32 %v1330, %v1354
        %v1402 = vmul.f32 %v1331, %v1354
        %v1403 = vmul.f32 %v1332, %v1354
        %v1404 = vmul.f32 %v1333, %v1354
        %v1405 = vmul.f32 %v1334, %v1354
        %v1406 = vmul.f32 %v1335, %v1354
        %v1407 = vmul.f32 %v1336, %v1354
        %v1408 = vmul.f32 %v1337, %v1354
        %v1409 = vmul.f32 %v1338, %v1354
        %v1410 = vmul.f32 %v1339, %v1354
        %v1411 = vmul.f32 %v1340, %v1354
        %v1412 = vmul.f32 %v1341, %v1354
        %v1413 = vmul.f32 %v1342, %v1354
        %v1414 = vmul.f32 %v1343, %v1354
        %v1415 = vmul.f32 %v1344, %v1354
        %v1416 = vmul.f32 %v1345, %v1354
        %v1417 = vmul.f32 %v1346, %v1354
        %v1418 = vmul.f32 %v1347, %v1354
        %v1419 = vmul.f32 %v1348, %v1354
        %v1420 = vsel %vm1082, %v1356, 0.0
        %1421 = vadd.xlane.f32.xlu0 %v1420
        %v1422 = vpop.xlane.xlu0 %1421
        %v1423 = vsel %vm1082, %v1357, 0.0
        %1424 = vadd.xlane.f32.xlu0 %v1423
        %v1425 = vpop.xlane.xlu0 %1424
        %v1426 = vsel %vm1082, %v1358, 0.0
        %1427 = vadd.xlane.f32.xlu0 %v1426
        %v1428 = vpop.xlane.xlu0 %1427
        %v1429 = vsel %vm1082, %v1359, 0.0
        %1430 = vadd.xlane.f32.xlu0 %v1429
        %v1431 = vpop.xlane.xlu0 %1430
        %v1432 = vsel %vm1082, %v1360, 0.0
        %1433 = vadd.xlane.f32.xlu0 %v1432
        %v1434 = vpop.xlane.xlu0 %1433
        %v1435 = vsel %vm1082, %v1361, 0.0
        %1436 = vadd.xlane.f32.xlu0 %v1435
        %v1437 = vpop.xlane.xlu0 %1436
        %v1438 = vsel %vm1082, %v1362, 0.0
        %1439 = vadd.xlane.f32.xlu0 %v1438
        %v1440 = vpop.xlane.xlu0 %1439
        %v1441 = vsel %vm1082, %v1363, 0.0
        %1442 = vadd.xlane.f32.xlu0 %v1441
        %v1443 = vpop.xlane.xlu0 %1442
        %v1444 = vsel %vm1082, %v1364, 0.0
        %1445 = vadd.xlane.f32.xlu0 %v1444
        %v1446 = vpop.xlane.xlu0 %1445
        %v1447 = vsel %vm1082, %v1365, 0.0
        %1448 = vadd.xlane.f32.xlu0 %v1447
        %v1449 = vpop.xlane.xlu0 %1448
        %v1450 = vsel %vm1082, %v1366, 0.0
        %1451 = vadd.xlane.f32.xlu0 %v1450
        %v1452 = vpop.xlane.xlu0 %1451
        %v1453 = vsel %vm1082, %v1367, 0.0
        %1454 = vadd.xlane.f32.xlu0 %v1453
        %v1455 = vpop.xlane.xlu0 %1454
        %v1456 = vsel %vm1082, %v1368, 0.0
        %1457 = vadd.xlane.f32.xlu0 %v1456
        %v1458 = vpop.xlane.xlu0 %1457
        %v1459 = vsel %vm1082, %v1369, 0.0
        %1460 = vadd.xlane.f32.xlu0 %v1459
        %v1461 = vpop.xlane.xlu0 %1460
        %v1462 = vsel %vm1082, %v1370, 0.0
        %1463 = vadd.xlane.f32.xlu0 %v1462
        %v1464 = vpop.xlane.xlu0 %1463
        %v1465 = vsel %vm1082, %v1371, 0.0
        %1466 = vadd.xlane.f32.xlu0 %v1465
        %v1467 = vpop.xlane.xlu0 %1466
        %v1468 = vsel %vm1082, %v1372, 0.0
        %1469 = vadd.xlane.f32.xlu0 %v1468
        %v1470 = vpop.xlane.xlu0 %1469
        %v1471 = vsel %vm1082, %v1373, 0.0
        %1472 = vadd.xlane.f32.xlu0 %v1471
        %v1473 = vpop.xlane.xlu0 %1472
        %v1474 = vsel %vm1082, %v1374, 0.0
        %1475 = vadd.xlane.f32.xlu0 %v1474
        %v1476 = vpop.xlane.xlu0 %1475
        %v1477 = vsel %vm1082, %v1375, 0.0
        %1478 = vadd.xlane.f32.xlu0 %v1477
        %v1479 = vpop.xlane.xlu0 %1478
        %v1480 = vsel %vm1082, %v1376, 0.0
        %1481 = vadd.xlane.f32.xlu0 %v1480
        %v1482 = vpop.xlane.xlu0 %1481
        %v1483 = vsel %vm1082, %v1377, 0.0
        %1484 = vadd.xlane.f32.xlu0 %v1483
        %v1485 = vpop.xlane.xlu0 %1484
        %v1486 = vsel %vm1082, %v1378, 0.0
        %1487 = vadd.xlane.f32.xlu0 %v1486
        %v1488 = vpop.xlane.xlu0 %1487
        %v1489 = vsel %vm1082, %v1379, 0.0
        %1490 = vadd.xlane.f32.xlu0 %v1489
        %v1491 = vpop.xlane.xlu0 %1490
        %v1492 = vsel %vm1082, %v1380, 0.0
        %1493 = vadd.xlane.f32.xlu0 %v1492
        %v1494 = vpop.xlane.xlu0 %1493
        %v1495 = vsel %vm1082, %v1381, 0.0
        %1496 = vadd.xlane.f32.xlu0 %v1495
        %v1497 = vpop.xlane.xlu0 %1496
        %v1498 = vsel %vm1082, %v1382, 0.0
        %1499 = vadd.xlane.f32.xlu0 %v1498
        %v1500 = vpop.xlane.xlu0 %1499
        %v1501 = vsel %vm1082, %v1383, 0.0
        %1502 = vadd.xlane.f32.xlu0 %v1501
        %v1503 = vpop.xlane.xlu0 %1502
        %v1504 = vsel %vm1082, %v1384, 0.0
        %1505 = vadd.xlane.f32.xlu0 %v1504
        %v1506 = vpop.xlane.xlu0 %1505
        %v1507 = vsel %vm1082, %v1385, 0.0
        %1508 = vadd.xlane.f32.xlu0 %v1507
        %v1509 = vpop.xlane.xlu0 %1508
        %v1510 = vsel %vm1082, %v1386, 0.0
        %1511 = vadd.xlane.f32.xlu0 %v1510
        %v1512 = vpop.xlane.xlu0 %1511
        %v1513 = vsel %vm1082, %v1387, 0.0
        %1514 = vadd.xlane.f32.xlu0 %v1513
        %v1515 = vpop.xlane.xlu0 %1514
        %v1516 = vsel %vm1082, %v1388, 0.0
        %1517 = vadd.xlane.f32.xlu0 %v1516
        %v1518 = vpop.xlane.xlu0 %1517
        %v1519 = vsel %vm1082, %v1389, 0.0
        %1520 = vadd.xlane.f32.xlu0 %v1519
        %v1521 = vpop.xlane.xlu0 %1520
        %v1522 = vsel %vm1082, %v1390, 0.0
        %1523 = vadd.xlane.f32.xlu0 %v1522
        %v1524 = vpop.xlane.xlu0 %1523
        %v1525 = vsel %vm1082, %v1391, 0.0
        %1526 = vadd.xlane.f32.xlu0 %v1525
        %v1527 = vpop.xlane.xlu0 %1526
        %v1528 = vsel %vm1082, %v1392, 0.0
        %1529 = vadd.xlane.f32.xlu0 %v1528
        %v1530 = vpop.xlane.xlu0 %1529
        %v1531 = vsel %vm1082, %v1393, 0.0
        %1532 = vadd.xlane.f32.xlu0 %v1531
        %v1533 = vpop.xlane.xlu0 %1532
        %v1534 = vsel %vm1082, %v1394, 0.0
        %1535 = vadd.xlane.f32.xlu0 %v1534
        %v1536 = vpop.xlane.xlu0 %1535
        %v1537 = vsel %vm1082, %v1395, 0.0
        %1538 = vadd.xlane.f32.xlu0 %v1537
        %v1539 = vpop.xlane.xlu0 %1538
        %v1540 = vsel %vm1082, %v1396, 0.0
        %1541 = vadd.xlane.f32.xlu0 %v1540
        %v1542 = vpop.xlane.xlu0 %1541
        %v1543 = vsel %vm1082, %v1397, 0.0
        %1544 = vadd.xlane.f32.xlu0 %v1543
        %v1545 = vpop.xlane.xlu0 %1544
        %v1546 = vsel %vm1082, %v1398, 0.0
        %1547 = vadd.xlane.f32.xlu0 %v1546
        %v1548 = vpop.xlane.xlu0 %1547
        %v1549 = vsel %vm1082, %v1399, 0.0
        %1550 = vadd.xlane.f32.xlu0 %v1549
        %v1551 = vpop.xlane.xlu0 %1550
        %v1552 = vsel %vm1082, %v1400, 0.0
        %1553 = vadd.xlane.f32.xlu0 %v1552
        %v1554 = vpop.xlane.xlu0 %1553
        %v1555 = vsel %vm1082, %v1401, 0.0
        %1556 = vadd.xlane.f32.xlu0 %v1555
        %v1557 = vpop.xlane.xlu0 %1556
        %v1558 = vsel %vm1082, %v1402, 0.0
        %1559 = vadd.xlane.f32.xlu0 %v1558
        %v1560 = vpop.xlane.xlu0 %1559
        %v1561 = vsel %vm1082, %v1403, 0.0
        %1562 = vadd.xlane.f32.xlu0 %v1561
        %v1563 = vpop.xlane.xlu0 %1562
        %v1564 = vsel %vm1082, %v1404, 0.0
        %1565 = vadd.xlane.f32.xlu0 %v1564
        %v1566 = vpop.xlane.xlu0 %1565
        %v1567 = vsel %vm1082, %v1405, 0.0
        %1568 = vadd.xlane.f32.xlu0 %v1567
        %v1569 = vpop.xlane.xlu0 %1568
        %v1570 = vsel %vm1082, %v1406, 0.0
        %1571 = vadd.xlane.f32.xlu0 %v1570
        %v1572 = vpop.xlane.xlu0 %1571
        %v1573 = vsel %vm1082, %v1407, 0.0
        %1574 = vadd.xlane.f32.xlu0 %v1573
        %v1575 = vpop.xlane.xlu0 %1574
        %v1576 = vsel %vm1082, %v1408, 0.0
        %1577 = vadd.xlane.f32.xlu0 %v1576
        %v1578 = vpop.xlane.xlu0 %1577
        %v1579 = vsel %vm1082, %v1409, 0.0
        %1580 = vadd.xlane.f32.xlu0 %v1579
        %v1581 = vpop.xlane.xlu0 %1580
        %v1582 = vsel %vm1082, %v1410, 0.0
        %1583 = vadd.xlane.f32.xlu0 %v1582
        %v1584 = vpop.xlane.xlu0 %1583
        %v1585 = vsel %vm1082, %v1411, 0.0
        %1586 = vadd.xlane.f32.xlu0 %v1585
        %v1587 = vpop.xlane.xlu0 %1586
        %v1588 = vsel %vm1082, %v1412, 0.0
        %1589 = vadd.xlane.f32.xlu0 %v1588
        %v1590 = vpop.xlane.xlu0 %1589
        %v1591 = vsel %vm1082, %v1413, 0.0
        %1592 = vadd.xlane.f32.xlu0 %v1591
        %v1593 = vpop.xlane.xlu0 %1592
        %v1594 = vsel %vm1082, %v1414, 0.0
        %1595 = vadd.xlane.f32.xlu0 %v1594
        %v1596 = vpop.xlane.xlu0 %1595
        %v1597 = vsel %vm1082, %v1415, 0.0
        %1598 = vadd.xlane.f32.xlu0 %v1597
        %v1599 = vpop.xlane.xlu0 %1598
        %v1600 = vsel %vm1082, %v1416, 0.0
        %1601 = vadd.xlane.f32.xlu0 %v1600
        %v1602 = vpop.xlane.xlu0 %1601
        %v1603 = vsel %vm1082, %v1417, 0.0
        %1604 = vadd.xlane.f32.xlu0 %v1603
        %v1605 = vpop.xlane.xlu0 %1604
        %v1606 = vsel %vm1082, %v1418, 0.0
        %1607 = vadd.xlane.f32.xlu0 %v1606
        %v1608 = vpop.xlane.xlu0 %1607
        %v1609 = vsel %vm1082, %v1419, 0.0
        %1610 = vadd.xlane.f32.xlu0 %v1609
        %v1611 = vpop.xlane.xlu0 %1610
        %v1612 = vld [vmem:[#allocation3] sm:$0x1]
        %v1614 = vlaneseq
        %v1615 = vshrl.u32 %v1614, 7
        %v1616 = vsub.s32 0, %v1615
        %v1617 = vrot.slane %v1612, %v1616
        %v1619 = vadd.f32 %v1422, %v1617
        %v1620 = vadd.f32 %v1425, %v1617
        %v1621 = vadd.f32 %v1428, %v1617
        %v1622 = vadd.f32 %v1431, %v1617
        %v1623 = vadd.f32 %v1434, %v1617
        %v1624 = vadd.f32 %v1437, %v1617
        %v1625 = vadd.f32 %v1440, %v1617
        %v1626 = vadd.f32 %v1443, %v1617
        %v1627 = vadd.f32 %v1446, %v1617
        %v1628 = vadd.f32 %v1449, %v1617
        %v1629 = vadd.f32 %v1452, %v1617
        %v1630 = vadd.f32 %v1455, %v1617
        %v1631 = vadd.f32 %v1458, %v1617
        %v1632 = vadd.f32 %v1461, %v1617
        %v1633 = vadd.f32 %v1464, %v1617
        %v1634 = vadd.f32 %v1467, %v1617
        %v1635 = vadd.f32 %v1470, %v1617
        %v1636 = vadd.f32 %v1473, %v1617
        %v1637 = vadd.f32 %v1476, %v1617
        %v1638 = vadd.f32 %v1479, %v1617
        %v1639 = vadd.f32 %v1482, %v1617
        %v1640 = vadd.f32 %v1485, %v1617
        %v1641 = vadd.f32 %v1488, %v1617
        %v1642 = vadd.f32 %v1491, %v1617
        %v1643 = vadd.f32 %v1494, %v1617
        %v1644 = vadd.f32 %v1497, %v1617
        %v1645 = vadd.f32 %v1500, %v1617
        %v1646 = vadd.f32 %v1503, %v1617
        %v1647 = vadd.f32 %v1506, %v1617
        %v1648 = vadd.f32 %v1509, %v1617
        %v1649 = vadd.f32 %v1512, %v1617
        %v1650 = vadd.f32 %v1515, %v1617
        %v1651 = vadd.f32 %v1518, %v1617
        %v1652 = vadd.f32 %v1521, %v1617
        %v1653 = vadd.f32 %v1524, %v1617
        %v1654 = vadd.f32 %v1527, %v1617
        %v1655 = vadd.f32 %v1530, %v1617
        %v1656 = vadd.f32 %v1533, %v1617
        %v1657 = vadd.f32 %v1536, %v1617
        %v1658 = vadd.f32 %v1539, %v1617
        %v1659 = vadd.f32 %v1542, %v1617
        %v1660 = vadd.f32 %v1545, %v1617
        %v1661 = vadd.f32 %v1548, %v1617
        %v1662 = vadd.f32 %v1551, %v1617
        %v1663 = vadd.f32 %v1554, %v1617
        %v1664 = vadd.f32 %v1557, %v1617
        %v1665 = vadd.f32 %v1560, %v1617
        %v1666 = vadd.f32 %v1563, %v1617
        %v1667 = vadd.f32 %v1566, %v1617
        %v1668 = vadd.f32 %v1569, %v1617
        %v1669 = vadd.f32 %v1572, %v1617
        %v1670 = vadd.f32 %v1575, %v1617
        %v1671 = vadd.f32 %v1578, %v1617
        %v1672 = vadd.f32 %v1581, %v1617
        %v1673 = vadd.f32 %v1584, %v1617
        %v1674 = vadd.f32 %v1587, %v1617
        %v1675 = vadd.f32 %v1590, %v1617
        %v1676 = vadd.f32 %v1593, %v1617
        %v1677 = vadd.f32 %v1596, %v1617
        %v1678 = vadd.f32 %v1599, %v1617
        %v1679 = vadd.f32 %v1602, %v1617
        %v1680 = vadd.f32 %v1605, %v1617
        %v1681 = vadd.f32 %v1608, %v1617
        %v1682 = vadd.f32 %v1611, %v1617
        %v1683 = vsub.f32 0.0, %v1619
        %v1684 = vsub.f32 0.0, %v1620
        %v1685 = vsub.f32 0.0, %v1621
        %v1686 = vsub.f32 0.0, %v1622
        %v1687 = vsub.f32 0.0, %v1623
        %v1688 = vsub.f32 0.0, %v1624
        %v1689 = vsub.f32 0.0, %v1625
        %v1690 = vsub.f32 0.0, %v1626
        %v1691 = vsub.f32 0.0, %v1627
        %v1692 = vsub.f32 0.0, %v1628
        %v1693 = vsub.f32 0.0, %v1629
        %v1694 = vsub.f32 0.0, %v1630
        %v1695 = vsub.f32 0.0, %v1631
        %v1696 = vsub.f32 0.0, %v1632
        %v1697 = vsub.f32 0.0, %v1633
        %v1698 = vsub.f32 0.0, %v1634
        %v1699 = vsub.f32 0.0, %v1635
        %v1700 = vsub.f32 0.0, %v1636
        %v1701 = vsub.f32 0.0, %v1637
        %v1702 = vsub.f32 0.0, %v1638
        %v1703 = vsub.f32 0.0, %v1639
        %v1704 = vsub.f32 0.0, %v1640
        %v1705 = vsub.f32 0.0, %v1641
        %v1706 = vsub.f32 0.0, %v1642
        %v1707 = vsub.f32 0.0, %v1643
        %v1708 = vsub.f32 0.0, %v1644
        %v1709 = vsub.f32 0.0, %v1645
        %v1710 = vsub.f32 0.0, %v1646
        %v1711 = vsub.f32 0.0, %v1647
        %v1712 = vsub.f32 0.0, %v1648
        %v1713 = vsub.f32 0.0, %v1649
        %v1714 = vsub.f32 0.0, %v1650
        %v1715 = vsub.f32 0.0, %v1651
        %v1716 = vsub.f32 0.0, %v1652
        %v1717 = vsub.f32 0.0, %v1653
        %v1718 = vsub.f32 0.0, %v1654
        %v1719 = vsub.f32 0.0, %v1655
        %v1720 = vsub.f32 0.0, %v1656
        %v1721 = vsub.f32 0.0, %v1657
        %v1722 = vsub.f32 0.0, %v1658
        %v1723 = vsub.f32 0.0, %v1659
        %v1724 = vsub.f32 0.0, %v1660
        %v1725 = vsub.f32 0.0, %v1661
        %v1726 = vsub.f32 0.0, %v1662
        %v1727 = vsub.f32 0.0, %v1663
        %v1728 = vsub.f32 0.0, %v1664
        %v1729 = vsub.f32 0.0, %v1665
        %v1730 = vsub.f32 0.0, %v1666
        %v1731 = vsub.f32 0.0, %v1667
        %v1732 = vsub.f32 0.0, %v1668
        %v1733 = vsub.f32 0.0, %v1669
        %v1734 = vsub.f32 0.0, %v1670
        %v1735 = vsub.f32 0.0, %v1671
        %v1736 = vsub.f32 0.0, %v1672
        %v1737 = vsub.f32 0.0, %v1673
        %v1738 = vsub.f32 0.0, %v1674
        %v1739 = vsub.f32 0.0, %v1675
        %v1740 = vsub.f32 0.0, %v1676
        %v1741 = vsub.f32 0.0, %v1677
        %v1742 = vsub.f32 0.0, %v1678
        %v1743 = vsub.f32 0.0, %v1679
        %v1744 = vsub.f32 0.0, %v1680
        %v1745 = vsub.f32 0.0, %v1681
        %v1746 = vsub.f32 0.0, %v1682
        %v1747 = vmul.f32 %v1683, 1.442695
        %v1748 = vpow.pop %v1747
        %v1749 = vmul.f32 %v1684, 1.442695
        %v1750 = vpow.pop %v1749
        %v1751 = vmul.f32 %v1685, 1.442695
        %v1752 = vpow.pop %v1751
        %v1753 = vmul.f32 %v1686, 1.442695
        %v1754 = vpow.pop %v1753
        %v1755 = vmul.f32 %v1687, 1.442695
        %v1756 = vpow.pop %v1755
        %v1757 = vmul.f32 %v1688, 1.442695
        %v1758 = vpow.pop %v1757
        %v1759 = vmul.f32 %v1689, 1.442695
        %v1760 = vpow.pop %v1759
        %v1761 = vmul.f32 %v1690, 1.442695
        %v1762 = vpow.pop %v1761
        %v1763 = vmul.f32 %v1691, 1.442695
        %v1764 = vpow.pop %v1763
        %v1765 = vmul.f32 %v1692, 1.442695
        %v1766 = vpow.pop %v1765
        %v1767 = vmul.f32 %v1693, 1.442695
        %v1768 = vpow.pop %v1767
        %v1769 = vmul.f32 %v1694, 1.442695
        %v1770 = vpow.pop %v1769
        %v1771 = vmul.f32 %v1695, 1.442695
        %v1772 = vpow.pop %v1771
        %v1773 = vmul.f32 %v1696, 1.442695
        %v1774 = vpow.pop %v1773
        %v1775 = vmul.f32 %v1697, 1.442695
        %v1776 = vpow.pop %v1775
        %v1777 = vmul.f32 %v1698, 1.442695
        %v1778 = vpow.pop %v1777
        %v1779 = vmul.f32 %v1699, 1.442695
        %v1780 = vpow.pop %v1779
        %v1781 = vmul.f32 %v1700, 1.442695
        %v1782 = vpow.pop %v1781
        %v1783 = vmul.f32 %v1701, 1.442695
        %v1784 = vpow.pop %v1783
        %v1785 = vmul.f32 %v1702, 1.442695
        %v1786 = vpow.pop %v1785
        %v1787 = vmul.f32 %v1703, 1.442695
        %v1788 = vpow.pop %v1787
        %v1789 = vmul.f32 %v1704, 1.442695
        %v1790 = vpow.pop %v1789
        %v1791 = vmul.f32 %v1705, 1.442695
        %v1792 = vpow.pop %v1791
        %v1793 = vmul.f32 %v1706, 1.442695
        %v1794 = vpow.pop %v1793
        %v1795 = vmul.f32 %v1707, 1.442695
        %v1796 = vpow.pop %v1795
        %v1797 = vmul.f32 %v1708, 1.442695
        %v1798 = vpow.pop %v1797
        %v1799 = vmul.f32 %v1709, 1.442695
        %v1800 = vpow.pop %v1799
        %v1801 = vmul.f32 %v1710, 1.442695
        %v1802 = vpow.pop %v1801
        %v1803 = vmul.f32 %v1711, 1.442695
        %v1804 = vpow.pop %v1803
        %v1805 = vmul.f32 %v1712, 1.442695
        %v1806 = vpow.pop %v1805
        %v1807 = vmul.f32 %v1713, 1.442695
        %v1808 = vpow.pop %v1807
        %v1809 = vmul.f32 %v1714, 1.442695
        %v1810 = vpow.pop %v1809
        %v1811 = vmul.f32 %v1715, 1.442695
        %v1812 = vpow.pop %v1811
        %v1813 = vmul.f32 %v1716, 1.442695
        %v1814 = vpow.pop %v1813
        %v1815 = vmul.f32 %v1717, 1.442695
        %v1816 = vpow.pop %v1815
        %v1817 = vmul.f32 %v1718, 1.442695
        %v1818 = vpow.pop %v1817
        %v1819 = vmul.f32 %v1719, 1.442695
        %v1820 = vpow.pop %v1819
        %v1821 = vmul.f32 %v1720, 1.442695
        %v1822 = vpow.pop %v1821
        %v1823 = vmul.f32 %v1721, 1.442695
        %v1824 = vpow.pop %v1823
        %v1825 = vmul.f32 %v1722, 1.442695
        %v1826 = vpow.pop %v1825
        %v1827 = vmul.f32 %v1723, 1.442695
        %v1828 = vpow.pop %v1827
        %v1829 = vmul.f32 %v1724, 1.442695
        %v1830 = vpow.pop %v1829
        %v1831 = vmul.f32 %v1725, 1.442695
        %v1832 = vpow.pop %v1831
        %v1833 = vmul.f32 %v1726, 1.442695
        %v1834 = vpow.pop %v1833
        %v1835 = vmul.f32 %v1727, 1.442695
        %v1836 = vpow.pop %v1835
        %v1837 = vmul.f32 %v1728, 1.442695
        %v1838 = vpow.pop %v1837
        %v1839 = vmul.f32 %v1729, 1.442695
        %v1840 = vpow.pop %v1839
        %v1841 = vmul.f32 %v1730, 1.442695
        %v1842 = vpow.pop %v1841
        %v1843 = vmul.f32 %v1731, 1.442695
        %v1844 = vpow.pop %v1843
        %v1845 = vmul.f32 %v1732, 1.442695
        %v1846 = vpow.pop %v1845
        %v1847 = vmul.f32 %v1733, 1.442695
        %v1848 = vpow.pop %v1847
        %v1849 = vmul.f32 %v1734, 1.442695
        %v1850 = vpow.pop %v1849
        %v1851 = vmul.f32 %v1735, 1.442695
        %v1852 = vpow.pop %v1851
        %v1853 = vmul.f32 %v1736, 1.442695
        %v1854 = vpow.pop %v1853
        %v1855 = vmul.f32 %v1737, 1.442695
        %v1856 = vpow.pop %v1855
        %v1857 = vmul.f32 %v1738, 1.442695
        %v1858 = vpow.pop %v1857
        %v1859 = vmul.f32 %v1739, 1.442695
        %v1860 = vpow.pop %v1859
        %v1861 = vmul.f32 %v1740, 1.442695
        %v1862 = vpow.pop %v1861
        %v1863 = vmul.f32 %v1741, 1.442695
        %v1864 = vpow.pop %v1863
        %v1865 = vmul.f32 %v1742, 1.442695
        %v1866 = vpow.pop %v1865
        %v1867 = vmul.f32 %v1743, 1.442695
        %v1868 = vpow.pop %v1867
        %v1869 = vmul.f32 %v1744, 1.442695
        %v1870 = vpow.pop %v1869
        %v1871 = vmul.f32 %v1745, 1.442695
        %v1872 = vpow.pop %v1871
        %v1873 = vmul.f32 %v1746, 1.442695
        %v1874 = vpow.pop %v1873
        %v1875 = vadd.f32 %v1748, 1.0
        %v1876 = vadd.f32 %v1750, 1.0
        %v1877 = vadd.f32 %v1752, 1.0
        %v1878 = vadd.f32 %v1754, 1.0
        %v1879 = vadd.f32 %v1756, 1.0
        %v1880 = vadd.f32 %v1758, 1.0
        %v1881 = vadd.f32 %v1760, 1.0
        %v1882 = vadd.f32 %v1762, 1.0
        %v1883 = vadd.f32 %v1764, 1.0
        %v1884 = vadd.f32 %v1766, 1.0
        %v1885 = vadd.f32 %v1768, 1.0
        %v1886 = vadd.f32 %v1770, 1.0
        %v1887 = vadd.f32 %v1772, 1.0
        %v1888 = vadd.f32 %v1774, 1.0
        %v1889 = vadd.f32 %v1776, 1.0
        %v1890 = vadd.f32 %v1778, 1.0
        %v1891 = vadd.f32 %v1780, 1.0
        %v1892 = vadd.f32 %v1782, 1.0
        %v1893 = vadd.f32 %v1784, 1.0
        %v1894 = vadd.f32 %v1786, 1.0
        %v1895 = vadd.f32 %v1788, 1.0
        %v1896 = vadd.f32 %v1790, 1.0
        %v1897 = vadd.f32 %v1792, 1.0
        %v1898 = vadd.f32 %v1794, 1.0
        %v1899 = vadd.f32 %v1796, 1.0
        %v1900 = vadd.f32 %v1798, 1.0
        %v1901 = vadd.f32 %v1800, 1.0
        %v1902 = vadd.f32 %v1802, 1.0
        %v1903 = vadd.f32 %v1804, 1.0
        %v1904 = vadd.f32 %v1806, 1.0
        %v1905 = vadd.f32 %v1808, 1.0
        %v1906 = vadd.f32 %v1810, 1.0
        %v1907 = vadd.f32 %v1812, 1.0
        %v1908 = vadd.f32 %v1814, 1.0
        %v1909 = vadd.f32 %v1816, 1.0
        %v1910 = vadd.f32 %v1818, 1.0
        %v1911 = vadd.f32 %v1820, 1.0
        %v1912 = vadd.f32 %v1822, 1.0
        %v1913 = vadd.f32 %v1824, 1.0
        %v1914 = vadd.f32 %v1826, 1.0
        %v1915 = vadd.f32 %v1828, 1.0
        %v1916 = vadd.f32 %v1830, 1.0
        %v1917 = vadd.f32 %v1832, 1.0
        %v1918 = vadd.f32 %v1834, 1.0
        %v1919 = vadd.f32 %v1836, 1.0
        %v1920 = vadd.f32 %v1838, 1.0
        %v1921 = vadd.f32 %v1840, 1.0
        %v1922 = vadd.f32 %v1842, 1.0
        %v1923 = vadd.f32 %v1844, 1.0
        %v1924 = vadd.f32 %v1846, 1.0
        %v1925 = vadd.f32 %v1848, 1.0
        %v1926 = vadd.f32 %v1850, 1.0
        %v1927 = vadd.f32 %v1852, 1.0
        %v1928 = vadd.f32 %v1854, 1.0
        %v1929 = vadd.f32 %v1856, 1.0
        %v1930 = vadd.f32 %v1858, 1.0
        %v1931 = vadd.f32 %v1860, 1.0
        %v1932 = vadd.f32 %v1862, 1.0
        %v1933 = vadd.f32 %v1864, 1.0
        %v1934 = vadd.f32 %v1866, 1.0
        %v1935 = vadd.f32 %v1868, 1.0
        %v1936 = vadd.f32 %v1870, 1.0
        %v1937 = vadd.f32 %v1872, 1.0
        %v1938 = vadd.f32 %v1874, 1.0
        %v1939 = vrcp.pop %v1875
        %v1940 = vrcp.pop %v1876
        %v1941 = vrcp.pop %v1877
        %v1942 = vrcp.pop %v1878
        %v1943 = vrcp.pop %v1879
        %v1944 = vrcp.pop %v1880
        %v1945 = vrcp.pop %v1881
        %v1946 = vrcp.pop %v1882
        %v1947 = vrcp.pop %v1883
        %v1948 = vrcp.pop %v1884
        %v1949 = vrcp.pop %v1885
        %v1950 = vrcp.pop %v1886
        %v1951 = vrcp.pop %v1887
        %v1952 = vrcp.pop %v1888
        %v1953 = vrcp.pop %v1889
        %v1954 = vrcp.pop %v1890
        %v1955 = vrcp.pop %v1891
        %v1956 = vrcp.pop %v1892
        %v1957 = vrcp.pop %v1893
        %v1958 = vrcp.pop %v1894
        %v1959 = vrcp.pop %v1895
        %v1960 = vrcp.pop %v1896
        %v1961 = vrcp.pop %v1897
        %v1962 = vrcp.pop %v1898
        %v1963 = vrcp.pop %v1899
        %v1964 = vrcp.pop %v1900
        %v1965 = vrcp.pop %v1901
        %v1966 = vrcp.pop %v1902
        %v1967 = vrcp.pop %v1903
        %v1968 = vrcp.pop %v1904
        %v1969 = vrcp.pop %v1905
        %v1970 = vrcp.pop %v1906
        %v1971 = vrcp.pop %v1907
        %v1972 = vrcp.pop %v1908
        %v1973 = vrcp.pop %v1909
        %v1974 = vrcp.pop %v1910
        %v1975 = vrcp.pop %v1911
        %v1976 = vrcp.pop %v1912
        %v1977 = vrcp.pop %v1913
        %v1978 = vrcp.pop %v1914
        %v1979 = vrcp.pop %v1915
        %v1980 = vrcp.pop %v1916
        %v1981 = vrcp.pop %v1917
        %v1982 = vrcp.pop %v1918
        %v1983 = vrcp.pop %v1919
        %v1984 = vrcp.pop %v1920
        %v1985 = vrcp.pop %v1921
        %v1986 = vrcp.pop %v1922
        %v1987 = vrcp.pop %v1923
        %v1988 = vrcp.pop %v1924
        %v1989 = vrcp.pop %v1925
        %v1990 = vrcp.pop %v1926
        %v1991 = vrcp.pop %v1927
        %v1992 = vrcp.pop %v1928
        %v1993 = vrcp.pop %v1929
        %v1994 = vrcp.pop %v1930
        %v1995 = vrcp.pop %v1931
        %v1996 = vrcp.pop %v1932
        %v1997 = vrcp.pop %v1933
        %v1998 = vrcp.pop %v1934
        %v1999 = vrcp.pop %v1935
        %v2000 = vrcp.pop %v1936
        %v2001 = vrcp.pop %v1937
        %v2002 = vrcp.pop %v1938
        %v2003 = vmax.f32 %v1939, 0.0
        %v2004 = vmax.f32 %v1940, 0.0
        %v2005 = vmax.f32 %v1941, 0.0
        %v2006 = vmax.f32 %v1942, 0.0
        %v2007 = vmax.f32 %v1943, 0.0
        %v2008 = vmax.f32 %v1944, 0.0
        %v2009 = vmax.f32 %v1945, 0.0
        %v2010 = vmax.f32 %v1946, 0.0
        %v2011 = vmax.f32 %v1947, 0.0
        %v2012 = vmax.f32 %v1948, 0.0
        %v2013 = vmax.f32 %v1949, 0.0
        %v2014 = vmax.f32 %v1950, 0.0
        %v2015 = vmax.f32 %v1951, 0.0
        %v2016 = vmax.f32 %v1952, 0.0
        %v2017 = vmax.f32 %v1953, 0.0
        %v2018 = vmax.f32 %v1954, 0.0
        %v2019 = vmax.f32 %v1955, 0.0
        %v2020 = vmax.f32 %v1956, 0.0
        %v2021 = vmax.f32 %v1957, 0.0
        %v2022 = vmax.f32 %v1958, 0.0
        %v2023 = vmax.f32 %v1959, 0.0
        %v2024 = vmax.f32 %v1960, 0.0
        %v2025 = vmax.f32 %v1961, 0.0
        %v2026 = vmax.f32 %v1962, 0.0
        %v2027 = vmax.f32 %v1963, 0.0
        %v2028 = vmax.f32 %v1964, 0.0
        %v2029 = vmax.f32 %v1965, 0.0
        %v2030 = vmax.f32 %v1966, 0.0
        %v2031 = vmax.f32 %v1967, 0.0
        %v2032 = vmax.f32 %v1968, 0.0
        %v2033 = vmax.f32 %v1969, 0.0
        %v2034 = vmax.f32 %v1970, 0.0
        %v2035 = vmax.f32 %v1971, 0.0
        %v2036 = vmax.f32 %v1972, 0.0
        %v2037 = vmax.f32 %v1973, 0.0
        %v2038 = vmax.f32 %v1974, 0.0
        %v2039 = vmax.f32 %v1975, 0.0
        %v2040 = vmax.f32 %v1976, 0.0
        %v2041 = vmax.f32 %v1977, 0.0
        %v2042 = vmax.f32 %v1978, 0.0
        %v2043 = vmax.f32 %v1979, 0.0
        %v2044 = vmax.f32 %v1980, 0.0
        %v2045 = vmax.f32 %v1981, 0.0
        %v2046 = vmax.f32 %v1982, 0.0
        %v2047 = vmax.f32 %v1983, 0.0
        %v2048 = vmax.f32 %v1984, 0.0
        %v2049 = vmax.f32 %v1985, 0.0
        %v2050 = vmax.f32 %v1986, 0.0
        %v2051 = vmax.f32 %v1987, 0.0
        %v2052 = vmax.f32 %v1988, 0.0
        %v2053 = vmax.f32 %v1989, 0.0
        %v2054 = vmax.f32 %v1990, 0.0
        %v2055 = vmax.f32 %v1991, 0.0
        %v2056 = vmax.f32 %v1992, 0.0
        %v2057 = vmax.f32 %v1993, 0.0
        %v2058 = vmax.f32 %v1994, 0.0
        %v2059 = vmax.f32 %v1995, 0.0
        %v2060 = vmax.f32 %v1996, 0.0
        %v2061 = vmax.f32 %v1997, 0.0
        %v2062 = vmax.f32 %v1998, 0.0
        %v2063 = vmax.f32 %v1999, 0.0
        %v2064 = vmax.f32 %v2000, 0.0
        %v2065 = vmax.f32 %v2001, 0.0
        %v2066 = vmax.f32 %v2002, 0.0
        %v2067 = vmin.f32 %v2003, 1.0
        %v2068 = vmin.f32 %v2004, 1.0
        %v2069 = vmin.f32 %v2005, 1.0
        %v2070 = vmin.f32 %v2006, 1.0
        %v2071 = vmin.f32 %v2007, 1.0
        %v2072 = vmin.f32 %v2008, 1.0
        %v2073 = vmin.f32 %v2009, 1.0
        %v2074 = vmin.f32 %v2010, 1.0
        %v2075 = vmin.f32 %v2011, 1.0
        %v2076 = vmin.f32 %v2012, 1.0
        %v2077 = vmin.f32 %v2013, 1.0
        %v2078 = vmin.f32 %v2014, 1.0
        %v2079 = vmin.f32 %v2015, 1.0
        %v2080 = vmin.f32 %v2016, 1.0
        %v2081 = vmin.f32 %v2017, 1.0
        %v2082 = vmin.f32 %v2018, 1.0
        %v2083 = vmin.f32 %v2019, 1.0
        %v2084 = vmin.f32 %v2020, 1.0
        %v2085 = vmin.f32 %v2021, 1.0
        %v2086 = vmin.f32 %v2022, 1.0
        %v2087 = vmin.f32 %v2023, 1.0
        %v2088 = vmin.f32 %v2024, 1.0
        %v2089 = vmin.f32 %v2025, 1.0
        %v2090 = vmin.f32 %v2026, 1.0
        %v2091 = vmin.f32 %v2027, 1.0
        %v2092 = vmin.f32 %v2028, 1.0
        %v2093 = vmin.f32 %v2029, 1.0
        %v2094 = vmin.f32 %v2030, 1.0
        %v2095 = vmin.f32 %v2031, 1.0
        %v2096 = vmin.f32 %v2032, 1.0
        %v2097 = vmin.f32 %v2033, 1.0
        %v2098 = vmin.f32 %v2034, 1.0
        %v2099 = vmin.f32 %v2035, 1.0
        %v2100 = vmin.f32 %v2036, 1.0
        %v2101 = vmin.f32 %v2037, 1.0
        %v2102 = vmin.f32 %v2038, 1.0
        %v2103 = vmin.f32 %v2039, 1.0
        %v2104 = vmin.f32 %v2040, 1.0
        %v2105 = vmin.f32 %v2041, 1.0
        %v2106 = vmin.f32 %v2042, 1.0
        %v2107 = vmin.f32 %v2043, 1.0
        %v2108 = vmin.f32 %v2044, 1.0
        %v2109 = vmin.f32 %v2045, 1.0
        %v2110 = vmin.f32 %v2046, 1.0
        %v2111 = vmin.f32 %v2047, 1.0
        %v2112 = vmin.f32 %v2048, 1.0
        %v2113 = vmin.f32 %v2049, 1.0
        %v2114 = vmin.f32 %v2050, 1.0
        %v2115 = vmin.f32 %v2051, 1.0
        %v2116 = vmin.f32 %v2052, 1.0
        %v2117 = vmin.f32 %v2053, 1.0
        %v2118 = vmin.f32 %v2054, 1.0
        %v2119 = vmin.f32 %v2055, 1.0
        %v2120 = vmin.f32 %v2056, 1.0
        %v2121 = vmin.f32 %v2057, 1.0
        %v2122 = vmin.f32 %v2058, 1.0
        %v2123 = vmin.f32 %v2059, 1.0
        %v2124 = vmin.f32 %v2060, 1.0
        %v2125 = vmin.f32 %v2061, 1.0
        %v2126 = vmin.f32 %v2062, 1.0
        %v2127 = vmin.f32 %v2063, 1.0
        %v2128 = vmin.f32 %v2064, 1.0
        %v2129 = vmin.f32 %v2065, 1.0
        %v2130 = vmin.f32 %v2066, 1.0
        %vm2131 = vcmask 7168
        %2132 = vst.msk [vmem:[%s273] sm:$0xff] %vm2131, %v2067
        %2133 = vst.msk [vmem:[%s273 + $0x8] sm:$0xff] %vm2131, %v2068
        %2134 = vst.msk [vmem:[%s273 + $0x10] sm:$0xff] %vm2131, %v2069
        %2135 = vst.msk [vmem:[%s273 + $0x18] sm:$0xff] %vm2131, %v2070
        %2136 = vst.msk [vmem:[%s273 + $0x20] sm:$0xff] %vm2131, %v2071
        %2137 = vst.msk [vmem:[%s273 + $0x28] sm:$0xff] %vm2131, %v2072
        %2138 = vst.msk [vmem:[%s273 + $0x30] sm:$0xff] %vm2131, %v2073
        %2139 = vst.msk [vmem:[%s273 + $0x38] sm:$0xff] %vm2131, %v2074
        %2140 = vst.msk [vmem:[%s273 + $0x40] sm:$0xff] %vm2131, %v2075
        %2141 = vst.msk [vmem:[%s273 + $0x48] sm:$0xff] %vm2131, %v2076
        %2142 = vst.msk [vmem:[%s273 + $0x50] sm:$0xff] %vm2131, %v2077
        %2143 = vst.msk [vmem:[%s273 + $0x58] sm:$0xff] %vm2131, %v2078
        %2144 = vst.msk [vmem:[%s273 + $0x60] sm:$0xff] %vm2131, %v2079
        %2145 = vst.msk [vmem:[%s273 + $0x68] sm:$0xff] %vm2131, %v2080
        %2146 = vst.msk [vmem:[%s273 + $0x70] sm:$0xff] %vm2131, %v2081
        %2147 = vst.msk [vmem:[%s273 + $0x78] sm:$0xff] %vm2131, %v2082
        %2148 = vst.msk [vmem:[%s273 + $0x80] sm:$0xff] %vm2131, %v2083
        %2149 = vst.msk [vmem:[%s273 + $0x88] sm:$0xff] %vm2131, %v2084
        %2150 = vst.msk [vmem:[%s273 + $0x90] sm:$0xff] %vm2131, %v2085
        %2151 = vst.msk [vmem:[%s273 + $0x98] sm:$0xff] %vm2131, %v2086
        %2152 = vst.msk [vmem:[%s273 + $0xa0] sm:$0xff] %vm2131, %v2087
        %2153 = vst.msk [vmem:[%s273 + $0xa8] sm:$0xff] %vm2131, %v2088
        %2154 = vst.msk [vmem:[%s273 + $0xb0] sm:$0xff] %vm2131, %v2089
        %2155 = vst.msk [vmem:[%s273 + $0xb8] sm:$0xff] %vm2131, %v2090
        %2156 = vst.msk [vmem:[%s273 + $0xc0] sm:$0xff] %vm2131, %v2091
        %2157 = vst.msk [vmem:[%s273 + $0xc8] sm:$0xff] %vm2131, %v2092
        %2158 = vst.msk [vmem:[%s273 + $0xd0] sm:$0xff] %vm2131, %v2093
        %2159 = vst.msk [vmem:[%s273 + $0xd8] sm:$0xff] %vm2131, %v2094
        %2160 = vst.msk [vmem:[%s273 + $0xe0] sm:$0xff] %vm2131, %v2095
        %2161 = vst.msk [vmem:[%s273 + $0xe8] sm:$0xff] %vm2131, %v2096
        %2162 = vst.msk [vmem:[%s273 + $0xf0] sm:$0xff] %vm2131, %v2097
        %2163 = vst.msk [vmem:[%s273 + $0xf8] sm:$0xff] %vm2131, %v2098
        %2164 = vst.msk [vmem:[%s273 + $0x100] sm:$0xff] %vm2131, %v2099
        %2165 = vst.msk [vmem:[%s273 + $0x108] sm:$0xff] %vm2131, %v2100
        %2166 = vst.msk [vmem:[%s273 + $0x110] sm:$0xff] %vm2131, %v2101
        %2167 = vst.msk [vmem:[%s273 + $0x118] sm:$0xff] %vm2131, %v2102
        %2168 = vst.msk [vmem:[%s273 + $0x120] sm:$0xff] %vm2131, %v2103
        %2169 = vst.msk [vmem:[%s273 + $0x128] sm:$0xff] %vm2131, %v2104
        %2170 = vst.msk [vmem:[%s273 + $0x130] sm:$0xff] %vm2131, %v2105
        %2171 = vst.msk [vmem:[%s273 + $0x138] sm:$0xff] %vm2131, %v2106
        %2172 = vst.msk [vmem:[%s273 + $0x140] sm:$0xff] %vm2131, %v2107
        %2173 = vst.msk [vmem:[%s273 + $0x148] sm:$0xff] %vm2131, %v2108
        %2174 = vst.msk [vmem:[%s273 + $0x150] sm:$0xff] %vm2131, %v2109
        %2175 = vst.msk [vmem:[%s273 + $0x158] sm:$0xff] %vm2131, %v2110
        %2176 = vst.msk [vmem:[%s273 + $0x160] sm:$0xff] %vm2131, %v2111
        %2177 = vst.msk [vmem:[%s273 + $0x168] sm:$0xff] %vm2131, %v2112
        %2178 = vst.msk [vmem:[%s273 + $0x170] sm:$0xff] %vm2131, %v2113
        %2179 = vst.msk [vmem:[%s273 + $0x178] sm:$0xff] %vm2131, %v2114
        %2180 = vst.msk [vmem:[%s273 + $0x180] sm:$0xff] %vm2131, %v2115
        %2181 = vst.msk [vmem:[%s273 + $0x188] sm:$0xff] %vm2131, %v2116
        %2182 = vst.msk [vmem:[%s273 + $0x190] sm:$0xff] %vm2131, %v2117
        %2183 = vst.msk [vmem:[%s273 + $0x198] sm:$0xff] %vm2131, %v2118
        %2184 = vst.msk [vmem:[%s273 + $0x1a0] sm:$0xff] %vm2131, %v2119
        %2185 = vst.msk [vmem:[%s273 + $0x1a8] sm:$0xff] %vm2131, %v2120
        %2186 = vst.msk [vmem:[%s273 + $0x1b0] sm:$0xff] %vm2131, %v2121
        %2187 = vst.msk [vmem:[%s273 + $0x1b8] sm:$0xff] %vm2131, %v2122
        %2188 = vst.msk [vmem:[%s273 + $0x1c0] sm:$0xff] %vm2131, %v2123
        %2189 = vst.msk [vmem:[%s273 + $0x1c8] sm:$0xff] %vm2131, %v2124
        %2190 = vst.msk [vmem:[%s273 + $0x1d0] sm:$0xff] %vm2131, %v2125
        %2191 = vst.msk [vmem:[%s273 + $0x1d8] sm:$0xff] %vm2131, %v2126
        %2192 = vst.msk [vmem:[%s273 + $0x1e0] sm:$0xff] %vm2131, %v2127
        %2193 = vst.msk [vmem:[%s273 + $0x1e8] sm:$0xff] %vm2131, %v2128
        %2194 = vst.msk [vmem:[%s273 + $0x1f0] sm:$0xff] %vm2131, %v2129
        %2195 = vst.msk [vmem:[%s273 + $0x1f8] sm:$0xff] %vm2131, %v2130
      $region48: #{detail_capture_forward.15} parent=39 // pred_fallthru
        _
      %s2196 = smul.u32 64, %s22
      %p2197 = scmp.lt.s32.totalorder %s2196, 255
      %s2198 = scalar_select %p2197, %s2196, 255
      %s2199 = smul.addr %s2198, 8
      %s2200 = scalar_lea.vmem %s5, %s2199
      // Predicated region
      $region49: #{detail_capture_forward.15} parent=39 // pred_check
        %p2201 = pneg %p165
      $region50: #{detail_capture_forward.15} parent=39 // pred_check_branch
        %2203 = sbr.rel (%p2201) target = $region52
      $region51: #{detail_capture_forward.15} parent=39 // pred_region
        %s2204 = smul.u32 64, %s22
      $region52: #{detail_capture_forward.15} parent=39 // pred_fallthru
        _
    $region40: #{detail_capture_forward.15} parent=5 // pred_fallthru
      _
    %p2205 = scmp.le.s32.totalorder 2, %s13
    // Predicated region
    $region53: #{detail_capture_forward.15} parent=5 // pred_check
      %p2206 = pneg %p2205
    $region54: #{detail_capture_forward.15} parent=5 // pred_check_branch
      %2208 = sbr.rel (%p2206) target = $region56
    $region55: #{detail_capture_forward.15} parent=5 // pred_region
      %s2209 = ssub.s32 %s13, 2
      // Predicated region
      $region57: #{detail_capture_forward.15} parent=55 // pred_check
        %p2210 = pneg %p171
      $region58: #{detail_capture_forward.15} parent=55 // pred_check_branch
        %2212 = sbr.rel (%p2210) target = $region60
      $region59: #{detail_capture_forward.15} parent=55 // pred_region
        %s2213 = smul.u32 64, %s24
        %p2214 = scmp.lt.s32.totalorder %s2213, 255
        %s2215 = scalar_select %p2214, %s2213, 255
        %s2216 = smul.addr %s2215, 8
        %s2217 = scalar_lea.vmem %s5, %s2216
      $region60: #{detail_capture_forward.15} parent=55 // pred_fallthru
        _
    $region56: #{detail_capture_forward.15} parent=5 // pred_fallthru
      _
  $region6: #{detail_capture_forward.15} parent=0 // loop_footer
    %s17 = sadd.s32 1, %s13
  $region7: #{detail_capture_forward.15} parent=0 // loop_footer_branch
    %12 = sbr.rel target = $region3
  $region8: #{detail_capture_forward.15} parent=0 // loop_exit
    _

</llo_original>
